<compile_context>
chip_gen: v7x
topology: tpu7x:2x2x1
jax: 0.10.0
libtpu: 0.0.40
codegen_flags: <defaults>
</compile_context>

<pallas_src>
import jax
import jax.numpy as jnp
from jax import lax
from jax.experimental import pallas as pl
from jax.experimental.pallas import tpu as pltpu

BN_EPS = 1e-5
L2_EPS = 1e-12


# ----------------------------------------------------------------------------
# Trace-time helpers used inside the fused kernel
# ----------------------------------------------------------------------------
def _bn(chunks, rows):
  """Training-mode BatchNorm (gamma=1, beta=0, biased variance) over a list of
  per-batch row chunks of shape (rows_b, C); stats are per channel over all rows."""
  s1 = chunks[0].sum(axis=0, keepdims=True)
  s2 = (chunks[0] * chunks[0]).sum(axis=0, keepdims=True)
  for c in chunks[1:]:
    s1 = s1 + c.sum(axis=0, keepdims=True)
    s2 = s2 + (c * c).sum(axis=0, keepdims=True)
  mean = s1 / rows
  var = jnp.maximum(s2 / rows - mean * mean, 0.0)   # clamp: one-pass var can go < 0
  inv = lax.rsqrt(var + BN_EPS)
  return [(c - mean) * inv for c in chunks]


def _conv3_s1(x_f32, w_ref, n, l_out):
  """k=3 / stride 1 / pad 1 conv over a per-batch zero-padded dense slab value
  x_f32 of shape (n*(l_out+2), C_in).  Returns per-batch (l_out, C_out) chunks."""
  x = x_f32.astype(jnp.bfloat16)
  p = [jnp.dot(x, w_ref[t], preferred_element_type=jnp.float32) for t in range(3)]
  lp = l_out + 2
  outs = []
  for b in range(n):
    s = b * lp
    outs.append(p[0][s:s + l_out, :] + p[1][s + 1:s + 1 + l_out, :]
                + p[2][s + 2:s + 2 + l_out, :])
  return outs


def _conv3_s2_pair(pair_f32, w12_ref, w0_ref, wd_ref, n, l_out, c_in):
  """k=3 / stride 2 / pad 1 conv (+ fused 1x1 stride-2 downsample) over a row-pair
  slab value of shape (n*(l_out+1), 2*c_in): per batch [zero pair, [x0|x1], ...].
  Taps 1,2 are folded into one 2*c_in-deep matmul; tap 0 reads the odd lane-half."""
  xp = pair_f32.astype(jnp.bfloat16)
  q12 = jnp.dot(xp, w12_ref[...], preferred_element_type=jnp.float32)
  q0 = jnp.dot(xp[:, c_in:], w0_ref[...], preferred_element_type=jnp.float32)
  pd = jnp.dot(xp[:, :c_in], wd_ref[...], preferred_element_type=jnp.float32)
  lp = l_out + 1
  ys, ids = [], []
  for b in range(n):
    s = b * lp
    ys.append(q12[s + 1:s + 1 + l_out, :] + q0[s:s + l_out, :])
    ids.append(pd[s + 1:s + 1 + l_out, :])
  return ys, ids


def _store_padded(dst_ref, chunks, n, l):
  """Write per-batch (l, C) chunks into a (n*(l+2), C) dense slab; zero pad rows only."""
  c = dst_ref.shape[1]
  zrow = jnp.zeros((1, c), jnp.float32)
  lp = l + 2
  for b in range(n):
    s = b * lp
    dst_ref[s:s + 1, :] = zrow
    dst_ref[s + 1:s + 1 + l, :] = chunks[b]
    dst_ref[s + 1 + l:s + 2 + l, :] = zrow


def _store_pairs(dst_ref, chunks, n, l):
  """Write per-batch (l, C) chunks into the row-pair layout (n*(l//2+1), 2*C):
  per batch one leading zero pair-row, then row p = [x[2p] | x[2p+1]]."""
  c = chunks[0].shape[1]
  zrow = jnp.zeros((1, 2 * c), jnp.float32)
  lh = l // 2
  for b in range(n):
    s = b * (lh + 1)
    dst_ref[s:s + 1, :] = zrow
    for i in range(l):
      r = s + 1 + i // 2
      h = (i % 2) * c
      dst_ref[r:r + 1, h:h + c] = chunks[b][i:i + 1, :]


def _block_s1(a_ref, w1_ref, w2_ref, mid_ref, n, l):
  """BasicBlock, stride 1, no downsample: conv3+BN+ReLU -> conv3+BN -> +id -> ReLU."""
  a = a_ref[...]
  ys = _bn(_conv3_s1(a, w1_ref, n, l), n * l)
  _store_padded(mid_ref, [jnp.maximum(y, 0.0) for y in ys], n, l)
  zs = _bn(_conv3_s1(mid_ref[...], w2_ref, n, l), n * l)
  lp = l + 2
  outs = []
  for b in range(n):
    ident = a[b * lp + 1:b * lp + 1 + l, :]
    outs.append(jnp.maximum(zs[b] + ident, 0.0))
  return outs


def _block_s2(pair_ref, w12_ref, w0_ref, wd_ref, w2_ref, mid_ref, n, l_out, c_in):
  """BasicBlock, stride 2, with 1x1-conv+BN downsample, reading the row-pair slab."""
  xp = pair_ref[...]
  ys, ids = _conv3_s2_pair(xp, w12_ref, w0_ref, wd_ref, n, l_out, c_in)
  ys = _bn(ys, n * l_out)
  _store_padded(mid_ref, [jnp.maximum(y, 0.0) for y in ys], n, l_out)
  ids = _bn(ids, n * l_out)
  zs = _bn(_conv3_s1(mid_ref[...], w2_ref, n, l_out), n * l_out)
  return [jnp.maximum(z + i, 0.0) for z, i in zip(zs, ids)]


# ----------------------------------------------------------------------------
# Fused whole-network kernel
# ----------------------------------------------------------------------------
def _make_fused_kernel(n, l_in, c_in):
  l1, l2, l3, l4 = l_in // 2, l_in // 4, l_in // 8, l_in // 16
  c1, c2, c3 = 64, 128, 256

  def kernel(xp_ref, wstem_ref,
             w1a_ref, w2a_ref,
             w12b_ref, w0b_ref, wdb_ref, w2b_ref,
             w12c_ref, w0c_ref, wdc_ref, w2c_ref,
             w12d_ref, w0d_ref, wdd_ref, w2d_ref,
             fcw_ref, fcb_ref,
             o_ref,
             patch_ref, a1_ref, mid1_ref, a2_ref, mid2_ref,
             a3_ref, mid3_ref, a4_ref, mid4_ref, feat_ref):
    # ---- stem: conv7 / stride 2 / pad 3, 7 taps folded into one matmul ----------
    xp = xp_ref[...]                              # (n*l1, 2*c_in): row-pair input
    w = c_in                                      # lane width of one original row
    patch_ref[...] = jnp.zeros(patch_ref.shape, jnp.float32)
    for b in range(n):
      pr = b * l1
      # output row j needs original rows 2j-3 .. 2j+3 == pairs j-2(hi), j-1, j, j+1
      patch_ref[pr + 2:pr + l1, 0:w] = xp[pr:pr + l1 - 2, w:2 * w]
      patch_ref[pr + 1:pr + l1, w:3 * w] = xp[pr:pr + l1 - 1, :]
      patch_ref[pr:pr + l1, 3 * w:5 * w] = xp[pr:pr + l1, :]
      patch_ref[pr:pr + l1 - 1, 5 * w:7 * w] = xp[pr + 1:pr + l1, :]
    y = jnp.dot(patch_ref[...].astype(jnp.bfloat16), wstem_ref[...],
                preferred_element_type=jnp.float32)           # (n*l1, 64)
    ys = _bn([y[b * l1:(b + 1) * l1, :] for b in range(n)], n * l1)
    _store_padded(a1_ref, [jnp.maximum(v, 0.0) for v in ys], n, l1)
    # TODO(synk): self.maxpool is built in __init__ but never called in forward(); skipped.

    # ---- layer1 (64 -> 64, stride 1) --------------------------------------------
    out1 = _block_s1(a1_ref, w1a_ref, w2a_ref, mid1_ref, n, l1)
    _store_pairs(a2_ref, out1, n, l1)
    # ---- layer2 (64 -> 128, stride 2 + downsample) ------------------------------
    out2 = _block_s2(a2_ref, w12b_ref, w0b_ref, wdb_ref, w2b_ref, mid2_ref, n, l2, c1)
    _store_pairs(a3_ref, out2, n, l2)
    # ---- layer3 (128 -> 256, stride 2 + downsample) -----------------------------
    out3 = _block_s2(a3_ref, w12c_ref, w0c_ref, wdc_ref, w2c_ref, mid3_ref, n, l3, c2)
    _store_pairs(a4_ref, out3, n, l3)
    # ---- layer4 (256 -> 512, stride 2 + downsample) -----------------------------
    out4 = _block_s2(a4_ref, w12d_ref, w0d_ref, wdd_ref, w2d_ref, mid4_ref, n, l4, c3)

    # ---- head: AdaptiveAvgPool1d(1) + Linear + L2 normalize (one batched matmul)
    for b in range(n):
      feat_ref[b:b + 1, :] = out4[b].mean(axis=0, keepdims=True)
    logits = jnp.dot(feat_ref[...], fcw_ref[...],
                     preferred_element_type=jnp.float32) + fcb_ref[...]
    ss = jnp.sum(logits * logits, axis=1, keepdims=True)
    o_ref[...] = logits * lax.rsqrt(ss + L2_EPS)

  return kernel


# ----------------------------------------------------------------------------
# Parameters (kernel-ready layouts, conv weights pre-folded and stored in bf16)
# ----------------------------------------------------------------------------
def _kaiming_conv(key, c_out, c_in, k):
  # kaiming_normal_(mode='fan_out', nonlinearity='relu'): std = sqrt(2 / (C_out*K))
  std = (2.0 / (c_out * k)) ** 0.5
  return jax.random.normal(key, (k, c_in, c_out), jnp.float32) * std   # (K, C_in, C_out)


def init_params(key, in_channels=4, num_classes=2):
  ks = iter(jax.random.split(key, 16))
  p = {}
  # Stem: taps folded into the contraction dim -> (7*C_in, 64).
  p["wstem"] = _kaiming_conv(next(ks), 64, in_channels, 7).reshape(
      7 * in_channels, 64).astype(jnp.bfloat16)
  # layer1: stride-1 block, 64 -> 64.
  p["w1a"] = _kaiming_conv(next(ks), 64, 64, 3).astype(jnp.bfloat16)
  p["w2a"] = _kaiming_conv(next(ks), 64, 64, 3).astype(jnp.bfloat16)
  # layer2..4: stride-2 blocks with 1x1 downsample; conv1 taps 1,2 fused -> (2*Cin, Cout).
  for tag, ci, co in (("b", 64, 128), ("c", 128, 256), ("d", 256, 512)):
    w1 = _kaiming_conv(next(ks), co, ci, 3)
    p["w12" + tag] = jnp.concatenate([w1[1], w1[2]], axis=0).astype(jnp.bfloat16)
    p["w0" + tag] = w1[0].astype(jnp.bfloat16)
    p["wd" + tag] = _kaiming_conv(next(ks), co, ci, 1)[0].astype(jnp.bfloat16)
    p["w2" + tag] = _kaiming_conv(next(ks), co, co, 3).astype(jnp.bfloat16)
  bound = 1.0 / (512 ** 0.5)                                   # nn.Linear default init
  p["fc_w"] = jax.random.uniform(next(ks), (512, num_classes), jnp.float32, -bound, bound)
  p["fc_b"] = jax.random.uniform(next(ks), (1, num_classes), jnp.float32, -bound, bound)
  return p


# ----------------------------------------------------------------------------
# Forward: one pallas_call for the whole network
# ----------------------------------------------------------------------------
def resnet_forward(x_ncl, params):
  n, c_in, l = x_ncl.shape
  assert l % 16 == 0, "sequence length must be divisible by 16 (4 stride-2 stages)"
  # Only wrapper glue: PyTorch NCL -> channels-last row-pair layout (n*l/2, 2*c_in).
  xp = jnp.transpose(x_ncl, (0, 2, 1)).astype(jnp.float32).reshape(
      n * (l // 2), 2 * c_in)
  l1, l2, l3, l4 = l // 2, l // 4, l // 8, l // 16
  nc = params["fc_w"].shape[1]

  args = [xp, params["wstem"],
          params["w1a"], params["w2a"],
          params["w12b"], params["w0b"], params["wdb"], params["w2b"],
          params["w12c"], params["w0c"], params["wdc"], params["w2c"],
          params["w12d"], params["w0d"], params["wdd"], params["w2d"],
          params["fc_w"], params["fc_b"]]

  def spec(shape):
    if len(shape) == 2:
      return pl.BlockSpec(shape, lambda i: (0, 0))
    return pl.BlockSpec(shape, lambda i: (0, 0, 0))

  scratch = [
      pltpu.VMEM((n * l1, 7 * c_in), jnp.float32),          # stem im2col patch
      pltpu.VMEM((n * (l1 + 2), 64), jnp.float32),          # a1: padded stem output
      pltpu.VMEM((n * (l1 + 2), 64), jnp.float32),          # mid1
      pltpu.VMEM((n * (l1 // 2 + 1), 2 * 64), jnp.float32),   # a2: pair layout
      pltpu.VMEM((n * (l2 + 2), 128), jnp.float32),         # mid2
      pltpu.VMEM((n * (l2 // 2 + 1), 2 * 128), jnp.float32),  # a3: pair layout
      pltpu.VMEM((n * (l3 + 2), 256), jnp.float32),         # mid3
      pltpu.VMEM((n * (l3 // 2 + 1), 2 * 256), jnp.float32),  # a4: pair layout
      pltpu.VMEM((n * (l4 + 2), 512), jnp.float32),         # mid4
      pltpu.VMEM((n, 512), jnp.float32),                    # pooled features
  ]

  flops = 2 * n * (l1 * 7 * c_in * 64
                   + l1 * (3 * 64 * 64 + 3 * 64 * 64)
                   + l2 * (3 * 64 * 128 + 64 * 128 + 3 * 128 * 128)
                   + l3 * (3 * 128 * 256 + 128 * 256 + 3 * 256 * 256)
                   + l4 * (3 * 256 * 512 + 256 * 512 + 3 * 512 * 512)
                   + 512 * nc)
  bytes_accessed = (xp.size * 4 + n * nc * 4
                    + sum(int(a.size) * a.dtype.itemsize for a in args[1:]))

  return pl.pallas_call(
      _make_fused_kernel(n, l, c_in),
      out_shape=jax.ShapeDtypeStruct((n, nc), jnp.float32),
      grid=(1,),
      in_specs=[spec(a.shape) for a in args],
      out_specs=spec((n, nc)),
      scratch_shapes=scratch,
      compiler_params=pltpu.CompilerParams(dimension_semantics=("arbitrary",)),
      cost_estimate=pl.CostEstimate(flops=int(flops), transcendentals=0,
                                    bytes_accessed=int(bytes_accessed)),
  )(*args)


# ----------------------------------------------------------------------------
if __name__ == "__main__":
  key = jax.random.PRNGKey(0)
  k_x, k_p = jax.random.split(key)
  x = jax.random.normal(k_x, (2, 4, 16), jnp.float32)   # (N=2, C_in=4, L=16), PyTorch NCL
  params = init_params(k_p, in_channels=4, num_classes=2)

  fwd = jax.jit(resnet_forward)
  out = jax.block_until_ready(fwd(x, params))
  assert out.shape == (2, 2) and out.dtype == jnp.float32
  assert bool(jnp.all(jnp.isfinite(out)))
  print("KERNEL_OK")
</pallas_src>

<mosaic_0001>
module attributes {stable_mosaic.version = 11 : i64} {
  func.func @kernel(%arg0: i32, %arg1: memref<16x8xf32, #tpu.memory_space<vmem>>, %arg2: memref<28x64xbf16, #tpu.memory_space<vmem>>, %arg3: memref<3x64x64xbf16, #tpu.memory_space<vmem>>, %arg4: memref<3x64x64xbf16, #tpu.memory_space<vmem>>, %arg5: memref<128x128xbf16, #tpu.memory_space<vmem>>, %arg6: memref<64x128xbf16, #tpu.memory_space<vmem>>, %arg7: memref<64x128xbf16, #tpu.memory_space<vmem>>, %arg8: memref<3x128x128xbf16, #tpu.memory_space<vmem>>, %arg9: memref<256x256xbf16, #tpu.memory_space<vmem>>, %arg10: memref<128x256xbf16, #tpu.memory_space<vmem>>, %arg11: memref<128x256xbf16, #tpu.memory_space<vmem>>, %arg12: memref<3x256x256xbf16, #tpu.memory_space<vmem>>, %arg13: memref<512x512xbf16, #tpu.memory_space<vmem>>, %arg14: memref<256x512xbf16, #tpu.memory_space<vmem>>, %arg15: memref<256x512xbf16, #tpu.memory_space<vmem>>, %arg16: memref<3x512x512xbf16, #tpu.memory_space<vmem>>, %arg17: memref<512x2xf32, #tpu.memory_space<vmem>>, %arg18: memref<1x2xf32, #tpu.memory_space<vmem>>, %arg19: memref<2x2xf32, #tpu.memory_space<vmem>>, %arg20: memref<16x28xf32, #tpu.memory_space<vmem>>, %arg21: memref<20x64xf32, #tpu.memory_space<vmem>>, %arg22: memref<20x64xf32, #tpu.memory_space<vmem>>, %arg23: memref<10x128xf32, #tpu.memory_space<vmem>>, %arg24: memref<12x128xf32, #tpu.memory_space<vmem>>, %arg25: memref<6x256xf32, #tpu.memory_space<vmem>>, %arg26: memref<8x256xf32, #tpu.memory_space<vmem>>, %arg27: memref<4x512xf32, #tpu.memory_space<vmem>>, %arg28: memref<6x512xf32, #tpu.memory_space<vmem>>, %arg29: memref<2x512xf32, #tpu.memory_space<vmem>>) attributes {dimension_semantics = [#tpu.dimension_semantics<arbitrary>], iteration_bounds = array<i64: 1>, scalar_prefetch = 0 : i64, scratch_operands = 10 : i64, tpu.core_type = #tpu.core_type<tc>, window_params = [{pipeline_mode = #tpu.pipeline_mode<synchronous>, transform_indices = @transform_0, window_bounds = array<i64: 16, 8>}, {pipeline_mode = #tpu.pipeline_mode<synchronous>, transform_indices = @transform_1, window_bounds = array<i64: 28, 64>}, {pipeline_mode = #tpu.pipeline_mode<synchronous>, transform_indices = @transform_2, window_bounds = array<i64: 3, 64, 64>}, {pipeline_mode = #tpu.pipeline_mode<synchronous>, transform_indices = @transform_3, window_bounds = array<i64: 3, 64, 64>}, {pipeline_mode = #tpu.pipeline_mode<synchronous>, transform_indices = @transform_4, window_bounds = array<i64: 128, 128>}, {pipeline_mode = #tpu.pipeline_mode<synchronous>, transform_indices = @transform_5, window_bounds = array<i64: 64, 128>}, {pipeline_mode = #tpu.pipeline_mode<synchronous>, transform_indices = @transform_6, window_bounds = array<i64: 64, 128>}, {pipeline_mode = #tpu.pipeline_mode<synchronous>, transform_indices = @transform_7, window_bounds = array<i64: 3, 128, 128>}, {pipeline_mode = #tpu.pipeline_mode<synchronous>, transform_indices = @transform_8, window_bounds = array<i64: 256, 256>}, {pipeline_mode = #tpu.pipeline_mode<synchronous>, transform_indices = @transform_9, window_bounds = array<i64: 128, 256>}, {pipeline_mode = #tpu.pipeline_mode<synchronous>, transform_indices = @transform_10, window_bounds = array<i64: 128, 256>}, {pipeline_mode = #tpu.pipeline_mode<synchronous>, transform_indices = @transform_11, window_bounds = array<i64: 3, 256, 256>}, {pipeline_mode = #tpu.pipeline_mode<synchronous>, transform_indices = @transform_12, window_bounds = array<i64: 512, 512>}, {pipeline_mode = #tpu.pipeline_mode<synchronous>, transform_indices = @transform_13, window_bounds = array<i64: 256, 512>}, {pipeline_mode = #tpu.pipeline_mode<synchronous>, transform_indices = @transform_14, window_bounds = array<i64: 256, 512>}, {pipeline_mode = #tpu.pipeline_mode<synchronous>, transform_indices = @transform_15, window_bounds = array<i64: 3, 512, 512>}, {pipeline_mode = #tpu.pipeline_mode<synchronous>, transform_indices = @transform_16, window_bounds = array<i64: 512, 2>}, {pipeline_mode = #tpu.pipeline_mode<synchronous>, transform_indices = @transform_17, window_bounds = array<i64: 1, 2>}, {pipeline_mode = #tpu.pipeline_mode<synchronous>, transform_indices = @transform_18, window_bounds = array<i64: 2, 2>}]} {
    %c0 = arith.constant 0 : index
    %c0_0 = arith.constant 0 : index
    %0 = vector.load %arg1[%c0, %c0_0] : memref<16x8xf32, #tpu.memory_space<vmem>>, vector<16x8xf32>
    %cst = arith.constant 0.000000e+00 : f32
    %1 = vector.broadcast %cst : f32 to vector<16x28xf32>
    %c0_1 = arith.constant 0 : index
    %c0_2 = arith.constant 0 : index
    %2 = vector.load %arg20[%c0_1, %c0_2] : memref<16x28xf32, #tpu.memory_space<vmem>>, vector<16x28xf32>
    tpu.vector_store %arg20[%c0_1, %c0_2], %1 {strides = array<i32>} : memref<16x28xf32, #tpu.memory_space<vmem>>, vector<16x28xf32>,
    %3 = vector.extract_strided_slice %0 {offsets = [0, 4], sizes = [6, 4], strides = [1, 1]} : vector<16x8xf32> to vector<6x4xf32>
    %c2 = arith.constant 2 : index
    %c0_3 = arith.constant 0 : index
    %4 = vector.load %arg20[%c2, %c0_3] : memref<16x28xf32, #tpu.memory_space<vmem>>, vector<6x4xf32>
    tpu.vector_store %arg20[%c2, %c0_3], %3 {strides = array<i32>} : memref<16x28xf32, #tpu.memory_space<vmem>>, vector<6x4xf32>,
    %5 = vector.extract_strided_slice %0 {offsets = [0, 0], sizes = [7, 8], strides = [1, 1]} : vector<16x8xf32> to vector<7x8xf32>
    %c1 = arith.constant 1 : index
    %c4 = arith.constant 4 : index
    %6 = vector.load %arg20[%c1, %c4] : memref<16x28xf32, #tpu.memory_space<vmem>>, vector<7x8xf32>
    tpu.vector_store %arg20[%c1, %c4], %5 {strides = array<i32>} : memref<16x28xf32, #tpu.memory_space<vmem>>, vector<7x8xf32>,
    %7 = vector.extract_strided_slice %0 {offsets = [0, 0], sizes = [8, 8], strides = [1, 1]} : vector<16x8xf32> to vector<8x8xf32>
    %c0_4 = arith.constant 0 : index
    %c12 = arith.constant 12 : index
    %8 = vector.load %arg20[%c0_4, %c12] : memref<16x28xf32, #tpu.memory_space<vmem>>, vector<8x8xf32>
    tpu.vector_store %arg20[%c0_4, %c12], %7 {strides = array<i32>} : memref<16x28xf32, #tpu.memory_space<vmem>>, vector<8x8xf32>,
    %9 = vector.extract_strided_slice %0 {offsets = [1, 0], sizes = [7, 8], strides = [1, 1]} : vector<16x8xf32> to vector<7x8xf32>
    %c0_5 = arith.constant 0 : index
    %c20 = arith.constant 20 : index
    %10 = vector.load %arg20[%c0_5, %c20] : memref<16x28xf32, #tpu.memory_space<vmem>>, vector<7x8xf32>
    tpu.vector_store %arg20[%c0_5, %c20], %9 {strides = array<i32>} : memref<16x28xf32, #tpu.memory_space<vmem>>, vector<7x8xf32>,
    %11 = vector.extract_strided_slice %0 {offsets = [8, 4], sizes = [6, 4], strides = [1, 1]} : vector<16x8xf32> to vector<6x4xf32>
    %c10 = arith.constant 10 : index
    %c0_6 = arith.constant 0 : index
    %12 = vector.load %arg20[%c10, %c0_6] : memref<16x28xf32, #tpu.memory_space<vmem>>, vector<6x4xf32>
    tpu.vector_store %arg20[%c10, %c0_6], %11 {strides = array<i32>} : memref<16x28xf32, #tpu.memory_space<vmem>>, vector<6x4xf32>,
    %13 = vector.extract_strided_slice %0 {offsets = [8, 0], sizes = [7, 8], strides = [1, 1]} : vector<16x8xf32> to vector<7x8xf32>
    %c9 = arith.constant 9 : index
    %c4_7 = arith.constant 4 : index
    %14 = vector.load %arg20[%c9, %c4_7] : memref<16x28xf32, #tpu.memory_space<vmem>>, vector<7x8xf32>
    tpu.vector_store %arg20[%c9, %c4_7], %13 {strides = array<i32>} : memref<16x28xf32, #tpu.memory_space<vmem>>, vector<7x8xf32>,
    %15 = vector.extract_strided_slice %0 {offsets = [8, 0], sizes = [8, 8], strides = [1, 1]} : vector<16x8xf32> to vector<8x8xf32>
    %c8 = arith.constant 8 : index
    %c12_8 = arith.constant 12 : index
    %16 = vector.load %arg20[%c8, %c12_8] : memref<16x28xf32, #tpu.memory_space<vmem>>, vector<8x8xf32>
    tpu.vector_store %arg20[%c8, %c12_8], %15 {strides = array<i32>} : memref<16x28xf32, #tpu.memory_space<vmem>>, vector<8x8xf32>,
    %17 = vector.extract_strided_slice %0 {offsets = [9, 0], sizes = [7, 8], strides = [1, 1]} : vector<16x8xf32> to vector<7x8xf32>
    %c8_9 = arith.constant 8 : index
    %c20_10 = arith.constant 20 : index
    %18 = vector.load %arg20[%c8_9, %c20_10] : memref<16x28xf32, #tpu.memory_space<vmem>>, vector<7x8xf32>
    tpu.vector_store %arg20[%c8_9, %c20_10], %17 {strides = array<i32>} : memref<16x28xf32, #tpu.memory_space<vmem>>, vector<7x8xf32>,
    %c0_11 = arith.constant 0 : index
    %c0_12 = arith.constant 0 : index
    %19 = vector.load %arg20[%c0_11, %c0_12] : memref<16x28xf32, #tpu.memory_space<vmem>>, vector<16x28xf32>
    %20 = arith.truncf %19 : vector<16x28xf32> to vector<16x28xbf16>
    %c0_13 = arith.constant 0 : index
    %c0_14 = arith.constant 0 : index
    %21 = vector.load %arg2[%c0_13, %c0_14] : memref<28x64xbf16, #tpu.memory_space<vmem>>, vector<28x64xbf16>
    %cst_15 = arith.constant dense<0.000000e+00> : vector<16x64xf32>
    %22 = tpu.matmul %20, %21, %cst_15 {dimension_numbers = #tpu.dot_dimension_numbers<[1], [0], [0], [1], [0, 0, 1, 1], [], []>} : vector<16x28xbf16>, vector<28x64xbf16>, vector<16x64xf32> -> vector<16x64xf32>
    %23 = vector.extract_strided_slice %22 {offsets = [0, 0], sizes = [8, 64], strides = [1, 1]} : vector<16x64xf32> to vector<8x64xf32>
    %24 = vector.extract_strided_slice %22 {offsets = [8, 0], sizes = [8, 64], strides = [1, 1]} : vector<16x64xf32> to vector<8x64xf32>
    %cst_16 = arith.constant dense<0.000000e+00> : vector<64xf32>
    %25 = vector.multi_reduction <add>, %23, %cst_16 [0] : vector<8x64xf32> to vector<64xf32>
    %26 = vector.shape_cast %25 : vector<64xf32> to vector<1x64xf32>
    %27 = arith.mulf %23, %23 : vector<8x64xf32>
    %cst_17 = arith.constant dense<0.000000e+00> : vector<64xf32>
    %28 = vector.multi_reduction <add>, %27, %cst_17 [0] : vector<8x64xf32> to vector<64xf32>
    %29 = vector.shape_cast %28 : vector<64xf32> to vector<1x64xf32>
    %cst_18 = arith.constant dense<0.000000e+00> : vector<64xf32>
    %30 = vector.multi_reduction <add>, %24, %cst_18 [0] : vector<8x64xf32> to vector<64xf32>
    %31 = vector.shape_cast %30 : vector<64xf32> to vector<1x64xf32>
    %32 = arith.addf %26, %31 : vector<1x64xf32>
    %33 = arith.mulf %24, %24 : vector<8x64xf32>
    %cst_19 = arith.constant dense<0.000000e+00> : vector<64xf32>
    %34 = vector.multi_reduction <add>, %33, %cst_19 [0] : vector<8x64xf32> to vector<64xf32>
    %35 = vector.shape_cast %34 : vector<64xf32> to vector<1x64xf32>
    %36 = arith.addf %29, %35 : vector<1x64xf32>
    %cst_20 = arith.constant 1.600000e+01 : f32
    %37 = vector.broadcast %cst_20 : f32 to vector<1x64xf32>
    %38 = arith.divf %32, %37 : vector<1x64xf32>
    %cst_21 = arith.constant 1.600000e+01 : f32
    %39 = vector.broadcast %cst_21 : f32 to vector<1x64xf32>
    %40 = arith.divf %36, %39 : vector<1x64xf32>
    %41 = arith.mulf %38, %38 : vector<1x64xf32>
    %42 = arith.subf %40, %41 : vector<1x64xf32>
    %cst_22 = arith.constant 0.000000e+00 : f32
    %43 = vector.broadcast %cst_22 : f32 to vector<1x64xf32>
    %44 = arith.maximumf %42, %43 : vector<1x64xf32>
    %cst_23 = arith.constant 9.99999974E-6 : f32
    %45 = vector.broadcast %cst_23 : f32 to vector<1x64xf32>
    %46 = arith.addf %44, %45 : vector<1x64xf32>
    %47 = math.rsqrt %46 : vector<1x64xf32>
    %48 = vector.broadcast %38 : vector<1x64xf32> to vector<8x64xf32>
    %49 = arith.subf %23, %48 : vector<8x64xf32>
    %50 = vector.broadcast %47 : vector<1x64xf32> to vector<8x64xf32>
    %51 = arith.mulf %49, %50 : vector<8x64xf32>
    %52 = vector.broadcast %38 : vector<1x64xf32> to vector<8x64xf32>
    %53 = arith.subf %24, %52 : vector<8x64xf32>
    %54 = vector.broadcast %47 : vector<1x64xf32> to vector<8x64xf32>
    %55 = arith.mulf %53, %54 : vector<8x64xf32>
    %cst_24 = arith.constant 0.000000e+00 : f32
    %56 = vector.broadcast %cst_24 : f32 to vector<8x64xf32>
    %57 = arith.maximumf %51, %56 : vector<8x64xf32>
    %cst_25 = arith.constant 0.000000e+00 : f32
    %58 = vector.broadcast %cst_25 : f32 to vector<8x64xf32>
    %59 = arith.maximumf %55, %58 : vector<8x64xf32>
    %cst_26 = arith.constant 0.000000e+00 : f32
    %60 = vector.broadcast %cst_26 : f32 to vector<1x64xf32>
    %c0_27 = arith.constant 0 : index
    %c0_28 = arith.constant 0 : index
    %61 = vector.load %arg21[%c0_27, %c0_28] : memref<20x64xf32, #tpu.memory_space<vmem>>, vector<1x64xf32>
    tpu.vector_store %arg21[%c0_27, %c0_28], %60 {strides = array<i32>} : memref<20x64xf32, #tpu.memory_space<vmem>>, vector<1x64xf32>,
    %c1_29 = arith.constant 1 : index
    %c0_30 = arith.constant 0 : index
    %62 = vector.load %arg21[%c1_29, %c0_30] : memref<20x64xf32, #tpu.memory_space<vmem>>, vector<8x64xf32>
    tpu.vector_store %arg21[%c1_29, %c0_30], %57 {strides = array<i32>} : memref<20x64xf32, #tpu.memory_space<vmem>>, vector<8x64xf32>,
    %c9_31 = arith.constant 9 : index
    %c0_32 = arith.constant 0 : index
    %63 = vector.load %arg21[%c9_31, %c0_32] : memref<20x64xf32, #tpu.memory_space<vmem>>, vector<1x64xf32>
    tpu.vector_store %arg21[%c9_31, %c0_32], %60 {strides = array<i32>} : memref<20x64xf32, #tpu.memory_space<vmem>>, vector<1x64xf32>,
    %c10_33 = arith.constant 10 : index
    %c0_34 = arith.constant 0 : index
    %64 = vector.load %arg21[%c10_33, %c0_34] : memref<20x64xf32, #tpu.memory_space<vmem>>, vector<1x64xf32>
    tpu.vector_store %arg21[%c10_33, %c0_34], %60 {strides = array<i32>} : memref<20x64xf32, #tpu.memory_space<vmem>>, vector<1x64xf32>,
    %c11 = arith.constant 11 : index
    %c0_35 = arith.constant 0 : index
    %65 = vector.load %arg21[%c11, %c0_35] : memref<20x64xf32, #tpu.memory_space<vmem>>, vector<8x64xf32>
    tpu.vector_store %arg21[%c11, %c0_35], %59 {strides = array<i32>} : memref<20x64xf32, #tpu.memory_space<vmem>>, vector<8x64xf32>,
    %c19 = arith.constant 19 : index
    %c0_36 = arith.constant 0 : index
    %66 = vector.load %arg21[%c19, %c0_36] : memref<20x64xf32, #tpu.memory_space<vmem>>, vector<1x64xf32>
    tpu.vector_store %arg21[%c19, %c0_36], %60 {strides = array<i32>} : memref<20x64xf32, #tpu.memory_space<vmem>>, vector<1x64xf32>,
    %c0_37 = arith.constant 0 : index
    %c0_38 = arith.constant 0 : index
    %67 = vector.load %arg21[%c0_37, %c0_38] : memref<20x64xf32, #tpu.memory_space<vmem>>, vector<20x64xf32>
    %68 = arith.truncf %67 : vector<20x64xf32> to vector<20x64xbf16>
    %c0_39 = arith.constant 0 : index
    %c0_40 = arith.constant 0 : index
    %c0_41 = arith.constant 0 : index
    %69 = vector.load %arg3[%c0_39, %c0_40, %c0_41] : memref<3x64x64xbf16, #tpu.memory_space<vmem>>, vector<1x64x64xbf16>
    %70 = vector.shape_cast %69 : vector<1x64x64xbf16> to vector<64x64xbf16>
    %cst_42 = arith.constant dense<0.000000e+00> : vector<20x64xf32>
    %71 = tpu.matmul %68, %70, %cst_42 {dimension_numbers = #tpu.dot_dimension_numbers<[1], [0], [0], [1], [0, 0, 1, 1], [], []>} : vector<20x64xbf16>, vector<64x64xbf16>, vector<20x64xf32> -> vector<20x64xf32>
    %c1_43 = arith.constant 1 : index
    %c0_44 = arith.constant 0 : index
    %c0_45 = arith.constant 0 : index
    %72 = vector.load %arg3[%c1_43, %c0_44, %c0_45] : memref<3x64x64xbf16, #tpu.memory_space<vmem>>, vector<1x64x64xbf16>
    %73 = vector.shape_cast %72 : vector<1x64x64xbf16> to vector<64x64xbf16>
    %cst_46 = arith.constant dense<0.000000e+00> : vector<20x64xf32>
    %74 = tpu.matmul %68, %73, %cst_46 {dimension_numbers = #tpu.dot_dimension_numbers<[1], [0], [0], [1], [0, 0, 1, 1], [], []>} : vector<20x64xbf16>, vector<64x64xbf16>, vector<20x64xf32> -> vector<20x64xf32>
    %c2_47 = arith.constant 2 : index
    %c0_48 = arith.constant 0 : index
    %c0_49 = arith.constant 0 : index
    %75 = vector.load %arg3[%c2_47, %c0_48, %c0_49] : memref<3x64x64xbf16, #tpu.memory_space<vmem>>, vector<1x64x64xbf16>
    %76 = vector.shape_cast %75 : vector<1x64x64xbf16> to vector<64x64xbf16>
    %cst_50 = arith.constant dense<0.000000e+00> : vector<20x64xf32>
    %77 = tpu.matmul %68, %76, %cst_50 {dimension_numbers = #tpu.dot_dimension_numbers<[1], [0], [0], [1], [0, 0, 1, 1], [], []>} : vector<20x64xbf16>, vector<64x64xbf16>, vector<20x64xf32> -> vector<20x64xf32>
    %78 = vector.extract_strided_slice %71 {offsets = [0, 0], sizes = [8, 64], strides = [1, 1]} : vector<20x64xf32> to vector<8x64xf32>
    %79 = vector.extract_strided_slice %74 {offsets = [1, 0], sizes = [8, 64], strides = [1, 1]} : vector<20x64xf32> to vector<8x64xf32>
    %80 = arith.addf %78, %79 : vector<8x64xf32>
    %81 = vector.extract_strided_slice %77 {offsets = [2, 0], sizes = [8, 64], strides = [1, 1]} : vector<20x64xf32> to vector<8x64xf32>
    %82 = arith.addf %80, %81 : vector<8x64xf32>
    %83 = vector.extract_strided_slice %71 {offsets = [10, 0], sizes = [8, 64], strides = [1, 1]} : vector<20x64xf32> to vector<8x64xf32>
    %84 = vector.extract_strided_slice %74 {offsets = [11, 0], sizes = [8, 64], strides = [1, 1]} : vector<20x64xf32> to vector<8x64xf32>
    %85 = arith.addf %83, %84 : vector<8x64xf32>
    %86 = vector.extract_strided_slice %77 {offsets = [12, 0], sizes = [8, 64], strides = [1, 1]} : vector<20x64xf32> to vector<8x64xf32>
    %87 = arith.addf %85, %86 : vector<8x64xf32>
    %cst_51 = arith.constant dense<0.000000e+00> : vector<64xf32>
    %88 = vector.multi_reduction <add>, %82, %cst_51 [0] : vector<8x64xf32> to vector<64xf32>
    %89 = vector.shape_cast %88 : vector<64xf32> to vector<1x64xf32>
    %90 = arith.mulf %82, %82 : vector<8x64xf32>
    %cst_52 = arith.constant dense<0.000000e+00> : vector<64xf32>
    %91 = vector.multi_reduction <add>, %90, %cst_52 [0] : vector<8x64xf32> to vector<64xf32>
    %92 = vector.shape_cast %91 : vector<64xf32> to vector<1x64xf32>
    %cst_53 = arith.constant dense<0.000000e+00> : vector<64xf32>
    %93 = vector.multi_reduction <add>, %87, %cst_53 [0] : vector<8x64xf32> to vector<64xf32>
    %94 = vector.shape_cast %93 : vector<64xf32> to vector<1x64xf32>
    %95 = arith.addf %89, %94 : vector<1x64xf32>
    %96 = arith.mulf %87, %87 : vector<8x64xf32>
    %cst_54 = arith.constant dense<0.000000e+00> : vector<64xf32>
    %97 = vector.multi_reduction <add>, %96, %cst_54 [0] : vector<8x64xf32> to vector<64xf32>
    %98 = vector.shape_cast %97 : vector<64xf32> to vector<1x64xf32>
    %99 = arith.addf %92, %98 : vector<1x64xf32>
    %cst_55 = arith.constant 1.600000e+01 : f32
    %100 = vector.broadcast %cst_55 : f32 to vector<1x64xf32>
    %101 = arith.divf %95, %100 : vector<1x64xf32>
    %cst_56 = arith.constant 1.600000e+01 : f32
    %102 = vector.broadcast %cst_56 : f32 to vector<1x64xf32>
    %103 = arith.divf %99, %102 : vector<1x64xf32>
    %104 = arith.mulf %101, %101 : vector<1x64xf32>
    %105 = arith.subf %103, %104 : vector<1x64xf32>
    %cst_57 = arith.constant 0.000000e+00 : f32
    %106 = vector.broadcast %cst_57 : f32 to vector<1x64xf32>
    %107 = arith.maximumf %105, %106 : vector<1x64xf32>
    %cst_58 = arith.constant 9.99999974E-6 : f32
    %108 = vector.broadcast %cst_58 : f32 to vector<1x64xf32>
    %109 = arith.addf %107, %108 : vector<1x64xf32>
    %110 = math.rsqrt %109 : vector<1x64xf32>
    %111 = vector.broadcast %101 : vector<1x64xf32> to vector<8x64xf32>
    %112 = arith.subf %82, %111 : vector<8x64xf32>
    %113 = vector.broadcast %110 : vector<1x64xf32> to vector<8x64xf32>
    %114 = arith.mulf %112, %113 : vector<8x64xf32>
    %115 = vector.broadcast %101 : vector<1x64xf32> to vector<8x64xf32>
    %116 = arith.subf %87, %115 : vector<8x64xf32>
    %117 = vector.broadcast %110 : vector<1x64xf32> to vector<8x64xf32>
    %118 = arith.mulf %116, %117 : vector<8x64xf32>
    %cst_59 = arith.constant 0.000000e+00 : f32
    %119 = vector.broadcast %cst_59 : f32 to vector<8x64xf32>
    %120 = arith.maximumf %114, %119 : vector<8x64xf32>
    %cst_60 = arith.constant 0.000000e+00 : f32
    %121 = vector.broadcast %cst_60 : f32 to vector<8x64xf32>
    %122 = arith.maximumf %118, %121 : vector<8x64xf32>
    %cst_61 = arith.constant 0.000000e+00 : f32
    %123 = vector.broadcast %cst_61 : f32 to vector<1x64xf32>
    %c0_62 = arith.constant 0 : index
    %c0_63 = arith.constant 0 : index
    %124 = vector.load %arg22[%c0_62, %c0_63] : memref<20x64xf32, #tpu.memory_space<vmem>>, vector<1x64xf32>
    tpu.vector_store %arg22[%c0_62, %c0_63], %123 {strides = array<i32>} : memref<20x64xf32, #tpu.memory_space<vmem>>, vector<1x64xf32>,
    %c1_64 = arith.constant 1 : index
    %c0_65 = arith.constant 0 : index
    %125 = vector.load %arg22[%c1_64, %c0_65] : memref<20x64xf32, #tpu.memory_space<vmem>>, vector<8x64xf32>
    tpu.vector_store %arg22[%c1_64, %c0_65], %120 {strides = array<i32>} : memref<20x64xf32, #tpu.memory_space<vmem>>, vector<8x64xf32>,
    %c9_66 = arith.constant 9 : index
    %c0_67 = arith.constant 0 : index
    %126 = vector.load %arg22[%c9_66, %c0_67] : memref<20x64xf32, #tpu.memory_space<vmem>>, vector<1x64xf32>
    tpu.vector_store %arg22[%c9_66, %c0_67], %123 {strides = array<i32>} : memref<20x64xf32, #tpu.memory_space<vmem>>, vector<1x64xf32>,
    %c10_68 = arith.constant 10 : index
    %c0_69 = arith.constant 0 : index
    %127 = vector.load %arg22[%c10_68, %c0_69] : memref<20x64xf32, #tpu.memory_space<vmem>>, vector<1x64xf32>
    tpu.vector_store %arg22[%c10_68, %c0_69], %123 {strides = array<i32>} : memref<20x64xf32, #tpu.memory_space<vmem>>, vector<1x64xf32>,
    %c11_70 = arith.constant 11 : index
    %c0_71 = arith.constant 0 : index
    %128 = vector.load %arg22[%c11_70, %c0_71] : memref<20x64xf32, #tpu.memory_space<vmem>>, vector<8x64xf32>
    tpu.vector_store %arg22[%c11_70, %c0_71], %122 {strides = array<i32>} : memref<20x64xf32, #tpu.memory_space<vmem>>, vector<8x64xf32>,
    %c19_72 = arith.constant 19 : index
    %c0_73 = arith.constant 0 : index
    %129 = vector.load %arg22[%c19_72, %c0_73] : memref<20x64xf32, #tpu.memory_space<vmem>>, vector<1x64xf32>
    tpu.vector_store %arg22[%c19_72, %c0_73], %123 {strides = array<i32>} : memref<20x64xf32, #tpu.memory_space<vmem>>, vector<1x64xf32>,
    %c0_74 = arith.constant 0 : index
    %c0_75 = arith.constant 0 : index
    %130 = vector.load %arg22[%c0_74, %c0_75] : memref<20x64xf32, #tpu.memory_space<vmem>>, vector<20x64xf32>
    %131 = arith.truncf %130 : vector<20x64xf32> to vector<20x64xbf16>
    %c0_76 = arith.constant 0 : index
    %c0_77 = arith.constant 0 : index
    %c0_78 = arith.constant 0 : index
    %132 = vector.load %arg4[%c0_76, %c0_77, %c0_78] : memref<3x64x64xbf16, #tpu.memory_space<vmem>>, vector<1x64x64xbf16>
    %133 = vector.shape_cast %132 : vector<1x64x64xbf16> to vector<64x64xbf16>
    %cst_79 = arith.constant dense<0.000000e+00> : vector<20x64xf32>
    %134 = tpu.matmul %131, %133, %cst_79 {dimension_numbers = #tpu.dot_dimension_numbers<[1], [0], [0], [1], [0, 0, 1, 1], [], []>} : vector<20x64xbf16>, vector<64x64xbf16>, vector<20x64xf32> -> vector<20x64xf32>
    %c1_80 = arith.constant 1 : index
    %c0_81 = arith.constant 0 : index
    %c0_82 = arith.constant 0 : index
    %135 = vector.load %arg4[%c1_80, %c0_81, %c0_82] : memref<3x64x64xbf16, #tpu.memory_space<vmem>>, vector<1x64x64xbf16>
    %136 = vector.shape_cast %135 : vector<1x64x64xbf16> to vector<64x64xbf16>
    %cst_83 = arith.constant dense<0.000000e+00> : vector<20x64xf32>
    %137 = tpu.matmul %131, %136, %cst_83 {dimension_numbers = #tpu.dot_dimension_numbers<[1], [0], [0], [1], [0, 0, 1, 1], [], []>} : vector<20x64xbf16>, vector<64x64xbf16>, vector<20x64xf32> -> vector<20x64xf32>
    %c2_84 = arith.constant 2 : index
    %c0_85 = arith.constant 0 : index
    %c0_86 = arith.constant 0 : index
    %138 = vector.load %arg4[%c2_84, %c0_85, %c0_86] : memref<3x64x64xbf16, #tpu.memory_space<vmem>>, vector<1x64x64xbf16>
    %139 = vector.shape_cast %138 : vector<1x64x64xbf16> to vector<64x64xbf16>
    %cst_87 = arith.constant dense<0.000000e+00> : vector<20x64xf32>
    %140 = tpu.matmul %131, %139, %cst_87 {dimension_numbers = #tpu.dot_dimension_numbers<[1], [0], [0], [1], [0, 0, 1, 1], [], []>} : vector<20x64xbf16>, vector<64x64xbf16>, vector<20x64xf32> -> vector<20x64xf32>
    %141 = vector.extract_strided_slice %134 {offsets = [0, 0], sizes = [8, 64], strides = [1, 1]} : vector<20x64xf32> to vector<8x64xf32>
    %142 = vector.extract_strided_slice %137 {offsets = [1, 0], sizes = [8, 64], strides = [1, 1]} : vector<20x64xf32> to vector<8x64xf32>
    %143 = arith.addf %141, %142 : vector<8x64xf32>
    %144 = vector.extract_strided_slice %140 {offsets = [2, 0], sizes = [8, 64], strides = [1, 1]} : vector<20x64xf32> to vector<8x64xf32>
    %145 = arith.addf %143, %144 : vector<8x64xf32>
    %146 = vector.extract_strided_slice %134 {offsets = [10, 0], sizes = [8, 64], strides = [1, 1]} : vector<20x64xf32> to vector<8x64xf32>
    %147 = vector.extract_strided_slice %137 {offsets = [11, 0], sizes = [8, 64], strides = [1, 1]} : vector<20x64xf32> to vector<8x64xf32>
    %148 = arith.addf %146, %147 : vector<8x64xf32>
    %149 = vector.extract_strided_slice %140 {offsets = [12, 0], sizes = [8, 64], strides = [1, 1]} : vector<20x64xf32> to vector<8x64xf32>
    %150 = arith.addf %148, %149 : vector<8x64xf32>
    %cst_88 = arith.constant dense<0.000000e+00> : vector<64xf32>
    %151 = vector.multi_reduction <add>, %145, %cst_88 [0] : vector<8x64xf32> to vector<64xf32>
    %152 = vector.shape_cast %151 : vector<64xf32> to vector<1x64xf32>
    %153 = arith.mulf %145, %145 : vector<8x64xf32>
    %cst_89 = arith.constant dense<0.000000e+00> : vector<64xf32>
    %154 = vector.multi_reduction <add>, %153, %cst_89 [0] : vector<8x64xf32> to vector<64xf32>
    %155 = vector.shape_cast %154 : vector<64xf32> to vector<1x64xf32>
    %cst_90 = arith.constant dense<0.000000e+00> : vector<64xf32>
    %156 = vector.multi_reduction <add>, %150, %cst_90 [0] : vector<8x64xf32> to vector<64xf32>
    %157 = vector.shape_cast %156 : vector<64xf32> to vector<1x64xf32>
    %158 = arith.addf %152, %157 : vector<1x64xf32>
    %159 = arith.mulf %150, %150 : vector<8x64xf32>
    %cst_91 = arith.constant dense<0.000000e+00> : vector<64xf32>
    %160 = vector.multi_reduction <add>, %159, %cst_91 [0] : vector<8x64xf32> to vector<64xf32>
    %161 = vector.shape_cast %160 : vector<64xf32> to vector<1x64xf32>
    %162 = arith.addf %155, %161 : vector<1x64xf32>
    %cst_92 = arith.constant 1.600000e+01 : f32
    %163 = vector.broadcast %cst_92 : f32 to vector<1x64xf32>
    %164 = arith.divf %158, %163 : vector<1x64xf32>
    %cst_93 = arith.constant 1.600000e+01 : f32
    %165 = vector.broadcast %cst_93 : f32 to vector<1x64xf32>
    %166 = arith.divf %162, %165 : vector<1x64xf32>
    %167 = arith.mulf %164, %164 : vector<1x64xf32>
    %168 = arith.subf %166, %167 : vector<1x64xf32>
    %cst_94 = arith.constant 0.000000e+00 : f32
    %169 = vector.broadcast %cst_94 : f32 to vector<1x64xf32>
    %170 = arith.maximumf %168, %169 : vector<1x64xf32>
    %cst_95 = arith.constant 9.99999974E-6 : f32
    %171 = vector.broadcast %cst_95 : f32 to vector<1x64xf32>
    %172 = arith.addf %170, %171 : vector<1x64xf32>
    %173 = math.rsqrt %172 : vector<1x64xf32>
    %174 = vector.broadcast %164 : vector<1x64xf32> to vector<8x64xf32>
    %175 = arith.subf %145, %174 : vector<8x64xf32>
    %176 = vector.broadcast %173 : vector<1x64xf32> to vector<8x64xf32>
    %177 = arith.mulf %175, %176 : vector<8x64xf32>
    %178 = vector.broadcast %164 : vector<1x64xf32> to vector<8x64xf32>
    %179 = arith.subf %150, %178 : vector<8x64xf32>
    %180 = vector.broadcast %173 : vector<1x64xf32> to vector<8x64xf32>
    %181 = arith.mulf %179, %180 : vector<8x64xf32>
    %182 = vector.extract_strided_slice %67 {offsets = [1, 0], sizes = [8, 64], strides = [1, 1]} : vector<20x64xf32> to vector<8x64xf32>
    %183 = arith.addf %177, %182 : vector<8x64xf32>
    %cst_96 = arith.constant 0.000000e+00 : f32
    %184 = vector.broadcast %cst_96 : f32 to vector<8x64xf32>
    %185 = arith.maximumf %183, %184 : vector<8x64xf32>
    %186 = vector.extract_strided_slice %67 {offsets = [11, 0], sizes = [8, 64], strides = [1, 1]} : vector<20x64xf32> to vector<8x64xf32>
    %187 = arith.addf %181, %186 : vector<8x64xf32>
    %cst_97 = arith.constant 0.000000e+00 : f32
    %188 = vector.broadcast %cst_97 : f32 to vector<8x64xf32>
    %189 = arith.maximumf %187, %188 : vector<8x64xf32>
    %cst_98 = arith.constant 0.000000e+00 : f32
    %190 = vector.broadcast %cst_98 : f32 to vector<1x128xf32>
    %c0_99 = arith.constant 0 : index
    %c0_100 = arith.constant 0 : index
    %191 = vector.load %arg23[%c0_99, %c0_100] : memref<10x128xf32, #tpu.memory_space<vmem>>, vector<1x128xf32>
    tpu.vector_store %arg23[%c0_99, %c0_100], %190 {strides = array<i32>} : memref<10x128xf32, #tpu.memory_space<vmem>>, vector<1x128xf32>,
    %192 = vector.extract_strided_slice %185 {offsets = [0, 0], sizes = [1, 64], strides = [1, 1]} : vector<8x64xf32> to vector<1x64xf32>
    %c1_101 = arith.constant 1 : index
    %c0_102 = arith.constant 0 : index
    %193 = vector.load %arg23[%c1_101, %c0_102] : memref<10x128xf32, #tpu.memory_space<vmem>>, vector<1x64xf32>
    tpu.vector_store %arg23[%c1_101, %c0_102], %192 {strides = array<i32>} : memref<10x128xf32, #tpu.memory_space<vmem>>, vector<1x64xf32>,
    %194 = vector.extract_strided_slice %185 {offsets = [1, 0], sizes = [1, 64], strides = [1, 1]} : vector<8x64xf32> to vector<1x64xf32>
    %c1_103 = arith.constant 1 : index
    %c64 = arith.constant 64 : index
    %195 = vector.load %arg23[%c1_103, %c64] : memref<10x128xf32, #tpu.memory_space<vmem>>, vector<1x64xf32>
    tpu.vector_store %arg23[%c1_103, %c64], %194 {strides = array<i32>} : memref<10x128xf32, #tpu.memory_space<vmem>>, vector<1x64xf32>,
    %196 = vector.extract_strided_slice %185 {offsets = [2, 0], sizes = [1, 64], strides = [1, 1]} : vector<8x64xf32> to vector<1x64xf32>
    %c2_104 = arith.constant 2 : index
    %c0_105 = arith.constant 0 : index
    %197 = vector.load %arg23[%c2_104, %c0_105] : memref<10x128xf32, #tpu.memory_space<vmem>>, vector<1x64xf32>
    tpu.vector_store %arg23[%c2_104, %c0_105], %196 {strides = array<i32>} : memref<10x128xf32, #tpu.memory_space<vmem>>, vector<1x64xf32>,
    %198 = vector.extract_strided_slice %185 {offsets = [3, 0], sizes = [1, 64], strides = [1, 1]} : vector<8x64xf32> to vector<1x64xf32>
    %c2_106 = arith.constant 2 : index
    %c64_107 = arith.constant 64 : index
    %199 = vector.load %arg23[%c2_106, %c64_107] : memref<10x128xf32, #tpu.memory_space<vmem>>, vector<1x64xf32>
    tpu.vector_store %arg23[%c2_106, %c64_107], %198 {strides = array<i32>} : memref<10x128xf32, #tpu.memory_space<vmem>>, vector<1x64xf32>,
    %200 = vector.extract_strided_slice %185 {offsets = [4, 0], sizes = [1, 64], strides = [1, 1]} : vector<8x64xf32> to vector<1x64xf32>
    %c3 = arith.constant 3 : index
    %c0_108 = arith.constant 0 : index
    %201 = vector.load %arg23[%c3, %c0_108] : memref<10x128xf32, #tpu.memory_space<vmem>>, vector<1x64xf32>
    tpu.vector_store %arg23[%c3, %c0_108], %200 {strides = array<i32>} : memref<10x128xf32, #tpu.memory_space<vmem>>, vector<1x64xf32>,
    %202 = vector.extract_strided_slice %185 {offsets = [5, 0], sizes = [1, 64], strides = [1, 1]} : vector<8x64xf32> to vector<1x64xf32>
    %c3_109 = arith.constant 3 : index
    %c64_110 = arith.constant 64 : index
    %203 = vector.load %arg23[%c3_109, %c64_110] : memref<10x128xf32, #tpu.memory_space<vmem>>, vector<1x64xf32>
    tpu.vector_store %arg23[%c3_109, %c64_110], %202 {strides = array<i32>} : memref<10x128xf32, #tpu.memory_space<vmem>>, vector<1x64xf32>,
    %204 = vector.extract_strided_slice %185 {offsets = [6, 0], sizes = [1, 64], strides = [1, 1]} : vector<8x64xf32> to vector<1x64xf32>
    %c4_111 = arith.constant 4 : index
    %c0_112 = arith.constant 0 : index
    %205 = vector.load %arg23[%c4_111, %c0_112] : memref<10x128xf32, #tpu.memory_space<vmem>>, vector<1x64xf32>
    tpu.vector_store %arg23[%c4_111, %c0_112], %204 {strides = array<i32>} : memref<10x128xf32, #tpu.memory_space<vmem>>, vector<1x64xf32>,
    %206 = vector.extract_strided_slice %185 {offsets = [7, 0], sizes = [1, 64], strides = [1, 1]} : vector<8x64xf32> to vector<1x64xf32>
    %c4_113 = arith.constant 4 : index
    %c64_114 = arith.constant 64 : index
    %207 = vector.load %arg23[%c4_113, %c64_114] : memref<10x128xf32, #tpu.memory_space<vmem>>, vector<1x64xf32>
    tpu.vector_store %arg23[%c4_113, %c64_114], %206 {strides = array<i32>} : memref<10x128xf32, #tpu.memory_space<vmem>>, vector<1x64xf32>,
    %c5 = arith.constant 5 : index
    %c0_115 = arith.constant 0 : index
    %208 = vector.load %arg23[%c5, %c0_115] : memref<10x128xf32, #tpu.memory_space<vmem>>, vector<1x128xf32>
    tpu.vector_store %arg23[%c5, %c0_115], %190 {strides = array<i32>} : memref<10x128xf32, #tpu.memory_space<vmem>>, vector<1x128xf32>,
    %209 = vector.extract_strided_slice %189 {offsets = [0, 0], sizes = [1, 64], strides = [1, 1]} : vector<8x64xf32> to vector<1x64xf32>
    %c6 = arith.constant 6 : index
    %c0_116 = arith.constant 0 : index
    %210 = vector.load %arg23[%c6, %c0_116] : memref<10x128xf32, #tpu.memory_space<vmem>>, vector<1x64xf32>
    tpu.vector_store %arg23[%c6, %c0_116], %209 {strides = array<i32>} : memref<10x128xf32, #tpu.memory_space<vmem>>, vector<1x64xf32>,
    %211 = vector.extract_strided_slice %189 {offsets = [1, 0], sizes = [1, 64], strides = [1, 1]} : vector<8x64xf32> to vector<1x64xf32>
    %c6_117 = arith.constant 6 : index
    %c64_118 = arith.constant 64 : index
    %212 = vector.load %arg23[%c6_117, %c64_118] : memref<10x128xf32, #tpu.memory_space<vmem>>, vector<1x64xf32>
    tpu.vector_store %arg23[%c6_117, %c64_118], %211 {strides = array<i32>} : memref<10x128xf32, #tpu.memory_space<vmem>>, vector<1x64xf32>,
    %213 = vector.extract_strided_slice %189 {offsets = [2, 0], sizes = [1, 64], strides = [1, 1]} : vector<8x64xf32> to vector<1x64xf32>
    %c7 = arith.constant 7 : index
    %c0_119 = arith.constant 0 : index
    %214 = vector.load %arg23[%c7, %c0_119] : memref<10x128xf32, #tpu.memory_space<vmem>>, vector<1x64xf32>
    tpu.vector_store %arg23[%c7, %c0_119], %213 {strides = array<i32>} : memref<10x128xf32, #tpu.memory_space<vmem>>, vector<1x64xf32>,
    %215 = vector.extract_strided_slice %189 {offsets = [3, 0], sizes = [1, 64], strides = [1, 1]} : vector<8x64xf32> to vector<1x64xf32>
    %c7_120 = arith.constant 7 : index
    %c64_121 = arith.constant 64 : index
    %216 = vector.load %arg23[%c7_120, %c64_121] : memref<10x128xf32, #tpu.memory_space<vmem>>, vector<1x64xf32>
    tpu.vector_store %arg23[%c7_120, %c64_121], %215 {strides = array<i32>} : memref<10x128xf32, #tpu.memory_space<vmem>>, vector<1x64xf32>,
    %217 = vector.extract_strided_slice %189 {offsets = [4, 0], sizes = [1, 64], strides = [1, 1]} : vector<8x64xf32> to vector<1x64xf32>
    %c8_122 = arith.constant 8 : index
    %c0_123 = arith.constant 0 : index
    %218 = vector.load %arg23[%c8_122, %c0_123] : memref<10x128xf32, #tpu.memory_space<vmem>>, vector<1x64xf32>
    tpu.vector_store %arg23[%c8_122, %c0_123], %217 {strides = array<i32>} : memref<10x128xf32, #tpu.memory_space<vmem>>, vector<1x64xf32>,
    %219 = vector.extract_strided_slice %189 {offsets = [5, 0], sizes = [1, 64], strides = [1, 1]} : vector<8x64xf32> to vector<1x64xf32>
    %c8_124 = arith.constant 8 : index
    %c64_125 = arith.constant 64 : index
    %220 = vector.load %arg23[%c8_124, %c64_125] : memref<10x128xf32, #tpu.memory_space<vmem>>, vector<1x64xf32>
    tpu.vector_store %arg23[%c8_124, %c64_125], %219 {strides = array<i32>} : memref<10x128xf32, #tpu.memory_space<vmem>>, vector<1x64xf32>,
    %221 = vector.extract_strided_slice %189 {offsets = [6, 0], sizes = [1, 64], strides = [1, 1]} : vector<8x64xf32> to vector<1x64xf32>
    %c9_126 = arith.constant 9 : index
    %c0_127 = arith.constant 0 : index
    %222 = vector.load %arg23[%c9_126, %c0_127] : memref<10x128xf32, #tpu.memory_space<vmem>>, vector<1x64xf32>
    tpu.vector_store %arg23[%c9_126, %c0_127], %221 {strides = array<i32>} : memref<10x128xf32, #tpu.memory_space<vmem>>, vector<1x64xf32>,
    %223 = vector.extract_strided_slice %189 {offsets = [7, 0], sizes = [1, 64], strides = [1, 1]} : vector<8x64xf32> to vector<1x64xf32>
    %c9_128 = arith.constant 9 : index
    %c64_129 = arith.constant 64 : index
    %224 = vector.load %arg23[%c9_128, %c64_129] : memref<10x128xf32, #tpu.memory_space<vmem>>, vector<1x64xf32>
    tpu.vector_store %arg23[%c9_128, %c64_129], %223 {strides = array<i32>} : memref<10x128xf32, #tpu.memory_space<vmem>>, vector<1x64xf32>,
    %c0_130 = arith.constant 0 : index
    %c0_131 = arith.constant 0 : index
    %225 = vector.load %arg23[%c0_130, %c0_131] : memref<10x128xf32, #tpu.memory_space<vmem>>, vector<10x128xf32>
    %226 = arith.truncf %225 : vector<10x128xf32> to vector<10x128xbf16>
    %c0_132 = arith.constant 0 : index
    %c0_133 = arith.constant 0 : index
    %227 = vector.load %arg5[%c0_132, %c0_133] : memref<128x128xbf16, #tpu.memory_space<vmem>>, vector<128x128xbf16>
    %cst_134 = arith.constant dense<0.000000e+00> : vector<10x128xf32>
    %228 = tpu.matmul %226, %227, %cst_134 {dimension_numbers = #tpu.dot_dimension_numbers<[1], [0], [0], [1], [0, 0, 1, 1], [], []>} : vector<10x128xbf16>, vector<128x128xbf16>, vector<10x128xf32> -> vector<10x128xf32>
    %229 = vector.extract_strided_slice %226 {offsets = [0, 64], sizes = [10, 64], strides = [1, 1]} : vector<10x128xbf16> to vector<10x64xbf16>
    %c0_135 = arith.constant 0 : index
    %c0_136 = arith.constant 0 : index
    %230 = vector.load %arg6[%c0_135, %c0_136] : memref<64x128xbf16, #tpu.memory_space<vmem>>, vector<64x128xbf16>
    %cst_137 = arith.constant dense<0.000000e+00> : vector<10x128xf32>
    %231 = tpu.matmul %229, %230, %cst_137 {dimension_numbers = #tpu.dot_dimension_numbers<[1], [0], [0], [1], [0, 0, 1, 1], [], []>} : vector<10x64xbf16>, vector<64x128xbf16>, vector<10x128xf32> -> vector<10x128xf32>
    %232 = vector.extract_strided_slice %226 {offsets = [0, 0], sizes = [10, 64], strides = [1, 1]} : vector<10x128xbf16> to vector<10x64xbf16>
    %c0_138 = arith.constant 0 : index
    %c0_139 = arith.constant 0 : index
    %233 = vector.load %arg7[%c0_138, %c0_139] : memref<64x128xbf16, #tpu.memory_space<vmem>>, vector<64x128xbf16>
    %cst_140 = arith.constant dense<0.000000e+00> : vector<10x128xf32>
    %234 = tpu.matmul %232, %233, %cst_140 {dimension_numbers = #tpu.dot_dimension_numbers<[1], [0], [0], [1], [0, 0, 1, 1], [], []>} : vector<10x64xbf16>, vector<64x128xbf16>, vector<10x128xf32> -> vector<10x128xf32>
    %235 = vector.extract_strided_slice %228 {offsets = [1, 0], sizes = [4, 128], strides = [1, 1]} : vector<10x128xf32> to vector<4x128xf32>
    %236 = vector.extract_strided_slice %231 {offsets = [0, 0], sizes = [4, 128], strides = [1, 1]} : vector<10x128xf32> to vector<4x128xf32>
    %237 = arith.addf %235, %236 : vector<4x128xf32>
    %238 = vector.extract_strided_slice %234 {offsets = [1, 0], sizes = [4, 128], strides = [1, 1]} : vector<10x128xf32> to vector<4x128xf32>
    %239 = vector.extract_strided_slice %228 {offsets = [6, 0], sizes = [4, 128], strides = [1, 1]} : vector<10x128xf32> to vector<4x128xf32>
    %240 = vector.extract_strided_slice %231 {offsets = [5, 0], sizes = [4, 128], strides = [1, 1]} : vector<10x128xf32> to vector<4x128xf32>
    %241 = arith.addf %239, %240 : vector<4x128xf32>
    %242 = vector.extract_strided_slice %234 {offsets = [6, 0], sizes = [4, 128], strides = [1, 1]} : vector<10x128xf32> to vector<4x128xf32>
    %cst_141 = arith.constant dense<0.000000e+00> : vector<128xf32>
    %243 = vector.multi_reduction <add>, %237, %cst_141 [0] : vector<4x128xf32> to vector<128xf32>
    %244 = vector.shape_cast %243 : vector<128xf32> to vector<1x128xf32>
    %245 = arith.mulf %237, %237 : vector<4x128xf32>
    %cst_142 = arith.constant dense<0.000000e+00> : vector<128xf32>
    %246 = vector.multi_reduction <add>, %245, %cst_142 [0] : vector<4x128xf32> to vector<128xf32>
    %247 = vector.shape_cast %246 : vector<128xf32> to vector<1x128xf32>
    %cst_143 = arith.constant dense<0.000000e+00> : vector<128xf32>
    %248 = vector.multi_reduction <add>, %241, %cst_143 [0] : vector<4x128xf32> to vector<128xf32>
    %249 = vector.shape_cast %248 : vector<128xf32> to vector<1x128xf32>
    %250 = arith.addf %244, %249 : vector<1x128xf32>
    %251 = arith.mulf %241, %241 : vector<4x128xf32>
    %cst_144 = arith.constant dense<0.000000e+00> : vector<128xf32>
    %252 = vector.multi_reduction <add>, %251, %cst_144 [0] : vector<4x128xf32> to vector<128xf32>
    %253 = vector.shape_cast %252 : vector<128xf32> to vector<1x128xf32>
    %254 = arith.addf %247, %253 : vector<1x128xf32>
    %cst_145 = arith.constant 8.000000e+00 : f32
    %255 = vector.broadcast %cst_145 : f32 to vector<1x128xf32>
    %256 = arith.divf %250, %255 : vector<1x128xf32>
    %cst_146 = arith.constant 8.000000e+00 : f32
    %257 = vector.broadcast %cst_146 : f32 to vector<1x128xf32>
    %258 = arith.divf %254, %257 : vector<1x128xf32>
    %259 = arith.mulf %256, %256 : vector<1x128xf32>
    %260 = arith.subf %258, %259 : vector<1x128xf32>
    %cst_147 = arith.constant 0.000000e+00 : f32
    %261 = vector.broadcast %cst_147 : f32 to vector<1x128xf32>
    %262 = arith.maximumf %260, %261 : vector<1x128xf32>
    %cst_148 = arith.constant 9.99999974E-6 : f32
    %263 = vector.broadcast %cst_148 : f32 to vector<1x128xf32>
    %264 = arith.addf %262, %263 : vector<1x128xf32>
    %265 = math.rsqrt %264 : vector<1x128xf32>
    %266 = vector.broadcast %256 : vector<1x128xf32> to vector<4x128xf32>
    %267 = arith.subf %237, %266 : vector<4x128xf32>
    %268 = vector.broadcast %265 : vector<1x128xf32> to vector<4x128xf32>
    %269 = arith.mulf %267, %268 : vector<4x128xf32>
    %270 = vector.broadcast %256 : vector<1x128xf32> to vector<4x128xf32>
    %271 = arith.subf %241, %270 : vector<4x128xf32>
    %272 = vector.broadcast %265 : vector<1x128xf32> to vector<4x128xf32>
    %273 = arith.mulf %271, %272 : vector<4x128xf32>
    %cst_149 = arith.constant 0.000000e+00 : f32
    %274 = vector.broadcast %cst_149 : f32 to vector<4x128xf32>
    %275 = arith.maximumf %269, %274 : vector<4x128xf32>
    %cst_150 = arith.constant 0.000000e+00 : f32
    %276 = vector.broadcast %cst_150 : f32 to vector<4x128xf32>
    %277 = arith.maximumf %273, %276 : vector<4x128xf32>
    %cst_151 = arith.constant 0.000000e+00 : f32
    %278 = vector.broadcast %cst_151 : f32 to vector<1x128xf32>
    %c0_152 = arith.constant 0 : index
    %c0_153 = arith.constant 0 : index
    %279 = vector.load %arg24[%c0_152, %c0_153] : memref<12x128xf32, #tpu.memory_space<vmem>>, vector<1x128xf32>
    tpu.vector_store %arg24[%c0_152, %c0_153], %278 {strides = array<i32>} : memref<12x128xf32, #tpu.memory_space<vmem>>, vector<1x128xf32>,
    %c1_154 = arith.constant 1 : index
    %c0_155 = arith.constant 0 : index
    %280 = vector.load %arg24[%c1_154, %c0_155] : memref<12x128xf32, #tpu.memory_space<vmem>>, vector<4x128xf32>
    tpu.vector_store %arg24[%c1_154, %c0_155], %275 {strides = array<i32>} : memref<12x128xf32, #tpu.memory_space<vmem>>, vector<4x128xf32>,
    %c5_156 = arith.constant 5 : index
    %c0_157 = arith.constant 0 : index
    %281 = vector.load %arg24[%c5_156, %c0_157] : memref<12x128xf32, #tpu.memory_space<vmem>>, vector<1x128xf32>
    tpu.vector_store %arg24[%c5_156, %c0_157], %278 {strides = array<i32>} : memref<12x128xf32, #tpu.memory_space<vmem>>, vector<1x128xf32>,
    %c6_158 = arith.constant 6 : index
    %c0_159 = arith.constant 0 : index
    %282 = vector.load %arg24[%c6_158, %c0_159] : memref<12x128xf32, #tpu.memory_space<vmem>>, vector<1x128xf32>
    tpu.vector_store %arg24[%c6_158, %c0_159], %278 {strides = array<i32>} : memref<12x128xf32, #tpu.memory_space<vmem>>, vector<1x128xf32>,
    %c7_160 = arith.constant 7 : index
    %c0_161 = arith.constant 0 : index
    %283 = vector.load %arg24[%c7_160, %c0_161] : memref<12x128xf32, #tpu.memory_space<vmem>>, vector<4x128xf32>
    tpu.vector_store %arg24[%c7_160, %c0_161], %277 {strides = array<i32>} : memref<12x128xf32, #tpu.memory_space<vmem>>, vector<4x128xf32>,
    %c11_162 = arith.constant 11 : index
    %c0_163 = arith.constant 0 : index
    %284 = vector.load %arg24[%c11_162, %c0_163] : memref<12x128xf32, #tpu.memory_space<vmem>>, vector<1x128xf32>
    tpu.vector_store %arg24[%c11_162, %c0_163], %278 {strides = array<i32>} : memref<12x128xf32, #tpu.memory_space<vmem>>, vector<1x128xf32>,
    %cst_164 = arith.constant dense<0.000000e+00> : vector<128xf32>
    %285 = vector.multi_reduction <add>, %238, %cst_164 [0] : vector<4x128xf32> to vector<128xf32>
    %286 = vector.shape_cast %285 : vector<128xf32> to vector<1x128xf32>
    %287 = arith.mulf %238, %238 : vector<4x128xf32>
    %cst_165 = arith.constant dense<0.000000e+00> : vector<128xf32>
    %288 = vector.multi_reduction <add>, %287, %cst_165 [0] : vector<4x128xf32> to vector<128xf32>
    %289 = vector.shape_cast %288 : vector<128xf32> to vector<1x128xf32>
    %cst_166 = arith.constant dense<0.000000e+00> : vector<128xf32>
    %290 = vector.multi_reduction <add>, %242, %cst_166 [0] : vector<4x128xf32> to vector<128xf32>
    %291 = vector.shape_cast %290 : vector<128xf32> to vector<1x128xf32>
    %292 = arith.addf %286, %291 : vector<1x128xf32>
    %293 = arith.mulf %242, %242 : vector<4x128xf32>
    %cst_167 = arith.constant dense<0.000000e+00> : vector<128xf32>
    %294 = vector.multi_reduction <add>, %293, %cst_167 [0] : vector<4x128xf32> to vector<128xf32>
    %295 = vector.shape_cast %294 : vector<128xf32> to vector<1x128xf32>
    %296 = arith.addf %289, %295 : vector<1x128xf32>
    %cst_168 = arith.constant 8.000000e+00 : f32
    %297 = vector.broadcast %cst_168 : f32 to vector<1x128xf32>
    %298 = arith.divf %292, %297 : vector<1x128xf32>
    %cst_169 = arith.constant 8.000000e+00 : f32
    %299 = vector.broadcast %cst_169 : f32 to vector<1x128xf32>
    %300 = arith.divf %296, %299 : vector<1x128xf32>
    %301 = arith.mulf %298, %298 : vector<1x128xf32>
    %302 = arith.subf %300, %301 : vector<1x128xf32>
    %cst_170 = arith.constant 0.000000e+00 : f32
    %303 = vector.broadcast %cst_170 : f32 to vector<1x128xf32>
    %304 = arith.maximumf %302, %303 : vector<1x128xf32>
    %cst_171 = arith.constant 9.99999974E-6 : f32
    %305 = vector.broadcast %cst_171 : f32 to vector<1x128xf32>
    %306 = arith.addf %304, %305 : vector<1x128xf32>
    %307 = math.rsqrt %306 : vector<1x128xf32>
    %308 = vector.broadcast %298 : vector<1x128xf32> to vector<4x128xf32>
    %309 = arith.subf %238, %308 : vector<4x128xf32>
    %310 = vector.broadcast %307 : vector<1x128xf32> to vector<4x128xf32>
    %311 = arith.mulf %309, %310 : vector<4x128xf32>
    %312 = vector.broadcast %298 : vector<1x128xf32> to vector<4x128xf32>
    %313 = arith.subf %242, %312 : vector<4x128xf32>
    %314 = vector.broadcast %307 : vector<1x128xf32> to vector<4x128xf32>
    %315 = arith.mulf %313, %314 : vector<4x128xf32>
    %c0_172 = arith.constant 0 : index
    %c0_173 = arith.constant 0 : index
    %316 = vector.load %arg24[%c0_172, %c0_173] : memref<12x128xf32, #tpu.memory_space<vmem>>, vector<12x128xf32>
    %317 = arith.truncf %316 : vector<12x128xf32> to vector<12x128xbf16>
    %c0_174 = arith.constant 0 : index
    %c0_175 = arith.constant 0 : index
    %c0_176 = arith.constant 0 : index
    %318 = vector.load %arg8[%c0_174, %c0_175, %c0_176] : memref<3x128x128xbf16, #tpu.memory_space<vmem>>, vector<1x128x128xbf16>
    %319 = vector.shape_cast %318 : vector<1x128x128xbf16> to vector<128x128xbf16>
    %cst_177 = arith.constant dense<0.000000e+00> : vector<12x128xf32>
    %320 = tpu.matmul %317, %319, %cst_177 {dimension_numbers = #tpu.dot_dimension_numbers<[1], [0], [0], [1], [0, 0, 1, 1], [], []>} : vector<12x128xbf16>, vector<128x128xbf16>, vector<12x128xf32> -> vector<12x128xf32>
    %c1_178 = arith.constant 1 : index
    %c0_179 = arith.constant 0 : index
    %c0_180 = arith.constant 0 : index
    %321 = vector.load %arg8[%c1_178, %c0_179, %c0_180] : memref<3x128x128xbf16, #tpu.memory_space<vmem>>, vector<1x128x128xbf16>
    %322 = vector.shape_cast %321 : vector<1x128x128xbf16> to vector<128x128xbf16>
    %cst_181 = arith.constant dense<0.000000e+00> : vector<12x128xf32>
    %323 = tpu.matmul %317, %322, %cst_181 {dimension_numbers = #tpu.dot_dimension_numbers<[1], [0], [0], [1], [0, 0, 1, 1], [], []>} : vector<12x128xbf16>, vector<128x128xbf16>, vector<12x128xf32> -> vector<12x128xf32>
    %c2_182 = arith.constant 2 : index
    %c0_183 = arith.constant 0 : index
    %c0_184 = arith.constant 0 : index
    %324 = vector.load %arg8[%c2_182, %c0_183, %c0_184] : memref<3x128x128xbf16, #tpu.memory_space<vmem>>, vector<1x128x128xbf16>
    %325 = vector.shape_cast %324 : vector<1x128x128xbf16> to vector<128x128xbf16>
    %cst_185 = arith.constant dense<0.000000e+00> : vector<12x128xf32>
    %326 = tpu.matmul %317, %325, %cst_185 {dimension_numbers = #tpu.dot_dimension_numbers<[1], [0], [0], [1], [0, 0, 1, 1], [], []>} : vector<12x128xbf16>, vector<128x128xbf16>, vector<12x128xf32> -> vector<12x128xf32>
    %327 = vector.extract_strided_slice %320 {offsets = [0, 0], sizes = [4, 128], strides = [1, 1]} : vector<12x128xf32> to vector<4x128xf32>
    %328 = vector.extract_strided_slice %323 {offsets = [1, 0], sizes = [4, 128], strides = [1, 1]} : vector<12x128xf32> to vector<4x128xf32>
    %329 = arith.addf %327, %328 : vector<4x128xf32>
    %330 = vector.extract_strided_slice %326 {offsets = [2, 0], sizes = [4, 128], strides = [1, 1]} : vector<12x128xf32> to vector<4x128xf32>
    %331 = arith.addf %329, %330 : vector<4x128xf32>
    %332 = vector.extract_strided_slice %320 {offsets = [6, 0], sizes = [4, 128], strides = [1, 1]} : vector<12x128xf32> to vector<4x128xf32>
    %333 = vector.extract_strided_slice %323 {offsets = [7, 0], sizes = [4, 128], strides = [1, 1]} : vector<12x128xf32> to vector<4x128xf32>
    %334 = arith.addf %332, %333 : vector<4x128xf32>
    %335 = vector.extract_strided_slice %326 {offsets = [8, 0], sizes = [4, 128], strides = [1, 1]} : vector<12x128xf32> to vector<4x128xf32>
    %336 = arith.addf %334, %335 : vector<4x128xf32>
    %cst_186 = arith.constant dense<0.000000e+00> : vector<128xf32>
    %337 = vector.multi_reduction <add>, %331, %cst_186 [0] : vector<4x128xf32> to vector<128xf32>
    %338 = vector.shape_cast %337 : vector<128xf32> to vector<1x128xf32>
    %339 = arith.mulf %331, %331 : vector<4x128xf32>
    %cst_187 = arith.constant dense<0.000000e+00> : vector<128xf32>
    %340 = vector.multi_reduction <add>, %339, %cst_187 [0] : vector<4x128xf32> to vector<128xf32>
    %341 = vector.shape_cast %340 : vector<128xf32> to vector<1x128xf32>
    %cst_188 = arith.constant dense<0.000000e+00> : vector<128xf32>
    %342 = vector.multi_reduction <add>, %336, %cst_188 [0] : vector<4x128xf32> to vector<128xf32>
    %343 = vector.shape_cast %342 : vector<128xf32> to vector<1x128xf32>
    %344 = arith.addf %338, %343 : vector<1x128xf32>
    %345 = arith.mulf %336, %336 : vector<4x128xf32>
    %cst_189 = arith.constant dense<0.000000e+00> : vector<128xf32>
    %346 = vector.multi_reduction <add>, %345, %cst_189 [0] : vector<4x128xf32> to vector<128xf32>
    %347 = vector.shape_cast %346 : vector<128xf32> to vector<1x128xf32>
    %348 = arith.addf %341, %347 : vector<1x128xf32>
    %cst_190 = arith.constant 8.000000e+00 : f32
    %349 = vector.broadcast %cst_190 : f32 to vector<1x128xf32>
    %350 = arith.divf %344, %349 : vector<1x128xf32>
    %cst_191 = arith.constant 8.000000e+00 : f32
    %351 = vector.broadcast %cst_191 : f32 to vector<1x128xf32>
    %352 = arith.divf %348, %351 : vector<1x128xf32>
    %353 = arith.mulf %350, %350 : vector<1x128xf32>
    %354 = arith.subf %352, %353 : vector<1x128xf32>
    %cst_192 = arith.constant 0.000000e+00 : f32
    %355 = vector.broadcast %cst_192 : f32 to vector<1x128xf32>
    %356 = arith.maximumf %354, %355 : vector<1x128xf32>
    %cst_193 = arith.constant 9.99999974E-6 : f32
    %357 = vector.broadcast %cst_193 : f32 to vector<1x128xf32>
    %358 = arith.addf %356, %357 : vector<1x128xf32>
    %359 = math.rsqrt %358 : vector<1x128xf32>
    %360 = vector.broadcast %350 : vector<1x128xf32> to vector<4x128xf32>
    %361 = arith.subf %331, %360 : vector<4x128xf32>
    %362 = vector.broadcast %359 : vector<1x128xf32> to vector<4x128xf32>
    %363 = arith.mulf %361, %362 : vector<4x128xf32>
    %364 = vector.broadcast %350 : vector<1x128xf32> to vector<4x128xf32>
    %365 = arith.subf %336, %364 : vector<4x128xf32>
    %366 = vector.broadcast %359 : vector<1x128xf32> to vector<4x128xf32>
    %367 = arith.mulf %365, %366 : vector<4x128xf32>
    %368 = arith.addf %363, %311 : vector<4x128xf32>
    %cst_194 = arith.constant 0.000000e+00 : f32
    %369 = vector.broadcast %cst_194 : f32 to vector<4x128xf32>
    %370 = arith.maximumf %368, %369 : vector<4x128xf32>
    %371 = arith.addf %367, %315 : vector<4x128xf32>
    %cst_195 = arith.constant 0.000000e+00 : f32
    %372 = vector.broadcast %cst_195 : f32 to vector<4x128xf32>
    %373 = arith.maximumf %371, %372 : vector<4x128xf32>
    %cst_196 = arith.constant 0.000000e+00 : f32
    %374 = vector.broadcast %cst_196 : f32 to vector<1x256xf32>
    %c0_197 = arith.constant 0 : index
    %c0_198 = arith.constant 0 : index
    %375 = vector.load %arg25[%c0_197, %c0_198] : memref<6x256xf32, #tpu.memory_space<vmem>>, vector<1x256xf32>
    tpu.vector_store %arg25[%c0_197, %c0_198], %374 {strides = array<i32>} : memref<6x256xf32, #tpu.memory_space<vmem>>, vector<1x256xf32>,
    %376 = vector.extract_strided_slice %370 {offsets = [0, 0], sizes = [1, 128], strides = [1, 1]} : vector<4x128xf32> to vector<1x128xf32>
    %c1_199 = arith.constant 1 : index
    %c0_200 = arith.constant 0 : index
    %377 = vector.load %arg25[%c1_199, %c0_200] : memref<6x256xf32, #tpu.memory_space<vmem>>, vector<1x128xf32>
    tpu.vector_store %arg25[%c1_199, %c0_200], %376 {strides = array<i32>} : memref<6x256xf32, #tpu.memory_space<vmem>>, vector<1x128xf32>,
    %378 = vector.extract_strided_slice %370 {offsets = [1, 0], sizes = [1, 128], strides = [1, 1]} : vector<4x128xf32> to vector<1x128xf32>
    %c1_201 = arith.constant 1 : index
    %c128 = arith.constant 128 : index
    %379 = vector.load %arg25[%c1_201, %c128] : memref<6x256xf32, #tpu.memory_space<vmem>>, vector<1x128xf32>
    tpu.vector_store %arg25[%c1_201, %c128], %378 {strides = array<i32>} : memref<6x256xf32, #tpu.memory_space<vmem>>, vector<1x128xf32>,
    %380 = vector.extract_strided_slice %370 {offsets = [2, 0], sizes = [1, 128], strides = [1, 1]} : vector<4x128xf32> to vector<1x128xf32>
    %c2_202 = arith.constant 2 : index
    %c0_203 = arith.constant 0 : index
    %381 = vector.load %arg25[%c2_202, %c0_203] : memref<6x256xf32, #tpu.memory_space<vmem>>, vector<1x128xf32>
    tpu.vector_store %arg25[%c2_202, %c0_203], %380 {strides = array<i32>} : memref<6x256xf32, #tpu.memory_space<vmem>>, vector<1x128xf32>,
    %382 = vector.extract_strided_slice %370 {offsets = [3, 0], sizes = [1, 128], strides = [1, 1]} : vector<4x128xf32> to vector<1x128xf32>
    %c2_204 = arith.constant 2 : index
    %c128_205 = arith.constant 128 : index
    %383 = vector.load %arg25[%c2_204, %c128_205] : memref<6x256xf32, #tpu.memory_space<vmem>>, vector<1x128xf32>
    tpu.vector_store %arg25[%c2_204, %c128_205], %382 {strides = array<i32>} : memref<6x256xf32, #tpu.memory_space<vmem>>, vector<1x128xf32>,
    %c3_206 = arith.constant 3 : index
    %c0_207 = arith.constant 0 : index
    %384 = vector.load %arg25[%c3_206, %c0_207] : memref<6x256xf32, #tpu.memory_space<vmem>>, vector<1x256xf32>
    tpu.vector_store %arg25[%c3_206, %c0_207], %374 {strides = array<i32>} : memref<6x256xf32, #tpu.memory_space<vmem>>, vector<1x256xf32>,
    %385 = vector.extract_strided_slice %373 {offsets = [0, 0], sizes = [1, 128], strides = [1, 1]} : vector<4x128xf32> to vector<1x128xf32>
    %c4_208 = arith.constant 4 : index
    %c0_209 = arith.constant 0 : index
    %386 = vector.load %arg25[%c4_208, %c0_209] : memref<6x256xf32, #tpu.memory_space<vmem>>, vector<1x128xf32>
    tpu.vector_store %arg25[%c4_208, %c0_209], %385 {strides = array<i32>} : memref<6x256xf32, #tpu.memory_space<vmem>>, vector<1x128xf32>,
    %387 = vector.extract_strided_slice %373 {offsets = [1, 0], sizes = [1, 128], strides = [1, 1]} : vector<4x128xf32> to vector<1x128xf32>
    %c4_210 = arith.constant 4 : index
    %c128_211 = arith.constant 128 : index
    %388 = vector.load %arg25[%c4_210, %c128_211] : memref<6x256xf32, #tpu.memory_space<vmem>>, vector<1x128xf32>
    tpu.vector_store %arg25[%c4_210, %c128_211], %387 {strides = array<i32>} : memref<6x256xf32, #tpu.memory_space<vmem>>, vector<1x128xf32>,
    %389 = vector.extract_strided_slice %373 {offsets = [2, 0], sizes = [1, 128], strides = [1, 1]} : vector<4x128xf32> to vector<1x128xf32>
    %c5_212 = arith.constant 5 : index
    %c0_213 = arith.constant 0 : index
    %390 = vector.load %arg25[%c5_212, %c0_213] : memref<6x256xf32, #tpu.memory_space<vmem>>, vector<1x128xf32>
    tpu.vector_store %arg25[%c5_212, %c0_213], %389 {strides = array<i32>} : memref<6x256xf32, #tpu.memory_space<vmem>>, vector<1x128xf32>,
    %391 = vector.extract_strided_slice %373 {offsets = [3, 0], sizes = [1, 128], strides = [1, 1]} : vector<4x128xf32> to vector<1x128xf32>
    %c5_214 = arith.constant 5 : index
    %c128_215 = arith.constant 128 : index
    %392 = vector.load %arg25[%c5_214, %c128_215] : memref<6x256xf32, #tpu.memory_space<vmem>>, vector<1x128xf32>
    tpu.vector_store %arg25[%c5_214, %c128_215], %391 {strides = array<i32>} : memref<6x256xf32, #tpu.memory_space<vmem>>, vector<1x128xf32>,
    %c0_216 = arith.constant 0 : index
    %c0_217 = arith.constant 0 : index
    %393 = vector.load %arg25[%c0_216, %c0_217] : memref<6x256xf32, #tpu.memory_space<vmem>>, vector<6x256xf32>
    %394 = arith.truncf %393 : vector<6x256xf32> to vector<6x256xbf16>
    %c0_218 = arith.constant 0 : index
    %c0_219 = arith.constant 0 : index
    %395 = vector.load %arg9[%c0_218, %c0_219] : memref<256x256xbf16, #tpu.memory_space<vmem>>, vector<256x256xbf16>
    %cst_220 = arith.constant dense<0.000000e+00> : vector<6x256xf32>
    %396 = tpu.matmul %394, %395, %cst_220 {dimension_numbers = #tpu.dot_dimension_numbers<[1], [0], [0], [1], [0, 0, 1, 1], [], []>} : vector<6x256xbf16>, vector<256x256xbf16>, vector<6x256xf32> -> vector<6x256xf32>
    %397 = vector.extract_strided_slice %394 {offsets = [0, 128], sizes = [6, 128], strides = [1, 1]} : vector<6x256xbf16> to vector<6x128xbf16>
    %c0_221 = arith.constant 0 : index
    %c0_222 = arith.constant 0 : index
    %398 = vector.load %arg10[%c0_221, %c0_222] : memref<128x256xbf16, #tpu.memory_space<vmem>>, vector<128x256xbf16>
    %cst_223 = arith.constant dense<0.000000e+00> : vector<6x256xf32>
    %399 = tpu.matmul %397, %398, %cst_223 {dimension_numbers = #tpu.dot_dimension_numbers<[1], [0], [0], [1], [0, 0, 1, 1], [], []>} : vector<6x128xbf16>, vector<128x256xbf16>, vector<6x256xf32> -> vector<6x256xf32>
    %400 = vector.extract_strided_slice %394 {offsets = [0, 0], sizes = [6, 128], strides = [1, 1]} : vector<6x256xbf16> to vector<6x128xbf16>
    %c0_224 = arith.constant 0 : index
    %c0_225 = arith.constant 0 : index
    %401 = vector.load %arg11[%c0_224, %c0_225] : memref<128x256xbf16, #tpu.memory_space<vmem>>, vector<128x256xbf16>
    %cst_226 = arith.constant dense<0.000000e+00> : vector<6x256xf32>
    %402 = tpu.matmul %400, %401, %cst_226 {dimension_numbers = #tpu.dot_dimension_numbers<[1], [0], [0], [1], [0, 0, 1, 1], [], []>} : vector<6x128xbf16>, vector<128x256xbf16>, vector<6x256xf32> -> vector<6x256xf32>
    %403 = vector.extract_strided_slice %396 {offsets = [1, 0], sizes = [2, 256], strides = [1, 1]} : vector<6x256xf32> to vector<2x256xf32>
    %404 = vector.extract_strided_slice %399 {offsets = [0, 0], sizes = [2, 256], strides = [1, 1]} : vector<6x256xf32> to vector<2x256xf32>
    %405 = arith.addf %403, %404 : vector<2x256xf32>
    %406 = vector.extract_strided_slice %402 {offsets = [1, 0], sizes = [2, 256], strides = [1, 1]} : vector<6x256xf32> to vector<2x256xf32>
    %407 = vector.extract_strided_slice %396 {offsets = [4, 0], sizes = [2, 256], strides = [1, 1]} : vector<6x256xf32> to vector<2x256xf32>
    %408 = vector.extract_strided_slice %399 {offsets = [3, 0], sizes = [2, 256], strides = [1, 1]} : vector<6x256xf32> to vector<2x256xf32>
    %409 = arith.addf %407, %408 : vector<2x256xf32>
    %410 = vector.extract_strided_slice %402 {offsets = [4, 0], sizes = [2, 256], strides = [1, 1]} : vector<6x256xf32> to vector<2x256xf32>
    %cst_227 = arith.constant dense<0.000000e+00> : vector<256xf32>
    %411 = vector.multi_reduction <add>, %405, %cst_227 [0] : vector<2x256xf32> to vector<256xf32>
    %412 = vector.shape_cast %411 : vector<256xf32> to vector<1x256xf32>
    %413 = arith.mulf %405, %405 : vector<2x256xf32>
    %cst_228 = arith.constant dense<0.000000e+00> : vector<256xf32>
    %414 = vector.multi_reduction <add>, %413, %cst_228 [0] : vector<2x256xf32> to vector<256xf32>
    %415 = vector.shape_cast %414 : vector<256xf32> to vector<1x256xf32>
    %cst_229 = arith.constant dense<0.000000e+00> : vector<256xf32>
    %416 = vector.multi_reduction <add>, %409, %cst_229 [0] : vector<2x256xf32> to vector<256xf32>
    %417 = vector.shape_cast %416 : vector<256xf32> to vector<1x256xf32>
    %418 = arith.addf %412, %417 : vector<1x256xf32>
    %419 = arith.mulf %409, %409 : vector<2x256xf32>
    %cst_230 = arith.constant dense<0.000000e+00> : vector<256xf32>
    %420 = vector.multi_reduction <add>, %419, %cst_230 [0] : vector<2x256xf32> to vector<256xf32>
    %421 = vector.shape_cast %420 : vector<256xf32> to vector<1x256xf32>
    %422 = arith.addf %415, %421 : vector<1x256xf32>
    %cst_231 = arith.constant 4.000000e+00 : f32
    %423 = vector.broadcast %cst_231 : f32 to vector<1x256xf32>
    %424 = arith.divf %418, %423 : vector<1x256xf32>
    %cst_232 = arith.constant 4.000000e+00 : f32
    %425 = vector.broadcast %cst_232 : f32 to vector<1x256xf32>
    %426 = arith.divf %422, %425 : vector<1x256xf32>
    %427 = arith.mulf %424, %424 : vector<1x256xf32>
    %428 = arith.subf %426, %427 : vector<1x256xf32>
    %cst_233 = arith.constant 0.000000e+00 : f32
    %429 = vector.broadcast %cst_233 : f32 to vector<1x256xf32>
    %430 = arith.maximumf %428, %429 : vector<1x256xf32>
    %cst_234 = arith.constant 9.99999974E-6 : f32
    %431 = vector.broadcast %cst_234 : f32 to vector<1x256xf32>
    %432 = arith.addf %430, %431 : vector<1x256xf32>
    %433 = math.rsqrt %432 : vector<1x256xf32>
    %434 = vector.broadcast %424 : vector<1x256xf32> to vector<2x256xf32>
    %435 = arith.subf %405, %434 : vector<2x256xf32>
    %436 = vector.broadcast %433 : vector<1x256xf32> to vector<2x256xf32>
    %437 = arith.mulf %435, %436 : vector<2x256xf32>
    %438 = vector.broadcast %424 : vector<1x256xf32> to vector<2x256xf32>
    %439 = arith.subf %409, %438 : vector<2x256xf32>
    %440 = vector.broadcast %433 : vector<1x256xf32> to vector<2x256xf32>
    %441 = arith.mulf %439, %440 : vector<2x256xf32>
    %cst_235 = arith.constant 0.000000e+00 : f32
    %442 = vector.broadcast %cst_235 : f32 to vector<2x256xf32>
    %443 = arith.maximumf %437, %442 : vector<2x256xf32>
    %cst_236 = arith.constant 0.000000e+00 : f32
    %444 = vector.broadcast %cst_236 : f32 to vector<2x256xf32>
    %445 = arith.maximumf %441, %444 : vector<2x256xf32>
    %cst_237 = arith.constant 0.000000e+00 : f32
    %446 = vector.broadcast %cst_237 : f32 to vector<1x256xf32>
    %c0_238 = arith.constant 0 : index
    %c0_239 = arith.constant 0 : index
    %447 = vector.load %arg26[%c0_238, %c0_239] : memref<8x256xf32, #tpu.memory_space<vmem>>, vector<1x256xf32>
    tpu.vector_store %arg26[%c0_238, %c0_239], %446 {strides = array<i32>} : memref<8x256xf32, #tpu.memory_space<vmem>>, vector<1x256xf32>,
    %c1_240 = arith.constant 1 : index
    %c0_241 = arith.constant 0 : index
    %448 = vector.load %arg26[%c1_240, %c0_241] : memref<8x256xf32, #tpu.memory_space<vmem>>, vector<2x256xf32>
    tpu.vector_store %arg26[%c1_240, %c0_241], %443 {strides = array<i32>} : memref<8x256xf32, #tpu.memory_space<vmem>>, vector<2x256xf32>,
    %c3_242 = arith.constant 3 : index
    %c0_243 = arith.constant 0 : index
    %449 = vector.load %arg26[%c3_242, %c0_243] : memref<8x256xf32, #tpu.memory_space<vmem>>, vector<1x256xf32>
    tpu.vector_store %arg26[%c3_242, %c0_243], %446 {strides = array<i32>} : memref<8x256xf32, #tpu.memory_space<vmem>>, vector<1x256xf32>,
    %c4_244 = arith.constant 4 : index
    %c0_245 = arith.constant 0 : index
    %450 = vector.load %arg26[%c4_244, %c0_245] : memref<8x256xf32, #tpu.memory_space<vmem>>, vector<1x256xf32>
    tpu.vector_store %arg26[%c4_244, %c0_245], %446 {strides = array<i32>} : memref<8x256xf32, #tpu.memory_space<vmem>>, vector<1x256xf32>,
    %c5_246 = arith.constant 5 : index
    %c0_247 = arith.constant 0 : index
    %451 = vector.load %arg26[%c5_246, %c0_247] : memref<8x256xf32, #tpu.memory_space<vmem>>, vector<2x256xf32>
    tpu.vector_store %arg26[%c5_246, %c0_247], %445 {strides = array<i32>} : memref<8x256xf32, #tpu.memory_space<vmem>>, vector<2x256xf32>,
    %c7_248 = arith.constant 7 : index
    %c0_249 = arith.constant 0 : index
    %452 = vector.load %arg26[%c7_248, %c0_249] : memref<8x256xf32, #tpu.memory_space<vmem>>, vector<1x256xf32>
    tpu.vector_store %arg26[%c7_248, %c0_249], %446 {strides = array<i32>} : memref<8x256xf32, #tpu.memory_space<vmem>>, vector<1x256xf32>,
    %cst_250 = arith.constant dense<0.000000e+00> : vector<256xf32>
    %453 = vector.multi_reduction <add>, %406, %cst_250 [0] : vector<2x256xf32> to vector<256xf32>
    %454 = vector.shape_cast %453 : vector<256xf32> to vector<1x256xf32>
    %455 = arith.mulf %406, %406 : vector<2x256xf32>
    %cst_251 = arith.constant dense<0.000000e+00> : vector<256xf32>
    %456 = vector.multi_reduction <add>, %455, %cst_251 [0] : vector<2x256xf32> to vector<256xf32>
    %457 = vector.shape_cast %456 : vector<256xf32> to vector<1x256xf32>
    %cst_252 = arith.constant dense<0.000000e+00> : vector<256xf32>
    %458 = vector.multi_reduction <add>, %410, %cst_252 [0] : vector<2x256xf32> to vector<256xf32>
    %459 = vector.shape_cast %458 : vector<256xf32> to vector<1x256xf32>
    %460 = arith.addf %454, %459 : vector<1x256xf32>
    %461 = arith.mulf %410, %410 : vector<2x256xf32>
    %cst_253 = arith.constant dense<0.000000e+00> : vector<256xf32>
    %462 = vector.multi_reduction <add>, %461, %cst_253 [0] : vector<2x256xf32> to vector<256xf32>
    %463 = vector.shape_cast %462 : vector<256xf32> to vector<1x256xf32>
    %464 = arith.addf %457, %463 : vector<1x256xf32>
    %cst_254 = arith.constant 4.000000e+00 : f32
    %465 = vector.broadcast %cst_254 : f32 to vector<1x256xf32>
    %466 = arith.divf %460, %465 : vector<1x256xf32>
    %cst_255 = arith.constant 4.000000e+00 : f32
    %467 = vector.broadcast %cst_255 : f32 to vector<1x256xf32>
    %468 = arith.divf %464, %467 : vector<1x256xf32>
    %469 = arith.mulf %466, %466 : vector<1x256xf32>
    %470 = arith.subf %468, %469 : vector<1x256xf32>
    %cst_256 = arith.constant 0.000000e+00 : f32
    %471 = vector.broadcast %cst_256 : f32 to vector<1x256xf32>
    %472 = arith.maximumf %470, %471 : vector<1x256xf32>
    %cst_257 = arith.constant 9.99999974E-6 : f32
    %473 = vector.broadcast %cst_257 : f32 to vector<1x256xf32>
    %474 = arith.addf %472, %473 : vector<1x256xf32>
    %475 = math.rsqrt %474 : vector<1x256xf32>
    %476 = vector.broadcast %466 : vector<1x256xf32> to vector<2x256xf32>
    %477 = arith.subf %406, %476 : vector<2x256xf32>
    %478 = vector.broadcast %475 : vector<1x256xf32> to vector<2x256xf32>
    %479 = arith.mulf %477, %478 : vector<2x256xf32>
    %480 = vector.broadcast %466 : vector<1x256xf32> to vector<2x256xf32>
    %481 = arith.subf %410, %480 : vector<2x256xf32>
    %482 = vector.broadcast %475 : vector<1x256xf32> to vector<2x256xf32>
    %483 = arith.mulf %481, %482 : vector<2x256xf32>
    %c0_258 = arith.constant 0 : index
    %c0_259 = arith.constant 0 : index
    %484 = vector.load %arg26[%c0_258, %c0_259] : memref<8x256xf32, #tpu.memory_space<vmem>>, vector<8x256xf32>
    %485 = arith.truncf %484 : vector<8x256xf32> to vector<8x256xbf16>
    %c0_260 = arith.constant 0 : index
    %c0_261 = arith.constant 0 : index
    %c0_262 = arith.constant 0 : index
    %486 = vector.load %arg12[%c0_260, %c0_261, %c0_262] : memref<3x256x256xbf16, #tpu.memory_space<vmem>>, vector<1x256x256xbf16>
    %487 = vector.shape_cast %486 : vector<1x256x256xbf16> to vector<256x256xbf16>
    %cst_263 = arith.constant dense<0.000000e+00> : vector<8x256xf32>
    %488 = tpu.matmul %485, %487, %cst_263 {dimension_numbers = #tpu.dot_dimension_numbers<[1], [0], [0], [1], [0, 0, 1, 1], [], []>} : vector<8x256xbf16>, vector<256x256xbf16>, vector<8x256xf32> -> vector<8x256xf32>
    %c1_264 = arith.constant 1 : index
    %c0_265 = arith.constant 0 : index
    %c0_266 = arith.constant 0 : index
    %489 = vector.load %arg12[%c1_264, %c0_265, %c0_266] : memref<3x256x256xbf16, #tpu.memory_space<vmem>>, vector<1x256x256xbf16>
    %490 = vector.shape_cast %489 : vector<1x256x256xbf16> to vector<256x256xbf16>
    %cst_267 = arith.constant dense<0.000000e+00> : vector<8x256xf32>
    %491 = tpu.matmul %485, %490, %cst_267 {dimension_numbers = #tpu.dot_dimension_numbers<[1], [0], [0], [1], [0, 0, 1, 1], [], []>} : vector<8x256xbf16>, vector<256x256xbf16>, vector<8x256xf32> -> vector<8x256xf32>
    %c2_268 = arith.constant 2 : index
    %c0_269 = arith.constant 0 : index
    %c0_270 = arith.constant 0 : index
    %492 = vector.load %arg12[%c2_268, %c0_269, %c0_270] : memref<3x256x256xbf16, #tpu.memory_space<vmem>>, vector<1x256x256xbf16>
    %493 = vector.shape_cast %492 : vector<1x256x256xbf16> to vector<256x256xbf16>
    %cst_271 = arith.constant dense<0.000000e+00> : vector<8x256xf32>
    %494 = tpu.matmul %485, %493, %cst_271 {dimension_numbers = #tpu.dot_dimension_numbers<[1], [0], [0], [1], [0, 0, 1, 1], [], []>} : vector<8x256xbf16>, vector<256x256xbf16>, vector<8x256xf32> -> vector<8x256xf32>
    %495 = vector.extract_strided_slice %488 {offsets = [0, 0], sizes = [2, 256], strides = [1, 1]} : vector<8x256xf32> to vector<2x256xf32>
    %496 = vector.extract_strided_slice %491 {offsets = [1, 0], sizes = [2, 256], strides = [1, 1]} : vector<8x256xf32> to vector<2x256xf32>
    %497 = arith.addf %495, %496 : vector<2x256xf32>
    %498 = vector.extract_strided_slice %494 {offsets = [2, 0], sizes = [2, 256], strides = [1, 1]} : vector<8x256xf32> to vector<2x256xf32>
    %499 = arith.addf %497, %498 : vector<2x256xf32>
    %500 = vector.extract_strided_slice %488 {offsets = [4, 0], sizes = [2, 256], strides = [1, 1]} : vector<8x256xf32> to vector<2x256xf32>
    %501 = vector.extract_strided_slice %491 {offsets = [5, 0], sizes = [2, 256], strides = [1, 1]} : vector<8x256xf32> to vector<2x256xf32>
    %502 = arith.addf %500, %501 : vector<2x256xf32>
    %503 = vector.extract_strided_slice %494 {offsets = [6, 0], sizes = [2, 256], strides = [1, 1]} : vector<8x256xf32> to vector<2x256xf32>
    %504 = arith.addf %502, %503 : vector<2x256xf32>
    %cst_272 = arith.constant dense<0.000000e+00> : vector<256xf32>
    %505 = vector.multi_reduction <add>, %499, %cst_272 [0] : vector<2x256xf32> to vector<256xf32>
    %506 = vector.shape_cast %505 : vector<256xf32> to vector<1x256xf32>
    %507 = arith.mulf %499, %499 : vector<2x256xf32>
    %cst_273 = arith.constant dense<0.000000e+00> : vector<256xf32>
    %508 = vector.multi_reduction <add>, %507, %cst_273 [0] : vector<2x256xf32> to vector<256xf32>
    %509 = vector.shape_cast %508 : vector<256xf32> to vector<1x256xf32>
    %cst_274 = arith.constant dense<0.000000e+00> : vector<256xf32>
    %510 = vector.multi_reduction <add>, %504, %cst_274 [0] : vector<2x256xf32> to vector<256xf32>
    %511 = vector.shape_cast %510 : vector<256xf32> to vector<1x256xf32>
    %512 = arith.addf %506, %511 : vector<1x256xf32>
    %513 = arith.mulf %504, %504 : vector<2x256xf32>
    %cst_275 = arith.constant dense<0.000000e+00> : vector<256xf32>
    %514 = vector.multi_reduction <add>, %513, %cst_275 [0] : vector<2x256xf32> to vector<256xf32>
    %515 = vector.shape_cast %514 : vector<256xf32> to vector<1x256xf32>
    %516 = arith.addf %509, %515 : vector<1x256xf32>
    %cst_276 = arith.constant 4.000000e+00 : f32
    %517 = vector.broadcast %cst_276 : f32 to vector<1x256xf32>
    %518 = arith.divf %512, %517 : vector<1x256xf32>
    %cst_277 = arith.constant 4.000000e+00 : f32
    %519 = vector.broadcast %cst_277 : f32 to vector<1x256xf32>
    %520 = arith.divf %516, %519 : vector<1x256xf32>
    %521 = arith.mulf %518, %518 : vector<1x256xf32>
    %522 = arith.subf %520, %521 : vector<1x256xf32>
    %cst_278 = arith.constant 0.000000e+00 : f32
    %523 = vector.broadcast %cst_278 : f32 to vector<1x256xf32>
    %524 = arith.maximumf %522, %523 : vector<1x256xf32>
    %cst_279 = arith.constant 9.99999974E-6 : f32
    %525 = vector.broadcast %cst_279 : f32 to vector<1x256xf32>
    %526 = arith.addf %524, %525 : vector<1x256xf32>
    %527 = math.rsqrt %526 : vector<1x256xf32>
    %528 = vector.broadcast %518 : vector<1x256xf32> to vector<2x256xf32>
    %529 = arith.subf %499, %528 : vector<2x256xf32>
    %530 = vector.broadcast %527 : vector<1x256xf32> to vector<2x256xf32>
    %531 = arith.mulf %529, %530 : vector<2x256xf32>
    %532 = vector.broadcast %518 : vector<1x256xf32> to vector<2x256xf32>
    %533 = arith.subf %504, %532 : vector<2x256xf32>
    %534 = vector.broadcast %527 : vector<1x256xf32> to vector<2x256xf32>
    %535 = arith.mulf %533, %534 : vector<2x256xf32>
    %536 = arith.addf %531, %479 : vector<2x256xf32>
    %cst_280 = arith.constant 0.000000e+00 : f32
    %537 = vector.broadcast %cst_280 : f32 to vector<2x256xf32>
    %538 = arith.maximumf %536, %537 : vector<2x256xf32>
    %539 = arith.addf %535, %483 : vector<2x256xf32>
    %cst_281 = arith.constant 0.000000e+00 : f32
    %540 = vector.broadcast %cst_281 : f32 to vector<2x256xf32>
    %541 = arith.maximumf %539, %540 : vector<2x256xf32>
    %cst_282 = arith.constant 0.000000e+00 : f32
    %542 = vector.broadcast %cst_282 : f32 to vector<1x512xf32>
    %c0_283 = arith.constant 0 : index
    %c0_284 = arith.constant 0 : index
    %543 = vector.load %arg27[%c0_283, %c0_284] : memref<4x512xf32, #tpu.memory_space<vmem>>, vector<1x512xf32>
    tpu.vector_store %arg27[%c0_283, %c0_284], %542 {strides = array<i32>} : memref<4x512xf32, #tpu.memory_space<vmem>>, vector<1x512xf32>,
    %544 = vector.extract_strided_slice %538 {offsets = [0, 0], sizes = [1, 256], strides = [1, 1]} : vector<2x256xf32> to vector<1x256xf32>
    %c1_285 = arith.constant 1 : index
    %c0_286 = arith.constant 0 : index
    %545 = vector.load %arg27[%c1_285, %c0_286] : memref<4x512xf32, #tpu.memory_space<vmem>>, vector<1x256xf32>
    tpu.vector_store %arg27[%c1_285, %c0_286], %544 {strides = array<i32>} : memref<4x512xf32, #tpu.memory_space<vmem>>, vector<1x256xf32>,
    %546 = vector.extract_strided_slice %538 {offsets = [1, 0], sizes = [1, 256], strides = [1, 1]} : vector<2x256xf32> to vector<1x256xf32>
    %c1_287 = arith.constant 1 : index
    %c256 = arith.constant 256 : index
    %547 = vector.load %arg27[%c1_287, %c256] : memref<4x512xf32, #tpu.memory_space<vmem>>, vector<1x256xf32>
    tpu.vector_store %arg27[%c1_287, %c256], %546 {strides = array<i32>} : memref<4x512xf32, #tpu.memory_space<vmem>>, vector<1x256xf32>,
    %c2_288 = arith.constant 2 : index
    %c0_289 = arith.constant 0 : index
    %548 = vector.load %arg27[%c2_288, %c0_289] : memref<4x512xf32, #tpu.memory_space<vmem>>, vector<1x512xf32>
    tpu.vector_store %arg27[%c2_288, %c0_289], %542 {strides = array<i32>} : memref<4x512xf32, #tpu.memory_space<vmem>>, vector<1x512xf32>,
    %549 = vector.extract_strided_slice %541 {offsets = [0, 0], sizes = [1, 256], strides = [1, 1]} : vector<2x256xf32> to vector<1x256xf32>
    %c3_290 = arith.constant 3 : index
    %c0_291 = arith.constant 0 : index
    %550 = vector.load %arg27[%c3_290, %c0_291] : memref<4x512xf32, #tpu.memory_space<vmem>>, vector<1x256xf32>
    tpu.vector_store %arg27[%c3_290, %c0_291], %549 {strides = array<i32>} : memref<4x512xf32, #tpu.memory_space<vmem>>, vector<1x256xf32>,
    %551 = vector.extract_strided_slice %541 {offsets = [1, 0], sizes = [1, 256], strides = [1, 1]} : vector<2x256xf32> to vector<1x256xf32>
    %c3_292 = arith.constant 3 : index
    %c256_293 = arith.constant 256 : index
    %552 = vector.load %arg27[%c3_292, %c256_293] : memref<4x512xf32, #tpu.memory_space<vmem>>, vector<1x256xf32>
    tpu.vector_store %arg27[%c3_292, %c256_293], %551 {strides = array<i32>} : memref<4x512xf32, #tpu.memory_space<vmem>>, vector<1x256xf32>,
    %c0_294 = arith.constant 0 : index
    %c0_295 = arith.constant 0 : index
    %553 = vector.load %arg27[%c0_294, %c0_295] : memref<4x512xf32, #tpu.memory_space<vmem>>, vector<4x512xf32>
    %554 = arith.truncf %553 : vector<4x512xf32> to vector<4x512xbf16>
    %c0_296 = arith.constant 0 : index
    %c0_297 = arith.constant 0 : index
    %555 = vector.load %arg13[%c0_296, %c0_297] : memref<512x512xbf16, #tpu.memory_space<vmem>>, vector<512x512xbf16>
    %cst_298 = arith.constant dense<0.000000e+00> : vector<4x512xf32>
    %556 = tpu.matmul %554, %555, %cst_298 {dimension_numbers = #tpu.dot_dimension_numbers<[1], [0], [0], [1], [0, 0, 1, 1], [], []>} : vector<4x512xbf16>, vector<512x512xbf16>, vector<4x512xf32> -> vector<4x512xf32>
    %557 = vector.extract_strided_slice %554 {offsets = [0, 256], sizes = [4, 256], strides = [1, 1]} : vector<4x512xbf16> to vector<4x256xbf16>
    %c0_299 = arith.constant 0 : index
    %c0_300 = arith.constant 0 : index
    %558 = vector.load %arg14[%c0_299, %c0_300] : memref<256x512xbf16, #tpu.memory_space<vmem>>, vector<256x512xbf16>
    %cst_301 = arith.constant dense<0.000000e+00> : vector<4x512xf32>
    %559 = tpu.matmul %557, %558, %cst_301 {dimension_numbers = #tpu.dot_dimension_numbers<[1], [0], [0], [1], [0, 0, 1, 1], [], []>} : vector<4x256xbf16>, vector<256x512xbf16>, vector<4x512xf32> -> vector<4x512xf32>
    %560 = vector.extract_strided_slice %554 {offsets = [0, 0], sizes = [4, 256], strides = [1, 1]} : vector<4x512xbf16> to vector<4x256xbf16>
    %c0_302 = arith.constant 0 : index
    %c0_303 = arith.constant 0 : index
    %561 = vector.load %arg15[%c0_302, %c0_303] : memref<256x512xbf16, #tpu.memory_space<vmem>>, vector<256x512xbf16>
    %cst_304 = arith.constant dense<0.000000e+00> : vector<4x512xf32>
    %562 = tpu.matmul %560, %561, %cst_304 {dimension_numbers = #tpu.dot_dimension_numbers<[1], [0], [0], [1], [0, 0, 1, 1], [], []>} : vector<4x256xbf16>, vector<256x512xbf16>, vector<4x512xf32> -> vector<4x512xf32>
    %563 = vector.extract_strided_slice %556 {offsets = [1, 0], sizes = [1, 512], strides = [1, 1]} : vector<4x512xf32> to vector<1x512xf32>
    %564 = vector.extract_strided_slice %559 {offsets = [0, 0], sizes = [1, 512], strides = [1, 1]} : vector<4x512xf32> to vector<1x512xf32>
    %565 = arith.addf %563, %564 : vector<1x512xf32>
    %566 = vector.extract_strided_slice %562 {offsets = [1, 0], sizes = [1, 512], strides = [1, 1]} : vector<4x512xf32> to vector<1x512xf32>
    %567 = vector.extract_strided_slice %556 {offsets = [3, 0], sizes = [1, 512], strides = [1, 1]} : vector<4x512xf32> to vector<1x512xf32>
    %568 = vector.extract_strided_slice %559 {offsets = [2, 0], sizes = [1, 512], strides = [1, 1]} : vector<4x512xf32> to vector<1x512xf32>
    %569 = arith.addf %567, %568 : vector<1x512xf32>
    %570 = vector.extract_strided_slice %562 {offsets = [3, 0], sizes = [1, 512], strides = [1, 1]} : vector<4x512xf32> to vector<1x512xf32>
    %cst_305 = arith.constant dense<0.000000e+00> : vector<512xf32>
    %571 = vector.multi_reduction <add>, %565, %cst_305 [0] : vector<1x512xf32> to vector<512xf32>
    %572 = vector.shape_cast %571 : vector<512xf32> to vector<1x512xf32>
    %573 = arith.mulf %565, %565 : vector<1x512xf32>
    %cst_306 = arith.constant dense<0.000000e+00> : vector<512xf32>
    %574 = vector.multi_reduction <add>, %573, %cst_306 [0] : vector<1x512xf32> to vector<512xf32>
    %575 = vector.shape_cast %574 : vector<512xf32> to vector<1x512xf32>
    %cst_307 = arith.constant dense<0.000000e+00> : vector<512xf32>
    %576 = vector.multi_reduction <add>, %569, %cst_307 [0] : vector<1x512xf32> to vector<512xf32>
    %577 = vector.shape_cast %576 : vector<512xf32> to vector<1x512xf32>
    %578 = arith.addf %572, %577 : vector<1x512xf32>
    %579 = arith.mulf %569, %569 : vector<1x512xf32>
    %cst_308 = arith.constant dense<0.000000e+00> : vector<512xf32>
    %580 = vector.multi_reduction <add>, %579, %cst_308 [0] : vector<1x512xf32> to vector<512xf32>
    %581 = vector.shape_cast %580 : vector<512xf32> to vector<1x512xf32>
    %582 = arith.addf %575, %581 : vector<1x512xf32>
    %cst_309 = arith.constant 2.000000e+00 : f32
    %583 = vector.broadcast %cst_309 : f32 to vector<1x512xf32>
    %584 = arith.divf %578, %583 : vector<1x512xf32>
    %cst_310 = arith.constant 2.000000e+00 : f32
    %585 = vector.broadcast %cst_310 : f32 to vector<1x512xf32>
    %586 = arith.divf %582, %585 : vector<1x512xf32>
    %587 = arith.mulf %584, %584 : vector<1x512xf32>
    %588 = arith.subf %586, %587 : vector<1x512xf32>
    %cst_311 = arith.constant 0.000000e+00 : f32
    %589 = vector.broadcast %cst_311 : f32 to vector<1x512xf32>
    %590 = arith.maximumf %588, %589 : vector<1x512xf32>
    %cst_312 = arith.constant 9.99999974E-6 : f32
    %591 = vector.broadcast %cst_312 : f32 to vector<1x512xf32>
    %592 = arith.addf %590, %591 : vector<1x512xf32>
    %593 = math.rsqrt %592 : vector<1x512xf32>
    %594 = arith.subf %565, %584 : vector<1x512xf32>
    %595 = arith.mulf %594, %593 : vector<1x512xf32>
    %596 = arith.subf %569, %584 : vector<1x512xf32>
    %597 = arith.mulf %596, %593 : vector<1x512xf32>
    %cst_313 = arith.constant 0.000000e+00 : f32
    %598 = vector.broadcast %cst_313 : f32 to vector<1x512xf32>
    %599 = arith.maximumf %595, %598 : vector<1x512xf32>
    %cst_314 = arith.constant 0.000000e+00 : f32
    %600 = vector.broadcast %cst_314 : f32 to vector<1x512xf32>
    %601 = arith.maximumf %597, %600 : vector<1x512xf32>
    %cst_315 = arith.constant 0.000000e+00 : f32
    %602 = vector.broadcast %cst_315 : f32 to vector<1x512xf32>
    %c0_316 = arith.constant 0 : index
    %c0_317 = arith.constant 0 : index
    %603 = vector.load %arg28[%c0_316, %c0_317] : memref<6x512xf32, #tpu.memory_space<vmem>>, vector<1x512xf32>
    tpu.vector_store %arg28[%c0_316, %c0_317], %602 {strides = array<i32>} : memref<6x512xf32, #tpu.memory_space<vmem>>, vector<1x512xf32>,
    %c1_318 = arith.constant 1 : index
    %c0_319 = arith.constant 0 : index
    %604 = vector.load %arg28[%c1_318, %c0_319] : memref<6x512xf32, #tpu.memory_space<vmem>>, vector<1x512xf32>
    tpu.vector_store %arg28[%c1_318, %c0_319], %599 {strides = array<i32>} : memref<6x512xf32, #tpu.memory_space<vmem>>, vector<1x512xf32>,
    %c2_320 = arith.constant 2 : index
    %c0_321 = arith.constant 0 : index
    %605 = vector.load %arg28[%c2_320, %c0_321] : memref<6x512xf32, #tpu.memory_space<vmem>>, vector<1x512xf32>
    tpu.vector_store %arg28[%c2_320, %c0_321], %602 {strides = array<i32>} : memref<6x512xf32, #tpu.memory_space<vmem>>, vector<1x512xf32>,
    %c3_322 = arith.constant 3 : index
    %c0_323 = arith.constant 0 : index
    %606 = vector.load %arg28[%c3_322, %c0_323] : memref<6x512xf32, #tpu.memory_space<vmem>>, vector<1x512xf32>
    tpu.vector_store %arg28[%c3_322, %c0_323], %602 {strides = array<i32>} : memref<6x512xf32, #tpu.memory_space<vmem>>, vector<1x512xf32>,
    %c4_324 = arith.constant 4 : index
    %c0_325 = arith.constant 0 : index
    %607 = vector.load %arg28[%c4_324, %c0_325] : memref<6x512xf32, #tpu.memory_space<vmem>>, vector<1x512xf32>
    tpu.vector_store %arg28[%c4_324, %c0_325], %601 {strides = array<i32>} : memref<6x512xf32, #tpu.memory_space<vmem>>, vector<1x512xf32>,
    %c5_326 = arith.constant 5 : index
    %c0_327 = arith.constant 0 : index
    %608 = vector.load %arg28[%c5_326, %c0_327] : memref<6x512xf32, #tpu.memory_space<vmem>>, vector<1x512xf32>
    tpu.vector_store %arg28[%c5_326, %c0_327], %602 {strides = array<i32>} : memref<6x512xf32, #tpu.memory_space<vmem>>, vector<1x512xf32>,
    %cst_328 = arith.constant dense<0.000000e+00> : vector<512xf32>
    %609 = vector.multi_reduction <add>, %566, %cst_328 [0] : vector<1x512xf32> to vector<512xf32>
    %610 = vector.shape_cast %609 : vector<512xf32> to vector<1x512xf32>
    %611 = arith.mulf %566, %566 : vector<1x512xf32>
    %cst_329 = arith.constant dense<0.000000e+00> : vector<512xf32>
    %612 = vector.multi_reduction <add>, %611, %cst_329 [0] : vector<1x512xf32> to vector<512xf32>
    %613 = vector.shape_cast %612 : vector<512xf32> to vector<1x512xf32>
    %cst_330 = arith.constant dense<0.000000e+00> : vector<512xf32>
    %614 = vector.multi_reduction <add>, %570, %cst_330 [0] : vector<1x512xf32> to vector<512xf32>
    %615 = vector.shape_cast %614 : vector<512xf32> to vector<1x512xf32>
    %616 = arith.addf %610, %615 : vector<1x512xf32>
    %617 = arith.mulf %570, %570 : vector<1x512xf32>
    %cst_331 = arith.constant dense<0.000000e+00> : vector<512xf32>
    %618 = vector.multi_reduction <add>, %617, %cst_331 [0] : vector<1x512xf32> to vector<512xf32>
    %619 = vector.shape_cast %618 : vector<512xf32> to vector<1x512xf32>
    %620 = arith.addf %613, %619 : vector<1x512xf32>
    %cst_332 = arith.constant 2.000000e+00 : f32
    %621 = vector.broadcast %cst_332 : f32 to vector<1x512xf32>
    %622 = arith.divf %616, %621 : vector<1x512xf32>
    %cst_333 = arith.constant 2.000000e+00 : f32
    %623 = vector.broadcast %cst_333 : f32 to vector<1x512xf32>
    %624 = arith.divf %620, %623 : vector<1x512xf32>
    %625 = arith.mulf %622, %622 : vector<1x512xf32>
    %626 = arith.subf %624, %625 : vector<1x512xf32>
    %cst_334 = arith.constant 0.000000e+00 : f32
    %627 = vector.broadcast %cst_334 : f32 to vector<1x512xf32>
    %628 = arith.maximumf %626, %627 : vector<1x512xf32>
    %cst_335 = arith.constant 9.99999974E-6 : f32
    %629 = vector.broadcast %cst_335 : f32 to vector<1x512xf32>
    %630 = arith.addf %628, %629 : vector<1x512xf32>
    %631 = math.rsqrt %630 : vector<1x512xf32>
    %632 = arith.subf %566, %622 : vector<1x512xf32>
    %633 = arith.mulf %632, %631 : vector<1x512xf32>
    %634 = arith.subf %570, %622 : vector<1x512xf32>
    %635 = arith.mulf %634, %631 : vector<1x512xf32>
    %c0_336 = arith.constant 0 : index
    %c0_337 = arith.constant 0 : index
    %636 = vector.load %arg28[%c0_336, %c0_337] : memref<6x512xf32, #tpu.memory_space<vmem>>, vector<6x512xf32>
    %637 = arith.truncf %636 : vector<6x512xf32> to vector<6x512xbf16>
    %c0_338 = arith.constant 0 : index
    %c0_339 = arith.constant 0 : index
    %c0_340 = arith.constant 0 : index
    %638 = vector.load %arg16[%c0_338, %c0_339, %c0_340] : memref<3x512x512xbf16, #tpu.memory_space<vmem>>, vector<1x512x512xbf16>
    %639 = vector.shape_cast %638 : vector<1x512x512xbf16> to vector<512x512xbf16>
    %cst_341 = arith.constant dense<0.000000e+00> : vector<6x512xf32>
    %640 = tpu.matmul %637, %639, %cst_341 {dimension_numbers = #tpu.dot_dimension_numbers<[1], [0], [0], [1], [0, 0, 1, 1], [], []>} : vector<6x512xbf16>, vector<512x512xbf16>, vector<6x512xf32> -> vector<6x512xf32>
    %c1_342 = arith.constant 1 : index
    %c0_343 = arith.constant 0 : index
    %c0_344 = arith.constant 0 : index
    %641 = vector.load %arg16[%c1_342, %c0_343, %c0_344] : memref<3x512x512xbf16, #tpu.memory_space<vmem>>, vector<1x512x512xbf16>
    %642 = vector.shape_cast %641 : vector<1x512x512xbf16> to vector<512x512xbf16>
    %cst_345 = arith.constant dense<0.000000e+00> : vector<6x512xf32>
    %643 = tpu.matmul %637, %642, %cst_345 {dimension_numbers = #tpu.dot_dimension_numbers<[1], [0], [0], [1], [0, 0, 1, 1], [], []>} : vector<6x512xbf16>, vector<512x512xbf16>, vector<6x512xf32> -> vector<6x512xf32>
    %c2_346 = arith.constant 2 : index
    %c0_347 = arith.constant 0 : index
    %c0_348 = arith.constant 0 : index
    %644 = vector.load %arg16[%c2_346, %c0_347, %c0_348] : memref<3x512x512xbf16, #tpu.memory_space<vmem>>, vector<1x512x512xbf16>
    %645 = vector.shape_cast %644 : vector<1x512x512xbf16> to vector<512x512xbf16>
    %cst_349 = arith.constant dense<0.000000e+00> : vector<6x512xf32>
    %646 = tpu.matmul %637, %645, %cst_349 {dimension_numbers = #tpu.dot_dimension_numbers<[1], [0], [0], [1], [0, 0, 1, 1], [], []>} : vector<6x512xbf16>, vector<512x512xbf16>, vector<6x512xf32> -> vector<6x512xf32>
    %647 = vector.extract_strided_slice %640 {offsets = [0, 0], sizes = [1, 512], strides = [1, 1]} : vector<6x512xf32> to vector<1x512xf32>
    %648 = vector.extract_strided_slice %643 {offsets = [1, 0], sizes = [1, 512], strides = [1, 1]} : vector<6x512xf32> to vector<1x512xf32>
    %649 = arith.addf %647, %648 : vector<1x512xf32>
    %650 = vector.extract_strided_slice %646 {offsets = [2, 0], sizes = [1, 512], strides = [1, 1]} : vector<6x512xf32> to vector<1x512xf32>
    %651 = arith.addf %649, %650 : vector<1x512xf32>
    %652 = vector.extract_strided_slice %640 {offsets = [3, 0], sizes = [1, 512], strides = [1, 1]} : vector<6x512xf32> to vector<1x512xf32>
    %653 = vector.extract_strided_slice %643 {offsets = [4, 0], sizes = [1, 512], strides = [1, 1]} : vector<6x512xf32> to vector<1x512xf32>
    %654 = arith.addf %652, %653 : vector<1x512xf32>
    %655 = vector.extract_strided_slice %646 {offsets = [5, 0], sizes = [1, 512], strides = [1, 1]} : vector<6x512xf32> to vector<1x512xf32>
    %656 = arith.addf %654, %655 : vector<1x512xf32>
    %cst_350 = arith.constant dense<0.000000e+00> : vector<512xf32>
    %657 = vector.multi_reduction <add>, %651, %cst_350 [0] : vector<1x512xf32> to vector<512xf32>
    %658 = vector.shape_cast %657 : vector<512xf32> to vector<1x512xf32>
    %659 = arith.mulf %651, %651 : vector<1x512xf32>
    %cst_351 = arith.constant dense<0.000000e+00> : vector<512xf32>
    %660 = vector.multi_reduction <add>, %659, %cst_351 [0] : vector<1x512xf32> to vector<512xf32>
    %661 = vector.shape_cast %660 : vector<512xf32> to vector<1x512xf32>
    %cst_352 = arith.constant dense<0.000000e+00> : vector<512xf32>
    %662 = vector.multi_reduction <add>, %656, %cst_352 [0] : vector<1x512xf32> to vector<512xf32>
    %663 = vector.shape_cast %662 : vector<512xf32> to vector<1x512xf32>
    %664 = arith.addf %658, %663 : vector<1x512xf32>
    %665 = arith.mulf %656, %656 : vector<1x512xf32>
    %cst_353 = arith.constant dense<0.000000e+00> : vector<512xf32>
    %666 = vector.multi_reduction <add>, %665, %cst_353 [0] : vector<1x512xf32> to vector<512xf32>
    %667 = vector.shape_cast %666 : vector<512xf32> to vector<1x512xf32>
    %668 = arith.addf %661, %667 : vector<1x512xf32>
    %cst_354 = arith.constant 2.000000e+00 : f32
    %669 = vector.broadcast %cst_354 : f32 to vector<1x512xf32>
    %670 = arith.divf %664, %669 : vector<1x512xf32>
    %cst_355 = arith.constant 2.000000e+00 : f32
    %671 = vector.broadcast %cst_355 : f32 to vector<1x512xf32>
    %672 = arith.divf %668, %671 : vector<1x512xf32>
    %673 = arith.mulf %670, %670 : vector<1x512xf32>
    %674 = arith.subf %672, %673 : vector<1x512xf32>
    %cst_356 = arith.constant 0.000000e+00 : f32
    %675 = vector.broadcast %cst_356 : f32 to vector<1x512xf32>
    %676 = arith.maximumf %674, %675 : vector<1x512xf32>
    %cst_357 = arith.constant 9.99999974E-6 : f32
    %677 = vector.broadcast %cst_357 : f32 to vector<1x512xf32>
    %678 = arith.addf %676, %677 : vector<1x512xf32>
    %679 = math.rsqrt %678 : vector<1x512xf32>
    %680 = arith.subf %651, %670 : vector<1x512xf32>
    %681 = arith.mulf %680, %679 : vector<1x512xf32>
    %682 = arith.subf %656, %670 : vector<1x512xf32>
    %683 = arith.mulf %682, %679 : vector<1x512xf32>
    %684 = arith.addf %681, %633 : vector<1x512xf32>
    %cst_358 = arith.constant 0.000000e+00 : f32
    %685 = vector.broadcast %cst_358 : f32 to vector<1x512xf32>
    %686 = arith.maximumf %684, %685 : vector<1x512xf32>
    %687 = arith.addf %683, %635 : vector<1x512xf32>
    %cst_359 = arith.constant 0.000000e+00 : f32
    %688 = vector.broadcast %cst_359 : f32 to vector<1x512xf32>
    %689 = arith.maximumf %687, %688 : vector<1x512xf32>
    %cst_360 = arith.constant dense<0.000000e+00> : vector<512xf32>
    %690 = vector.multi_reduction <add>, %686, %cst_360 [0] : vector<1x512xf32> to vector<512xf32>
    %691 = vector.shape_cast %690 : vector<512xf32> to vector<1x512xf32>
    %cst_361 = arith.constant 1.000000e+00 : f32
    %692 = vector.broadcast %cst_361 : f32 to vector<1x512xf32>
    %693 = arith.divf %691, %692 : vector<1x512xf32>
    %c0_362 = arith.constant 0 : index
    %c0_363 = arith.constant 0 : index
    %694 = vector.load %arg29[%c0_362, %c0_363] : memref<2x512xf32, #tpu.memory_space<vmem>>, vector<1x512xf32>
    tpu.vector_store %arg29[%c0_362, %c0_363], %693 {strides = array<i32>} : memref<2x512xf32, #tpu.memory_space<vmem>>, vector<1x512xf32>,
    %cst_364 = arith.constant dense<0.000000e+00> : vector<512xf32>
    %695 = vector.multi_reduction <add>, %689, %cst_364 [0] : vector<1x512xf32> to vector<512xf32>
    %696 = vector.shape_cast %695 : vector<512xf32> to vector<1x512xf32>
    %cst_365 = arith.constant 1.000000e+00 : f32
    %697 = vector.broadcast %cst_365 : f32 to vector<1x512xf32>
    %698 = arith.divf %696, %697 : vector<1x512xf32>
    %c1_366 = arith.constant 1 : index
    %c0_367 = arith.constant 0 : index
    %699 = vector.load %arg29[%c1_366, %c0_367] : memref<2x512xf32, #tpu.memory_space<vmem>>, vector<1x512xf32>
    tpu.vector_store %arg29[%c1_366, %c0_367], %698 {strides = array<i32>} : memref<2x512xf32, #tpu.memory_space<vmem>>, vector<1x512xf32>,
    %c0_368 = arith.constant 0 : index
    %c0_369 = arith.constant 0 : index
    %700 = vector.load %arg29[%c0_368, %c0_369] : memref<2x512xf32, #tpu.memory_space<vmem>>, vector<2x512xf32>
    %c0_370 = arith.constant 0 : index
    %c0_371 = arith.constant 0 : index
    %701 = vector.load %arg17[%c0_370, %c0_371] : memref<512x2xf32, #tpu.memory_space<vmem>>, vector<512x2xf32>
    %cst_372 = arith.constant dense<0.000000e+00> : vector<2x2xf32>
    %702 = tpu.matmul %700, %701, %cst_372 {dimension_numbers = #tpu.dot_dimension_numbers<[1], [0], [0], [1], [0, 0, 1, 1], [], []>} : vector<2x512xf32>, vector<512x2xf32>, vector<2x2xf32> -> vector<2x2xf32>
    %c0_373 = arith.constant 0 : index
    %c0_374 = arith.constant 0 : index
    %703 = vector.load %arg18[%c0_373, %c0_374] : memref<1x2xf32, #tpu.memory_space<vmem>>, vector<1x2xf32>
    %704 = vector.broadcast %703 : vector<1x2xf32> to vector<2x2xf32>
    %705 = arith.addf %702, %704 : vector<2x2xf32>
    %706 = arith.mulf %705, %705 : vector<2x2xf32>
    %cst_375 = arith.constant dense<0.000000e+00> : vector<2xf32>
    %707 = vector.multi_reduction <add>, %706, %cst_375 [1] : vector<2x2xf32> to vector<2xf32>
    %708 = vector.shape_cast %707 : vector<2xf32> to vector<2x1xf32>
    %cst_376 = arith.constant 9.99999996E-13 : f32
    %709 = vector.broadcast %cst_376 : f32 to vector<2x1xf32>
    %710 = arith.addf %708, %709 : vector<2x1xf32>
    %711 = math.rsqrt %710 : vector<2x1xf32>
    %712 = vector.broadcast %711 : vector<2x1xf32> to vector<2x2xf32>
    %713 = arith.mulf %705, %712 : vector<2x2xf32>
    %c0_377 = arith.constant 0 : index
    %c0_378 = arith.constant 0 : index
    %714 = vector.load %arg19[%c0_377, %c0_378] : memref<2x2xf32, #tpu.memory_space<vmem>>, vector<2x2xf32>
    tpu.vector_store %arg19[%c0_377, %c0_378], %713 {strides = array<i32>} : memref<2x2xf32, #tpu.memory_space<vmem>>, vector<2x2xf32>,
    return
  }
  func.func @transform_0(%arg0: i32) -> (i32, i32) {
    %c0_i32 = arith.constant 0 : i32
    %c0_i32_0 = arith.constant 0 : i32
    %c0_i32_1 = arith.constant 0 : i32
    return %c0_i32, %c0_i32_0 : i32, i32
  }
  func.func @transform_1(%arg0: i32) -> (i32, i32) {
    %c0_i32 = arith.constant 0 : i32
    %c0_i32_0 = arith.constant 0 : i32
    %c0_i32_1 = arith.constant 0 : i32
    return %c0_i32, %c0_i32_0 : i32, i32
  }
  func.func @transform_2(%arg0: i32) -> (i32, i32, i32) {
    %c0_i32 = arith.constant 0 : i32
    %c0_i32_0 = arith.constant 0 : i32
    %c0_i32_1 = arith.constant 0 : i32
    %c0_i32_2 = arith.constant 0 : i32
    return %c0_i32, %c0_i32_0, %c0_i32_1 : i32, i32, i32
  }
  func.func @transform_3(%arg0: i32) -> (i32, i32, i32) {
    %c0_i32 = arith.constant 0 : i32
    %c0_i32_0 = arith.constant 0 : i32
    %c0_i32_1 = arith.constant 0 : i32
    %c0_i32_2 = arith.constant 0 : i32
    return %c0_i32, %c0_i32_0, %c0_i32_1 : i32, i32, i32
  }
  func.func @transform_4(%arg0: i32) -> (i32, i32) {
    %c0_i32 = arith.constant 0 : i32
    %c0_i32_0 = arith.constant 0 : i32
    %c0_i32_1 = arith.constant 0 : i32
    return %c0_i32, %c0_i32_0 : i32, i32
  }
  func.func @transform_5(%arg0: i32) -> (i32, i32) {
    %c0_i32 = arith.constant 0 : i32
    %c0_i32_0 = arith.constant 0 : i32
    %c0_i32_1 = arith.constant 0 : i32
    return %c0_i32, %c0_i32_0 : i32, i32
  }
  func.func @transform_6(%arg0: i32) -> (i32, i32) {
    %c0_i32 = arith.constant 0 : i32
    %c0_i32_0 = arith.constant 0 : i32
    %c0_i32_1 = arith.constant 0 : i32
    return %c0_i32, %c0_i32_0 : i32, i32
  }
  func.func @transform_7(%arg0: i32) -> (i32, i32, i32) {
    %c0_i32 = arith.constant 0 : i32
    %c0_i32_0 = arith.constant 0 : i32
    %c0_i32_1 = arith.constant 0 : i32
    %c0_i32_2 = arith.constant 0 : i32
    return %c0_i32, %c0_i32_0, %c0_i32_1 : i32, i32, i32
  }
  func.func @transform_8(%arg0: i32) -> (i32, i32) {
    %c0_i32 = arith.constant 0 : i32
    %c0_i32_0 = arith.constant 0 : i32
    %c0_i32_1 = arith.constant 0 : i32
    return %c0_i32, %c0_i32_0 : i32, i32
  }
  func.func @transform_9(%arg0: i32) -> (i32, i32) {
    %c0_i32 = arith.constant 0 : i32
    %c0_i32_0 = arith.constant 0 : i32
    %c0_i32_1 = arith.constant 0 : i32
    return %c0_i32, %c0_i32_0 : i32, i32
  }
  func.func @transform_10(%arg0: i32) -> (i32, i32) {
    %c0_i32 = arith.constant 0 : i32
    %c0_i32_0 = arith.constant 0 : i32
    %c0_i32_1 = arith.constant 0 : i32
    return %c0_i32, %c0_i32_0 : i32, i32
  }
  func.func @transform_11(%arg0: i32) -> (i32, i32, i32) {
    %c0_i32 = arith.constant 0 : i32
    %c0_i32_0 = arith.constant 0 : i32
    %c0_i32_1 = arith.constant 0 : i32
    %c0_i32_2 = arith.constant 0 : i32
    return %c0_i32, %c0_i32_0, %c0_i32_1 : i32, i32, i32
  }
  func.func @transform_12(%arg0: i32) -> (i32, i32) {
    %c0_i32 = arith.constant 0 : i32
    %c0_i32_0 = arith.constant 0 : i32
    %c0_i32_1 = arith.constant 0 : i32
    return %c0_i32, %c0_i32_0 : i32, i32
  }
  func.func @transform_13(%arg0: i32) -> (i32, i32) {
    %c0_i32 = arith.constant 0 : i32
    %c0_i32_0 = arith.constant 0 : i32
    %c0_i32_1 = arith.constant 0 : i32
    return %c0_i32, %c0_i32_0 : i32, i32
  }
  func.func @transform_14(%arg0: i32) -> (i32, i32) {
    %c0_i32 = arith.constant 0 : i32
    %c0_i32_0 = arith.constant 0 : i32
    %c0_i32_1 = arith.constant 0 : i32
    return %c0_i32, %c0_i32_0 : i32, i32
  }
  func.func @transform_15(%arg0: i32) -> (i32, i32, i32) {
    %c0_i32 = arith.constant 0 : i32
    %c0_i32_0 = arith.constant 0 : i32
    %c0_i32_1 = arith.constant 0 : i32
    %c0_i32_2 = arith.constant 0 : i32
    return %c0_i32, %c0_i32_0, %c0_i32_1 : i32, i32, i32
  }
  func.func @transform_16(%arg0: i32) -> (i32, i32) {
    %c0_i32 = arith.constant 0 : i32
    %c0_i32_0 = arith.constant 0 : i32
    %c0_i32_1 = arith.constant 0 : i32
    return %c0_i32, %c0_i32_0 : i32, i32
  }
  func.func @transform_17(%arg0: i32) -> (i32, i32) {
    %c0_i32 = arith.constant 0 : i32
    %c0_i32_0 = arith.constant 0 : i32
    %c0_i32_1 = arith.constant 0 : i32
    return %c0_i32, %c0_i32_0 : i32, i32
  }
  func.func @transform_18(%arg0: i32) -> (i32, i32) {
    %c0_i32 = arith.constant 0 : i32
    %c0_i32_0 = arith.constant 0 : i32
    %c0_i32_1 = arith.constant 0 : i32
    return %c0_i32, %c0_i32_0 : i32, i32
  }
}

</mosaic_0001>

<llo_original>
// kernel: resnet_forward.1
$region0: #{resnet_forward.1}
  #allocation0 [shape = 'u32[]', space=smem, size = 0x4, offset = 0x4, fixed_abs, tag = 'smem constant byte address 0x4 - core index']
  #allocation1 [shape = 'u32[144,128]{1,0:T(1,128)}', space=vmem, size = 0x12000, scoped, tag = 'internal scratch']
  #allocation2 [shape = 'f32[16,28]{1,0:T(8,128)}', space=vmem, size = 0x2000, scoped, tag = 'scratch operand']
  #allocation3 [shape = 'f32[20,64]{1,0:T(8,128)}', space=vmem, size = 0x3000, scoped, tag = 'scratch operand']
  #allocation4 [shape = 'f32[20,64]{1,0:T(8,128)}', space=vmem, size = 0x3000, scoped, tag = 'scratch operand']
  #allocation5 [shape = 'f32[10,128]{1,0:T(8,128)}', space=vmem, size = 0x2000, scoped, tag = 'scratch operand']
  #allocation6 [shape = 'f32[12,128]{1,0:T(8,128)}', space=vmem, size = 0x2000, scoped, tag = 'scratch operand']
  #allocation7 [shape = 'f32[6,256]{1,0:T(8,128)}', space=vmem, size = 0x2000, scoped, tag = 'scratch operand']
  #allocation8 [shape = 'f32[8,256]{1,0:T(8,128)}', space=vmem, size = 0x2000, scoped, tag = 'scratch operand']
  #allocation9 [shape = 'f32[4,512]{1,0:T(4,128)}', space=vmem, size = 0x2000, scoped, tag = 'scratch operand']
  #allocation10 [shape = 'f32[6,512]{1,0:T(8,128)}', space=vmem, size = 0x4000, scoped, tag = 'scratch operand']
  #allocation11 [shape = 'f32[2,512]{1,0:T(2,128)}', space=vmem, size = 0x1000, scoped, tag = 'scratch operand']
  %s0 = inlined_call_operand.vmem [shape: f32[16,8], index: 0, kind: input, shape index: {}]
  %s1 = inlined_call_operand.hbm [shape: bf16[28,64], index: 1, kind: input, shape index: {}]
  %s2 = inlined_call_operand.hbm [shape: bf16[3,64,64], index: 2, kind: input, shape index: {}]
  %s3 = inlined_call_operand.hbm [shape: bf16[3,64,64], index: 3, kind: input, shape index: {}]
  %s4 = inlined_call_operand.hbm [shape: bf16[128,128], index: 4, kind: input, shape index: {}]
  %s5 = inlined_call_operand.hbm [shape: bf16[64,128], index: 5, kind: input, shape index: {}]
  %s6 = inlined_call_operand.hbm [shape: bf16[64,128], index: 6, kind: input, shape index: {}]
  %s7 = inlined_call_operand.hbm [shape: bf16[3,128,128], index: 7, kind: input, shape index: {}]
  %s8 = inlined_call_operand.hbm [shape: bf16[256,256], index: 8, kind: input, shape index: {}]
  %s9 = inlined_call_operand.hbm [shape: bf16[128,256], index: 9, kind: input, shape index: {}]
  %s10 = inlined_call_operand.hbm [shape: bf16[128,256], index: 10, kind: input, shape index: {}]
  %s11 = inlined_call_operand.hbm [shape: bf16[3,256,256], index: 11, kind: input, shape index: {}]
  %s12 = inlined_call_operand.hbm [shape: bf16[512,512], index: 12, kind: input, shape index: {}]
  %s13 = inlined_call_operand.hbm [shape: bf16[256,512], index: 13, kind: input, shape index: {}]
  %s14 = inlined_call_operand.hbm [shape: bf16[256,512], index: 14, kind: input, shape index: {}]
  %s15 = inlined_call_operand.hbm [shape: bf16[3,512,512], index: 15, kind: input, shape index: {}]
  %s16 = inlined_call_operand.vmem [shape: f32[512,2], index: 16, kind: input, shape index: {}]
  %s17 = inlined_call_operand.hbm [shape: f32[1,2], index: 17, kind: input, shape index: {}]
  %s18 = inlined_call_operand.hbm [shape: f32[2,2], index: 18, kind: output, shape index: {}]
  %s19 = sld [smem:[#allocation0]]
  $region146: #{resnet_forward.1} parent=0
    _
  %s21 = ssub.s32 1, %s19
  %s22 = scalar_select 0, %s21, %s19
  $region1: #{resnet_forward.1} parent=0
    #allocation12 [shape = 'u8[8192]{0}', space=vmem, size = 0x2000, scoped, tag = 'input window, operand 1, single buffered']
    #allocation13 [shape = 's32[1]{0}', space=sflag, size = 0x4, scoped, tag = 'scoped memory for resnet_forward.1']
    #allocation14 [shape = 's32[1]{0}', space=sflag, size = 0x4, scoped, tag = 'scoped memory for resnet_forward.1']
    #allocation15 [shape = 'u8[49152]{0}', space=vmem, size = 0xc000, scoped, tag = 'input window, operand 2, single buffered']
    #allocation16 [shape = 's32[1]{0}', space=sflag, size = 0x4, scoped, tag = 'scoped memory for resnet_forward.1']
    #allocation17 [shape = 'u8[49152]{0}', space=vmem, size = 0xc000, scoped, tag = 'input window, operand 3, single buffered']
    #allocation18 [shape = 'u8[32768]{0}', space=vmem, size = 0x8000, scoped, tag = 'input window, operand 4, single buffered']
    #allocation19 [shape = 's32[1]{0}', space=sflag, size = 0x4, scoped, tag = 'scoped memory for resnet_forward.1']
    #allocation20 [shape = 'u8[16384]{0}', space=vmem, size = 0x4000, scoped, tag = 'input window, operand 5, single buffered']
    #allocation21 [shape = 'u8[16384]{0}', space=vmem, size = 0x4000, scoped, tag = 'input window, operand 6, single buffered']
    #allocation22 [shape = 's32[1]{0}', space=sflag, size = 0x4, scoped, tag = 'scoped memory for resnet_forward.1']
    #allocation23 [shape = 'u8[98304]{0}', space=vmem, size = 0x18000, scoped, tag = 'input window, operand 7, single buffered']
    #allocation24 [shape = 'u8[131072]{0}', space=vmem, size = 0x20000, scoped, tag = 'input window, operand 8, single buffered']
    #allocation25 [shape = 's32[1]{0}', space=sflag, size = 0x4, scoped, tag = 'scoped memory for resnet_forward.1']
    #allocation26 [shape = 'u8[65536]{0}', space=vmem, size = 0x10000, scoped, tag = 'input window, operand 9, single buffered']
    #allocation27 [shape = 'u8[65536]{0}', space=vmem, size = 0x10000, scoped, tag = 'input window, operand 10, single buffered']
    #allocation28 [shape = 's32[1]{0}', space=sflag, size = 0x4, scoped, tag = 'scoped memory for resnet_forward.1']
    #allocation29 [shape = 'u8[393216]{0}', space=vmem, size = 0x60000, scoped, tag = 'input window, operand 11, single buffered']
    #allocation30 [shape = 'u8[524288]{0}', space=vmem, size = 0x80000, scoped, tag = 'input window, operand 12, single buffered']
    #allocation31 [shape = 's32[1]{0}', space=sflag, size = 0x4, scoped, tag = 'scoped memory for resnet_forward.1']
    #allocation32 [shape = 'u8[262144]{0}', space=vmem, size = 0x40000, scoped, tag = 'input window, operand 13, single buffered']
    #allocation33 [shape = 'u8[262144]{0}', space=vmem, size = 0x40000, scoped, tag = 'input window, operand 14, single buffered']
    #allocation34 [shape = 's32[1]{0}', space=sflag, size = 0x4, scoped, tag = 'scoped memory for resnet_forward.1']
    #allocation35 [shape = 'u8[1572864]{0}', space=vmem, size = 0x180000, scoped, tag = 'input window, operand 15, single buffered']
    #allocation36 [shape = 'u8[512]{0}', space=vmem, size = 0x400, scoped, tag = 'input window, operand 17, single buffered']
    #allocation37 [shape = 's32[1]{0}', space=sflag, size = 0x4, scoped, tag = 'scoped memory for resnet_forward.1']
    #allocation38 [shape = 'u8[1024]{0}', space=vmem, size = 0x400, scoped, tag = 'output window, operand 0, single buffered']
    %23 = vsyncpa [#allocation13], 0
    %24 = vsyncpa [#allocation16], 0
    %25 = vsyncpa [#allocation19], 0
    %26 = vsyncpa [#allocation22], 0
    %27 = vsyncpa [#allocation25], 0
    %28 = vsyncpa [#allocation28], 0
    %29 = vsyncpa [#allocation31], 0
    %30 = vsyncpa [#allocation34], 0
    %31 = vsyncpa [#allocation37], 0
    %32 = vsyncpa [#allocation14], 0
    // Predicated region
    $region2: #{resnet_forward.1} parent=1 // pred_check
      _
    $region3: #{resnet_forward.1} parent=1 // pred_check_branch
      %34 = sbr.rel (0) target = $region5
    $region4: #{resnet_forward.1} parent=1 // pred_region
      _
    $region5: #{resnet_forward.1} parent=1 // pred_fallthru
      _
    // Predicated region
    $region6: #{resnet_forward.1} parent=1 // pred_check
      _
    $region7: #{resnet_forward.1} parent=1 // pred_check_branch
      %36 = sbr.rel (0) target = $region9
    $region8: #{resnet_forward.1} parent=1 // pred_region
      %s38 = ssub.s32 256, 256
      %39 = vsyncadd [#allocation13], %s38
      %s40 = sshll.u32 [#allocation12], 4
      %s41 = int_to_ptr.vmem [resolvable:$true] %s40
      %46 = dma.hbm_to_vmem [thread:$0]  %s1, 256, %s41, [#allocation13], 64, 64, 4
    $region9: #{resnet_forward.1} parent=1 // pred_fallthru
      _
    // Predicated region
    $region10: #{resnet_forward.1} parent=1 // pred_check
      _
    $region11: #{resnet_forward.1} parent=1 // pred_check_branch
      %48 = sbr.rel (0) target = $region13
    $region12: #{resnet_forward.1} parent=1 // pred_region
      %s50 = ssub.s32 1536, 1536
      %51 = vsyncadd [#allocation16], %s50
      %s52 = sshll.u32 [#allocation15], 4
      %s53 = int_to_ptr.vmem [resolvable:$true] %s52
      %58 = dma.hbm_to_vmem [thread:$0]  %s2, 1536, %s53, [#allocation16], 64, 64, 4
    $region13: #{resnet_forward.1} parent=1 // pred_fallthru
      _
    // Predicated region
    $region14: #{resnet_forward.1} parent=1 // pred_check
      _
    $region15: #{resnet_forward.1} parent=1 // pred_check_branch
      %60 = sbr.rel (0) target = $region17
    $region16: #{resnet_forward.1} parent=1 // pred_region
      %s62 = ssub.s32 1536, 1536
      %63 = vsyncadd [#allocation16], %s62
      %s64 = sshll.u32 [#allocation17], 4
      %s65 = int_to_ptr.vmem [resolvable:$true] %s64
      %70 = dma.hbm_to_vmem [thread:$0]  %s3, 1536, %s65, [#allocation16], 64, 64, 4
    $region17: #{resnet_forward.1} parent=1 // pred_fallthru
      _
    // Predicated region
    $region18: #{resnet_forward.1} parent=1 // pred_check
      _
    $region19: #{resnet_forward.1} parent=1 // pred_check_branch
      %72 = sbr.rel (0) target = $region21
    $region20: #{resnet_forward.1} parent=1 // pred_region
      %s74 = ssub.s32 1024, 1024
      %75 = vsyncadd [#allocation19], %s74
      %s76 = sshll.u32 [#allocation18], 4
      %s77 = int_to_ptr.vmem [resolvable:$true] %s76
      %82 = dma.hbm_to_vmem [thread:$0]  %s4, 1024, %s77, [#allocation19], 64, 64, 4
    $region21: #{resnet_forward.1} parent=1 // pred_fallthru
      _
    // Predicated region
    $region22: #{resnet_forward.1} parent=1 // pred_check
      _
    $region23: #{resnet_forward.1} parent=1 // pred_check_branch
      %84 = sbr.rel (0) target = $region25
    $region24: #{resnet_forward.1} parent=1 // pred_region
      %s86 = ssub.s32 512, 512
      %87 = vsyncadd [#allocation19], %s86
      %s88 = sshll.u32 [#allocation20], 4
      %s89 = int_to_ptr.vmem [resolvable:$true] %s88
      %94 = dma.hbm_to_vmem [thread:$0]  %s5, 512, %s89, [#allocation19], 64, 64, 4
    $region25: #{resnet_forward.1} parent=1 // pred_fallthru
      _
    // Predicated region
    $region26: #{resnet_forward.1} parent=1 // pred_check
      _
    $region27: #{resnet_forward.1} parent=1 // pred_check_branch
      %96 = sbr.rel (0) target = $region29
    $region28: #{resnet_forward.1} parent=1 // pred_region
      %s98 = ssub.s32 512, 512
      %99 = vsyncadd [#allocation22], %s98
      %s100 = sshll.u32 [#allocation21], 4
      %s101 = int_to_ptr.vmem [resolvable:$true] %s100
      %106 = dma.hbm_to_vmem [thread:$0]  %s6, 512, %s101, [#allocation22], 64, 64, 4
    $region29: #{resnet_forward.1} parent=1 // pred_fallthru
      _
    // Predicated region
    $region30: #{resnet_forward.1} parent=1 // pred_check
      _
    $region31: #{resnet_forward.1} parent=1 // pred_check_branch
      %108 = sbr.rel (0) target = $region33
    $region32: #{resnet_forward.1} parent=1 // pred_region
      %s110 = ssub.s32 3072, 3072
      %111 = vsyncadd [#allocation22], %s110
      %s112 = sshll.u32 [#allocation23], 4
      %s113 = int_to_ptr.vmem [resolvable:$true] %s112
      %118 = dma.hbm_to_vmem [thread:$0]  %s7, 3072, %s113, [#allocation22], 64, 64, 4
    $region33: #{resnet_forward.1} parent=1 // pred_fallthru
      _
    // Predicated region
    $region34: #{resnet_forward.1} parent=1 // pred_check
      _
    $region35: #{resnet_forward.1} parent=1 // pred_check_branch
      %120 = sbr.rel (0) target = $region37
    $region36: #{resnet_forward.1} parent=1 // pred_region
      %s122 = ssub.s32 4096, 4096
      %123 = vsyncadd [#allocation25], %s122
      %s124 = sshll.u32 [#allocation24], 4
      %s125 = int_to_ptr.vmem [resolvable:$true] %s124
      %130 = dma.hbm_to_vmem [thread:$0]  %s8, 4096, %s125, [#allocation25], 128, 128, 8
    $region37: #{resnet_forward.1} parent=1 // pred_fallthru
      _
    // Predicated region
    $region38: #{resnet_forward.1} parent=1 // pred_check
      _
    $region39: #{resnet_forward.1} parent=1 // pred_check_branch
      %132 = sbr.rel (0) target = $region41
    $region40: #{resnet_forward.1} parent=1 // pred_region
      %s134 = ssub.s32 2048, 2048
      %135 = vsyncadd [#allocation25], %s134
      %s136 = sshll.u32 [#allocation26], 4
      %s137 = int_to_ptr.vmem [resolvable:$true] %s136
      %142 = dma.hbm_to_vmem [thread:$0]  %s9, 2048, %s137, [#allocation25], 128, 128, 8
    $region41: #{resnet_forward.1} parent=1 // pred_fallthru
      _
    // Predicated region
    $region42: #{resnet_forward.1} parent=1 // pred_check
      _
    $region43: #{resnet_forward.1} parent=1 // pred_check_branch
      %144 = sbr.rel (0) target = $region45
    $region44: #{resnet_forward.1} parent=1 // pred_region
      %s146 = ssub.s32 2048, 2048
      %147 = vsyncadd [#allocation28], %s146
      %s148 = sshll.u32 [#allocation27], 4
      %s149 = int_to_ptr.vmem [resolvable:$true] %s148
      %154 = dma.hbm_to_vmem [thread:$0]  %s10, 2048, %s149, [#allocation28], 128, 128, 8
    $region45: #{resnet_forward.1} parent=1 // pred_fallthru
      _
    // Predicated region
    $region46: #{resnet_forward.1} parent=1 // pred_check
      _
    $region47: #{resnet_forward.1} parent=1 // pred_check_branch
      %156 = sbr.rel (0) target = $region49
    $region48: #{resnet_forward.1} parent=1 // pred_region
      %s158 = ssub.s32 12288, 12288
      %159 = vsyncadd [#allocation28], %s158
      %s160 = sshll.u32 [#allocation29], 4
      %s161 = int_to_ptr.vmem [resolvable:$true] %s160
      %166 = dma.hbm_to_vmem [thread:$0]  %s11, 12288, %s161, [#allocation28], 128, 128, 8
    $region49: #{resnet_forward.1} parent=1 // pred_fallthru
      _
    // Predicated region
    $region50: #{resnet_forward.1} parent=1 // pred_check
      _
    $region51: #{resnet_forward.1} parent=1 // pred_check_branch
      %168 = sbr.rel (0) target = $region53
    $region52: #{resnet_forward.1} parent=1 // pred_region
      %s170 = ssub.s32 16384, 16384
      %171 = vsyncadd [#allocation31], %s170
      %s172 = sshll.u32 [#allocation30], 4
      %s173 = int_to_ptr.vmem [resolvable:$true] %s172
      %178 = dma.hbm_to_vmem [thread:$0]  %s12, 16384, %s173, [#allocation31], 256, 256, 16
    $region53: #{resnet_forward.1} parent=1 // pred_fallthru
      _
    // Predicated region
    $region54: #{resnet_forward.1} parent=1 // pred_check
      _
    $region55: #{resnet_forward.1} parent=1 // pred_check_branch
      %180 = sbr.rel (0) target = $region57
    $region56: #{resnet_forward.1} parent=1 // pred_region
      %s182 = ssub.s32 8192, 8192
      %183 = vsyncadd [#allocation31], %s182
      %s184 = sshll.u32 [#allocation32], 4
      %s185 = int_to_ptr.vmem [resolvable:$true] %s184
      %190 = dma.hbm_to_vmem [thread:$0]  %s13, 8192, %s185, [#allocation31], 256, 256, 16
    $region57: #{resnet_forward.1} parent=1 // pred_fallthru
      _
    // Predicated region
    $region58: #{resnet_forward.1} parent=1 // pred_check
      _
    $region59: #{resnet_forward.1} parent=1 // pred_check_branch
      %192 = sbr.rel (0) target = $region61
    $region60: #{resnet_forward.1} parent=1 // pred_region
      %s194 = ssub.s32 8192, 8192
      %195 = vsyncadd [#allocation34], %s194
      %s196 = sshll.u32 [#allocation33], 4
      %s197 = int_to_ptr.vmem [resolvable:$true] %s196
      %202 = dma.hbm_to_vmem [thread:$0]  %s14, 8192, %s197, [#allocation34], 256, 256, 16
    $region61: #{resnet_forward.1} parent=1 // pred_fallthru
      _
    // Predicated region
    $region62: #{resnet_forward.1} parent=1 // pred_check
      _
    $region63: #{resnet_forward.1} parent=1 // pred_check_branch
      %204 = sbr.rel (0) target = $region65
    $region64: #{resnet_forward.1} parent=1 // pred_region
      %s206 = ssub.s32 49152, 49152
      %207 = vsyncadd [#allocation34], %s206
      %s208 = sshll.u32 [#allocation35], 4
      %s209 = int_to_ptr.vmem [resolvable:$true] %s208
      %214 = dma.hbm_to_vmem [thread:$0]  %s15, 49152, %s209, [#allocation34], 256, 256, 16
    $region65: #{resnet_forward.1} parent=1 // pred_fallthru
      _
    // Predicated region
    $region66: #{resnet_forward.1} parent=1 // pred_check
      _
    $region67: #{resnet_forward.1} parent=1 // pred_check_branch
      %216 = sbr.rel (0) target = $region69
    $region68: #{resnet_forward.1} parent=1 // pred_region
      _
    $region69: #{resnet_forward.1} parent=1 // pred_fallthru
      _
    // Predicated region
    $region70: #{resnet_forward.1} parent=1 // pred_check
      _
    $region71: #{resnet_forward.1} parent=1 // pred_check_branch
      %218 = sbr.rel (0) target = $region73
    $region72: #{resnet_forward.1} parent=1 // pred_region
      %s220 = ssub.s32 16, 16
      %221 = vsyncadd [#allocation37], %s220
      %s223 = sshll.u32 [#allocation36], 4
      %s224 = int_to_ptr.vmem [resolvable:$true] %s223
      %226 = dma.hbm_to_vmem [thread:$0]  %s17, 16, %s224, [#allocation37]
    $region73: #{resnet_forward.1} parent=1 // pred_fallthru
      _
    // Predicated region
    $region74: #{resnet_forward.1} parent=1 // pred_check
      _
    $region75: #{resnet_forward.1} parent=1 // pred_check_branch
      %228 = sbr.rel (0) target = $region77
    $region76: #{resnet_forward.1} parent=1 // pred_region
      %229 = dma.done [#allocation13], 256
    $region77: #{resnet_forward.1} parent=1 // pred_fallthru
      _
    // Predicated region
    $region78: #{resnet_forward.1} parent=1 // pred_check
      _
    $region79: #{resnet_forward.1} parent=1 // pred_check_branch
      %231 = sbr.rel (0) target = $region81
    $region80: #{resnet_forward.1} parent=1 // pred_region
      %232 = dma.done [#allocation16], 1536
    $region81: #{resnet_forward.1} parent=1 // pred_fallthru
      _
    // Predicated region
    $region82: #{resnet_forward.1} parent=1 // pred_check
      _
    $region83: #{resnet_forward.1} parent=1 // pred_check_branch
      %234 = sbr.rel (0) target = $region85
    $region84: #{resnet_forward.1} parent=1 // pred_region
      %235 = dma.done [#allocation16], 1536
    $region85: #{resnet_forward.1} parent=1 // pred_fallthru
      _
    // Predicated region
    $region86: #{resnet_forward.1} parent=1 // pred_check
      _
    $region87: #{resnet_forward.1} parent=1 // pred_check_branch
      %237 = sbr.rel (0) target = $region89
    $region88: #{resnet_forward.1} parent=1 // pred_region
      %238 = dma.done [#allocation19], 1024
    $region89: #{resnet_forward.1} parent=1 // pred_fallthru
      _
    // Predicated region
    $region90: #{resnet_forward.1} parent=1 // pred_check
      _
    $region91: #{resnet_forward.1} parent=1 // pred_check_branch
      %240 = sbr.rel (0) target = $region93
    $region92: #{resnet_forward.1} parent=1 // pred_region
      %241 = dma.done [#allocation19], 512
    $region93: #{resnet_forward.1} parent=1 // pred_fallthru
      _
    // Predicated region
    $region94: #{resnet_forward.1} parent=1 // pred_check
      _
    $region95: #{resnet_forward.1} parent=1 // pred_check_branch
      %243 = sbr.rel (0) target = $region97
    $region96: #{resnet_forward.1} parent=1 // pred_region
      %244 = dma.done [#allocation22], 512
    $region97: #{resnet_forward.1} parent=1 // pred_fallthru
      _
    // Predicated region
    $region98: #{resnet_forward.1} parent=1 // pred_check
      _
    $region99: #{resnet_forward.1} parent=1 // pred_check_branch
      %246 = sbr.rel (0) target = $region101
    $region100: #{resnet_forward.1} parent=1 // pred_region
      %247 = dma.done [#allocation22], 3072
    $region101: #{resnet_forward.1} parent=1 // pred_fallthru
      _
    // Predicated region
    $region102: #{resnet_forward.1} parent=1 // pred_check
      _
    $region103: #{resnet_forward.1} parent=1 // pred_check_branch
      %249 = sbr.rel (0) target = $region105
    $region104: #{resnet_forward.1} parent=1 // pred_region
      %250 = dma.done [#allocation25], 4096
    $region105: #{resnet_forward.1} parent=1 // pred_fallthru
      _
    // Predicated region
    $region106: #{resnet_forward.1} parent=1 // pred_check
      _
    $region107: #{resnet_forward.1} parent=1 // pred_check_branch
      %252 = sbr.rel (0) target = $region109
    $region108: #{resnet_forward.1} parent=1 // pred_region
      %253 = dma.done [#allocation25], 2048
    $region109: #{resnet_forward.1} parent=1 // pred_fallthru
      _
    // Predicated region
    $region110: #{resnet_forward.1} parent=1 // pred_check
      _
    $region111: #{resnet_forward.1} parent=1 // pred_check_branch
      %255 = sbr.rel (0) target = $region113
    $region112: #{resnet_forward.1} parent=1 // pred_region
      %256 = dma.done [#allocation28], 2048
    $region113: #{resnet_forward.1} parent=1 // pred_fallthru
      _
    // Predicated region
    $region114: #{resnet_forward.1} parent=1 // pred_check
      _
    $region115: #{resnet_forward.1} parent=1 // pred_check_branch
      %258 = sbr.rel (0) target = $region117
    $region116: #{resnet_forward.1} parent=1 // pred_region
      %259 = dma.done [#allocation28], 12288
    $region117: #{resnet_forward.1} parent=1 // pred_fallthru
      _
    // Predicated region
    $region118: #{resnet_forward.1} parent=1 // pred_check
      _
    $region119: #{resnet_forward.1} parent=1 // pred_check_branch
      %261 = sbr.rel (0) target = $region121
    $region120: #{resnet_forward.1} parent=1 // pred_region
      %262 = dma.done [#allocation31], 16384
    $region121: #{resnet_forward.1} parent=1 // pred_fallthru
      _
    // Predicated region
    $region122: #{resnet_forward.1} parent=1 // pred_check
      _
    $region123: #{resnet_forward.1} parent=1 // pred_check_branch
      %264 = sbr.rel (0) target = $region125
    $region124: #{resnet_forward.1} parent=1 // pred_region
      %265 = dma.done [#allocation31], 8192
    $region125: #{resnet_forward.1} parent=1 // pred_fallthru
      _
    // Predicated region
    $region126: #{resnet_forward.1} parent=1 // pred_check
      _
    $region127: #{resnet_forward.1} parent=1 // pred_check_branch
      %267 = sbr.rel (0) target = $region129
    $region128: #{resnet_forward.1} parent=1 // pred_region
      %268 = dma.done [#allocation34], 8192
    $region129: #{resnet_forward.1} parent=1 // pred_fallthru
      _
    // Predicated region
    $region130: #{resnet_forward.1} parent=1 // pred_check
      _
    $region131: #{resnet_forward.1} parent=1 // pred_check_branch
      %270 = sbr.rel (0) target = $region133
    $region132: #{resnet_forward.1} parent=1 // pred_region
      %271 = dma.done [#allocation34], 49152
    $region133: #{resnet_forward.1} parent=1 // pred_fallthru
      _
    // Predicated region
    $region134: #{resnet_forward.1} parent=1 // pred_check
      _
    $region135: #{resnet_forward.1} parent=1 // pred_check_branch
      %273 = sbr.rel (0) target = $region137
    $region136: #{resnet_forward.1} parent=1 // pred_region
      %274 = dma.done [#allocation37], 16
    $region137: #{resnet_forward.1} parent=1 // pred_fallthru
      _
    %v276 = vld [vmem:[%s0] sm:$0xff]
    %v277 = vld [vmem:[%s0 + $0x8] sm:$0xff]
    %vm278 = vcmask 228352
    %279 = vst.msk [vmem:[#allocation2] sm:$0xff] %vm278, 0.0
    %280 = vst.msk [vmem:[#allocation2 + $0x8] sm:$0xff] %vm278, 0.0
    %282 = vrot.lane.b32.xlu0 %v276, 124
    %v283 = vpop.permute.xlu0 %282
    %vm285 = vcmask 29696
    %286 = vst.msk [vmem:[#allocation2 + $0x2] sm:$0x3f] %vm285, %v283
    %287 = vrot.lane.b32.xlu0 %v276, 4
    %v288 = vpop.permute.xlu0 %287
    %vm290 = vcmask 96288
    %291 = vst.msk [vmem:[#allocation2 + $0x1] sm:$0x7f] %vm290, %v288
    %292 = vrot.lane.b32.xlu0 %v276, 12
    %v293 = vpop.permute.xlu0 %292
    %vm295 = vcmask 162912
    %296 = vst.msk [vmem:[#allocation2] sm:$0xff] %vm295, %v293
    %297 = vrot.lane.b32.xlu0 %v276, 20
    %v298 = vpop.permute.xlu0 %297
    %vm300 = vcmask 228513
    %301 = vst.msk [vmem:[#allocation2 - $0x1] sm:$0xfe] %vm300, %v298
    %303 = vrot.lane.b32.xlu0 %v277, 124
    %v304 = vpop.permute.xlu0 %303
    %306 = vst.msk [vmem:[#allocation2 + $0xa] sm:$0x3f] %vm285, %v304
    %307 = vrot.lane.b32.xlu0 %v277, 4
    %v308 = vpop.permute.xlu0 %307
    %310 = vst.msk [vmem:[#allocation2 + $0x9] sm:$0x7f] %vm290, %v308
    %311 = vrot.lane.b32.xlu0 %v277, 12
    %v312 = vpop.permute.xlu0 %311
    %314 = vst.msk [vmem:[#allocation2 + $0x8] sm:$0xff] %vm295, %v312
    %315 = vrot.lane.b32.xlu0 %v277, 20
    %v316 = vpop.permute.xlu0 %315
    %318 = vst.msk [vmem:[#allocation2 + $0x7] sm:$0xfe] %vm300, %v316
    %v319 = vld [vmem:[#allocation2] sm:$0xff]
    %v320 = vld [vmem:[#allocation2 + $0x8] sm:$0xff]
    %v321 = vpack.c.bf16 %v320, %v319
    %v322 = vld [vmem:[#allocation12] sm:$0xf]
    %v323 = vld [vmem:[#allocation12 + $0x4] sm:$0xf]
    %v324 = vld [vmem:[#allocation12 + $0x8] sm:$0xf]
    %v325 = vld [vmem:[#allocation12 + $0xc] sm:$0x3]
    %v330 = vunpack.c.l.b16 %v322
    %v331 = vunpack.c.l.b16 %v323
    %v332 = vunpack.c.l.b16 %v324
    %v333 = vunpack.c.l.b16 %v325
    %v334 = vpack.c.b16 %v331, %v330
    %v335 = vpack.c.b16 %v333, %v332
    %v338 = vsel %vm278, %v321, 0
    %vm340 = vcmask 1045504
    %v342 = vsel %vm340, %v335, 0
    %344 = vmatprep.subr.bf16.mxu0 0
    %345 = vmatpush1.bf16.msra.mxu0 %v334
    %346 = vmatprep.subr.bf16.mxu0 0
    %347 = vmatpush1.bf16.msra.mxu0 %v342
    %348 = vmatprep.subr.bf16.mxu0 0
    %349 = vmatpush1.bf16.msra.mxu0 0
    %350 = vmatprep.subr.bf16.mxu0 0
    %351 = vmatpush1.bf16.msra.mxu0 0
    %352 = vmatprep.subr.bf16.mxu0 0
    %353 = vmatpush1.bf16.msra.mxu0 0
    %354 = vmatprep.subr.bf16.mxu0 0
    %355 = vmatpush1.bf16.msra.mxu0 0
    %356 = vmatprep.subr.bf16.mxu0 0
    %357 = vmatpush1.bf16.msra.mxu0 0
    %358 = vmatprep.subr.bf16.mxu0 0
    %359 = vmatpush1.bf16.msra.mxu0 0
    %360 = vmatprep.subr.bf16.mxu0 0
    %361 = vmatpush1.bf16.msra.mxu0 0
    %362 = vmatprep.subr.bf16.mxu0 0
    %363 = vmatpush1.bf16.msra.mxu0 0
    %364 = vmatprep.subr.bf16.mxu0 0
    %365 = vmatpush1.bf16.msra.mxu0 0
    %366 = vmatprep.subr.bf16.mxu0 0
    %367 = vmatpush1.bf16.msra.mxu0 0
    %368 = vmatprep.subr.bf16.mxu0 0
    %369 = vmatpush1.bf16.msra.mxu0 0
    %370 = vmatprep.subr.bf16.mxu0 0
    %371 = vmatpush1.bf16.msra.mxu0 0
    %372 = vmatprep.subr.bf16.mxu0 0
    %373 = vmatpush1.bf16.msra.mxu0 0
    %374 = vmatprep.subr.bf16.mxu0 0
    %375 = vmatpush1.bf16.msra.mxu0 0
    %376 = vmatprep.mubr.bf16.mxu0 0
    %377 = vmatmul.mubr.bf16.gmra.mrb[0].mxu0 %v338
    %v378 = vpop.f32.mrb[0].mxu0
    %v379 = vadd.f32 0.0, %v378
    %v380 = vpop.f32.mrb[0].mxu0
    %v381 = vpop.f32.mrb[0].mxu0
    %v382 = vadd.f32 0.0, %v381
    %v383 = vpop.f32.mrb[0].mxu0
    %384 = vdwg.mxu0
    %vm385 = vcmask 523264
    %v386 = vsel %vm385, %v379, 0.0
    %v387 = vrot.slane %v386, 4
    %v388 = vadd.f32 %v386, %v387
    %v389 = vrot.slane %v388, 2
    %v390 = vadd.f32 %v388, %v389
    %v391 = vrot.slane %v390, 1
    %v392 = vadd.f32 %v390, %v391
    %v393 = vmul.f32 %v379, %v379
    %v394 = vsel %vm385, %v393, 0.0
    %v395 = vrot.slane %v394, 4
    %v396 = vadd.f32 %v394, %v395
    %v397 = vrot.slane %v396, 2
    %v398 = vadd.f32 %v396, %v397
    %v399 = vrot.slane %v398, 1
    %v400 = vadd.f32 %v398, %v399
    %v401 = vsel %vm385, %v382, 0.0
    %v402 = vrot.slane %v401, 4
    %v403 = vadd.f32 %v401, %v402
    %v404 = vrot.slane %v403, 2
    %v405 = vadd.f32 %v403, %v404
    %v406 = vrot.slane %v405, 1
    %v407 = vadd.f32 %v405, %v406
    %v408 = vadd.f32 %v392, %v407
    %v409 = vmul.f32 %v382, %v382
    %v410 = vsel %vm385, %v409, 0.0
    %v411 = vrot.slane %v410, 4
    %v412 = vadd.f32 %v410, %v411
    %v413 = vrot.slane %v412, 2
    %v414 = vadd.f32 %v412, %v413
    %v415 = vrot.slane %v414, 1
    %v416 = vadd.f32 %v414, %v415
    %v417 = vadd.f32 %v400, %v416
    %v418 = vrcp.pop 16.0
    %v419 = vmul.f32 %v408, %v418
    %v420 = vmul.f32 %v417, %v418
    %v421 = vmul.f32 %v419, %v419
    %v422 = vsub.f32 %v420, %v421
    %v423 = vmax.f32 %v422, 0.0
    %v424 = vadd.f32 %v423, 1e-05
    %v425 = vrsqrt.pop %v424
    %v426 = vsub.f32 %v379, %v419
    %v427 = vmul.f32 %v426, %v425
    %v428 = vsub.f32 %v382, %v419
    %v429 = vmul.f32 %v428, %v425
    %v430 = vmax.f32 %v427, 0.0
    %v431 = vmax.f32 %v429, 0.0
    %vm432 = vcmask 516096
    %433 = vst.msk [vmem:[#allocation3] sm:$0x1] %vm432, 0.0
    %434 = vst.msk [vmem:[#allocation3 + $0x1] sm:$0xff] %vm385, %v430
    %435 = vst.msk [vmem:[#allocation3 + $0x9] sm:$0x1] %vm432, 0.0
    %436 = vst.msk [vmem:[#allocation3 + $0xa] sm:$0x1] %vm432, 0.0
    %437 = vst.msk [vmem:[#allocation3 + $0xb] sm:$0xff] %vm385, %v431
    %438 = vst.msk [vmem:[#allocation3 + $0x13] sm:$0x1] %vm432, 0.0
    %v439 = vld [vmem:[#allocation3] sm:$0xff]
    %v440 = vld [vmem:[#allocation3 + $0x8] sm:$0xff]
    %v441 = vld [vmem:[#allocation3 + $0x10] sm:$0xf]
    %v442 = vpack.c.bf16 %v440, %v439
    %v443 = vpack.c.bf16 %v441, %v441
    %v444 = vld [vmem:[#allocation15] sm:$0xf]
    %v445 = vld [vmem:[#allocation15 + $0x4] sm:$0xf]
    %v446 = vld [vmem:[#allocation15 + $0x8] sm:$0xf]
    %v447 = vld [vmem:[#allocation15 + $0xc] sm:$0xf]
    %v448 = vld [vmem:[#allocation15 + $0x10] sm:$0xf]
    %v449 = vld [vmem:[#allocation15 + $0x14] sm:$0xf]
    %v450 = vld [vmem:[#allocation15 + $0x18] sm:$0xf]
    %v451 = vld [vmem:[#allocation15 + $0x1c] sm:$0xf]
    %v460 = vunpack.c.l.b16 %v444
    %v461 = vunpack.c.l.b16 %v445
    %v462 = vunpack.c.l.b16 %v446
    %v463 = vunpack.c.l.b16 %v447
    %v464 = vunpack.c.l.b16 %v448
    %v465 = vunpack.c.l.b16 %v449
    %v466 = vunpack.c.l.b16 %v450
    %v467 = vunpack.c.l.b16 %v451
    %v468 = vpack.c.b16 %v461, %v460
    %v469 = vpack.c.b16 %v463, %v462
    %v470 = vpack.c.b16 %v465, %v464
    %v471 = vpack.c.b16 %v467, %v466
    %v477 = vsel %vm385, %v442, 0
    %v480 = vsel %vm385, %v443, 0
    %482 = vmatprep.subr.bf16.mxu0 0
    %483 = vmatpush1.bf16.msra.mxu0 %v468
    %484 = vmatprep.subr.bf16.mxu0 0
    %485 = vmatpush1.bf16.msra.mxu0 %v469
    %486 = vmatprep.subr.bf16.mxu0 0
    %487 = vmatpush1.bf16.msra.mxu0 %v470
    %488 = vmatprep.subr.bf16.mxu0 0
    %489 = vmatpush1.bf16.msra.mxu0 %v471
    %490 = vmatprep.subr.bf16.mxu0 0
    %491 = vmatpush1.bf16.msra.mxu0 0
    %492 = vmatprep.subr.bf16.mxu0 0
    %493 = vmatpush1.bf16.msra.mxu0 0
    %494 = vmatprep.subr.bf16.mxu0 0
    %495 = vmatpush1.bf16.msra.mxu0 0
    %496 = vmatprep.subr.bf16.mxu0 0
    %497 = vmatpush1.bf16.msra.mxu0 0
    %498 = vmatprep.subr.bf16.mxu0 0
    %499 = vmatpush1.bf16.msra.mxu0 0
    %500 = vmatprep.subr.bf16.mxu0 0
    %501 = vmatpush1.bf16.msra.mxu0 0
    %502 = vmatprep.subr.bf16.mxu0 0
    %503 = vmatpush1.bf16.msra.mxu0 0
    %504 = vmatprep.subr.bf16.mxu0 0
    %505 = vmatpush1.bf16.msra.mxu0 0
    %506 = vmatprep.subr.bf16.mxu0 0
    %507 = vmatpush1.bf16.msra.mxu0 0
    %508 = vmatprep.subr.bf16.mxu0 0
    %509 = vmatpush1.bf16.msra.mxu0 0
    %510 = vmatprep.subr.bf16.mxu0 0
    %511 = vmatpush1.bf16.msra.mxu0 0
    %512 = vmatprep.subr.bf16.mxu0 0
    %513 = vmatpush1.bf16.msra.mxu0 0
    %514 = vmatprep.mubr.bf16.mxu0 0
    %515 = vmatmul.mubr.bf16.gmra.mrb[0].mxu0 %v477
    %v516 = vpop.f32.mrb[0].mxu0
    %v517 = vadd.f32 0.0, %v516
    %v518 = vpop.f32.mrb[0].mxu0
    %v519 = vpop.f32.mrb[0].mxu0
    %v520 = vadd.f32 0.0, %v519
    %v521 = vpop.f32.mrb[0].mxu0
    %522 = vmatprep.mubr.bf16.mxu0 0
    %523 = vmatmul.mubr.bf16.gmra.mrb[0].mxu0 %v480
    %v524 = vpop.f32.mrb[0].mxu0
    %v525 = vadd.f32 0.0, %v524
    %v526 = vpop.f32.mrb[0].mxu0
    %v527 = vpop.f32.mrb[0].mxu0
    %v528 = vpop.f32.mrb[0].mxu0
    %529 = vdwg.mxu0
    %s530 = scalar_lea.vmem [#allocation15], 32
    %v531 = vld [vmem:[%s530] sm:$0xf]
    %v532 = vld [vmem:[%s530 + $0x4] sm:$0xf]
    %v533 = vld [vmem:[%s530 + $0x8] sm:$0xf]
    %v534 = vld [vmem:[%s530 + $0xc] sm:$0xf]
    %v535 = vld [vmem:[%s530 + $0x10] sm:$0xf]
    %v536 = vld [vmem:[%s530 + $0x14] sm:$0xf]
    %v537 = vld [vmem:[%s530 + $0x18] sm:$0xf]
    %v538 = vld [vmem:[%s530 + $0x1c] sm:$0xf]
    %v547 = vunpack.c.l.b16 %v531
    %v548 = vunpack.c.l.b16 %v532
    %v549 = vunpack.c.l.b16 %v533
    %v550 = vunpack.c.l.b16 %v534
    %v551 = vunpack.c.l.b16 %v535
    %v552 = vunpack.c.l.b16 %v536
    %v553 = vunpack.c.l.b16 %v537
    %v554 = vunpack.c.l.b16 %v538
    %v555 = vpack.c.b16 %v548, %v547
    %v556 = vpack.c.b16 %v550, %v549
    %v557 = vpack.c.b16 %v552, %v551
    %v558 = vpack.c.b16 %v554, %v553
    %563 = vmatprep.subr.bf16.mxu0 0
    %564 = vmatpush1.bf16.msra.mxu0 %v555
    %565 = vmatprep.subr.bf16.mxu0 0
    %566 = vmatpush1.bf16.msra.mxu0 %v556
    %567 = vmatprep.subr.bf16.mxu0 0
    %568 = vmatpush1.bf16.msra.mxu0 %v557
    %569 = vmatprep.subr.bf16.mxu0 0
    %570 = vmatpush1.bf16.msra.mxu0 %v558
    %571 = vmatprep.subr.bf16.mxu0 0
    %572 = vmatpush1.bf16.msra.mxu0 0
    %573 = vmatprep.subr.bf16.mxu0 0
    %574 = vmatpush1.bf16.msra.mxu0 0
    %575 = vmatprep.subr.bf16.mxu0 0
    %576 = vmatpush1.bf16.msra.mxu0 0
    %577 = vmatprep.subr.bf16.mxu0 0
    %578 = vmatpush1.bf16.msra.mxu0 0
    %579 = vmatprep.subr.bf16.mxu0 0
    %580 = vmatpush1.bf16.msra.mxu0 0
    %581 = vmatprep.subr.bf16.mxu0 0
    %582 = vmatpush1.bf16.msra.mxu0 0
    %583 = vmatprep.subr.bf16.mxu0 0
    %584 = vmatpush1.bf16.msra.mxu0 0
    %585 = vmatprep.subr.bf16.mxu0 0
    %586 = vmatpush1.bf16.msra.mxu0 0
    %587 = vmatprep.subr.bf16.mxu0 0
    %588 = vmatpush1.bf16.msra.mxu0 0
    %589 = vmatprep.subr.bf16.mxu0 0
    %590 = vmatpush1.bf16.msra.mxu0 0
    %591 = vmatprep.subr.bf16.mxu0 0
    %592 = vmatpush1.bf16.msra.mxu0 0
    %593 = vmatprep.subr.bf16.mxu0 0
    %594 = vmatpush1.bf16.msra.mxu0 0
    %595 = vmatprep.mubr.bf16.mxu0 0
    %596 = vmatmul.mubr.bf16.gmra.mrb[0].mxu0 %v477
    %v597 = vpop.f32.mrb[0].mxu0
    %v598 = vadd.f32 0.0, %v597
    %v599 = vpop.f32.mrb[0].mxu0
    %v600 = vpop.f32.mrb[0].mxu0
    %v601 = vadd.f32 0.0, %v600
    %v602 = vpop.f32.mrb[0].mxu0
    %603 = vmatprep.mubr.bf16.mxu0 0
    %604 = vmatmul.mubr.bf16.gmra.mrb[0].mxu0 %v480
    %v605 = vpop.f32.mrb[0].mxu0
    %v606 = vadd.f32 0.0, %v605
    %v607 = vpop.f32.mrb[0].mxu0
    %v608 = vpop.f32.mrb[0].mxu0
    %v609 = vpop.f32.mrb[0].mxu0
    %610 = vdwg.mxu0
    %s611 = scalar_lea.vmem [#allocation15], 64
    %v612 = vld [vmem:[%s611] sm:$0xf]
    %v613 = vld [vmem:[%s611 + $0x4] sm:$0xf]
    %v614 = vld [vmem:[%s611 + $0x8] sm:$0xf]
    %v615 = vld [vmem:[%s611 + $0xc] sm:$0xf]
    %v616 = vld [vmem:[%s611 + $0x10] sm:$0xf]
    %v617 = vld [vmem:[%s611 + $0x14] sm:$0xf]
    %v618 = vld [vmem:[%s611 + $0x18] sm:$0xf]
    %v619 = vld [vmem:[%s611 + $0x1c] sm:$0xf]
    %v628 = vunpack.c.l.b16 %v612
    %v629 = vunpack.c.l.b16 %v613
    %v630 = vunpack.c.l.b16 %v614
    %v631 = vunpack.c.l.b16 %v615
    %v632 = vunpack.c.l.b16 %v616
    %v633 = vunpack.c.l.b16 %v617
    %v634 = vunpack.c.l.b16 %v618
    %v635 = vunpack.c.l.b16 %v619
    %v636 = vpack.c.b16 %v629, %v628
    %v637 = vpack.c.b16 %v631, %v630
    %v638 = vpack.c.b16 %v633, %v632
    %v639 = vpack.c.b16 %v635, %v634
    %644 = vmatprep.subr.bf16.mxu0 0
    %645 = vmatpush1.bf16.msra.mxu0 %v636
    %646 = vmatprep.subr.bf16.mxu0 0
    %647 = vmatpush1.bf16.msra.mxu0 %v637
    %648 = vmatprep.subr.bf16.mxu0 0
    %649 = vmatpush1.bf16.msra.mxu0 %v638
    %650 = vmatprep.subr.bf16.mxu0 0
    %651 = vmatpush1.bf16.msra.mxu0 %v639
    %652 = vmatprep.subr.bf16.mxu0 0
    %653 = vmatpush1.bf16.msra.mxu0 0
    %654 = vmatprep.subr.bf16.mxu0 0
    %655 = vmatpush1.bf16.msra.mxu0 0
    %656 = vmatprep.subr.bf16.mxu0 0
    %657 = vmatpush1.bf16.msra.mxu0 0
    %658 = vmatprep.subr.bf16.mxu0 0
    %659 = vmatpush1.bf16.msra.mxu0 0
    %660 = vmatprep.subr.bf16.mxu0 0
    %661 = vmatpush1.bf16.msra.mxu0 0
    %662 = vmatprep.subr.bf16.mxu0 0
    %663 = vmatpush1.bf16.msra.mxu0 0
    %664 = vmatprep.subr.bf16.mxu0 0
    %665 = vmatpush1.bf16.msra.mxu0 0
    %666 = vmatprep.subr.bf16.mxu0 0
    %667 = vmatpush1.bf16.msra.mxu0 0
    %668 = vmatprep.subr.bf16.mxu0 0
    %669 = vmatpush1.bf16.msra.mxu0 0
    %670 = vmatprep.subr.bf16.mxu0 0
    %671 = vmatpush1.bf16.msra.mxu0 0
    %672 = vmatprep.subr.bf16.mxu0 0
    %673 = vmatpush1.bf16.msra.mxu0 0
    %674 = vmatprep.subr.bf16.mxu0 0
    %675 = vmatpush1.bf16.msra.mxu0 0
    %676 = vmatprep.mubr.bf16.mxu0 0
    %677 = vmatmul.mubr.bf16.gmra.mrb[0].mxu0 %v477
    %v678 = vpop.f32.mrb[0].mxu0
    %v679 = vadd.f32 0.0, %v678
    %v680 = vpop.f32.mrb[0].mxu0
    %v681 = vpop.f32.mrb[0].mxu0
    %v682 = vadd.f32 0.0, %v681
    %v683 = vpop.f32.mrb[0].mxu0
    %684 = vmatprep.mubr.bf16.mxu0 0
    %685 = vmatmul.mubr.bf16.gmra.mrb[0].mxu0 %v480
    %v686 = vpop.f32.mrb[0].mxu0
    %v687 = vadd.f32 0.0, %v686
    %v688 = vpop.f32.mrb[0].mxu0
    %v689 = vpop.f32.mrb[0].mxu0
    %v690 = vpop.f32.mrb[0].mxu0
    %691 = vdwg.mxu0
    %vm694 = vcmask 1046528
    %v695 = vrot.slane %v598, 1
    %v696 = vrot.slane %v601, 1
    %v697 = vsel %vm694, %v695, %v696
    %v699 = vadd.f32 %v517, %v697
    %v702 = vrot.slane %v679, 2
    %v703 = vrot.slane %v682, 2
    %v704 = vsel %vm340, %v702, %v703
    %v706 = vadd.f32 %v699, %v704
    %v708 = vrot.slane %v606, 1
    %v709 = vsel %vm694, %v696, %v708
    %v712 = vadd.f32 %v520, %v709
    %v713 = vadd.f32 %v525, %v708
    %v715 = vrot.slane %v687, 2
    %v716 = vsel %vm340, %v703, %v715
    %v719 = vadd.f32 %v712, %v716
    %v720 = vadd.f32 %v713, %v715
    %v721 = vsel %vm385, %v706, 0.0
    %v722 = vrot.slane %v721, 4
    %v723 = vadd.f32 %v721, %v722
    %v724 = vrot.slane %v723, 2
    %v725 = vadd.f32 %v723, %v724
    %v726 = vrot.slane %v725, 1
    %v727 = vadd.f32 %v725, %v726
    %v728 = vmul.f32 %v706, %v706
    %v729 = vsel %vm385, %v728, 0.0
    %v730 = vrot.slane %v729, 4
    %v731 = vadd.f32 %v729, %v730
    %v732 = vrot.slane %v731, 2
    %v733 = vadd.f32 %v731, %v732
    %v734 = vrot.slane %v733, 1
    %v735 = vadd.f32 %v733, %v734
    %v738 = vrot.slane %v719, 2
    %v739 = vrot.slane %v720, 2
    %v740 = vsel %vm340, %v738, %v739
    %v742 = vsel %vm385, %v740, 0.0
    %v743 = vrot.slane %v742, 4
    %v744 = vadd.f32 %v742, %v743
    %v745 = vrot.slane %v744, 2
    %v746 = vadd.f32 %v744, %v745
    %v747 = vrot.slane %v746, 1
    %v748 = vadd.f32 %v746, %v747
    %v749 = vadd.f32 %v727, %v748
    %v750 = vmul.f32 %v719, %v719
    %v751 = vmul.f32 %v720, %v720
    %v754 = vrot.slane %v750, 2
    %v755 = vrot.slane %v751, 2
    %v756 = vsel %vm340, %v754, %v755
    %v758 = vsel %vm385, %v756, 0.0
    %v759 = vrot.slane %v758, 4
    %v760 = vadd.f32 %v758, %v759
    %v761 = vrot.slane %v760, 2
    %v762 = vadd.f32 %v760, %v761
    %v763 = vrot.slane %v762, 1
    %v764 = vadd.f32 %v762, %v763
    %v765 = vadd.f32 %v735, %v764
    %v766 = vmul.f32 %v749, %v418
    %v767 = vmul.f32 %v765, %v418
    %v768 = vmul.f32 %v766, %v766
    %v769 = vsub.f32 %v767, %v768
    %v770 = vmax.f32 %v769, 0.0
    %v771 = vadd.f32 %v770, 1e-05
    %v772 = vrsqrt.pop %v771
    %v773 = vsub.f32 %v706, %v766
    %v774 = vmul.f32 %v773, %v772
    %v775 = vsub.f32 %v719, %v766
    %v776 = vsub.f32 %v720, %v766
    %v777 = vmul.f32 %v775, %v772
    %v778 = vmul.f32 %v776, %v772
    %v779 = vmax.f32 %v774, 0.0
    %v780 = vmax.f32 %v777, 0.0
    %v781 = vmax.f32 %v778, 0.0
    %782 = vst.msk [vmem:[#allocation4] sm:$0x1] %vm432, 0.0
    %783 = vst.msk [vmem:[#allocation4 + $0x1] sm:$0xff] %vm385, %v779
    %784 = vst.msk [vmem:[#allocation4 + $0x9] sm:$0x1] %vm432, 0.0
    %785 = vst.msk [vmem:[#allocation4 + $0xa] sm:$0x1] %vm432, 0.0
    %vm786 = vcmask 523266
    %787 = vst.msk [vmem:[#allocation4 + $0x9] sm:$0xfc] %vm786, %v780
    %vm788 = vcmask 517120
    %789 = vst.msk [vmem:[#allocation4 + $0x11] sm:$0x3] %vm788, %v781
    %790 = vst.msk [vmem:[#allocation4 + $0x13] sm:$0x1] %vm432, 0.0
    %v791 = vld [vmem:[#allocation4] sm:$0xff]
    %v792 = vld [vmem:[#allocation4 + $0x8] sm:$0xff]
    %v793 = vld [vmem:[#allocation4 + $0x10] sm:$0xf]
    %v794 = vpack.c.bf16 %v792, %v791
    %v795 = vpack.c.bf16 %v793, %v793
    %v796 = vld [vmem:[#allocation17] sm:$0xf]
    %v797 = vld [vmem:[#allocation17 + $0x4] sm:$0xf]
    %v798 = vld [vmem:[#allocation17 + $0x8] sm:$0xf]
    %v799 = vld [vmem:[#allocation17 + $0xc] sm:$0xf]
    %v800 = vld [vmem:[#allocation17 + $0x10] sm:$0xf]
    %v801 = vld [vmem:[#allocation17 + $0x14] sm:$0xf]
    %v802 = vld [vmem:[#allocation17 + $0x18] sm:$0xf]
    %v803 = vld [vmem:[#allocation17 + $0x1c] sm:$0xf]
    %v812 = vunpack.c.l.b16 %v796
    %v813 = vunpack.c.l.b16 %v797
    %v814 = vunpack.c.l.b16 %v798
    %v815 = vunpack.c.l.b16 %v799
    %v816 = vunpack.c.l.b16 %v800
    %v817 = vunpack.c.l.b16 %v801
    %v818 = vunpack.c.l.b16 %v802
    %v819 = vunpack.c.l.b16 %v803
    %v820 = vpack.c.b16 %v813, %v812
    %v821 = vpack.c.b16 %v815, %v814
    %v822 = vpack.c.b16 %v817, %v816
    %v823 = vpack.c.b16 %v819, %v818
    %v829 = vsel %vm385, %v794, 0
    %v832 = vsel %vm385, %v795, 0
    %834 = vmatprep.subr.bf16.mxu0 0
    %835 = vmatpush1.bf16.msra.mxu0 %v820
    %836 = vmatprep.subr.bf16.mxu0 0
    %837 = vmatpush1.bf16.msra.mxu0 %v821
    %838 = vmatprep.subr.bf16.mxu0 0
    %839 = vmatpush1.bf16.msra.mxu0 %v822
    %840 = vmatprep.subr.bf16.mxu0 0
    %841 = vmatpush1.bf16.msra.mxu0 %v823
    %842 = vmatprep.subr.bf16.mxu0 0
    %843 = vmatpush1.bf16.msra.mxu0 0
    %844 = vmatprep.subr.bf16.mxu0 0
    %845 = vmatpush1.bf16.msra.mxu0 0
    %846 = vmatprep.subr.bf16.mxu0 0
    %847 = vmatpush1.bf16.msra.mxu0 0
    %848 = vmatprep.subr.bf16.mxu0 0
    %849 = vmatpush1.bf16.msra.mxu0 0
    %850 = vmatprep.subr.bf16.mxu0 0
    %851 = vmatpush1.bf16.msra.mxu0 0
    %852 = vmatprep.subr.bf16.mxu0 0
    %853 = vmatpush1.bf16.msra.mxu0 0
    %854 = vmatprep.subr.bf16.mxu0 0
    %855 = vmatpush1.bf16.msra.mxu0 0
    %856 = vmatprep.subr.bf16.mxu0 0
    %857 = vmatpush1.bf16.msra.mxu0 0
    %858 = vmatprep.subr.bf16.mxu0 0
    %859 = vmatpush1.bf16.msra.mxu0 0
    %860 = vmatprep.subr.bf16.mxu0 0
    %861 = vmatpush1.bf16.msra.mxu0 0
    %862 = vmatprep.subr.bf16.mxu0 0
    %863 = vmatpush1.bf16.msra.mxu0 0
    %864 = vmatprep.subr.bf16.mxu0 0
    %865 = vmatpush1.bf16.msra.mxu0 0
    %866 = vmatprep.mubr.bf16.mxu0 0
    %867 = vmatmul.mubr.bf16.gmra.mrb[0].mxu0 %v829
    %v868 = vpop.f32.mrb[0].mxu0
    %v869 = vadd.f32 0.0, %v868
    %v870 = vpop.f32.mrb[0].mxu0
    %v871 = vpop.f32.mrb[0].mxu0
    %v872 = vadd.f32 0.0, %v871
    %v873 = vpop.f32.mrb[0].mxu0
    %874 = vmatprep.mubr.bf16.mxu0 0
    %875 = vmatmul.mubr.bf16.gmra.mrb[0].mxu0 %v832
    %v876 = vpop.f32.mrb[0].mxu0
    %v877 = vadd.f32 0.0, %v876
    %v878 = vpop.f32.mrb[0].mxu0
    %v879 = vpop.f32.mrb[0].mxu0
    %v880 = vpop.f32.mrb[0].mxu0
    %881 = vdwg.mxu0
    %s882 = scalar_lea.vmem [#allocation17], 32
    %v883 = vld [vmem:[%s882] sm:$0xf]
    %v884 = vld [vmem:[%s882 + $0x4] sm:$0xf]
    %v885 = vld [vmem:[%s882 + $0x8] sm:$0xf]
    %v886 = vld [vmem:[%s882 + $0xc] sm:$0xf]
    %v887 = vld [vmem:[%s882 + $0x10] sm:$0xf]
    %v888 = vld [vmem:[%s882 + $0x14] sm:$0xf]
    %v889 = vld [vmem:[%s882 + $0x18] sm:$0xf]
    %v890 = vld [vmem:[%s882 + $0x1c] sm:$0xf]
    %v899 = vunpack.c.l.b16 %v883
    %v900 = vunpack.c.l.b16 %v884
    %v901 = vunpack.c.l.b16 %v885
    %v902 = vunpack.c.l.b16 %v886
    %v903 = vunpack.c.l.b16 %v887
    %v904 = vunpack.c.l.b16 %v888
    %v905 = vunpack.c.l.b16 %v889
    %v906 = vunpack.c.l.b16 %v890
    %v907 = vpack.c.b16 %v900, %v899
    %v908 = vpack.c.b16 %v902, %v901
    %v909 = vpack.c.b16 %v904, %v903
    %v910 = vpack.c.b16 %v906, %v905
    %915 = vmatprep.subr.bf16.mxu0 0
    %916 = vmatpush1.bf16.msra.mxu0 %v907
    %917 = vmatprep.subr.bf16.mxu0 0
    %918 = vmatpush1.bf16.msra.mxu0 %v908
    %919 = vmatprep.subr.bf16.mxu0 0
    %920 = vmatpush1.bf16.msra.mxu0 %v909
    %921 = vmatprep.subr.bf16.mxu0 0
    %922 = vmatpush1.bf16.msra.mxu0 %v910
    %923 = vmatprep.subr.bf16.mxu0 0
    %924 = vmatpush1.bf16.msra.mxu0 0
    %925 = vmatprep.subr.bf16.mxu0 0
    %926 = vmatpush1.bf16.msra.mxu0 0
    %927 = vmatprep.subr.bf16.mxu0 0
    %928 = vmatpush1.bf16.msra.mxu0 0
    %929 = vmatprep.subr.bf16.mxu0 0
    %930 = vmatpush1.bf16.msra.mxu0 0
    %931 = vmatprep.subr.bf16.mxu0 0
    %932 = vmatpush1.bf16.msra.mxu0 0
    %933 = vmatprep.subr.bf16.mxu0 0
    %934 = vmatpush1.bf16.msra.mxu0 0
    %935 = vmatprep.subr.bf16.mxu0 0
    %936 = vmatpush1.bf16.msra.mxu0 0
    %937 = vmatprep.subr.bf16.mxu0 0
    %938 = vmatpush1.bf16.msra.mxu0 0
    %939 = vmatprep.subr.bf16.mxu0 0
    %940 = vmatpush1.bf16.msra.mxu0 0
    %941 = vmatprep.subr.bf16.mxu0 0
    %942 = vmatpush1.bf16.msra.mxu0 0
    %943 = vmatprep.subr.bf16.mxu0 0
    %944 = vmatpush1.bf16.msra.mxu0 0
    %945 = vmatprep.subr.bf16.mxu0 0
    %946 = vmatpush1.bf16.msra.mxu0 0
    %947 = vmatprep.mubr.bf16.mxu0 0
    %948 = vmatmul.mubr.bf16.gmra.mrb[0].mxu0 %v829
    %v949 = vpop.f32.mrb[0].mxu0
    %v950 = vadd.f32 0.0, %v949
    %v951 = vpop.f32.mrb[0].mxu0
    %v952 = vpop.f32.mrb[0].mxu0
    %v953 = vadd.f32 0.0, %v952
    %v954 = vpop.f32.mrb[0].mxu0
    %955 = vmatprep.mubr.bf16.mxu0 0
    %956 = vmatmul.mubr.bf16.gmra.mrb[0].mxu0 %v832
    %v957 = vpop.f32.mrb[0].mxu0
    %v958 = vadd.f32 0.0, %v957
    %v959 = vpop.f32.mrb[0].mxu0
    %v960 = vpop.f32.mrb[0].mxu0
    %v961 = vpop.f32.mrb[0].mxu0
    %962 = vdwg.mxu0
    %s963 = scalar_lea.vmem [#allocation17], 64
    %v964 = vld [vmem:[%s963] sm:$0xf]
    %v965 = vld [vmem:[%s963 + $0x4] sm:$0xf]
    %v966 = vld [vmem:[%s963 + $0x8] sm:$0xf]
    %v967 = vld [vmem:[%s963 + $0xc] sm:$0xf]
    %v968 = vld [vmem:[%s963 + $0x10] sm:$0xf]
    %v969 = vld [vmem:[%s963 + $0x14] sm:$0xf]
    %v970 = vld [vmem:[%s963 + $0x18] sm:$0xf]
    %v971 = vld [vmem:[%s963 + $0x1c] sm:$0xf]
    %v980 = vunpack.c.l.b16 %v964
    %v981 = vunpack.c.l.b16 %v965
    %v982 = vunpack.c.l.b16 %v966
    %v983 = vunpack.c.l.b16 %v967
    %v984 = vunpack.c.l.b16 %v968
    %v985 = vunpack.c.l.b16 %v969
    %v986 = vunpack.c.l.b16 %v970
    %v987 = vunpack.c.l.b16 %v971
    %v988 = vpack.c.b16 %v981, %v980
    %v989 = vpack.c.b16 %v983, %v982
    %v990 = vpack.c.b16 %v985, %v984
    %v991 = vpack.c.b16 %v987, %v986
    %996 = vmatprep.subr.bf16.mxu0 0
    %997 = vmatpush1.bf16.msra.mxu0 %v988
    %998 = vmatprep.subr.bf16.mxu0 0
    %999 = vmatpush1.bf16.msra.mxu0 %v989
    %1000 = vmatprep.subr.bf16.mxu0 0
    %1001 = vmatpush1.bf16.msra.mxu0 %v990
    %1002 = vmatprep.subr.bf16.mxu0 0
    %1003 = vmatpush1.bf16.msra.mxu0 %v991
    %1004 = vmatprep.subr.bf16.mxu0 0
    %1005 = vmatpush1.bf16.msra.mxu0 0
    %1006 = vmatprep.subr.bf16.mxu0 0
    %1007 = vmatpush1.bf16.msra.mxu0 0
    %1008 = vmatprep.subr.bf16.mxu0 0
    %1009 = vmatpush1.bf16.msra.mxu0 0
    %1010 = vmatprep.subr.bf16.mxu0 0
    %1011 = vmatpush1.bf16.msra.mxu0 0
    %1012 = vmatprep.subr.bf16.mxu0 0
    %1013 = vmatpush1.bf16.msra.mxu0 0
    %1014 = vmatprep.subr.bf16.mxu0 0
    %1015 = vmatpush1.bf16.msra.mxu0 0
    %1016 = vmatprep.subr.bf16.mxu0 0
    %1017 = vmatpush1.bf16.msra.mxu0 0
    %1018 = vmatprep.subr.bf16.mxu0 0
    %1019 = vmatpush1.bf16.msra.mxu0 0
    %1020 = vmatprep.subr.bf16.mxu0 0
    %1021 = vmatpush1.bf16.msra.mxu0 0
    %1022 = vmatprep.subr.bf16.mxu0 0
    %1023 = vmatpush1.bf16.msra.mxu0 0
    %1024 = vmatprep.subr.bf16.mxu0 0
    %1025 = vmatpush1.bf16.msra.mxu0 0
    %1026 = vmatprep.subr.bf16.mxu0 0
    %1027 = vmatpush1.bf16.msra.mxu0 0
    %1028 = vmatprep.mubr.bf16.mxu0 0
    %1029 = vmatmul.mubr.bf16.gmra.mrb[0].mxu0 %v829
    %v1030 = vpop.f32.mrb[0].mxu0
    %v1031 = vadd.f32 0.0, %v1030
    %v1032 = vpop.f32.mrb[0].mxu0
    %v1033 = vpop.f32.mrb[0].mxu0
    %v1034 = vadd.f32 0.0, %v1033
    %v1035 = vpop.f32.mrb[0].mxu0
    %1036 = vmatprep.mubr.bf16.mxu0 0
    %1037 = vmatmul.mubr.bf16.gmra.mrb[0].mxu0 %v832
    %v1038 = vpop.f32.mrb[0].mxu0
    %v1039 = vadd.f32 0.0, %v1038
    %v1040 = vpop.f32.mrb[0].mxu0
    %v1041 = vpop.f32.mrb[0].mxu0
    %v1042 = vpop.f32.mrb[0].mxu0
    %1043 = vdwg.mxu0
    %v1046 = vrot.slane %v950, 1
    %v1047 = vrot.slane %v953, 1
    %v1048 = vsel %vm694, %v1046, %v1047
    %v1050 = vadd.f32 %v869, %v1048
    %v1053 = vrot.slane %v1031, 2
    %v1054 = vrot.slane %v1034, 2
    %v1055 = vsel %vm340, %v1053, %v1054
    %v1057 = vadd.f32 %v1050, %v1055
    %v1059 = vrot.slane %v958, 1
    %v1060 = vsel %vm694, %v1047, %v1059
    %v1063 = vadd.f32 %v872, %v1060
    %v1064 = vadd.f32 %v877, %v1059
    %v1066 = vrot.slane %v1039, 2
    %v1067 = vsel %vm340, %v1054, %v1066
    %v1070 = vadd.f32 %v1063, %v1067
    %v1071 = vadd.f32 %v1064, %v1066
    %v1072 = vsel %vm385, %v1057, 0.0
    %v1073 = vrot.slane %v1072, 4
    %v1074 = vadd.f32 %v1072, %v1073
    %v1075 = vrot.slane %v1074, 2
    %v1076 = vadd.f32 %v1074, %v1075
    %v1077 = vrot.slane %v1076, 1
    %v1078 = vadd.f32 %v1076, %v1077
    %v1079 = vmul.f32 %v1057, %v1057
    %v1080 = vsel %vm385, %v1079, 0.0
    %v1081 = vrot.slane %v1080, 4
    %v1082 = vadd.f32 %v1080, %v1081
    %v1083 = vrot.slane %v1082, 2
    %v1084 = vadd.f32 %v1082, %v1083
    %v1085 = vrot.slane %v1084, 1
    %v1086 = vadd.f32 %v1084, %v1085
    %v1089 = vrot.slane %v1070, 2
    %v1090 = vrot.slane %v1071, 2
    %v1091 = vsel %vm340, %v1089, %v1090
    %v1093 = vsel %vm385, %v1091, 0.0
    %v1094 = vrot.slane %v1093, 4
    %v1095 = vadd.f32 %v1093, %v1094
    %v1096 = vrot.slane %v1095, 2
    %v1097 = vadd.f32 %v1095, %v1096
    %v1098 = vrot.slane %v1097, 1
    %v1099 = vadd.f32 %v1097, %v1098
    %v1100 = vadd.f32 %v1078, %v1099
    %v1101 = vmul.f32 %v1070, %v1070
    %v1102 = vmul.f32 %v1071, %v1071
    %v1105 = vrot.slane %v1101, 2
    %v1106 = vrot.slane %v1102, 2
    %v1107 = vsel %vm340, %v1105, %v1106
    %v1109 = vsel %vm385, %v1107, 0.0
    %v1110 = vrot.slane %v1109, 4
    %v1111 = vadd.f32 %v1109, %v1110
    %v1112 = vrot.slane %v1111, 2
    %v1113 = vadd.f32 %v1111, %v1112
    %v1114 = vrot.slane %v1113, 1
    %v1115 = vadd.f32 %v1113, %v1114
    %v1116 = vadd.f32 %v1086, %v1115
    %v1117 = vmul.f32 %v1100, %v418
    %v1118 = vmul.f32 %v1116, %v418
    %v1119 = vmul.f32 %v1117, %v1117
    %v1120 = vsub.f32 %v1118, %v1119
    %v1121 = vmax.f32 %v1120, 0.0
    %v1122 = vadd.f32 %v1121, 1e-05
    %v1123 = vrsqrt.pop %v1122
    %v1124 = vsub.f32 %v1057, %v1117
    %v1125 = vmul.f32 %v1124, %v1123
    %v1126 = vsub.f32 %v1070, %v1117
    %v1127 = vsub.f32 %v1071, %v1117
    %v1128 = vmul.f32 %v1126, %v1123
    %v1129 = vmul.f32 %v1127, %v1123
    %v1132 = vrot.slane %v439, 1
    %v1133 = vrot.slane %v440, 1
    %v1134 = vsel %vm694, %v1132, %v1133
    %v1136 = vadd.f32 %v1125, %v1134
    %v1137 = vmax.f32 %v1136, 0.0
    %v1139 = vrot.slane %v441, 1
    %v1140 = vsel %vm694, %v1133, %v1139
    %v1143 = vadd.f32 %v1128, %v1140
    %v1144 = vadd.f32 %v1129, %v1139
    %v1145 = vmax.f32 %v1143, 0.0
    %v1146 = vmax.f32 %v1144, 0.0
    %1147 = vst [vmem:[#allocation5] sm:$0x1] 0.0
    %1148 = vst.msk [vmem:[#allocation5 + $0x1] sm:$0x1] %vm432, %v1137
    %1150 = vrot.lane.b32.xlu0 %v1137, 64
    %v1151 = vpop.permute.xlu0 %1150
    %vm1153 = vcmask 1041921
    %1154 = vst.msk [vmem:[#allocation5] sm:$0x2] %vm1153, %v1151
    %vm1155 = vcmask 518146
    %1156 = vst.msk [vmem:[#allocation5] sm:$0x4] %vm1155, %v1137
    %vm1157 = vcmask 1043971
    %1158 = vst.msk [vmem:[#allocation5 - $0x1] sm:$0x8] %vm1157, %v1151
    %vm1159 = vcmask 520196
    %1160 = vst.msk [vmem:[#allocation5 - $0x1] sm:$0x10] %vm1159, %v1137
    %vm1161 = vcmask 1046021
    %1162 = vst.msk [vmem:[#allocation5 - $0x2] sm:$0x20] %vm1161, %v1151
    %vm1163 = vcmask 522246
    %1164 = vst.msk [vmem:[#allocation5 - $0x2] sm:$0x40] %vm1163, %v1137
    %vm1165 = vcmask 1048071
    %1166 = vst.msk [vmem:[#allocation5 - $0x3] sm:$0x80] %vm1165, %v1151
    %1167 = vst [vmem:[#allocation5 + $0x5] sm:$0x1] 0.0
    %1168 = vst.msk [vmem:[#allocation5 + $0x4] sm:$0x4] %vm1155, %v1145
    %1170 = vrot.lane.b32.xlu0 %v1145, 64
    %v1171 = vpop.permute.xlu0 %1170
    %1173 = vst.msk [vmem:[#allocation5 + $0x3] sm:$0x8] %vm1157, %v1171
    %1174 = vst.msk [vmem:[#allocation5 + $0x3] sm:$0x10] %vm1159, %v1145
    %1175 = vst.msk [vmem:[#allocation5 + $0x2] sm:$0x20] %vm1161, %v1171
    %1176 = vst.msk [vmem:[#allocation5 + $0x2] sm:$0x40] %vm1163, %v1145
    %1177 = vst.msk [vmem:[#allocation5 + $0x1] sm:$0x80] %vm1165, %v1171
    %1178 = vst.msk [vmem:[#allocation5 + $0x9] sm:$0x1] %vm432, %v1146
    %1180 = vrot.lane.b32.xlu0 %v1146, 64
    %v1181 = vpop.permute.xlu0 %1180
    %1183 = vst.msk [vmem:[#allocation5 + $0x8] sm:$0x2] %vm1153, %v1181
    %v1184 = vld [vmem:[#allocation5] sm:$0xff]
    %v1185 = vld [vmem:[#allocation5 + $0x8] sm:$0x3]
    %v1186 = vpack.c.bf16 %v1185, %v1184
    %v1187 = vld [vmem:[#allocation18] sm:$0xf]
    %v1188 = vld [vmem:[#allocation18 + $0x4] sm:$0xf]
    %v1189 = vld [vmem:[#allocation18 + $0x8] sm:$0xf]
    %v1190 = vld [vmem:[#allocation18 + $0xc] sm:$0xf]
    %v1191 = vld [vmem:[#allocation18 + $0x10] sm:$0xf]
    %v1192 = vld [vmem:[#allocation18 + $0x14] sm:$0xf]
    %v1193 = vld [vmem:[#allocation18 + $0x18] sm:$0xf]
    %v1194 = vld [vmem:[#allocation18 + $0x1c] sm:$0xf]
    %v1195 = vld [vmem:[#allocation18 + $0x20] sm:$0xf]
    %v1196 = vld [vmem:[#allocation18 + $0x24] sm:$0xf]
    %v1197 = vld [vmem:[#allocation18 + $0x28] sm:$0xf]
    %v1198 = vld [vmem:[#allocation18 + $0x2c] sm:$0xf]
    %v1199 = vld [vmem:[#allocation18 + $0x30] sm:$0xf]
    %v1200 = vld [vmem:[#allocation18 + $0x34] sm:$0xf]
    %v1201 = vld [vmem:[#allocation18 + $0x38] sm:$0xf]
    %v1202 = vld [vmem:[#allocation18 + $0x3c] sm:$0xf]
    %v1219 = vunpack.c.l.b16 %v1187
    %v1220 = vunpack.c.l.b16 %v1188
    %v1221 = vunpack.c.l.b16 %v1189
    %v1222 = vunpack.c.l.b16 %v1190
    %v1223 = vunpack.c.l.b16 %v1191
    %v1224 = vunpack.c.l.b16 %v1192
    %v1225 = vunpack.c.l.b16 %v1193
    %v1226 = vunpack.c.l.b16 %v1194
    %v1227 = vunpack.c.l.b16 %v1195
    %v1228 = vunpack.c.l.b16 %v1196
    %v1229 = vunpack.c.l.b16 %v1197
    %v1230 = vunpack.c.l.b16 %v1198
    %v1231 = vunpack.c.l.b16 %v1199
    %v1232 = vunpack.c.l.b16 %v1200
    %v1233 = vunpack.c.l.b16 %v1201
    %v1234 = vunpack.c.l.b16 %v1202
    %v1235 = vpack.c.b16 %v1220, %v1219
    %v1236 = vpack.c.b16 %v1222, %v1221
    %v1237 = vpack.c.b16 %v1224, %v1223
    %v1238 = vpack.c.b16 %v1226, %v1225
    %v1239 = vpack.c.b16 %v1228, %v1227
    %v1240 = vpack.c.b16 %v1230, %v1229
    %v1241 = vpack.c.b16 %v1232, %v1231
    %v1242 = vpack.c.b16 %v1234, %v1233
    %1251 = vmatprep.subr.bf16.mxu0 0
    %1252 = vmatpush1.bf16.msra.mxu0 %v1235
    %1253 = vmatprep.subr.bf16.mxu0 0
    %1254 = vmatpush1.bf16.msra.mxu0 %v1236
    %1255 = vmatprep.subr.bf16.mxu0 0
    %1256 = vmatpush1.bf16.msra.mxu0 %v1237
    %1257 = vmatprep.subr.bf16.mxu0 0
    %1258 = vmatpush1.bf16.msra.mxu0 %v1238
    %1259 = vmatprep.subr.bf16.mxu0 0
    %1260 = vmatpush1.bf16.msra.mxu0 %v1239
    %1261 = vmatprep.subr.bf16.mxu0 0
    %1262 = vmatpush1.bf16.msra.mxu0 %v1240
    %1263 = vmatprep.subr.bf16.mxu0 0
    %1264 = vmatpush1.bf16.msra.mxu0 %v1241
    %1265 = vmatprep.subr.bf16.mxu0 0
    %1266 = vmatpush1.bf16.msra.mxu0 %v1242
    %1267 = vmatprep.subr.bf16.mxu0 0
    %1268 = vmatpush1.bf16.msra.mxu0 0
    %1269 = vmatprep.subr.bf16.mxu0 0
    %1270 = vmatpush1.bf16.msra.mxu0 0
    %1271 = vmatprep.subr.bf16.mxu0 0
    %1272 = vmatpush1.bf16.msra.mxu0 0
    %1273 = vmatprep.subr.bf16.mxu0 0
    %1274 = vmatpush1.bf16.msra.mxu0 0
    %1275 = vmatprep.subr.bf16.mxu0 0
    %1276 = vmatpush1.bf16.msra.mxu0 0
    %1277 = vmatprep.subr.bf16.mxu0 0
    %1278 = vmatpush1.bf16.msra.mxu0 0
    %1279 = vmatprep.subr.bf16.mxu0 0
    %1280 = vmatpush1.bf16.msra.mxu0 0
    %1281 = vmatprep.subr.bf16.mxu0 0
    %1282 = vmatpush1.bf16.msra.mxu0 0
    %1283 = vmatprep.mubr.bf16.mxu0 0
    %1284 = vmatmul.mubr.bf16.gmra.mrb[0].mxu0 %v1186
    %v1285 = vpop.f32.mrb[0].mxu0
    %v1286 = vadd.f32 0.0, %v1285
    %v1287 = vpop.f32.mrb[0].mxu0
    %v1288 = vpop.f32.mrb[0].mxu0
    %v1289 = vadd.f32 0.0, %v1288
    %v1290 = vpop.f32.mrb[0].mxu0
    %1291 = vdwg.mxu0
    %v1292 = vld [vmem:[#allocation20] sm:$0xf]
    %v1293 = vld [vmem:[#allocation20 + $0x4] sm:$0xf]
    %v1294 = vld [vmem:[#allocation20 + $0x8] sm:$0xf]
    %v1295 = vld [vmem:[#allocation20 + $0xc] sm:$0xf]
    %v1296 = vld [vmem:[#allocation20 + $0x10] sm:$0xf]
    %v1297 = vld [vmem:[#allocation20 + $0x14] sm:$0xf]
    %v1298 = vld [vmem:[#allocation20 + $0x18] sm:$0xf]
    %v1299 = vld [vmem:[#allocation20 + $0x1c] sm:$0xf]
    %1301 = vrot.lane.b32.xlu0 %v1186, 64
    %v1302 = vpop.permute.xlu0 %1301
    %v1311 = vunpack.c.l.b16 %v1292
    %v1312 = vunpack.c.l.b16 %v1293
    %v1313 = vunpack.c.l.b16 %v1294
    %v1314 = vunpack.c.l.b16 %v1295
    %v1315 = vunpack.c.l.b16 %v1296
    %v1316 = vunpack.c.l.b16 %v1297
    %v1317 = vunpack.c.l.b16 %v1298
    %v1318 = vunpack.c.l.b16 %v1299
    %v1319 = vpack.c.b16 %v1312, %v1311
    %v1320 = vpack.c.b16 %v1314, %v1313
    %v1321 = vpack.c.b16 %v1316, %v1315
    %v1322 = vpack.c.b16 %v1318, %v1317
    %v1328 = vsel %vm385, %v1302, 0
    %1330 = vmatprep.subr.bf16.mxu0 0
    %1331 = vmatpush1.bf16.msra.mxu0 %v1319
    %1332 = vmatprep.subr.bf16.mxu0 0
    %1333 = vmatpush1.bf16.msra.mxu0 %v1320
    %1334 = vmatprep.subr.bf16.mxu0 0
    %1335 = vmatpush1.bf16.msra.mxu0 %v1321
    %1336 = vmatprep.subr.bf16.mxu0 0
    %1337 = vmatpush1.bf16.msra.mxu0 %v1322
    %1338 = vmatprep.subr.bf16.mxu0 0
    %1339 = vmatpush1.bf16.msra.mxu0 0
    %1340 = vmatprep.subr.bf16.mxu0 0
    %1341 = vmatpush1.bf16.msra.mxu0 0
    %1342 = vmatprep.subr.bf16.mxu0 0
    %1343 = vmatpush1.bf16.msra.mxu0 0
    %1344 = vmatprep.subr.bf16.mxu0 0
    %1345 = vmatpush1.bf16.msra.mxu0 0
    %1346 = vmatprep.subr.bf16.mxu0 0
    %1347 = vmatpush1.bf16.msra.mxu0 0
    %1348 = vmatprep.subr.bf16.mxu0 0
    %1349 = vmatpush1.bf16.msra.mxu0 0
    %1350 = vmatprep.subr.bf16.mxu0 0
    %1351 = vmatpush1.bf16.msra.mxu0 0
    %1352 = vmatprep.subr.bf16.mxu0 0
    %1353 = vmatpush1.bf16.msra.mxu0 0
    %1354 = vmatprep.subr.bf16.mxu0 0
    %1355 = vmatpush1.bf16.msra.mxu0 0
    %1356 = vmatprep.subr.bf16.mxu0 0
    %1357 = vmatpush1.bf16.msra.mxu0 0
    %1358 = vmatprep.subr.bf16.mxu0 0
    %1359 = vmatpush1.bf16.msra.mxu0 0
    %1360 = vmatprep.subr.bf16.mxu0 0
    %1361 = vmatpush1.bf16.msra.mxu0 0
    %1362 = vmatprep.mubr.bf16.mxu0 0
    %1363 = vmatmul.mubr.bf16.gmra.mrb[0].mxu0 %v1328
    %v1364 = vpop.f32.mrb[0].mxu0
    %v1365 = vadd.f32 0.0, %v1364
    %v1366 = vpop.f32.mrb[0].mxu0
    %v1367 = vpop.f32.mrb[0].mxu0
    %v1368 = vadd.f32 0.0, %v1367
    %v1369 = vpop.f32.mrb[0].mxu0
    %1370 = vdwg.mxu0
    %v1371 = vld [vmem:[#allocation21] sm:$0xf]
    %v1372 = vld [vmem:[#allocation21 + $0x4] sm:$0xf]
    %v1373 = vld [vmem:[#allocation21 + $0x8] sm:$0xf]
    %v1374 = vld [vmem:[#allocation21 + $0xc] sm:$0xf]
    %v1375 = vld [vmem:[#allocation21 + $0x10] sm:$0xf]
    %v1376 = vld [vmem:[#allocation21 + $0x14] sm:$0xf]
    %v1377 = vld [vmem:[#allocation21 + $0x18] sm:$0xf]
    %v1378 = vld [vmem:[#allocation21 + $0x1c] sm:$0xf]
    %v1387 = vunpack.c.l.b16 %v1371
    %v1388 = vunpack.c.l.b16 %v1372
    %v1389 = vunpack.c.l.b16 %v1373
    %v1390 = vunpack.c.l.b16 %v1374
    %v1391 = vunpack.c.l.b16 %v1375
    %v1392 = vunpack.c.l.b16 %v1376
    %v1393 = vunpack.c.l.b16 %v1377
    %v1394 = vunpack.c.l.b16 %v1378
    %v1395 = vpack.c.b16 %v1388, %v1387
    %v1396 = vpack.c.b16 %v1390, %v1389
    %v1397 = vpack.c.b16 %v1392, %v1391
    %v1398 = vpack.c.b16 %v1394, %v1393
    %v1404 = vsel %vm385, %v1186, 0
    %1406 = vmatprep.subr.bf16.mxu0 0
    %1407 = vmatpush1.bf16.msra.mxu0 %v1395
    %1408 = vmatprep.subr.bf16.mxu0 0
    %1409 = vmatpush1.bf16.msra.mxu0 %v1396
    %1410 = vmatprep.subr.bf16.mxu0 0
    %1411 = vmatpush1.bf16.msra.mxu0 %v1397
    %1412 = vmatprep.subr.bf16.mxu0 0
    %1413 = vmatpush1.bf16.msra.mxu0 %v1398
    %1414 = vmatprep.subr.bf16.mxu0 0
    %1415 = vmatpush1.bf16.msra.mxu0 0
    %1416 = vmatprep.subr.bf16.mxu0 0
    %1417 = vmatpush1.bf16.msra.mxu0 0
    %1418 = vmatprep.subr.bf16.mxu0 0
    %1419 = vmatpush1.bf16.msra.mxu0 0
    %1420 = vmatprep.subr.bf16.mxu0 0
    %1421 = vmatpush1.bf16.msra.mxu0 0
    %1422 = vmatprep.subr.bf16.mxu0 0
    %1423 = vmatpush1.bf16.msra.mxu0 0
    %1424 = vmatprep.subr.bf16.mxu0 0
    %1425 = vmatpush1.bf16.msra.mxu0 0
    %1426 = vmatprep.subr.bf16.mxu0 0
    %1427 = vmatpush1.bf16.msra.mxu0 0
    %1428 = vmatprep.subr.bf16.mxu0 0
    %1429 = vmatpush1.bf16.msra.mxu0 0
    %1430 = vmatprep.subr.bf16.mxu0 0
    %1431 = vmatpush1.bf16.msra.mxu0 0
    %1432 = vmatprep.subr.bf16.mxu0 0
    %1433 = vmatpush1.bf16.msra.mxu0 0
    %1434 = vmatprep.subr.bf16.mxu0 0
    %1435 = vmatpush1.bf16.msra.mxu0 0
    %1436 = vmatprep.subr.bf16.mxu0 0
    %1437 = vmatpush1.bf16.msra.mxu0 0
    %1438 = vmatprep.mubr.bf16.mxu0 0
    %1439 = vmatmul.mubr.bf16.gmra.mrb[0].mxu0 %v1404
    %v1440 = vpop.f32.mrb[0].mxu0
    %v1441 = vadd.f32 0.0, %v1440
    %v1442 = vpop.f32.mrb[0].mxu0
    %v1443 = vpop.f32.mrb[0].mxu0
    %v1444 = vadd.f32 0.0, %v1443
    %v1445 = vpop.f32.mrb[0].mxu0
    %1446 = vdwg.mxu0
    %v1448 = vrot.slane %v1365, 7
    %v1450 = vadd.f32 %v1286, %v1448
    %vm1452 = vcmask 1040384
    %v1453 = vrot.slane %v1368, 7
    %v1454 = vsel %vm1452, %v1448, %v1453
    %v1456 = vadd.f32 %v1289, %v1454
    %v1458 = vrot.slane %v1450, 1
    %vm1460 = vcmask 1043456
    %v1461 = vsel %vm1460, %v1458, 0.0
    %v1462 = vrot.slane %v1461, 4
    %v1463 = vadd.f32 %v1461, %v1462
    %v1464 = vrot.slane %v1463, 2
    %v1465 = vadd.f32 %v1463, %v1464
    %v1466 = vrot.slane %v1465, 1
    %v1467 = vadd.f32 %v1465, %v1466
    %v1468 = vmul.f32 %v1450, %v1450
    %v1470 = vrot.slane %v1468, 1
    %v1472 = vsel %vm1460, %v1470, 0.0
    %v1473 = vrot.slane %v1472, 4
    %v1474 = vadd.f32 %v1472, %v1473
    %v1475 = vrot.slane %v1474, 2
    %v1476 = vadd.f32 %v1474, %v1475
    %v1477 = vrot.slane %v1476, 1
    %v1478 = vadd.f32 %v1476, %v1477
    %vm1480 = vcmask 1041408
    %v1481 = vrot.slane %v1450, 6
    %v1482 = vrot.slane %v1456, 6
    %v1483 = vsel %vm1480, %v1481, %v1482
    %v1485 = vsel %vm1460, %v1483, 0.0
    %v1486 = vrot.slane %v1485, 4
    %v1487 = vadd.f32 %v1485, %v1486
    %v1488 = vrot.slane %v1487, 2
    %v1489 = vadd.f32 %v1487, %v1488
    %v1490 = vrot.slane %v1489, 1
    %v1491 = vadd.f32 %v1489, %v1490
    %v1492 = vadd.f32 %v1467, %v1491
    %v1493 = vmul.f32 %v1456, %v1456
    %v1495 = vrot.slane %v1468, 6
    %v1496 = vrot.slane %v1493, 6
    %v1497 = vsel %vm1480, %v1495, %v1496
    %v1499 = vsel %vm1460, %v1497, 0.0
    %v1500 = vrot.slane %v1499, 4
    %v1501 = vadd.f32 %v1499, %v1500
    %v1502 = vrot.slane %v1501, 2
    %v1503 = vadd.f32 %v1501, %v1502
    %v1504 = vrot.slane %v1503, 1
    %v1505 = vadd.f32 %v1503, %v1504
    %v1506 = vadd.f32 %v1478, %v1505
    %v1507 = vrcp.pop 8.0
    %v1508 = vmul.f32 %v1492, %v1507
    %v1509 = vmul.f32 %v1506, %v1507
    %v1510 = vmul.f32 %v1508, %v1508
    %v1511 = vsub.f32 %v1509, %v1510
    %v1512 = vmax.f32 %v1511, 0.0
    %v1513 = vadd.f32 %v1512, 1e-05
    %v1514 = vrsqrt.pop %v1513
    %v1515 = vsub.f32 %v1450, %v1508
    %v1516 = vmul.f32 %v1515, %v1514
    %v1517 = vsub.f32 %v1456, %v1508
    %v1518 = vmul.f32 %v1517, %v1514
    %v1519 = vmax.f32 %v1516, 0.0
    %v1520 = vmax.f32 %v1518, 0.0
    %1521 = vst [vmem:[#allocation6] sm:$0x1] 0.0
    %1522 = vst [vmem:[#allocation6] sm:$0x1e] %v1519
    %1523 = vst [vmem:[#allocation6 + $0x5] sm:$0x1] 0.0
    %1524 = vst [vmem:[#allocation6 + $0x6] sm:$0x1] 0.0
    %1525 = vst [vmem:[#allocation6 + $0x1] sm:$0xc0] %v1519
    %1526 = vst [vmem:[#allocation6 + $0x9] sm:$0x3] %v1520
    %1527 = vst [vmem:[#allocation6 + $0xb] sm:$0x1] 0.0
    %v1529 = vrot.slane %v1441, 1
    %v1531 = vsel %vm1460, %v1529, 0.0
    %v1532 = vrot.slane %v1531, 4
    %v1533 = vadd.f32 %v1531, %v1532
    %v1534 = vrot.slane %v1533, 2
    %v1535 = vadd.f32 %v1533, %v1534
    %v1536 = vrot.slane %v1535, 1
    %v1537 = vadd.f32 %v1535, %v1536
    %v1538 = vmul.f32 %v1441, %v1441
    %v1540 = vrot.slane %v1538, 1
    %v1542 = vsel %vm1460, %v1540, 0.0
    %v1543 = vrot.slane %v1542, 4
    %v1544 = vadd.f32 %v1542, %v1543
    %v1545 = vrot.slane %v1544, 2
    %v1546 = vadd.f32 %v1544, %v1545
    %v1547 = vrot.slane %v1546, 1
    %v1548 = vadd.f32 %v1546, %v1547
    %v1550 = vrot.slane %v1441, 6
    %v1551 = vrot.slane %v1444, 6
    %v1552 = vsel %vm1480, %v1550, %v1551
    %v1554 = vsel %vm1460, %v1552, 0.0
    %v1555 = vrot.slane %v1554, 4
    %v1556 = vadd.f32 %v1554, %v1555
    %v1557 = vrot.slane %v1556, 2
    %v1558 = vadd.f32 %v1556, %v1557
    %v1559 = vrot.slane %v1558, 1
    %v1560 = vadd.f32 %v1558, %v1559
    %v1561 = vadd.f32 %v1537, %v1560
    %v1562 = vmul.f32 %v1444, %v1444
    %v1564 = vrot.slane %v1538, 6
    %v1565 = vrot.slane %v1562, 6
    %v1566 = vsel %vm1480, %v1564, %v1565
    %v1568 = vsel %vm1460, %v1566, 0.0
    %v1569 = vrot.slane %v1568, 4
    %v1570 = vadd.f32 %v1568, %v1569
    %v1571 = vrot.slane %v1570, 2
    %v1572 = vadd.f32 %v1570, %v1571
    %v1573 = vrot.slane %v1572, 1
    %v1574 = vadd.f32 %v1572, %v1573
    %v1575 = vadd.f32 %v1548, %v1574
    %v1576 = vmul.f32 %v1561, %v1507
    %v1577 = vmul.f32 %v1575, %v1507
    %v1578 = vmul.f32 %v1576, %v1576
    %v1579 = vsub.f32 %v1577, %v1578
    %v1580 = vmax.f32 %v1579, 0.0
    %v1581 = vadd.f32 %v1580, 1e-05
    %v1582 = vrsqrt.pop %v1581
    %v1583 = vsub.f32 %v1441, %v1576
    %v1584 = vmul.f32 %v1583, %v1582
    %v1585 = vsub.f32 %v1444, %v1576
    %v1586 = vmul.f32 %v1585, %v1582
    %v1587 = vld [vmem:[#allocation6] sm:$0xff]
    %v1588 = vld [vmem:[#allocation6 + $0x8] sm:$0xf]
    %v1589 = vpack.c.bf16 %v1588, %v1587
    %v1590 = vld [vmem:[#allocation23] sm:$0xf]
    %v1591 = vld [vmem:[#allocation23 + $0x4] sm:$0xf]
    %v1592 = vld [vmem:[#allocation23 + $0x8] sm:$0xf]
    %v1593 = vld [vmem:[#allocation23 + $0xc] sm:$0xf]
    %v1594 = vld [vmem:[#allocation23 + $0x10] sm:$0xf]
    %v1595 = vld [vmem:[#allocation23 + $0x14] sm:$0xf]
    %v1596 = vld [vmem:[#allocation23 + $0x18] sm:$0xf]
    %v1597 = vld [vmem:[#allocation23 + $0x1c] sm:$0xf]
    %v1598 = vld [vmem:[#allocation23 + $0x20] sm:$0xf]
    %v1599 = vld [vmem:[#allocation23 + $0x24] sm:$0xf]
    %v1600 = vld [vmem:[#allocation23 + $0x28] sm:$0xf]
    %v1601 = vld [vmem:[#allocation23 + $0x2c] sm:$0xf]
    %v1602 = vld [vmem:[#allocation23 + $0x30] sm:$0xf]
    %v1603 = vld [vmem:[#allocation23 + $0x34] sm:$0xf]
    %v1604 = vld [vmem:[#allocation23 + $0x38] sm:$0xf]
    %v1605 = vld [vmem:[#allocation23 + $0x3c] sm:$0xf]
    %v1622 = vunpack.c.l.b16 %v1590
    %v1623 = vunpack.c.l.b16 %v1591
    %v1624 = vunpack.c.l.b16 %v1592
    %v1625 = vunpack.c.l.b16 %v1593
    %v1626 = vunpack.c.l.b16 %v1594
    %v1627 = vunpack.c.l.b16 %v1595
    %v1628 = vunpack.c.l.b16 %v1596
    %v1629 = vunpack.c.l.b16 %v1597
    %v1630 = vunpack.c.l.b16 %v1598
    %v1631 = vunpack.c.l.b16 %v1599
    %v1632 = vunpack.c.l.b16 %v1600
    %v1633 = vunpack.c.l.b16 %v1601
    %v1634 = vunpack.c.l.b16 %v1602
    %v1635 = vunpack.c.l.b16 %v1603
    %v1636 = vunpack.c.l.b16 %v1604
    %v1637 = vunpack.c.l.b16 %v1605
    %v1638 = vpack.c.b16 %v1623, %v1622
    %v1639 = vpack.c.b16 %v1625, %v1624
    %v1640 = vpack.c.b16 %v1627, %v1626
    %v1641 = vpack.c.b16 %v1629, %v1628
    %v1642 = vpack.c.b16 %v1631, %v1630
    %v1643 = vpack.c.b16 %v1633, %v1632
    %v1644 = vpack.c.b16 %v1635, %v1634
    %v1645 = vpack.c.b16 %v1637, %v1636
    %1654 = vmatprep.subr.bf16.mxu0 0
    %1655 = vmatpush1.bf16.msra.mxu0 %v1638
    %1656 = vmatprep.subr.bf16.mxu0 0
    %1657 = vmatpush1.bf16.msra.mxu0 %v1639
    %1658 = vmatprep.subr.bf16.mxu0 0
    %1659 = vmatpush1.bf16.msra.mxu0 %v1640
    %1660 = vmatprep.subr.bf16.mxu0 0
    %1661 = vmatpush1.bf16.msra.mxu0 %v1641
    %1662 = vmatprep.subr.bf16.mxu0 0
    %1663 = vmatpush1.bf16.msra.mxu0 %v1642
    %1664 = vmatprep.subr.bf16.mxu0 0
    %1665 = vmatpush1.bf16.msra.mxu0 %v1643
    %1666 = vmatprep.subr.bf16.mxu0 0
    %1667 = vmatpush1.bf16.msra.mxu0 %v1644
    %1668 = vmatprep.subr.bf16.mxu0 0
    %1669 = vmatpush1.bf16.msra.mxu0 %v1645
    %1670 = vmatprep.subr.bf16.mxu0 0
    %1671 = vmatpush1.bf16.msra.mxu0 0
    %1672 = vmatprep.subr.bf16.mxu0 0
    %1673 = vmatpush1.bf16.msra.mxu0 0
    %1674 = vmatprep.subr.bf16.mxu0 0
    %1675 = vmatpush1.bf16.msra.mxu0 0
    %1676 = vmatprep.subr.bf16.mxu0 0
    %1677 = vmatpush1.bf16.msra.mxu0 0
    %1678 = vmatprep.subr.bf16.mxu0 0
    %1679 = vmatpush1.bf16.msra.mxu0 0
    %1680 = vmatprep.subr.bf16.mxu0 0
    %1681 = vmatpush1.bf16.msra.mxu0 0
    %1682 = vmatprep.subr.bf16.mxu0 0
    %1683 = vmatpush1.bf16.msra.mxu0 0
    %1684 = vmatprep.subr.bf16.mxu0 0
    %1685 = vmatpush1.bf16.msra.mxu0 0
    %1686 = vmatprep.mubr.bf16.mxu0 0
    %1687 = vmatmul.mubr.bf16.gmra.mrb[0].mxu0 %v1589
    %v1688 = vpop.f32.mrb[0].mxu0
    %v1689 = vadd.f32 0.0, %v1688
    %v1690 = vpop.f32.mrb[0].mxu0
    %v1691 = vpop.f32.mrb[0].mxu0
    %v1692 = vadd.f32 0.0, %v1691
    %v1693 = vpop.f32.mrb[0].mxu0
    %1694 = vdwg.mxu0
    %s1695 = scalar_lea.vmem [#allocation23], 64
    %v1696 = vld [vmem:[%s1695] sm:$0xf]
    %v1697 = vld [vmem:[%s1695 + $0x4] sm:$0xf]
    %v1698 = vld [vmem:[%s1695 + $0x8] sm:$0xf]
    %v1699 = vld [vmem:[%s1695 + $0xc] sm:$0xf]
    %v1700 = vld [vmem:[%s1695 + $0x10] sm:$0xf]
    %v1701 = vld [vmem:[%s1695 + $0x14] sm:$0xf]
    %v1702 = vld [vmem:[%s1695 + $0x18] sm:$0xf]
    %v1703 = vld [vmem:[%s1695 + $0x1c] sm:$0xf]
    %v1704 = vld [vmem:[%s1695 + $0x20] sm:$0xf]
    %v1705 = vld [vmem:[%s1695 + $0x24] sm:$0xf]
    %v1706 = vld [vmem:[%s1695 + $0x28] sm:$0xf]
    %v1707 = vld [vmem:[%s1695 + $0x2c] sm:$0xf]
    %v1708 = vld [vmem:[%s1695 + $0x30] sm:$0xf]
    %v1709 = vld [vmem:[%s1695 + $0x34] sm:$0xf]
    %v1710 = vld [vmem:[%s1695 + $0x38] sm:$0xf]
    %v1711 = vld [vmem:[%s1695 + $0x3c] sm:$0xf]
    %v1728 = vunpack.c.l.b16 %v1696
    %v1729 = vunpack.c.l.b16 %v1697
    %v1730 = vunpack.c.l.b16 %v1698
    %v1731 = vunpack.c.l.b16 %v1699
    %v1732 = vunpack.c.l.b16 %v1700
    %v1733 = vunpack.c.l.b16 %v1701
    %v1734 = vunpack.c.l.b16 %v1702
    %v1735 = vunpack.c.l.b16 %v1703
    %v1736 = vunpack.c.l.b16 %v1704
    %v1737 = vunpack.c.l.b16 %v1705
    %v1738 = vunpack.c.l.b16 %v1706
    %v1739 = vunpack.c.l.b16 %v1707
    %v1740 = vunpack.c.l.b16 %v1708
    %v1741 = vunpack.c.l.b16 %v1709
    %v1742 = vunpack.c.l.b16 %v1710
    %v1743 = vunpack.c.l.b16 %v1711
    %v1744 = vpack.c.b16 %v1729, %v1728
    %v1745 = vpack.c.b16 %v1731, %v1730
    %v1746 = vpack.c.b16 %v1733, %v1732
    %v1747 = vpack.c.b16 %v1735, %v1734
    %v1748 = vpack.c.b16 %v1737, %v1736
    %v1749 = vpack.c.b16 %v1739, %v1738
    %v1750 = vpack.c.b16 %v1741, %v1740
    %v1751 = vpack.c.b16 %v1743, %v1742
    %1760 = vmatprep.subr.bf16.mxu0 0
    %1761 = vmatpush1.bf16.msra.mxu0 %v1744
    %1762 = vmatprep.subr.bf16.mxu0 0
    %1763 = vmatpush1.bf16.msra.mxu0 %v1745
    %1764 = vmatprep.subr.bf16.mxu0 0
    %1765 = vmatpush1.bf16.msra.mxu0 %v1746
    %1766 = vmatprep.subr.bf16.mxu0 0
    %1767 = vmatpush1.bf16.msra.mxu0 %v1747
    %1768 = vmatprep.subr.bf16.mxu0 0
    %1769 = vmatpush1.bf16.msra.mxu0 %v1748
    %1770 = vmatprep.subr.bf16.mxu0 0
    %1771 = vmatpush1.bf16.msra.mxu0 %v1749
    %1772 = vmatprep.subr.bf16.mxu0 0
    %1773 = vmatpush1.bf16.msra.mxu0 %v1750
    %1774 = vmatprep.subr.bf16.mxu0 0
    %1775 = vmatpush1.bf16.msra.mxu0 %v1751
    %1776 = vmatprep.subr.bf16.mxu0 0
    %1777 = vmatpush1.bf16.msra.mxu0 0
    %1778 = vmatprep.subr.bf16.mxu0 0
    %1779 = vmatpush1.bf16.msra.mxu0 0
    %1780 = vmatprep.subr.bf16.mxu0 0
    %1781 = vmatpush1.bf16.msra.mxu0 0
    %1782 = vmatprep.subr.bf16.mxu0 0
    %1783 = vmatpush1.bf16.msra.mxu0 0
    %1784 = vmatprep.subr.bf16.mxu0 0
    %1785 = vmatpush1.bf16.msra.mxu0 0
    %1786 = vmatprep.subr.bf16.mxu0 0
    %1787 = vmatpush1.bf16.msra.mxu0 0
    %1788 = vmatprep.subr.bf16.mxu0 0
    %1789 = vmatpush1.bf16.msra.mxu0 0
    %1790 = vmatprep.subr.bf16.mxu0 0
    %1791 = vmatpush1.bf16.msra.mxu0 0
    %1792 = vmatprep.mubr.bf16.mxu0 0
    %1793 = vmatmul.mubr.bf16.gmra.mrb[0].mxu0 %v1589
    %v1794 = vpop.f32.mrb[0].mxu0
    %v1795 = vadd.f32 0.0, %v1794
    %v1796 = vpop.f32.mrb[0].mxu0
    %v1797 = vpop.f32.mrb[0].mxu0
    %v1798 = vadd.f32 0.0, %v1797
    %v1799 = vpop.f32.mrb[0].mxu0
    %1800 = vdwg.mxu0
    %s1801 = scalar_lea.vmem [#allocation23], 128
    %v1802 = vld [vmem:[%s1801] sm:$0xf]
    %v1803 = vld [vmem:[%s1801 + $0x4] sm:$0xf]
    %v1804 = vld [vmem:[%s1801 + $0x8] sm:$0xf]
    %v1805 = vld [vmem:[%s1801 + $0xc] sm:$0xf]
    %v1806 = vld [vmem:[%s1801 + $0x10] sm:$0xf]
    %v1807 = vld [vmem:[%s1801 + $0x14] sm:$0xf]
    %v1808 = vld [vmem:[%s1801 + $0x18] sm:$0xf]
    %v1809 = vld [vmem:[%s1801 + $0x1c] sm:$0xf]
    %v1810 = vld [vmem:[%s1801 + $0x20] sm:$0xf]
    %v1811 = vld [vmem:[%s1801 + $0x24] sm:$0xf]
    %v1812 = vld [vmem:[%s1801 + $0x28] sm:$0xf]
    %v1813 = vld [vmem:[%s1801 + $0x2c] sm:$0xf]
    %v1814 = vld [vmem:[%s1801 + $0x30] sm:$0xf]
    %v1815 = vld [vmem:[%s1801 + $0x34] sm:$0xf]
    %v1816 = vld [vmem:[%s1801 + $0x38] sm:$0xf]
    %v1817 = vld [vmem:[%s1801 + $0x3c] sm:$0xf]
    %v1834 = vunpack.c.l.b16 %v1802
    %v1835 = vunpack.c.l.b16 %v1803
    %v1836 = vunpack.c.l.b16 %v1804
    %v1837 = vunpack.c.l.b16 %v1805
    %v1838 = vunpack.c.l.b16 %v1806
    %v1839 = vunpack.c.l.b16 %v1807
    %v1840 = vunpack.c.l.b16 %v1808
    %v1841 = vunpack.c.l.b16 %v1809
    %v1842 = vunpack.c.l.b16 %v1810
    %v1843 = vunpack.c.l.b16 %v1811
    %v1844 = vunpack.c.l.b16 %v1812
    %v1845 = vunpack.c.l.b16 %v1813
    %v1846 = vunpack.c.l.b16 %v1814
    %v1847 = vunpack.c.l.b16 %v1815
    %v1848 = vunpack.c.l.b16 %v1816
    %v1849 = vunpack.c.l.b16 %v1817
    %v1850 = vpack.c.b16 %v1835, %v1834
    %v1851 = vpack.c.b16 %v1837, %v1836
    %v1852 = vpack.c.b16 %v1839, %v1838
    %v1853 = vpack.c.b16 %v1841, %v1840
    %v1854 = vpack.c.b16 %v1843, %v1842
    %v1855 = vpack.c.b16 %v1845, %v1844
    %v1856 = vpack.c.b16 %v1847, %v1846
    %v1857 = vpack.c.b16 %v1849, %v1848
    %1866 = vmatprep.subr.bf16.mxu0 0
    %1867 = vmatpush1.bf16.msra.mxu0 %v1850
    %1868 = vmatprep.subr.bf16.mxu0 0
    %1869 = vmatpush1.bf16.msra.mxu0 %v1851
    %1870 = vmatprep.subr.bf16.mxu0 0
    %1871 = vmatpush1.bf16.msra.mxu0 %v1852
    %1872 = vmatprep.subr.bf16.mxu0 0
    %1873 = vmatpush1.bf16.msra.mxu0 %v1853
    %1874 = vmatprep.subr.bf16.mxu0 0
    %1875 = vmatpush1.bf16.msra.mxu0 %v1854
    %1876 = vmatprep.subr.bf16.mxu0 0
    %1877 = vmatpush1.bf16.msra.mxu0 %v1855
    %1878 = vmatprep.subr.bf16.mxu0 0
    %1879 = vmatpush1.bf16.msra.mxu0 %v1856
    %1880 = vmatprep.subr.bf16.mxu0 0
    %1881 = vmatpush1.bf16.msra.mxu0 %v1857
    %1882 = vmatprep.subr.bf16.mxu0 0
    %1883 = vmatpush1.bf16.msra.mxu0 0
    %1884 = vmatprep.subr.bf16.mxu0 0
    %1885 = vmatpush1.bf16.msra.mxu0 0
    %1886 = vmatprep.subr.bf16.mxu0 0
    %1887 = vmatpush1.bf16.msra.mxu0 0
    %1888 = vmatprep.subr.bf16.mxu0 0
    %1889 = vmatpush1.bf16.msra.mxu0 0
    %1890 = vmatprep.subr.bf16.mxu0 0
    %1891 = vmatpush1.bf16.msra.mxu0 0
    %1892 = vmatprep.subr.bf16.mxu0 0
    %1893 = vmatpush1.bf16.msra.mxu0 0
    %1894 = vmatprep.subr.bf16.mxu0 0
    %1895 = vmatpush1.bf16.msra.mxu0 0
    %1896 = vmatprep.subr.bf16.mxu0 0
    %1897 = vmatpush1.bf16.msra.mxu0 0
    %1898 = vmatprep.mubr.bf16.mxu0 0
    %1899 = vmatmul.mubr.bf16.gmra.mrb[0].mxu0 %v1589
    %v1900 = vpop.f32.mrb[0].mxu0
    %v1901 = vadd.f32 0.0, %v1900
    %v1902 = vpop.f32.mrb[0].mxu0
    %v1903 = vpop.f32.mrb[0].mxu0
    %v1904 = vadd.f32 0.0, %v1903
    %v1905 = vpop.f32.mrb[0].mxu0
    %1906 = vdwg.mxu0
    %v1908 = vrot.slane %v1795, 1
    %v1910 = vadd.f32 %v1689, %v1908
    %v1912 = vrot.slane %v1901, 2
    %v1914 = vadd.f32 %v1910, %v1912
    %v1916 = vrot.slane %v1798, 1
    %v1917 = vsel %vm694, %v1908, %v1916
    %v1920 = vadd.f32 %v1689, %v1917
    %v1921 = vadd.f32 %v1692, %v1916
    %v1923 = vrot.slane %v1904, 2
    %v1925 = vadd.f32 %v1920, %v1923
    %v1926 = vadd.f32 %v1921, %v1923
    %v1927 = vsel %vm1460, %v1914, 0.0
    %v1928 = vrot.slane %v1927, 4
    %v1929 = vadd.f32 %v1927, %v1928
    %v1930 = vrot.slane %v1929, 2
    %v1931 = vadd.f32 %v1929, %v1930
    %v1932 = vrot.slane %v1931, 1
    %v1933 = vadd.f32 %v1931, %v1932
    %v1934 = vmul.f32 %v1914, %v1914
    %v1935 = vsel %vm1460, %v1934, 0.0
    %v1936 = vrot.slane %v1935, 4
    %v1937 = vadd.f32 %v1935, %v1936
    %v1938 = vrot.slane %v1937, 2
    %v1939 = vadd.f32 %v1937, %v1938
    %v1940 = vrot.slane %v1939, 1
    %v1941 = vadd.f32 %v1939, %v1940
    %v1944 = vrot.slane %v1925, 6
    %v1945 = vrot.slane %v1926, 6
    %v1946 = vsel %vm1480, %v1944, %v1945
    %v1948 = vsel %vm1460, %v1946, 0.0
    %v1949 = vrot.slane %v1948, 4
    %v1950 = vadd.f32 %v1948, %v1949
    %v1951 = vrot.slane %v1950, 2
    %v1952 = vadd.f32 %v1950, %v1951
    %v1953 = vrot.slane %v1952, 1
    %v1954 = vadd.f32 %v1952, %v1953
    %v1955 = vadd.f32 %v1933, %v1954
    %v1956 = vmul.f32 %v1925, %v1925
    %v1957 = vmul.f32 %v1926, %v1926
    %v1960 = vrot.slane %v1956, 6
    %v1961 = vrot.slane %v1957, 6
    %v1962 = vsel %vm1480, %v1960, %v1961
    %v1964 = vsel %vm1460, %v1962, 0.0
    %v1965 = vrot.slane %v1964, 4
    %v1966 = vadd.f32 %v1964, %v1965
    %v1967 = vrot.slane %v1966, 2
    %v1968 = vadd.f32 %v1966, %v1967
    %v1969 = vrot.slane %v1968, 1
    %v1970 = vadd.f32 %v1968, %v1969
    %v1971 = vadd.f32 %v1941, %v1970
    %v1972 = vmul.f32 %v1955, %v1507
    %v1973 = vmul.f32 %v1971, %v1507
    %v1974 = vmul.f32 %v1972, %v1972
    %v1975 = vsub.f32 %v1973, %v1974
    %v1976 = vmax.f32 %v1975, 0.0
    %v1977 = vadd.f32 %v1976, 1e-05
    %v1978 = vrsqrt.pop %v1977
    %v1979 = vsub.f32 %v1914, %v1972
    %v1980 = vmul.f32 %v1979, %v1978
    %v1981 = vsub.f32 %v1925, %v1972
    %v1982 = vsub.f32 %v1926, %v1972
    %v1983 = vmul.f32 %v1981, %v1978
    %v1984 = vmul.f32 %v1982, %v1978
    %v1986 = vrot.slane %v1584, 1
    %v1988 = vadd.f32 %v1980, %v1986
    %v1989 = vmax.f32 %v1988, 0.0
    %v1990 = vadd.f32 %v1983, %v1584
    %v1991 = vadd.f32 %v1984, %v1586
    %v1992 = vmax.f32 %v1990, 0.0
    %v1993 = vmax.f32 %v1991, 0.0
    %v1994 = vlaneseq
    %vm1995 = vcmp.ge.s32.totalorder %v1994, 0
    %vm1996 = vcmp.lt.s32.totalorder %v1994, 256
    %vm1997 = vmand %vm1995, %vm1996
    %1998 = vst.msk [vmem:[#allocation7] ss:$8 sm:$0x3] %vm1997, 0.0
    %1999 = vst.msk [vmem:[#allocation7] ss:$8 sm:$0x0] %vm1997, 0.0
    %2000 = vst [vmem:[#allocation7 + $0x1] sm:$0x1] %v1989
    %v2002 = vrot.slane %v1989, 1
    %2004 = vst [vmem:[#allocation7 + $0x9] sm:$0x1] %v2002
    %v2005 = vrot.slane %v1989, 2
    %2007 = vst [vmem:[#allocation7 + $0x2] sm:$0x1] %v2005
    %v2008 = vrot.slane %v1989, 3
    %2010 = vst [vmem:[#allocation7 + $0xa] sm:$0x1] %v2008
    %s2011 = scalar_lea.vmem [#allocation7], 3
    %2012 = vst.msk [vmem:[%s2011] ss:$8 sm:$0x3] %vm1997, 0.0
    %2013 = vst.msk [vmem:[%s2011] ss:$8 sm:$0x0] %vm1997, 0.0
    %v2015 = vrot.slane %v1992, 6
    %2017 = vst [vmem:[#allocation7 + $0x4] sm:$0x1] %v2015
    %v2018 = vrot.slane %v1992, 7
    %2020 = vst [vmem:[#allocation7 + $0xc] sm:$0x1] %v2018
    %2021 = vst [vmem:[#allocation7 + $0x5] sm:$0x1] %v1993
    %v2023 = vrot.slane %v1993, 1
    %2025 = vst [vmem:[#allocation7 + $0xd] sm:$0x1] %v2023
    %v2026 = vld [vmem:[#allocation7] sm:$0x3f]
    %v2027 = vld [vmem:[#allocation7 + $0x8] sm:$0x3f]
    %v2028 = vpack.c.bf16 %v2026, %v2026
    %v2029 = vpack.c.bf16 %v2027, %v2027
    %v2030 = vld [vmem:[#allocation24] sm:$0xff]
    %v2031 = vld [vmem:[#allocation24 + $0x8] sm:$0xff]
    %v2032 = vld [vmem:[#allocation24 + $0x10] sm:$0xff]
    %v2033 = vld [vmem:[#allocation24 + $0x18] sm:$0xff]
    %v2034 = vld [vmem:[#allocation24 + $0x20] sm:$0xff]
    %v2035 = vld [vmem:[#allocation24 + $0x28] sm:$0xff]
    %v2036 = vld [vmem:[#allocation24 + $0x30] sm:$0xff]
    %v2037 = vld [vmem:[#allocation24 + $0x38] sm:$0xff]
    %v2038 = vld [vmem:[#allocation24 + $0x40] sm:$0xff]
    %v2039 = vld [vmem:[#allocation24 + $0x48] sm:$0xff]
    %v2040 = vld [vmem:[#allocation24 + $0x50] sm:$0xff]
    %v2041 = vld [vmem:[#allocation24 + $0x58] sm:$0xff]
    %v2042 = vld [vmem:[#allocation24 + $0x60] sm:$0xff]
    %v2043 = vld [vmem:[#allocation24 + $0x68] sm:$0xff]
    %v2044 = vld [vmem:[#allocation24 + $0x70] sm:$0xff]
    %v2045 = vld [vmem:[#allocation24 + $0x78] sm:$0xff]
    %v2046 = vld [vmem:[#allocation24 + $0x80] sm:$0xff]
    %v2047 = vld [vmem:[#allocation24 + $0x88] sm:$0xff]
    %v2048 = vld [vmem:[#allocation24 + $0x90] sm:$0xff]
    %v2049 = vld [vmem:[#allocation24 + $0x98] sm:$0xff]
    %v2050 = vld [vmem:[#allocation24 + $0xa0] sm:$0xff]
    %v2051 = vld [vmem:[#allocation24 + $0xa8] sm:$0xff]
    %v2052 = vld [vmem:[#allocation24 + $0xb0] sm:$0xff]
    %v2053 = vld [vmem:[#allocation24 + $0xb8] sm:$0xff]
    %v2054 = vld [vmem:[#allocation24 + $0xc0] sm:$0xff]
    %v2055 = vld [vmem:[#allocation24 + $0xc8] sm:$0xff]
    %v2056 = vld [vmem:[#allocation24 + $0xd0] sm:$0xff]
    %v2057 = vld [vmem:[#allocation24 + $0xd8] sm:$0xff]
    %v2058 = vld [vmem:[#allocation24 + $0xe0] sm:$0xff]
    %v2059 = vld [vmem:[#allocation24 + $0xe8] sm:$0xff]
    %v2060 = vld [vmem:[#allocation24 + $0xf0] sm:$0xff]
    %v2061 = vld [vmem:[#allocation24 + $0xf8] sm:$0xff]
    %v2094 = vunpack.c.l.b16 %v2030
    %v2095 = vunpack.c.h.b16 %v2030
    %v2096 = vunpack.c.l.b16 %v2031
    %v2097 = vunpack.c.h.b16 %v2031
    %v2098 = vunpack.c.l.b16 %v2032
    %v2099 = vunpack.c.h.b16 %v2032
    %v2100 = vunpack.c.l.b16 %v2033
    %v2101 = vunpack.c.h.b16 %v2033
    %v2102 = vunpack.c.l.b16 %v2034
    %v2103 = vunpack.c.h.b16 %v2034
    %v2104 = vunpack.c.l.b16 %v2035
    %v2105 = vunpack.c.h.b16 %v2035
    %v2106 = vunpack.c.l.b16 %v2036
    %v2107 = vunpack.c.h.b16 %v2036
    %v2108 = vunpack.c.l.b16 %v2037
    %v2109 = vunpack.c.h.b16 %v2037
    %v2110 = vunpack.c.l.b16 %v2038
    %v2111 = vunpack.c.h.b16 %v2038
    %v2112 = vunpack.c.l.b16 %v2039
    %v2113 = vunpack.c.h.b16 %v2039
    %v2114 = vunpack.c.l.b16 %v2040
    %v2115 = vunpack.c.h.b16 %v2040
    %v2116 = vunpack.c.l.b16 %v2041
    %v2117 = vunpack.c.h.b16 %v2041
    %v2118 = vunpack.c.l.b16 %v2042
    %v2119 = vunpack.c.h.b16 %v2042
    %v2120 = vunpack.c.l.b16 %v2043
    %v2121 = vunpack.c.h.b16 %v2043
    %v2122 = vunpack.c.l.b16 %v2044
    %v2123 = vunpack.c.h.b16 %v2044
    %v2124 = vunpack.c.l.b16 %v2045
    %v2125 = vunpack.c.h.b16 %v2045
    %v2126 = vunpack.c.l.b16 %v2046
    %v2127 = vunpack.c.h.b16 %v2046
    %v2128 = vunpack.c.l.b16 %v2047
    %v2129 = vunpack.c.h.b16 %v2047
    %v2130 = vunpack.c.l.b16 %v2048
    %v2131 = vunpack.c.h.b16 %v2048
    %v2132 = vunpack.c.l.b16 %v2049
    %v2133 = vunpack.c.h.b16 %v2049
    %v2134 = vunpack.c.l.b16 %v2050
    %v2135 = vunpack.c.h.b16 %v2050
    %v2136 = vunpack.c.l.b16 %v2051
    %v2137 = vunpack.c.h.b16 %v2051
    %v2138 = vunpack.c.l.b16 %v2052
    %v2139 = vunpack.c.h.b16 %v2052
    %v2140 = vunpack.c.l.b16 %v2053
    %v2141 = vunpack.c.h.b16 %v2053
    %v2142 = vunpack.c.l.b16 %v2054
    %v2143 = vunpack.c.h.b16 %v2054
    %v2144 = vunpack.c.l.b16 %v2055
    %v2145 = vunpack.c.h.b16 %v2055
    %v2146 = vunpack.c.l.b16 %v2056
    %v2147 = vunpack.c.h.b16 %v2056
    %v2148 = vunpack.c.l.b16 %v2057
    %v2149 = vunpack.c.h.b16 %v2057
    %v2150 = vunpack.c.l.b16 %v2058
    %v2151 = vunpack.c.h.b16 %v2058
    %v2152 = vunpack.c.l.b16 %v2059
    %v2153 = vunpack.c.h.b16 %v2059
    %v2154 = vunpack.c.l.b16 %v2060
    %v2155 = vunpack.c.h.b16 %v2060
    %v2156 = vunpack.c.l.b16 %v2061
    %v2157 = vunpack.c.h.b16 %v2061
    %v2158 = vpack.c.b16 %v2096, %v2094
    %v2159 = vpack.c.b16 %v2097, %v2095
    %v2160 = vpack.c.b16 %v2100, %v2098
    %v2161 = vpack.c.b16 %v2101, %v2099
    %v2162 = vpack.c.b16 %v2104, %v2102
    %v2163 = vpack.c.b16 %v2105, %v2103
    %v2164 = vpack.c.b16 %v2108, %v2106
    %v2165 = vpack.c.b16 %v2109, %v2107
    %v2166 = vpack.c.b16 %v2112, %v2110
    %v2167 = vpack.c.b16 %v2113, %v2111
    %v2168 = vpack.c.b16 %v2116, %v2114
    %v2169 = vpack.c.b16 %v2117, %v2115
    %v2170 = vpack.c.b16 %v2120, %v2118
    %v2171 = vpack.c.b16 %v2121, %v2119
    %v2172 = vpack.c.b16 %v2124, %v2122
    %v2173 = vpack.c.b16 %v2125, %v2123
    %v2174 = vpack.c.b16 %v2128, %v2126
    %v2175 = vpack.c.b16 %v2129, %v2127
    %v2176 = vpack.c.b16 %v2132, %v2130
    %v2177 = vpack.c.b16 %v2133, %v2131
    %v2178 = vpack.c.b16 %v2136, %v2134
    %v2179 = vpack.c.b16 %v2137, %v2135
    %v2180 = vpack.c.b16 %v2140, %v2138
    %v2181 = vpack.c.b16 %v2141, %v2139
    %v2182 = vpack.c.b16 %v2144, %v2142
    %v2183 = vpack.c.b16 %v2145, %v2143
    %v2184 = vpack.c.b16 %v2148, %v2146
    %v2185 = vpack.c.b16 %v2149, %v2147
    %v2186 = vpack.c.b16 %v2152, %v2150
    %v2187 = vpack.c.b16 %v2153, %v2151
    %v2188 = vpack.c.b16 %v2156, %v2154
    %v2189 = vpack.c.b16 %v2157, %v2155
    %2222 = vmatprep.subr.bf16.mxu0 %v2159
    %2223 = vmatpush1.bf16.msra.mxu0 %v2158
    %2224 = vmatprep.subr.bf16.mxu0 %v2161
    %2225 = vmatpush1.bf16.msra.mxu0 %v2160
    %2226 = vmatprep.subr.bf16.mxu0 %v2163
    %2227 = vmatpush1.bf16.msra.mxu0 %v2162
    %2228 = vmatprep.subr.bf16.mxu0 %v2165
    %2229 = vmatpush1.bf16.msra.mxu0 %v2164
    %2230 = vmatprep.subr.bf16.mxu0 %v2167
    %2231 = vmatpush1.bf16.msra.mxu0 %v2166
    %2232 = vmatprep.subr.bf16.mxu0 %v2169
    %2233 = vmatpush1.bf16.msra.mxu0 %v2168
    %2234 = vmatprep.subr.bf16.mxu0 %v2171
    %2235 = vmatpush1.bf16.msra.mxu0 %v2170
    %2236 = vmatprep.subr.bf16.mxu0 %v2173
    %2237 = vmatpush1.bf16.msra.mxu0 %v2172
    %2238 = vmatprep.subr.bf16.mxu0 %v2175
    %2239 = vmatpush1.bf16.msra.mxu0 %v2174
    %2240 = vmatprep.subr.bf16.mxu0 %v2177
    %2241 = vmatpush1.bf16.msra.mxu0 %v2176
    %2242 = vmatprep.subr.bf16.mxu0 %v2179
    %2243 = vmatpush1.bf16.msra.mxu0 %v2178
    %2244 = vmatprep.subr.bf16.mxu0 %v2181
    %2245 = vmatpush1.bf16.msra.mxu0 %v2180
    %2246 = vmatprep.subr.bf16.mxu0 %v2183
    %2247 = vmatpush1.bf16.msra.mxu0 %v2182
    %2248 = vmatprep.subr.bf16.mxu0 %v2185
    %2249 = vmatpush1.bf16.msra.mxu0 %v2184
    %2250 = vmatprep.subr.bf16.mxu0 %v2187
    %2251 = vmatpush1.bf16.msra.mxu0 %v2186
    %2252 = vmatprep.subr.bf16.mxu0 %v2189
    %2253 = vmatpush1.bf16.msra.mxu0 %v2188
    %2254 = vmatprep.mubr.bf16.mxu0 %v2029
    %2255 = vmatmul.mubr.bf16.gmra.mrb[0].mxu0 %v2028
    %v2256 = vpop.f32.mrb[0].mxu0
    %v2257 = vadd.f32 0.0, %v2256
    %v2258 = vpop.f32.mrb[0].mxu0
    %v2259 = vadd.f32 0.0, %v2258
    %v2260 = vpop.f32.mrb[0].mxu0
    %v2261 = vpop.f32.mrb[0].mxu0
    %2262 = vdwg.mxu0
    %v2263 = vld [vmem:[#allocation26] sm:$0xff]
    %v2264 = vld [vmem:[#allocation26 + $0x8] sm:$0xff]
    %v2265 = vld [vmem:[#allocation26 + $0x10] sm:$0xff]
    %v2266 = vld [vmem:[#allocation26 + $0x18] sm:$0xff]
    %v2267 = vld [vmem:[#allocation26 + $0x20] sm:$0xff]
    %v2268 = vld [vmem:[#allocation26 + $0x28] sm:$0xff]
    %v2269 = vld [vmem:[#allocation26 + $0x30] sm:$0xff]
    %v2270 = vld [vmem:[#allocation26 + $0x38] sm:$0xff]
    %v2271 = vld [vmem:[#allocation26 + $0x40] sm:$0xff]
    %v2272 = vld [vmem:[#allocation26 + $0x48] sm:$0xff]
    %v2273 = vld [vmem:[#allocation26 + $0x50] sm:$0xff]
    %v2274 = vld [vmem:[#allocation26 + $0x58] sm:$0xff]
    %v2275 = vld [vmem:[#allocation26 + $0x60] sm:$0xff]
    %v2276 = vld [vmem:[#allocation26 + $0x68] sm:$0xff]
    %v2277 = vld [vmem:[#allocation26 + $0x70] sm:$0xff]
    %v2278 = vld [vmem:[#allocation26 + $0x78] sm:$0xff]
    %v2295 = vunpack.c.l.b16 %v2263
    %v2296 = vunpack.c.h.b16 %v2263
    %v2297 = vunpack.c.l.b16 %v2264
    %v2298 = vunpack.c.h.b16 %v2264
    %v2299 = vunpack.c.l.b16 %v2265
    %v2300 = vunpack.c.h.b16 %v2265
    %v2301 = vunpack.c.l.b16 %v2266
    %v2302 = vunpack.c.h.b16 %v2266
    %v2303 = vunpack.c.l.b16 %v2267
    %v2304 = vunpack.c.h.b16 %v2267
    %v2305 = vunpack.c.l.b16 %v2268
    %v2306 = vunpack.c.h.b16 %v2268
    %v2307 = vunpack.c.l.b16 %v2269
    %v2308 = vunpack.c.h.b16 %v2269
    %v2309 = vunpack.c.l.b16 %v2270
    %v2310 = vunpack.c.h.b16 %v2270
    %v2311 = vunpack.c.l.b16 %v2271
    %v2312 = vunpack.c.h.b16 %v2271
    %v2313 = vunpack.c.l.b16 %v2272
    %v2314 = vunpack.c.h.b16 %v2272
    %v2315 = vunpack.c.l.b16 %v2273
    %v2316 = vunpack.c.h.b16 %v2273
    %v2317 = vunpack.c.l.b16 %v2274
    %v2318 = vunpack.c.h.b16 %v2274
    %v2319 = vunpack.c.l.b16 %v2275
    %v2320 = vunpack.c.h.b16 %v2275
    %v2321 = vunpack.c.l.b16 %v2276
    %v2322 = vunpack.c.h.b16 %v2276
    %v2323 = vunpack.c.l.b16 %v2277
    %v2324 = vunpack.c.h.b16 %v2277
    %v2325 = vunpack.c.l.b16 %v2278
    %v2326 = vunpack.c.h.b16 %v2278
    %v2327 = vpack.c.b16 %v2297, %v2295
    %v2328 = vpack.c.b16 %v2298, %v2296
    %v2329 = vpack.c.b16 %v2301, %v2299
    %v2330 = vpack.c.b16 %v2302, %v2300
    %v2331 = vpack.c.b16 %v2305, %v2303
    %v2332 = vpack.c.b16 %v2306, %v2304
    %v2333 = vpack.c.b16 %v2309, %v2307
    %v2334 = vpack.c.b16 %v2310, %v2308
    %v2335 = vpack.c.b16 %v2313, %v2311
    %v2336 = vpack.c.b16 %v2314, %v2312
    %v2337 = vpack.c.b16 %v2317, %v2315
    %v2338 = vpack.c.b16 %v2318, %v2316
    %v2339 = vpack.c.b16 %v2321, %v2319
    %v2340 = vpack.c.b16 %v2322, %v2320
    %v2341 = vpack.c.b16 %v2325, %v2323
    %v2342 = vpack.c.b16 %v2326, %v2324
    %2359 = vmatprep.subr.bf16.mxu0 %v2328
    %2360 = vmatpush1.bf16.msra.mxu0 %v2327
    %2361 = vmatprep.subr.bf16.mxu0 %v2330
    %2362 = vmatpush1.bf16.msra.mxu0 %v2329
    %2363 = vmatprep.subr.bf16.mxu0 %v2332
    %2364 = vmatpush1.bf16.msra.mxu0 %v2331
    %2365 = vmatprep.subr.bf16.mxu0 %v2334
    %2366 = vmatpush1.bf16.msra.mxu0 %v2333
    %2367 = vmatprep.subr.bf16.mxu0 %v2336
    %2368 = vmatpush1.bf16.msra.mxu0 %v2335
    %2369 = vmatprep.subr.bf16.mxu0 %v2338
    %2370 = vmatpush1.bf16.msra.mxu0 %v2337
    %2371 = vmatprep.subr.bf16.mxu0 %v2340
    %2372 = vmatpush1.bf16.msra.mxu0 %v2339
    %2373 = vmatprep.subr.bf16.mxu0 %v2342
    %2374 = vmatpush1.bf16.msra.mxu0 %v2341
    %2375 = vmatprep.subr.bf16.mxu0 0
    %2376 = vmatpush1.bf16.msra.mxu0 0
    %2377 = vmatprep.subr.bf16.mxu0 0
    %2378 = vmatpush1.bf16.msra.mxu0 0
    %2379 = vmatprep.subr.bf16.mxu0 0
    %2380 = vmatpush1.bf16.msra.mxu0 0
    %2381 = vmatprep.subr.bf16.mxu0 0
    %2382 = vmatpush1.bf16.msra.mxu0 0
    %2383 = vmatprep.subr.bf16.mxu0 0
    %2384 = vmatpush1.bf16.msra.mxu0 0
    %2385 = vmatprep.subr.bf16.mxu0 0
    %2386 = vmatpush1.bf16.msra.mxu0 0
    %2387 = vmatprep.subr.bf16.mxu0 0
    %2388 = vmatpush1.bf16.msra.mxu0 0
    %2389 = vmatprep.subr.bf16.mxu0 0
    %2390 = vmatpush1.bf16.msra.mxu0 0
    %2391 = vmatprep.mubr.bf16.mxu0 0
    %2392 = vmatmul.mubr.bf16.gmra.mrb[0].mxu0 %v2029
    %v2393 = vpop.f32.mrb[0].mxu0
    %v2394 = vadd.f32 0.0, %v2393
    %v2395 = vpop.f32.mrb[0].mxu0
    %v2396 = vadd.f32 0.0, %v2395
    %v2397 = vpop.f32.mrb[0].mxu0
    %v2398 = vpop.f32.mrb[0].mxu0
    %2399 = vdwg.mxu0
    %v2400 = vld [vmem:[#allocation27] sm:$0xff]
    %v2401 = vld [vmem:[#allocation27 + $0x8] sm:$0xff]
    %v2402 = vld [vmem:[#allocation27 + $0x10] sm:$0xff]
    %v2403 = vld [vmem:[#allocation27 + $0x18] sm:$0xff]
    %v2404 = vld [vmem:[#allocation27 + $0x20] sm:$0xff]
    %v2405 = vld [vmem:[#allocation27 + $0x28] sm:$0xff]
    %v2406 = vld [vmem:[#allocation27 + $0x30] sm:$0xff]
    %v2407 = vld [vmem:[#allocation27 + $0x38] sm:$0xff]
    %v2408 = vld [vmem:[#allocation27 + $0x40] sm:$0xff]
    %v2409 = vld [vmem:[#allocation27 + $0x48] sm:$0xff]
    %v2410 = vld [vmem:[#allocation27 + $0x50] sm:$0xff]
    %v2411 = vld [vmem:[#allocation27 + $0x58] sm:$0xff]
    %v2412 = vld [vmem:[#allocation27 + $0x60] sm:$0xff]
    %v2413 = vld [vmem:[#allocation27 + $0x68] sm:$0xff]
    %v2414 = vld [vmem:[#allocation27 + $0x70] sm:$0xff]
    %v2415 = vld [vmem:[#allocation27 + $0x78] sm:$0xff]
    %v2432 = vunpack.c.l.b16 %v2400
    %v2433 = vunpack.c.h.b16 %v2400
    %v2434 = vunpack.c.l.b16 %v2401
    %v2435 = vunpack.c.h.b16 %v2401
    %v2436 = vunpack.c.l.b16 %v2402
    %v2437 = vunpack.c.h.b16 %v2402
    %v2438 = vunpack.c.l.b16 %v2403
    %v2439 = vunpack.c.h.b16 %v2403
    %v2440 = vunpack.c.l.b16 %v2404
    %v2441 = vunpack.c.h.b16 %v2404
    %v2442 = vunpack.c.l.b16 %v2405
    %v2443 = vunpack.c.h.b16 %v2405
    %v2444 = vunpack.c.l.b16 %v2406
    %v2445 = vunpack.c.h.b16 %v2406
    %v2446 = vunpack.c.l.b16 %v2407
    %v2447 = vunpack.c.h.b16 %v2407
    %v2448 = vunpack.c.l.b16 %v2408
    %v2449 = vunpack.c.h.b16 %v2408
    %v2450 = vunpack.c.l.b16 %v2409
    %v2451 = vunpack.c.h.b16 %v2409
    %v2452 = vunpack.c.l.b16 %v2410
    %v2453 = vunpack.c.h.b16 %v2410
    %v2454 = vunpack.c.l.b16 %v2411
    %v2455 = vunpack.c.h.b16 %v2411
    %v2456 = vunpack.c.l.b16 %v2412
    %v2457 = vunpack.c.h.b16 %v2412
    %v2458 = vunpack.c.l.b16 %v2413
    %v2459 = vunpack.c.h.b16 %v2413
    %v2460 = vunpack.c.l.b16 %v2414
    %v2461 = vunpack.c.h.b16 %v2414
    %v2462 = vunpack.c.l.b16 %v2415
    %v2463 = vunpack.c.h.b16 %v2415
    %v2464 = vpack.c.b16 %v2434, %v2432
    %v2465 = vpack.c.b16 %v2435, %v2433
    %v2466 = vpack.c.b16 %v2438, %v2436
    %v2467 = vpack.c.b16 %v2439, %v2437
    %v2468 = vpack.c.b16 %v2442, %v2440
    %v2469 = vpack.c.b16 %v2443, %v2441
    %v2470 = vpack.c.b16 %v2446, %v2444
    %v2471 = vpack.c.b16 %v2447, %v2445
    %v2472 = vpack.c.b16 %v2450, %v2448
    %v2473 = vpack.c.b16 %v2451, %v2449
    %v2474 = vpack.c.b16 %v2454, %v2452
    %v2475 = vpack.c.b16 %v2455, %v2453
    %v2476 = vpack.c.b16 %v2458, %v2456
    %v2477 = vpack.c.b16 %v2459, %v2457
    %v2478 = vpack.c.b16 %v2462, %v2460
    %v2479 = vpack.c.b16 %v2463, %v2461
    %2496 = vmatprep.subr.bf16.mxu0 %v2465
    %2497 = vmatpush1.bf16.msra.mxu0 %v2464
    %2498 = vmatprep.subr.bf16.mxu0 %v2467
    %2499 = vmatpush1.bf16.msra.mxu0 %v2466
    %2500 = vmatprep.subr.bf16.mxu0 %v2469
    %2501 = vmatpush1.bf16.msra.mxu0 %v2468
    %2502 = vmatprep.subr.bf16.mxu0 %v2471
    %2503 = vmatpush1.bf16.msra.mxu0 %v2470
    %2504 = vmatprep.subr.bf16.mxu0 %v2473
    %2505 = vmatpush1.bf16.msra.mxu0 %v2472
    %2506 = vmatprep.subr.bf16.mxu0 %v2475
    %2507 = vmatpush1.bf16.msra.mxu0 %v2474
    %2508 = vmatprep.subr.bf16.mxu0 %v2477
    %2509 = vmatpush1.bf16.msra.mxu0 %v2476
    %2510 = vmatprep.subr.bf16.mxu0 %v2479
    %2511 = vmatpush1.bf16.msra.mxu0 %v2478
    %2512 = vmatprep.subr.bf16.mxu0 0
    %2513 = vmatpush1.bf16.msra.mxu0 0
    %2514 = vmatprep.subr.bf16.mxu0 0
    %2515 = vmatpush1.bf16.msra.mxu0 0
    %2516 = vmatprep.subr.bf16.mxu0 0
    %2517 = vmatpush1.bf16.msra.mxu0 0
    %2518 = vmatprep.subr.bf16.mxu0 0
    %2519 = vmatpush1.bf16.msra.mxu0 0
    %2520 = vmatprep.subr.bf16.mxu0 0
    %2521 = vmatpush1.bf16.msra.mxu0 0
    %2522 = vmatprep.subr.bf16.mxu0 0
    %2523 = vmatpush1.bf16.msra.mxu0 0
    %2524 = vmatprep.subr.bf16.mxu0 0
    %2525 = vmatpush1.bf16.msra.mxu0 0
    %2526 = vmatprep.subr.bf16.mxu0 0
    %2527 = vmatpush1.bf16.msra.mxu0 0
    %2528 = vmatprep.mubr.bf16.mxu0 0
    %2529 = vmatmul.mubr.bf16.gmra.mrb[0].mxu0 %v2028
    %v2530 = vpop.f32.mrb[0].mxu0
    %v2531 = vadd.f32 0.0, %v2530
    %v2532 = vpop.f32.mrb[0].mxu0
    %v2533 = vadd.f32 0.0, %v2532
    %v2534 = vpop.f32.mrb[0].mxu0
    %v2535 = vpop.f32.mrb[0].mxu0
    %2536 = vdwg.mxu0
    %v2539 = vrot.slane %v2394, 7
    %v2540 = vrot.slane %v2396, 7
    %v2543 = vadd.f32 %v2257, %v2539
    %v2544 = vadd.f32 %v2259, %v2540
    %v2547 = vrot.slane %v2543, 1
    %v2548 = vrot.slane %v2544, 1
    %v2551 = vsel %vm1480, %v2547, 0.0
    %v2552 = vrot.slane %v2551, 4
    %v2553 = vadd.f32 %v2551, %v2552
    %v2554 = vrot.slane %v2553, 2
    %v2555 = vadd.f32 %v2553, %v2554
    %v2556 = vrot.slane %v2555, 1
    %v2557 = vadd.f32 %v2555, %v2556
    %v2558 = vsel %vm1480, %v2548, 0.0
    %v2559 = vrot.slane %v2558, 4
    %v2560 = vadd.f32 %v2558, %v2559
    %v2561 = vrot.slane %v2560, 2
    %v2562 = vadd.f32 %v2560, %v2561
    %v2563 = vrot.slane %v2562, 1
    %v2564 = vadd.f32 %v2562, %v2563
    %v2565 = vmul.f32 %v2543, %v2543
    %v2566 = vmul.f32 %v2544, %v2544
    %v2569 = vrot.slane %v2565, 1
    %v2570 = vrot.slane %v2566, 1
    %v2573 = vsel %vm1480, %v2569, 0.0
    %v2574 = vrot.slane %v2573, 4
    %v2575 = vadd.f32 %v2573, %v2574
    %v2576 = vrot.slane %v2575, 2
    %v2577 = vadd.f32 %v2575, %v2576
    %v2578 = vrot.slane %v2577, 1
    %v2579 = vadd.f32 %v2577, %v2578
    %v2580 = vsel %vm1480, %v2570, 0.0
    %v2581 = vrot.slane %v2580, 4
    %v2582 = vadd.f32 %v2580, %v2581
    %v2583 = vrot.slane %v2582, 2
    %v2584 = vadd.f32 %v2582, %v2583
    %v2585 = vrot.slane %v2584, 1
    %v2586 = vadd.f32 %v2584, %v2585
    %v2587 = vrot.slane %v2543, 4
    %v2588 = vrot.slane %v2544, 4
    %v2591 = vsel %vm1480, %v2587, 0.0
    %v2592 = vrot.slane %v2591, 4
    %v2593 = vadd.f32 %v2591, %v2592
    %v2594 = vrot.slane %v2593, 2
    %v2595 = vadd.f32 %v2593, %v2594
    %v2596 = vrot.slane %v2595, 1
    %v2597 = vadd.f32 %v2595, %v2596
    %v2598 = vsel %vm1480, %v2588, 0.0
    %v2599 = vrot.slane %v2598, 4
    %v2600 = vadd.f32 %v2598, %v2599
    %v2601 = vrot.slane %v2600, 2
    %v2602 = vadd.f32 %v2600, %v2601
    %v2603 = vrot.slane %v2602, 1
    %v2604 = vadd.f32 %v2602, %v2603
    %v2605 = vadd.f32 %v2557, %v2597
    %v2606 = vadd.f32 %v2564, %v2604
    %v2607 = vrot.slane %v2565, 4
    %v2608 = vrot.slane %v2566, 4
    %v2611 = vsel %vm1480, %v2607, 0.0
    %v2612 = vrot.slane %v2611, 4
    %v2613 = vadd.f32 %v2611, %v2612
    %v2614 = vrot.slane %v2613, 2
    %v2615 = vadd.f32 %v2613, %v2614
    %v2616 = vrot.slane %v2615, 1
    %v2617 = vadd.f32 %v2615, %v2616
    %v2618 = vsel %vm1480, %v2608, 0.0
    %v2619 = vrot.slane %v2618, 4
    %v2620 = vadd.f32 %v2618, %v2619
    %v2621 = vrot.slane %v2620, 2
    %v2622 = vadd.f32 %v2620, %v2621
    %v2623 = vrot.slane %v2622, 1
    %v2624 = vadd.f32 %v2622, %v2623
    %v2625 = vadd.f32 %v2579, %v2617
    %v2626 = vadd.f32 %v2586, %v2624
    %v2627 = vrcp.pop 4.0
    %v2628 = vmul.f32 %v2605, %v2627
    %v2629 = vmul.f32 %v2606, %v2627
    %v2630 = vmul.f32 %v2625, %v2627
    %v2631 = vmul.f32 %v2626, %v2627
    %v2632 = vmul.f32 %v2628, %v2628
    %v2633 = vmul.f32 %v2629, %v2629
    %v2634 = vsub.f32 %v2630, %v2632
    %v2635 = vsub.f32 %v2631, %v2633
    %v2636 = vmax.f32 %v2634, 0.0
    %v2637 = vmax.f32 %v2635, 0.0
    %v2638 = vadd.f32 %v2636, 1e-05
    %v2639 = vadd.f32 %v2637, 1e-05
    %v2640 = vrsqrt.pop %v2638
    %v2641 = vrsqrt.pop %v2639
    %v2642 = vsub.f32 %v2543, %v2628
    %v2643 = vsub.f32 %v2544, %v2629
    %v2644 = vmul.f32 %v2642, %v2640
    %v2645 = vmul.f32 %v2643, %v2641
    %v2646 = vmax.f32 %v2644, 0.0
    %v2647 = vmax.f32 %v2645, 0.0
    %2648 = vst.msk [vmem:[#allocation8] ss:$8 sm:$0x3] %vm1997, 0.0
    %2649 = vst.msk [vmem:[#allocation8] ss:$8 sm:$0x0] %vm1997, 0.0
    %2650 = vst [vmem:[#allocation8] sm:$0x6] %v2646
    %2651 = vst [vmem:[#allocation8 + $0x8] sm:$0x6] %v2647
    %s2652 = scalar_lea.vmem [#allocation8], 3
    %2653 = vst.msk [vmem:[%s2652] ss:$8 sm:$0x3] %vm1997, 0.0
    %2654 = vst.msk [vmem:[%s2652] ss:$8 sm:$0x0] %vm1997, 0.0
    %s2655 = scalar_lea.vmem [#allocation8], 4
    %2656 = vst.msk [vmem:[%s2655] ss:$8 sm:$0x3] %vm1997, 0.0
    %2657 = vst.msk [vmem:[%s2655] ss:$8 sm:$0x0] %vm1997, 0.0
    %v2660 = vrot.slane %v2646, 7
    %v2661 = vrot.slane %v2647, 7
    %2664 = vst [vmem:[#allocation8] sm:$0x60] %v2660
    %2665 = vst [vmem:[#allocation8 + $0x8] sm:$0x60] %v2661
    %s2666 = scalar_lea.vmem [#allocation8], 7
    %2667 = vst.msk [vmem:[%s2666] ss:$8 sm:$0x3] %vm1997, 0.0
    %2668 = vst.msk [vmem:[%s2666] ss:$8 sm:$0x0] %vm1997, 0.0
    %v2671 = vrot.slane %v2531, 1
    %v2672 = vrot.slane %v2533, 1
    %v2675 = vsel %vm1480, %v2671, 0.0
    %v2676 = vrot.slane %v2675, 4
    %v2677 = vadd.f32 %v2675, %v2676
    %v2678 = vrot.slane %v2677, 2
    %v2679 = vadd.f32 %v2677, %v2678
    %v2680 = vrot.slane %v2679, 1
    %v2681 = vadd.f32 %v2679, %v2680
    %v2682 = vsel %vm1480, %v2672, 0.0
    %v2683 = vrot.slane %v2682, 4
    %v2684 = vadd.f32 %v2682, %v2683
    %v2685 = vrot.slane %v2684, 2
    %v2686 = vadd.f32 %v2684, %v2685
    %v2687 = vrot.slane %v2686, 1
    %v2688 = vadd.f32 %v2686, %v2687
    %v2689 = vmul.f32 %v2531, %v2531
    %v2690 = vmul.f32 %v2533, %v2533
    %v2693 = vrot.slane %v2689, 1
    %v2694 = vrot.slane %v2690, 1
    %v2697 = vsel %vm1480, %v2693, 0.0
    %v2698 = vrot.slane %v2697, 4
    %v2699 = vadd.f32 %v2697, %v2698
    %v2700 = vrot.slane %v2699, 2
    %v2701 = vadd.f32 %v2699, %v2700
    %v2702 = vrot.slane %v2701, 1
    %v2703 = vadd.f32 %v2701, %v2702
    %v2704 = vsel %vm1480, %v2694, 0.0
    %v2705 = vrot.slane %v2704, 4
    %v2706 = vadd.f32 %v2704, %v2705
    %v2707 = vrot.slane %v2706, 2
    %v2708 = vadd.f32 %v2706, %v2707
    %v2709 = vrot.slane %v2708, 1
    %v2710 = vadd.f32 %v2708, %v2709
    %v2711 = vrot.slane %v2531, 4
    %v2712 = vrot.slane %v2533, 4
    %v2715 = vsel %vm1480, %v2711, 0.0
    %v2716 = vrot.slane %v2715, 4
    %v2717 = vadd.f32 %v2715, %v2716
    %v2718 = vrot.slane %v2717, 2
    %v2719 = vadd.f32 %v2717, %v2718
    %v2720 = vrot.slane %v2719, 1
    %v2721 = vadd.f32 %v2719, %v2720
    %v2722 = vsel %vm1480, %v2712, 0.0
    %v2723 = vrot.slane %v2722, 4
    %v2724 = vadd.f32 %v2722, %v2723
    %v2725 = vrot.slane %v2724, 2
    %v2726 = vadd.f32 %v2724, %v2725
    %v2727 = vrot.slane %v2726, 1
    %v2728 = vadd.f32 %v2726, %v2727
    %v2729 = vadd.f32 %v2681, %v2721
    %v2730 = vadd.f32 %v2688, %v2728
    %v2731 = vrot.slane %v2689, 4
    %v2732 = vrot.slane %v2690, 4
    %v2735 = vsel %vm1480, %v2731, 0.0
    %v2736 = vrot.slane %v2735, 4
    %v2737 = vadd.f32 %v2735, %v2736
    %v2738 = vrot.slane %v2737, 2
    %v2739 = vadd.f32 %v2737, %v2738
    %v2740 = vrot.slane %v2739, 1
    %v2741 = vadd.f32 %v2739, %v2740
    %v2742 = vsel %vm1480, %v2732, 0.0
    %v2743 = vrot.slane %v2742, 4
    %v2744 = vadd.f32 %v2742, %v2743
    %v2745 = vrot.slane %v2744, 2
    %v2746 = vadd.f32 %v2744, %v2745
    %v2747 = vrot.slane %v2746, 1
    %v2748 = vadd.f32 %v2746, %v2747
    %v2749 = vadd.f32 %v2703, %v2741
    %v2750 = vadd.f32 %v2710, %v2748
    %v2751 = vmul.f32 %v2729, %v2627
    %v2752 = vmul.f32 %v2730, %v2627
    %v2753 = vmul.f32 %v2749, %v2627
    %v2754 = vmul.f32 %v2750, %v2627
    %v2755 = vmul.f32 %v2751, %v2751
    %v2756 = vmul.f32 %v2752, %v2752
    %v2757 = vsub.f32 %v2753, %v2755
    %v2758 = vsub.f32 %v2754, %v2756
    %v2759 = vmax.f32 %v2757, 0.0
    %v2760 = vmax.f32 %v2758, 0.0
    %v2761 = vadd.f32 %v2759, 1e-05
    %v2762 = vadd.f32 %v2760, 1e-05
    %v2763 = vrsqrt.pop %v2761
    %v2764 = vrsqrt.pop %v2762
    %v2765 = vsub.f32 %v2531, %v2751
    %v2766 = vsub.f32 %v2533, %v2752
    %v2767 = vmul.f32 %v2765, %v2763
    %v2768 = vmul.f32 %v2766, %v2764
    %v2769 = vld [vmem:[#allocation8] sm:$0xff]
    %v2770 = vld [vmem:[#allocation8 + $0x8] sm:$0xff]
    %v2771 = vpack.c.bf16 %v2769, %v2769
    %v2772 = vpack.c.bf16 %v2770, %v2770
    %v2773 = vld [vmem:[#allocation29] sm:$0xff]
    %v2774 = vld [vmem:[#allocation29 + $0x8] sm:$0xff]
    %v2775 = vld [vmem:[#allocation29 + $0x10] sm:$0xff]
    %v2776 = vld [vmem:[#allocation29 + $0x18] sm:$0xff]
    %v2777 = vld [vmem:[#allocation29 + $0x20] sm:$0xff]
    %v2778 = vld [vmem:[#allocation29 + $0x28] sm:$0xff]
    %v2779 = vld [vmem:[#allocation29 + $0x30] sm:$0xff]
    %v2780 = vld [vmem:[#allocation29 + $0x38] sm:$0xff]
    %v2781 = vld [vmem:[#allocation29 + $0x40] sm:$0xff]
    %v2782 = vld [vmem:[#allocation29 + $0x48] sm:$0xff]
    %v2783 = vld [vmem:[#allocation29 + $0x50] sm:$0xff]
    %v2784 = vld [vmem:[#allocation29 + $0x58] sm:$0xff]
    %v2785 = vld [vmem:[#allocation29 + $0x60] sm:$0xff]
    %v2786 = vld [vmem:[#allocation29 + $0x68] sm:$0xff]
    %v2787 = vld [vmem:[#allocation29 + $0x70] sm:$0xff]
    %v2788 = vld [vmem:[#allocation29 + $0x78] sm:$0xff]
    %v2789 = vld [vmem:[#allocation29 + $0x80] sm:$0xff]
    %v2790 = vld [vmem:[#allocation29 + $0x88] sm:$0xff]
    %v2791 = vld [vmem:[#allocation29 + $0x90] sm:$0xff]
    %v2792 = vld [vmem:[#allocation29 + $0x98] sm:$0xff]
    %v2793 = vld [vmem:[#allocation29 + $0xa0] sm:$0xff]
    %v2794 = vld [vmem:[#allocation29 + $0xa8] sm:$0xff]
    %v2795 = vld [vmem:[#allocation29 + $0xb0] sm:$0xff]
    %v2796 = vld [vmem:[#allocation29 + $0xb8] sm:$0xff]
    %v2797 = vld [vmem:[#allocation29 + $0xc0] sm:$0xff]
    %v2798 = vld [vmem:[#allocation29 + $0xc8] sm:$0xff]
    %v2799 = vld [vmem:[#allocation29 + $0xd0] sm:$0xff]
    %v2800 = vld [vmem:[#allocation29 + $0xd8] sm:$0xff]
    %v2801 = vld [vmem:[#allocation29 + $0xe0] sm:$0xff]
    %v2802 = vld [vmem:[#allocation29 + $0xe8] sm:$0xff]
    %v2803 = vld [vmem:[#allocation29 + $0xf0] sm:$0xff]
    %v2804 = vld [vmem:[#allocation29 + $0xf8] sm:$0xff]
    %v2837 = vunpack.c.l.b16 %v2773
    %v2838 = vunpack.c.h.b16 %v2773
    %v2839 = vunpack.c.l.b16 %v2774
    %v2840 = vunpack.c.h.b16 %v2774
    %v2841 = vunpack.c.l.b16 %v2775
    %v2842 = vunpack.c.h.b16 %v2775
    %v2843 = vunpack.c.l.b16 %v2776
    %v2844 = vunpack.c.h.b16 %v2776
    %v2845 = vunpack.c.l.b16 %v2777
    %v2846 = vunpack.c.h.b16 %v2777
    %v2847 = vunpack.c.l.b16 %v2778
    %v2848 = vunpack.c.h.b16 %v2778
    %v2849 = vunpack.c.l.b16 %v2779
    %v2850 = vunpack.c.h.b16 %v2779
    %v2851 = vunpack.c.l.b16 %v2780
    %v2852 = vunpack.c.h.b16 %v2780
    %v2853 = vunpack.c.l.b16 %v2781
    %v2854 = vunpack.c.h.b16 %v2781
    %v2855 = vunpack.c.l.b16 %v2782
    %v2856 = vunpack.c.h.b16 %v2782
    %v2857 = vunpack.c.l.b16 %v2783
    %v2858 = vunpack.c.h.b16 %v2783
    %v2859 = vunpack.c.l.b16 %v2784
    %v2860 = vunpack.c.h.b16 %v2784
    %v2861 = vunpack.c.l.b16 %v2785
    %v2862 = vunpack.c.h.b16 %v2785
    %v2863 = vunpack.c.l.b16 %v2786
    %v2864 = vunpack.c.h.b16 %v2786
    %v2865 = vunpack.c.l.b16 %v2787
    %v2866 = vunpack.c.h.b16 %v2787
    %v2867 = vunpack.c.l.b16 %v2788
    %v2868 = vunpack.c.h.b16 %v2788
    %v2869 = vunpack.c.l.b16 %v2789
    %v2870 = vunpack.c.h.b16 %v2789
    %v2871 = vunpack.c.l.b16 %v2790
    %v2872 = vunpack.c.h.b16 %v2790
    %v2873 = vunpack.c.l.b16 %v2791
    %v2874 = vunpack.c.h.b16 %v2791
    %v2875 = vunpack.c.l.b16 %v2792
    %v2876 = vunpack.c.h.b16 %v2792
    %v2877 = vunpack.c.l.b16 %v2793
    %v2878 = vunpack.c.h.b16 %v2793
    %v2879 = vunpack.c.l.b16 %v2794
    %v2880 = vunpack.c.h.b16 %v2794
    %v2881 = vunpack.c.l.b16 %v2795
    %v2882 = vunpack.c.h.b16 %v2795
    %v2883 = vunpack.c.l.b16 %v2796
    %v2884 = vunpack.c.h.b16 %v2796
    %v2885 = vunpack.c.l.b16 %v2797
    %v2886 = vunpack.c.h.b16 %v2797
    %v2887 = vunpack.c.l.b16 %v2798
    %v2888 = vunpack.c.h.b16 %v2798
    %v2889 = vunpack.c.l.b16 %v2799
    %v2890 = vunpack.c.h.b16 %v2799
    %v2891 = vunpack.c.l.b16 %v2800
    %v2892 = vunpack.c.h.b16 %v2800
    %v2893 = vunpack.c.l.b16 %v2801
    %v2894 = vunpack.c.h.b16 %v2801
    %v2895 = vunpack.c.l.b16 %v2802
    %v2896 = vunpack.c.h.b16 %v2802
    %v2897 = vunpack.c.l.b16 %v2803
    %v2898 = vunpack.c.h.b16 %v2803
    %v2899 = vunpack.c.l.b16 %v2804
    %v2900 = vunpack.c.h.b16 %v2804
    %v2901 = vpack.c.b16 %v2839, %v2837
    %v2902 = vpack.c.b16 %v2840, %v2838
    %v2903 = vpack.c.b16 %v2843, %v2841
    %v2904 = vpack.c.b16 %v2844, %v2842
    %v2905 = vpack.c.b16 %v2847, %v2845
    %v2906 = vpack.c.b16 %v2848, %v2846
    %v2907 = vpack.c.b16 %v2851, %v2849
    %v2908 = vpack.c.b16 %v2852, %v2850
    %v2909 = vpack.c.b16 %v2855, %v2853
    %v2910 = vpack.c.b16 %v2856, %v2854
    %v2911 = vpack.c.b16 %v2859, %v2857
    %v2912 = vpack.c.b16 %v2860, %v2858
    %v2913 = vpack.c.b16 %v2863, %v2861
    %v2914 = vpack.c.b16 %v2864, %v2862
    %v2915 = vpack.c.b16 %v2867, %v2865
    %v2916 = vpack.c.b16 %v2868, %v2866
    %v2917 = vpack.c.b16 %v2871, %v2869
    %v2918 = vpack.c.b16 %v2872, %v2870
    %v2919 = vpack.c.b16 %v2875, %v2873
    %v2920 = vpack.c.b16 %v2876, %v2874
    %v2921 = vpack.c.b16 %v2879, %v2877
    %v2922 = vpack.c.b16 %v2880, %v2878
    %v2923 = vpack.c.b16 %v2883, %v2881
    %v2924 = vpack.c.b16 %v2884, %v2882
    %v2925 = vpack.c.b16 %v2887, %v2885
    %v2926 = vpack.c.b16 %v2888, %v2886
    %v2927 = vpack.c.b16 %v2891, %v2889
    %v2928 = vpack.c.b16 %v2892, %v2890
    %v2929 = vpack.c.b16 %v2895, %v2893
    %v2930 = vpack.c.b16 %v2896, %v2894
    %v2931 = vpack.c.b16 %v2899, %v2897
    %v2932 = vpack.c.b16 %v2900, %v2898
    %2965 = vmatprep.subr.bf16.mxu0 %v2902
    %2966 = vmatpush1.bf16.msra.mxu0 %v2901
    %2967 = vmatprep.subr.bf16.mxu0 %v2904
    %2968 = vmatpush1.bf16.msra.mxu0 %v2903
    %2969 = vmatprep.subr.bf16.mxu0 %v2906
    %2970 = vmatpush1.bf16.msra.mxu0 %v2905
    %2971 = vmatprep.subr.bf16.mxu0 %v2908
    %2972 = vmatpush1.bf16.msra.mxu0 %v2907
    %2973 = vmatprep.subr.bf16.mxu0 %v2910
    %2974 = vmatpush1.bf16.msra.mxu0 %v2909
    %2975 = vmatprep.subr.bf16.mxu0 %v2912
    %2976 = vmatpush1.bf16.msra.mxu0 %v2911
    %2977 = vmatprep.subr.bf16.mxu0 %v2914
    %2978 = vmatpush1.bf16.msra.mxu0 %v2913
    %2979 = vmatprep.subr.bf16.mxu0 %v2916
    %2980 = vmatpush1.bf16.msra.mxu0 %v2915
    %2981 = vmatprep.subr.bf16.mxu0 %v2918
    %2982 = vmatpush1.bf16.msra.mxu0 %v2917
    %2983 = vmatprep.subr.bf16.mxu0 %v2920
    %2984 = vmatpush1.bf16.msra.mxu0 %v2919
    %2985 = vmatprep.subr.bf16.mxu0 %v2922
    %2986 = vmatpush1.bf16.msra.mxu0 %v2921
    %2987 = vmatprep.subr.bf16.mxu0 %v2924
    %2988 = vmatpush1.bf16.msra.mxu0 %v2923
    %2989 = vmatprep.subr.bf16.mxu0 %v2926
    %2990 = vmatpush1.bf16.msra.mxu0 %v2925
    %2991 = vmatprep.subr.bf16.mxu0 %v2928
    %2992 = vmatpush1.bf16.msra.mxu0 %v2927
    %2993 = vmatprep.subr.bf16.mxu0 %v2930
    %2994 = vmatpush1.bf16.msra.mxu0 %v2929
    %2995 = vmatprep.subr.bf16.mxu0 %v2932
    %2996 = vmatpush1.bf16.msra.mxu0 %v2931
    %2997 = vmatprep.mubr.bf16.mxu0 %v2772
    %2998 = vmatmul.mubr.bf16.gmra.mrb[0].mxu0 %v2771
    %v2999 = vpop.f32.mrb[0].mxu0
    %v3000 = vadd.f32 0.0, %v2999
    %v3001 = vpop.f32.mrb[0].mxu0
    %v3002 = vadd.f32 0.0, %v3001
    %v3003 = vpop.f32.mrb[0].mxu0
    %v3004 = vpop.f32.mrb[0].mxu0
    %3005 = vdwg.mxu0
    %s3006 = scalar_lea.vmem [#allocation29], 256
    %v3007 = vld [vmem:[%s3006] sm:$0xff]
    %v3008 = vld [vmem:[%s3006 + $0x8] sm:$0xff]
    %v3009 = vld [vmem:[%s3006 + $0x10] sm:$0xff]
    %v3010 = vld [vmem:[%s3006 + $0x18] sm:$0xff]
    %v3011 = vld [vmem:[%s3006 + $0x20] sm:$0xff]
    %v3012 = vld [vmem:[%s3006 + $0x28] sm:$0xff]
    %v3013 = vld [vmem:[%s3006 + $0x30] sm:$0xff]
    %v3014 = vld [vmem:[%s3006 + $0x38] sm:$0xff]
    %v3015 = vld [vmem:[%s3006 + $0x40] sm:$0xff]
    %v3016 = vld [vmem:[%s3006 + $0x48] sm:$0xff]
    %v3017 = vld [vmem:[%s3006 + $0x50] sm:$0xff]
    %v3018 = vld [vmem:[%s3006 + $0x58] sm:$0xff]
    %v3019 = vld [vmem:[%s3006 + $0x60] sm:$0xff]
    %v3020 = vld [vmem:[%s3006 + $0x68] sm:$0xff]
    %v3021 = vld [vmem:[%s3006 + $0x70] sm:$0xff]
    %v3022 = vld [vmem:[%s3006 + $0x78] sm:$0xff]
    %v3023 = vld [vmem:[%s3006 + $0x80] sm:$0xff]
    %v3024 = vld [vmem:[%s3006 + $0x88] sm:$0xff]
    %v3025 = vld [vmem:[%s3006 + $0x90] sm:$0xff]
    %v3026 = vld [vmem:[%s3006 + $0x98] sm:$0xff]
    %v3027 = vld [vmem:[%s3006 + $0xa0] sm:$0xff]
    %v3028 = vld [vmem:[%s3006 + $0xa8] sm:$0xff]
    %v3029 = vld [vmem:[%s3006 + $0xb0] sm:$0xff]
    %v3030 = vld [vmem:[%s3006 + $0xb8] sm:$0xff]
    %v3031 = vld [vmem:[%s3006 + $0xc0] sm:$0xff]
    %v3032 = vld [vmem:[%s3006 + $0xc8] sm:$0xff]
    %v3033 = vld [vmem:[%s3006 + $0xd0] sm:$0xff]
    %v3034 = vld [vmem:[%s3006 + $0xd8] sm:$0xff]
    %v3035 = vld [vmem:[%s3006 + $0xe0] sm:$0xff]
    %v3036 = vld [vmem:[%s3006 + $0xe8] sm:$0xff]
    %v3037 = vld [vmem:[%s3006 + $0xf0] sm:$0xff]
    %v3038 = vld [vmem:[%s3006 + $0xf8] sm:$0xff]
    %v3071 = vunpack.c.l.b16 %v3007
    %v3072 = vunpack.c.h.b16 %v3007
    %v3073 = vunpack.c.l.b16 %v3008
    %v3074 = vunpack.c.h.b16 %v3008
    %v3075 = vunpack.c.l.b16 %v3009
    %v3076 = vunpack.c.h.b16 %v3009
    %v3077 = vunpack.c.l.b16 %v3010
    %v3078 = vunpack.c.h.b16 %v3010
    %v3079 = vunpack.c.l.b16 %v3011
    %v3080 = vunpack.c.h.b16 %v3011
    %v3081 = vunpack.c.l.b16 %v3012
    %v3082 = vunpack.c.h.b16 %v3012
    %v3083 = vunpack.c.l.b16 %v3013
    %v3084 = vunpack.c.h.b16 %v3013
    %v3085 = vunpack.c.l.b16 %v3014
    %v3086 = vunpack.c.h.b16 %v3014
    %v3087 = vunpack.c.l.b16 %v3015
    %v3088 = vunpack.c.h.b16 %v3015
    %v3089 = vunpack.c.l.b16 %v3016
    %v3090 = vunpack.c.h.b16 %v3016
    %v3091 = vunpack.c.l.b16 %v3017
    %v3092 = vunpack.c.h.b16 %v3017
    %v3093 = vunpack.c.l.b16 %v3018
    %v3094 = vunpack.c.h.b16 %v3018
    %v3095 = vunpack.c.l.b16 %v3019
    %v3096 = vunpack.c.h.b16 %v3019
    %v3097 = vunpack.c.l.b16 %v3020
    %v3098 = vunpack.c.h.b16 %v3020
    %v3099 = vunpack.c.l.b16 %v3021
    %v3100 = vunpack.c.h.b16 %v3021
    %v3101 = vunpack.c.l.b16 %v3022
    %v3102 = vunpack.c.h.b16 %v3022
    %v3103 = vunpack.c.l.b16 %v3023
    %v3104 = vunpack.c.h.b16 %v3023
    %v3105 = vunpack.c.l.b16 %v3024
    %v3106 = vunpack.c.h.b16 %v3024
    %v3107 = vunpack.c.l.b16 %v3025
    %v3108 = vunpack.c.h.b16 %v3025
    %v3109 = vunpack.c.l.b16 %v3026
    %v3110 = vunpack.c.h.b16 %v3026
    %v3111 = vunpack.c.l.b16 %v3027
    %v3112 = vunpack.c.h.b16 %v3027
    %v3113 = vunpack.c.l.b16 %v3028
    %v3114 = vunpack.c.h.b16 %v3028
    %v3115 = vunpack.c.l.b16 %v3029
    %v3116 = vunpack.c.h.b16 %v3029
    %v3117 = vunpack.c.l.b16 %v3030
    %v3118 = vunpack.c.h.b16 %v3030
    %v3119 = vunpack.c.l.b16 %v3031
    %v3120 = vunpack.c.h.b16 %v3031
    %v3121 = vunpack.c.l.b16 %v3032
    %v3122 = vunpack.c.h.b16 %v3032
    %v3123 = vunpack.c.l.b16 %v3033
    %v3124 = vunpack.c.h.b16 %v3033
    %v3125 = vunpack.c.l.b16 %v3034
    %v3126 = vunpack.c.h.b16 %v3034
    %v3127 = vunpack.c.l.b16 %v3035
    %v3128 = vunpack.c.h.b16 %v3035
    %v3129 = vunpack.c.l.b16 %v3036
    %v3130 = vunpack.c.h.b16 %v3036
    %v3131 = vunpack.c.l.b16 %v3037
    %v3132 = vunpack.c.h.b16 %v3037
    %v3133 = vunpack.c.l.b16 %v3038
    %v3134 = vunpack.c.h.b16 %v3038
    %v3135 = vpack.c.b16 %v3073, %v3071
    %v3136 = vpack.c.b16 %v3074, %v3072
    %v3137 = vpack.c.b16 %v3077, %v3075
    %v3138 = vpack.c.b16 %v3078, %v3076
    %v3139 = vpack.c.b16 %v3081, %v3079
    %v3140 = vpack.c.b16 %v3082, %v3080
    %v3141 = vpack.c.b16 %v3085, %v3083
    %v3142 = vpack.c.b16 %v3086, %v3084
    %v3143 = vpack.c.b16 %v3089, %v3087
    %v3144 = vpack.c.b16 %v3090, %v3088
    %v3145 = vpack.c.b16 %v3093, %v3091
    %v3146 = vpack.c.b16 %v3094, %v3092
    %v3147 = vpack.c.b16 %v3097, %v3095
    %v3148 = vpack.c.b16 %v3098, %v3096
    %v3149 = vpack.c.b16 %v3101, %v3099
    %v3150 = vpack.c.b16 %v3102, %v3100
    %v3151 = vpack.c.b16 %v3105, %v3103
    %v3152 = vpack.c.b16 %v3106, %v3104
    %v3153 = vpack.c.b16 %v3109, %v3107
    %v3154 = vpack.c.b16 %v3110, %v3108
    %v3155 = vpack.c.b16 %v3113, %v3111
    %v3156 = vpack.c.b16 %v3114, %v3112
    %v3157 = vpack.c.b16 %v3117, %v3115
    %v3158 = vpack.c.b16 %v3118, %v3116
    %v3159 = vpack.c.b16 %v3121, %v3119
    %v3160 = vpack.c.b16 %v3122, %v3120
    %v3161 = vpack.c.b16 %v3125, %v3123
    %v3162 = vpack.c.b16 %v3126, %v3124
    %v3163 = vpack.c.b16 %v3129, %v3127
    %v3164 = vpack.c.b16 %v3130, %v3128
    %v3165 = vpack.c.b16 %v3133, %v3131
    %v3166 = vpack.c.b16 %v3134, %v3132
    %3199 = vmatprep.subr.bf16.mxu0 %v3136
    %3200 = vmatpush1.bf16.msra.mxu0 %v3135
    %3201 = vmatprep.subr.bf16.mxu0 %v3138
    %3202 = vmatpush1.bf16.msra.mxu0 %v3137
    %3203 = vmatprep.subr.bf16.mxu0 %v3140
    %3204 = vmatpush1.bf16.msra.mxu0 %v3139
    %3205 = vmatprep.subr.bf16.mxu0 %v3142
    %3206 = vmatpush1.bf16.msra.mxu0 %v3141
    %3207 = vmatprep.subr.bf16.mxu0 %v3144
    %3208 = vmatpush1.bf16.msra.mxu0 %v3143
    %3209 = vmatprep.subr.bf16.mxu0 %v3146
    %3210 = vmatpush1.bf16.msra.mxu0 %v3145
    %3211 = vmatprep.subr.bf16.mxu0 %v3148
    %3212 = vmatpush1.bf16.msra.mxu0 %v3147
    %3213 = vmatprep.subr.bf16.mxu0 %v3150
    %3214 = vmatpush1.bf16.msra.mxu0 %v3149
    %3215 = vmatprep.subr.bf16.mxu0 %v3152
    %3216 = vmatpush1.bf16.msra.mxu0 %v3151
    %3217 = vmatprep.subr.bf16.mxu0 %v3154
    %3218 = vmatpush1.bf16.msra.mxu0 %v3153
    %3219 = vmatprep.subr.bf16.mxu0 %v3156
    %3220 = vmatpush1.bf16.msra.mxu0 %v3155
    %3221 = vmatprep.subr.bf16.mxu0 %v3158
    %3222 = vmatpush1.bf16.msra.mxu0 %v3157
    %3223 = vmatprep.subr.bf16.mxu0 %v3160
    %3224 = vmatpush1.bf16.msra.mxu0 %v3159
    %3225 = vmatprep.subr.bf16.mxu0 %v3162
    %3226 = vmatpush1.bf16.msra.mxu0 %v3161
    %3227 = vmatprep.subr.bf16.mxu0 %v3164
    %3228 = vmatpush1.bf16.msra.mxu0 %v3163
    %3229 = vmatprep.subr.bf16.mxu0 %v3166
    %3230 = vmatpush1.bf16.msra.mxu0 %v3165
    %3231 = vmatprep.mubr.bf16.mxu0 %v2772
    %3232 = vmatmul.mubr.bf16.gmra.mrb[0].mxu0 %v2771
    %v3233 = vpop.f32.mrb[0].mxu0
    %v3234 = vadd.f32 0.0, %v3233
    %v3235 = vpop.f32.mrb[0].mxu0
    %v3236 = vadd.f32 0.0, %v3235
    %v3237 = vpop.f32.mrb[0].mxu0
    %v3238 = vpop.f32.mrb[0].mxu0
    %3239 = vdwg.mxu0
    %s3240 = scalar_lea.vmem [#allocation29], 512
    %v3241 = vld [vmem:[%s3240] sm:$0xff]
    %v3242 = vld [vmem:[%s3240 + $0x8] sm:$0xff]
    %v3243 = vld [vmem:[%s3240 + $0x10] sm:$0xff]
    %v3244 = vld [vmem:[%s3240 + $0x18] sm:$0xff]
    %v3245 = vld [vmem:[%s3240 + $0x20] sm:$0xff]
    %v3246 = vld [vmem:[%s3240 + $0x28] sm:$0xff]
    %v3247 = vld [vmem:[%s3240 + $0x30] sm:$0xff]
    %v3248 = vld [vmem:[%s3240 + $0x38] sm:$0xff]
    %v3249 = vld [vmem:[%s3240 + $0x40] sm:$0xff]
    %v3250 = vld [vmem:[%s3240 + $0x48] sm:$0xff]
    %v3251 = vld [vmem:[%s3240 + $0x50] sm:$0xff]
    %v3252 = vld [vmem:[%s3240 + $0x58] sm:$0xff]
    %v3253 = vld [vmem:[%s3240 + $0x60] sm:$0xff]
    %v3254 = vld [vmem:[%s3240 + $0x68] sm:$0xff]
    %v3255 = vld [vmem:[%s3240 + $0x70] sm:$0xff]
    %v3256 = vld [vmem:[%s3240 + $0x78] sm:$0xff]
    %v3257 = vld [vmem:[%s3240 + $0x80] sm:$0xff]
    %v3258 = vld [vmem:[%s3240 + $0x88] sm:$0xff]
    %v3259 = vld [vmem:[%s3240 + $0x90] sm:$0xff]
    %v3260 = vld [vmem:[%s3240 + $0x98] sm:$0xff]
    %v3261 = vld [vmem:[%s3240 + $0xa0] sm:$0xff]
    %v3262 = vld [vmem:[%s3240 + $0xa8] sm:$0xff]
    %v3263 = vld [vmem:[%s3240 + $0xb0] sm:$0xff]
    %v3264 = vld [vmem:[%s3240 + $0xb8] sm:$0xff]
    %v3265 = vld [vmem:[%s3240 + $0xc0] sm:$0xff]
    %v3266 = vld [vmem:[%s3240 + $0xc8] sm:$0xff]
    %v3267 = vld [vmem:[%s3240 + $0xd0] sm:$0xff]
    %v3268 = vld [vmem:[%s3240 + $0xd8] sm:$0xff]
    %v3269 = vld [vmem:[%s3240 + $0xe0] sm:$0xff]
    %v3270 = vld [vmem:[%s3240 + $0xe8] sm:$0xff]
    %v3271 = vld [vmem:[%s3240 + $0xf0] sm:$0xff]
    %v3272 = vld [vmem:[%s3240 + $0xf8] sm:$0xff]
    %v3305 = vunpack.c.l.b16 %v3241
    %v3306 = vunpack.c.h.b16 %v3241
    %v3307 = vunpack.c.l.b16 %v3242
    %v3308 = vunpack.c.h.b16 %v3242
    %v3309 = vunpack.c.l.b16 %v3243
    %v3310 = vunpack.c.h.b16 %v3243
    %v3311 = vunpack.c.l.b16 %v3244
    %v3312 = vunpack.c.h.b16 %v3244
    %v3313 = vunpack.c.l.b16 %v3245
    %v3314 = vunpack.c.h.b16 %v3245
    %v3315 = vunpack.c.l.b16 %v3246
    %v3316 = vunpack.c.h.b16 %v3246
    %v3317 = vunpack.c.l.b16 %v3247
    %v3318 = vunpack.c.h.b16 %v3247
    %v3319 = vunpack.c.l.b16 %v3248
    %v3320 = vunpack.c.h.b16 %v3248
    %v3321 = vunpack.c.l.b16 %v3249
    %v3322 = vunpack.c.h.b16 %v3249
    %v3323 = vunpack.c.l.b16 %v3250
    %v3324 = vunpack.c.h.b16 %v3250
    %v3325 = vunpack.c.l.b16 %v3251
    %v3326 = vunpack.c.h.b16 %v3251
    %v3327 = vunpack.c.l.b16 %v3252
    %v3328 = vunpack.c.h.b16 %v3252
    %v3329 = vunpack.c.l.b16 %v3253
    %v3330 = vunpack.c.h.b16 %v3253
    %v3331 = vunpack.c.l.b16 %v3254
    %v3332 = vunpack.c.h.b16 %v3254
    %v3333 = vunpack.c.l.b16 %v3255
    %v3334 = vunpack.c.h.b16 %v3255
    %v3335 = vunpack.c.l.b16 %v3256
    %v3336 = vunpack.c.h.b16 %v3256
    %v3337 = vunpack.c.l.b16 %v3257
    %v3338 = vunpack.c.h.b16 %v3257
    %v3339 = vunpack.c.l.b16 %v3258
    %v3340 = vunpack.c.h.b16 %v3258
    %v3341 = vunpack.c.l.b16 %v3259
    %v3342 = vunpack.c.h.b16 %v3259
    %v3343 = vunpack.c.l.b16 %v3260
    %v3344 = vunpack.c.h.b16 %v3260
    %v3345 = vunpack.c.l.b16 %v3261
    %v3346 = vunpack.c.h.b16 %v3261
    %v3347 = vunpack.c.l.b16 %v3262
    %v3348 = vunpack.c.h.b16 %v3262
    %v3349 = vunpack.c.l.b16 %v3263
    %v3350 = vunpack.c.h.b16 %v3263
    %v3351 = vunpack.c.l.b16 %v3264
    %v3352 = vunpack.c.h.b16 %v3264
    %v3353 = vunpack.c.l.b16 %v3265
    %v3354 = vunpack.c.h.b16 %v3265
    %v3355 = vunpack.c.l.b16 %v3266
    %v3356 = vunpack.c.h.b16 %v3266
    %v3357 = vunpack.c.l.b16 %v3267
    %v3358 = vunpack.c.h.b16 %v3267
    %v3359 = vunpack.c.l.b16 %v3268
    %v3360 = vunpack.c.h.b16 %v3268
    %v3361 = vunpack.c.l.b16 %v3269
    %v3362 = vunpack.c.h.b16 %v3269
    %v3363 = vunpack.c.l.b16 %v3270
    %v3364 = vunpack.c.h.b16 %v3270
    %v3365 = vunpack.c.l.b16 %v3271
    %v3366 = vunpack.c.h.b16 %v3271
    %v3367 = vunpack.c.l.b16 %v3272
    %v3368 = vunpack.c.h.b16 %v3272
    %v3369 = vpack.c.b16 %v3307, %v3305
    %v3370 = vpack.c.b16 %v3308, %v3306
    %v3371 = vpack.c.b16 %v3311, %v3309
    %v3372 = vpack.c.b16 %v3312, %v3310
    %v3373 = vpack.c.b16 %v3315, %v3313
    %v3374 = vpack.c.b16 %v3316, %v3314
    %v3375 = vpack.c.b16 %v3319, %v3317
    %v3376 = vpack.c.b16 %v3320, %v3318
    %v3377 = vpack.c.b16 %v3323, %v3321
    %v3378 = vpack.c.b16 %v3324, %v3322
    %v3379 = vpack.c.b16 %v3327, %v3325
    %v3380 = vpack.c.b16 %v3328, %v3326
    %v3381 = vpack.c.b16 %v3331, %v3329
    %v3382 = vpack.c.b16 %v3332, %v3330
    %v3383 = vpack.c.b16 %v3335, %v3333
    %v3384 = vpack.c.b16 %v3336, %v3334
    %v3385 = vpack.c.b16 %v3339, %v3337
    %v3386 = vpack.c.b16 %v3340, %v3338
    %v3387 = vpack.c.b16 %v3343, %v3341
    %v3388 = vpack.c.b16 %v3344, %v3342
    %v3389 = vpack.c.b16 %v3347, %v3345
    %v3390 = vpack.c.b16 %v3348, %v3346
    %v3391 = vpack.c.b16 %v3351, %v3349
    %v3392 = vpack.c.b16 %v3352, %v3350
    %v3393 = vpack.c.b16 %v3355, %v3353
    %v3394 = vpack.c.b16 %v3356, %v3354
    %v3395 = vpack.c.b16 %v3359, %v3357
    %v3396 = vpack.c.b16 %v3360, %v3358
    %v3397 = vpack.c.b16 %v3363, %v3361
    %v3398 = vpack.c.b16 %v3364, %v3362
    %v3399 = vpack.c.b16 %v3367, %v3365
    %v3400 = vpack.c.b16 %v3368, %v3366
    %3433 = vmatprep.subr.bf16.mxu0 %v3370
    %3434 = vmatpush1.bf16.msra.mxu0 %v3369
    %3435 = vmatprep.subr.bf16.mxu0 %v3372
    %3436 = vmatpush1.bf16.msra.mxu0 %v3371
    %3437 = vmatprep.subr.bf16.mxu0 %v3374
    %3438 = vmatpush1.bf16.msra.mxu0 %v3373
    %3439 = vmatprep.subr.bf16.mxu0 %v3376
    %3440 = vmatpush1.bf16.msra.mxu0 %v3375
    %3441 = vmatprep.subr.bf16.mxu0 %v3378
    %3442 = vmatpush1.bf16.msra.mxu0 %v3377
    %3443 = vmatprep.subr.bf16.mxu0 %v3380
    %3444 = vmatpush1.bf16.msra.mxu0 %v3379
    %3445 = vmatprep.subr.bf16.mxu0 %v3382
    %3446 = vmatpush1.bf16.msra.mxu0 %v3381
    %3447 = vmatprep.subr.bf16.mxu0 %v3384
    %3448 = vmatpush1.bf16.msra.mxu0 %v3383
    %3449 = vmatprep.subr.bf16.mxu0 %v3386
    %3450 = vmatpush1.bf16.msra.mxu0 %v3385
    %3451 = vmatprep.subr.bf16.mxu0 %v3388
    %3452 = vmatpush1.bf16.msra.mxu0 %v3387
    %3453 = vmatprep.subr.bf16.mxu0 %v3390
    %3454 = vmatpush1.bf16.msra.mxu0 %v3389
    %3455 = vmatprep.subr.bf16.mxu0 %v3392
    %3456 = vmatpush1.bf16.msra.mxu0 %v3391
    %3457 = vmatprep.subr.bf16.mxu0 %v3394
    %3458 = vmatpush1.bf16.msra.mxu0 %v3393
    %3459 = vmatprep.subr.bf16.mxu0 %v3396
    %3460 = vmatpush1.bf16.msra.mxu0 %v3395
    %3461 = vmatprep.subr.bf16.mxu0 %v3398
    %3462 = vmatpush1.bf16.msra.mxu0 %v3397
    %3463 = vmatprep.subr.bf16.mxu0 %v3400
    %3464 = vmatpush1.bf16.msra.mxu0 %v3399
    %3465 = vmatprep.mubr.bf16.mxu0 %v2772
    %3466 = vmatmul.mubr.bf16.gmra.mrb[0].mxu0 %v2771
    %v3467 = vpop.f32.mrb[0].mxu0
    %v3468 = vadd.f32 0.0, %v3467
    %v3469 = vpop.f32.mrb[0].mxu0
    %v3470 = vadd.f32 0.0, %v3469
    %v3471 = vpop.f32.mrb[0].mxu0
    %v3472 = vpop.f32.mrb[0].mxu0
    %3473 = vdwg.mxu0
    %v3476 = vrot.slane %v3234, 1
    %v3477 = vrot.slane %v3236, 1
    %v3480 = vadd.f32 %v3000, %v3476
    %v3481 = vadd.f32 %v3002, %v3477
    %v3484 = vrot.slane %v3468, 2
    %v3485 = vrot.slane %v3470, 2
    %v3488 = vadd.f32 %v3480, %v3484
    %v3489 = vadd.f32 %v3481, %v3485
    %v3490 = vsel %vm1480, %v3488, 0.0
    %v3491 = vrot.slane %v3490, 4
    %v3492 = vadd.f32 %v3490, %v3491
    %v3493 = vrot.slane %v3492, 2
    %v3494 = vadd.f32 %v3492, %v3493
    %v3495 = vrot.slane %v3494, 1
    %v3496 = vadd.f32 %v3494, %v3495
    %v3497 = vsel %vm1480, %v3489, 0.0
    %v3498 = vrot.slane %v3497, 4
    %v3499 = vadd.f32 %v3497, %v3498
    %v3500 = vrot.slane %v3499, 2
    %v3501 = vadd.f32 %v3499, %v3500
    %v3502 = vrot.slane %v3501, 1
    %v3503 = vadd.f32 %v3501, %v3502
    %v3504 = vmul.f32 %v3488, %v3488
    %v3505 = vmul.f32 %v3489, %v3489
    %v3506 = vsel %vm1480, %v3504, 0.0
    %v3507 = vrot.slane %v3506, 4
    %v3508 = vadd.f32 %v3506, %v3507
    %v3509 = vrot.slane %v3508, 2
    %v3510 = vadd.f32 %v3508, %v3509
    %v3511 = vrot.slane %v3510, 1
    %v3512 = vadd.f32 %v3510, %v3511
    %v3513 = vsel %vm1480, %v3505, 0.0
    %v3514 = vrot.slane %v3513, 4
    %v3515 = vadd.f32 %v3513, %v3514
    %v3516 = vrot.slane %v3515, 2
    %v3517 = vadd.f32 %v3515, %v3516
    %v3518 = vrot.slane %v3517, 1
    %v3519 = vadd.f32 %v3517, %v3518
    %v3522 = vrot.slane %v3488, 4
    %v3523 = vrot.slane %v3489, 4
    %v3526 = vsel %vm1480, %v3522, 0.0
    %v3527 = vrot.slane %v3526, 4
    %v3528 = vadd.f32 %v3526, %v3527
    %v3529 = vrot.slane %v3528, 2
    %v3530 = vadd.f32 %v3528, %v3529
    %v3531 = vrot.slane %v3530, 1
    %v3532 = vadd.f32 %v3530, %v3531
    %v3533 = vsel %vm1480, %v3523, 0.0
    %v3534 = vrot.slane %v3533, 4
    %v3535 = vadd.f32 %v3533, %v3534
    %v3536 = vrot.slane %v3535, 2
    %v3537 = vadd.f32 %v3535, %v3536
    %v3538 = vrot.slane %v3537, 1
    %v3539 = vadd.f32 %v3537, %v3538
    %v3540 = vadd.f32 %v3496, %v3532
    %v3541 = vadd.f32 %v3503, %v3539
    %v3544 = vrot.slane %v3504, 4
    %v3545 = vrot.slane %v3505, 4
    %v3548 = vsel %vm1480, %v3544, 0.0
    %v3549 = vrot.slane %v3548, 4
    %v3550 = vadd.f32 %v3548, %v3549
    %v3551 = vrot.slane %v3550, 2
    %v3552 = vadd.f32 %v3550, %v3551
    %v3553 = vrot.slane %v3552, 1
    %v3554 = vadd.f32 %v3552, %v3553
    %v3555 = vsel %vm1480, %v3545, 0.0
    %v3556 = vrot.slane %v3555, 4
    %v3557 = vadd.f32 %v3555, %v3556
    %v3558 = vrot.slane %v3557, 2
    %v3559 = vadd.f32 %v3557, %v3558
    %v3560 = vrot.slane %v3559, 1
    %v3561 = vadd.f32 %v3559, %v3560
    %v3562 = vadd.f32 %v3512, %v3554
    %v3563 = vadd.f32 %v3519, %v3561
    %v3564 = vmul.f32 %v3540, %v2627
    %v3565 = vmul.f32 %v3541, %v2627
    %v3566 = vmul.f32 %v3562, %v2627
    %v3567 = vmul.f32 %v3563, %v2627
    %v3568 = vmul.f32 %v3564, %v3564
    %v3569 = vmul.f32 %v3565, %v3565
    %v3570 = vsub.f32 %v3566, %v3568
    %v3571 = vsub.f32 %v3567, %v3569
    %v3572 = vmax.f32 %v3570, 0.0
    %v3573 = vmax.f32 %v3571, 0.0
    %v3574 = vadd.f32 %v3572, 1e-05
    %v3575 = vadd.f32 %v3573, 1e-05
    %v3576 = vrsqrt.pop %v3574
    %v3577 = vrsqrt.pop %v3575
    %v3578 = vsub.f32 %v3488, %v3564
    %v3579 = vsub.f32 %v3489, %v3565
    %v3580 = vmul.f32 %v3578, %v3576
    %v3581 = vmul.f32 %v3579, %v3577
    %v3584 = vrot.slane %v2767, 1
    %v3585 = vrot.slane %v2768, 1
    %v3588 = vadd.f32 %v3580, %v3584
    %v3589 = vadd.f32 %v3581, %v3585
    %v3590 = vmax.f32 %v3588, 0.0
    %v3591 = vmax.f32 %v3589, 0.0
    %v3592 = vadd.f32 %v3580, %v2767
    %v3593 = vadd.f32 %v3581, %v2768
    %v3594 = vmax.f32 %v3592, 0.0
    %v3595 = vmax.f32 %v3593, 0.0
    %vm3596 = vcmp.lt.s32.totalorder %v1994, 512
    %vm3597 = vmand %vm1995, %vm3596
    %3598 = vst.msk [vmem:[#allocation9] ss:$4 sm:$0xf] %vm3597, 0.0
    %v3601 = vcombine.low %v3590, %v3591
    %v3603 = vunpack.c.l.s4 1966171168
    %v3604 = vunpack.c.0.s8 %v3603
    %v3605 = vlaneseq
    %v3606 = vshrl.u32 %v3605, 7
    %v3607 = vsub.s32 %v3604, %v3606
    %v3608 = vrot.slane %v3601, %v3607
    %v3610 = vunpack.c.l.s4 1966171168
    %v3611 = vunpack.c.0.s8 %v3610
    %v3612 = vlaneseq
    %v3613 = vshrl.u32 %v3612, 7
    %v3614 = vsub.s32 %v3611, %v3613
    %v3615 = vrot.slane %v3608, %v3614
    %s3617 = scalar_lea.vmem [#allocation9], 1
    %3618 = vst.msk [vmem:[%s3617] ss:$4 sm:$0x3] %vm1997, %v3615
    %v3619 = vcombine.high %v3608, %v3608
    %v3621 = vunpack.c.l.s4 1966171168
    %v3622 = vunpack.c.0.s8 %v3621
    %v3623 = vlaneseq
    %v3624 = vshrl.u32 %v3623, 7
    %v3625 = vsub.s32 %v3622, %v3624
    %v3626 = vrot.slane %v3619, %v3625
    %s3628 = scalar_lea.vmem [#allocation9], 9
    %3629 = vst.msk [vmem:[%s3628] ss:$4 sm:$0x3] %vm1997, %v3626
    %s3630 = scalar_lea.vmem [#allocation9], 2
    %3631 = vst.msk [vmem:[%s3630] ss:$4 sm:$0xf] %vm3597, 0.0
    %v3634 = vcombine.high %v3594, %v3595
    %v3636 = vunpack.c.l.s4 1966171168
    %v3637 = vunpack.c.0.s8 %v3636
    %v3638 = vlaneseq
    %v3639 = vshrl.u32 %v3638, 7
    %v3640 = vsub.s32 %v3637, %v3639
    %v3641 = vrot.slane %v3634, %v3640
    %v3643 = vunpack.c.l.s4 1966171168
    %v3644 = vunpack.c.0.s8 %v3643
    %v3645 = vlaneseq
    %v3646 = vshrl.u32 %v3645, 7
    %v3647 = vsub.s32 %v3644, %v3646
    %v3648 = vrot.slane %v3641, %v3647
    %s3650 = scalar_lea.vmem [#allocation9], 3
    %3651 = vst.msk [vmem:[%s3650] ss:$4 sm:$0x3] %vm1997, %v3648
    %v3652 = vcombine.high %v3641, %v3641
    %v3654 = vunpack.c.l.s4 1966171168
    %v3655 = vunpack.c.0.s8 %v3654
    %v3656 = vlaneseq
    %v3657 = vshrl.u32 %v3656, 7
    %v3658 = vsub.s32 %v3655, %v3657
    %v3659 = vrot.slane %v3652, %v3658
    %s3661 = scalar_lea.vmem [#allocation9], 11
    %3662 = vst.msk [vmem:[%s3661] ss:$4 sm:$0x3] %vm1997, %v3659
    %v3663 = vld [vmem:[#allocation9] sm:$0xff]
    %v3664 = vld [vmem:[#allocation9 + $0x8] sm:$0xff]
    %v3667 = vcombine.high %v3663, %v3663
    %v3668 = vcombine.high %v3664, %v3664
    %v3671 = vpack.c.bf16 %v3663, %v3663
    %v3672 = vpack.c.bf16 %v3667, %v3667
    %v3673 = vpack.c.bf16 %v3664, %v3664
    %v3674 = vpack.c.bf16 %v3668, %v3668
    %v3675 = vld [vmem:[#allocation30] sm:$0xff]
    %v3676 = vld [vmem:[#allocation30 + $0x8] sm:$0xff]
    %v3677 = vld [vmem:[#allocation30 + $0x10] sm:$0xff]
    %v3678 = vld [vmem:[#allocation30 + $0x18] sm:$0xff]
    %v3679 = vld [vmem:[#allocation30 + $0x20] sm:$0xff]
    %v3680 = vld [vmem:[#allocation30 + $0x28] sm:$0xff]
    %v3681 = vld [vmem:[#allocation30 + $0x30] sm:$0xff]
    %v3682 = vld [vmem:[#allocation30 + $0x38] sm:$0xff]
    %v3683 = vld [vmem:[#allocation30 + $0x40] sm:$0xff]
    %v3684 = vld [vmem:[#allocation30 + $0x48] sm:$0xff]
    %v3685 = vld [vmem:[#allocation30 + $0x50] sm:$0xff]
    %v3686 = vld [vmem:[#allocation30 + $0x58] sm:$0xff]
    %v3687 = vld [vmem:[#allocation30 + $0x60] sm:$0xff]
    %v3688 = vld [vmem:[#allocation30 + $0x68] sm:$0xff]
    %v3689 = vld [vmem:[#allocation30 + $0x70] sm:$0xff]
    %v3690 = vld [vmem:[#allocation30 + $0x78] sm:$0xff]
    %v3691 = vld [vmem:[#allocation30 + $0x80] sm:$0xff]
    %v3692 = vld [vmem:[#allocation30 + $0x88] sm:$0xff]
    %v3693 = vld [vmem:[#allocation30 + $0x90] sm:$0xff]
    %v3694 = vld [vmem:[#allocation30 + $0x98] sm:$0xff]
    %v3695 = vld [vmem:[#allocation30 + $0xa0] sm:$0xff]
    %v3696 = vld [vmem:[#allocation30 + $0xa8] sm:$0xff]
    %v3697 = vld [vmem:[#allocation30 + $0xb0] sm:$0xff]
    %v3698 = vld [vmem:[#allocation30 + $0xb8] sm:$0xff]
    %v3699 = vld [vmem:[#allocation30 + $0xc0] sm:$0xff]
    %v3700 = vld [vmem:[#allocation30 + $0xc8] sm:$0xff]
    %v3701 = vld [vmem:[#allocation30 + $0xd0] sm:$0xff]
    %v3702 = vld [vmem:[#allocation30 + $0xd8] sm:$0xff]
    %v3703 = vld [vmem:[#allocation30 + $0xe0] sm:$0xff]
    %v3704 = vld [vmem:[#allocation30 + $0xe8] sm:$0xff]
    %v3705 = vld [vmem:[#allocation30 + $0xf0] sm:$0xff]
    %v3706 = vld [vmem:[#allocation30 + $0xf8] sm:$0xff]
    %v3707 = vld [vmem:[#allocation30 + $0x100] sm:$0xff]
    %v3708 = vld [vmem:[#allocation30 + $0x108] sm:$0xff]
    %v3709 = vld [vmem:[#allocation30 + $0x110] sm:$0xff]
    %v3710 = vld [vmem:[#allocation30 + $0x118] sm:$0xff]
    %v3711 = vld [vmem:[#allocation30 + $0x120] sm:$0xff]
    %v3712 = vld [vmem:[#allocation30 + $0x128] sm:$0xff]
    %v3713 = vld [vmem:[#allocation30 + $0x130] sm:$0xff]
    %v3714 = vld [vmem:[#allocation30 + $0x138] sm:$0xff]
    %v3715 = vld [vmem:[#allocation30 + $0x140] sm:$0xff]
    %v3716 = vld [vmem:[#allocation30 + $0x148] sm:$0xff]
    %v3717 = vld [vmem:[#allocation30 + $0x150] sm:$0xff]
    %v3718 = vld [vmem:[#allocation30 + $0x158] sm:$0xff]
    %v3719 = vld [vmem:[#allocation30 + $0x160] sm:$0xff]
    %v3720 = vld [vmem:[#allocation30 + $0x168] sm:$0xff]
    %v3721 = vld [vmem:[#allocation30 + $0x170] sm:$0xff]
    %v3722 = vld [vmem:[#allocation30 + $0x178] sm:$0xff]
    %v3723 = vld [vmem:[#allocation30 + $0x180] sm:$0xff]
    %v3724 = vld [vmem:[#allocation30 + $0x188] sm:$0xff]
    %v3725 = vld [vmem:[#allocation30 + $0x190] sm:$0xff]
    %v3726 = vld [vmem:[#allocation30 + $0x198] sm:$0xff]
    %v3727 = vld [vmem:[#allocation30 + $0x1a0] sm:$0xff]
    %v3728 = vld [vmem:[#allocation30 + $0x1a8] sm:$0xff]
    %v3729 = vld [vmem:[#allocation30 + $0x1b0] sm:$0xff]
    %v3730 = vld [vmem:[#allocation30 + $0x1b8] sm:$0xff]
    %v3731 = vld [vmem:[#allocation30 + $0x1c0] sm:$0xff]
    %v3732 = vld [vmem:[#allocation30 + $0x1c8] sm:$0xff]
    %v3733 = vld [vmem:[#allocation30 + $0x1d0] sm:$0xff]
    %v3734 = vld [vmem:[#allocation30 + $0x1d8] sm:$0xff]
    %v3735 = vld [vmem:[#allocation30 + $0x1e0] sm:$0xff]
    %v3736 = vld [vmem:[#allocation30 + $0x1e8] sm:$0xff]
    %v3737 = vld [vmem:[#allocation30 + $0x1f0] sm:$0xff]
    %v3738 = vld [vmem:[#allocation30 + $0x1f8] sm:$0xff]
    %v3739 = vld [vmem:[#allocation30 + $0x200] sm:$0xff]
    %v3740 = vld [vmem:[#allocation30 + $0x208] sm:$0xff]
    %v3741 = vld [vmem:[#allocation30 + $0x210] sm:$0xff]
    %v3742 = vld [vmem:[#allocation30 + $0x218] sm:$0xff]
    %v3743 = vld [vmem:[#allocation30 + $0x220] sm:$0xff]
    %v3744 = vld [vmem:[#allocation30 + $0x228] sm:$0xff]
    %v3745 = vld [vmem:[#allocation30 + $0x230] sm:$0xff]
    %v3746 = vld [vmem:[#allocation30 + $0x238] sm:$0xff]
    %v3747 = vld [vmem:[#allocation30 + $0x240] sm:$0xff]
    %v3748 = vld [vmem:[#allocation30 + $0x248] sm:$0xff]
    %v3749 = vld [vmem:[#allocation30 + $0x250] sm:$0xff]
    %v3750 = vld [vmem:[#allocation30 + $0x258] sm:$0xff]
    %v3751 = vld [vmem:[#allocation30 + $0x260] sm:$0xff]
    %v3752 = vld [vmem:[#allocation30 + $0x268] sm:$0xff]
    %v3753 = vld [vmem:[#allocation30 + $0x270] sm:$0xff]
    %v3754 = vld [vmem:[#allocation30 + $0x278] sm:$0xff]
    %v3755 = vld [vmem:[#allocation30 + $0x280] sm:$0xff]
    %v3756 = vld [vmem:[#allocation30 + $0x288] sm:$0xff]
    %v3757 = vld [vmem:[#allocation30 + $0x290] sm:$0xff]
    %v3758 = vld [vmem:[#allocation30 + $0x298] sm:$0xff]
    %v3759 = vld [vmem:[#allocation30 + $0x2a0] sm:$0xff]
    %v3760 = vld [vmem:[#allocation30 + $0x2a8] sm:$0xff]
    %v3761 = vld [vmem:[#allocation30 + $0x2b0] sm:$0xff]
    %v3762 = vld [vmem:[#allocation30 + $0x2b8] sm:$0xff]
    %v3763 = vld [vmem:[#allocation30 + $0x2c0] sm:$0xff]
    %v3764 = vld [vmem:[#allocation30 + $0x2c8] sm:$0xff]
    %v3765 = vld [vmem:[#allocation30 + $0x2d0] sm:$0xff]
    %v3766 = vld [vmem:[#allocation30 + $0x2d8] sm:$0xff]
    %v3767 = vld [vmem:[#allocation30 + $0x2e0] sm:$0xff]
    %v3768 = vld [vmem:[#allocation30 + $0x2e8] sm:$0xff]
    %v3769 = vld [vmem:[#allocation30 + $0x2f0] sm:$0xff]
    %v3770 = vld [vmem:[#allocation30 + $0x2f8] sm:$0xff]
    %v3771 = vld [vmem:[#allocation30 + $0x300] sm:$0xff]
    %v3772 = vld [vmem:[#allocation30 + $0x308] sm:$0xff]
    %v3773 = vld [vmem:[#allocation30 + $0x310] sm:$0xff]
    %v3774 = vld [vmem:[#allocation30 + $0x318] sm:$0xff]
    %v3775 = vld [vmem:[#allocation30 + $0x320] sm:$0xff]
    %v3776 = vld [vmem:[#allocation30 + $0x328] sm:$0xff]
    %v3777 = vld [vmem:[#allocation30 + $0x330] sm:$0xff]
    %v3778 = vld [vmem:[#allocation30 + $0x338] sm:$0xff]
    %v3779 = vld [vmem:[#allocation30 + $0x340] sm:$0xff]
    %v3780 = vld [vmem:[#allocation30 + $0x348] sm:$0xff]
    %v3781 = vld [vmem:[#allocation30 + $0x350] sm:$0xff]
    %v3782 = vld [vmem:[#allocation30 + $0x358] sm:$0xff]
    %v3783 = vld [vmem:[#allocation30 + $0x360] sm:$0xff]
    %v3784 = vld [vmem:[#allocation30 + $0x368] sm:$0xff]
    %v3785 = vld [vmem:[#allocation30 + $0x370] sm:$0xff]
    %v3786 = vld [vmem:[#allocation30 + $0x378] sm:$0xff]
    %v3787 = vld [vmem:[#allocation30 + $0x380] sm:$0xff]
    %v3788 = vld [vmem:[#allocation30 + $0x388] sm:$0xff]
    %v3789 = vld [vmem:[#allocation30 + $0x390] sm:$0xff]
    %v3790 = vld [vmem:[#allocation30 + $0x398] sm:$0xff]
    %v3791 = vld [vmem:[#allocation30 + $0x3a0] sm:$0xff]
    %v3792 = vld [vmem:[#allocation30 + $0x3a8] sm:$0xff]
    %v3793 = vld [vmem:[#allocation30 + $0x3b0] sm:$0xff]
    %v3794 = vld [vmem:[#allocation30 + $0x3b8] sm:$0xff]
    %v3795 = vld [vmem:[#allocation30 + $0x3c0] sm:$0xff]
    %v3796 = vld [vmem:[#allocation30 + $0x3c8] sm:$0xff]
    %v3797 = vld [vmem:[#allocation30 + $0x3d0] sm:$0xff]
    %v3798 = vld [vmem:[#allocation30 + $0x3d8] sm:$0xff]
    %v3799 = vld [vmem:[#allocation30 + $0x3e0] sm:$0xff]
    %v3800 = vld [vmem:[#allocation30 + $0x3e8] sm:$0xff]
    %v3801 = vld [vmem:[#allocation30 + $0x3f0] sm:$0xff]
    %v3802 = vld [vmem:[#allocation30 + $0x3f8] sm:$0xff]
    %v3931 = vunpack.c.l.b16 %v3675
    %v3932 = vunpack.c.h.b16 %v3675
    %v3933 = vunpack.c.l.b16 %v3676
    %v3934 = vunpack.c.h.b16 %v3676
    %v3935 = vunpack.c.l.b16 %v3677
    %v3936 = vunpack.c.h.b16 %v3677
    %v3937 = vunpack.c.l.b16 %v3678
    %v3938 = vunpack.c.h.b16 %v3678
    %v3939 = vunpack.c.l.b16 %v3679
    %v3940 = vunpack.c.h.b16 %v3679
    %v3941 = vunpack.c.l.b16 %v3680
    %v3942 = vunpack.c.h.b16 %v3680
    %v3943 = vunpack.c.l.b16 %v3681
    %v3944 = vunpack.c.h.b16 %v3681
    %v3945 = vunpack.c.l.b16 %v3682
    %v3946 = vunpack.c.h.b16 %v3682
    %v3947 = vunpack.c.l.b16 %v3683
    %v3948 = vunpack.c.h.b16 %v3683
    %v3949 = vunpack.c.l.b16 %v3684
    %v3950 = vunpack.c.h.b16 %v3684
    %v3951 = vunpack.c.l.b16 %v3685
    %v3952 = vunpack.c.h.b16 %v3685
    %v3953 = vunpack.c.l.b16 %v3686
    %v3954 = vunpack.c.h.b16 %v3686
    %v3955 = vunpack.c.l.b16 %v3687
    %v3956 = vunpack.c.h.b16 %v3687
    %v3957 = vunpack.c.l.b16 %v3688
    %v3958 = vunpack.c.h.b16 %v3688
    %v3959 = vunpack.c.l.b16 %v3689
    %v3960 = vunpack.c.h.b16 %v3689
    %v3961 = vunpack.c.l.b16 %v3690
    %v3962 = vunpack.c.h.b16 %v3690
    %v3963 = vunpack.c.l.b16 %v3691
    %v3964 = vunpack.c.h.b16 %v3691
    %v3965 = vunpack.c.l.b16 %v3692
    %v3966 = vunpack.c.h.b16 %v3692
    %v3967 = vunpack.c.l.b16 %v3693
    %v3968 = vunpack.c.h.b16 %v3693
    %v3969 = vunpack.c.l.b16 %v3694
    %v3970 = vunpack.c.h.b16 %v3694
    %v3971 = vunpack.c.l.b16 %v3695
    %v3972 = vunpack.c.h.b16 %v3695
    %v3973 = vunpack.c.l.b16 %v3696
    %v3974 = vunpack.c.h.b16 %v3696
    %v3975 = vunpack.c.l.b16 %v3697
    %v3976 = vunpack.c.h.b16 %v3697
    %v3977 = vunpack.c.l.b16 %v3698
    %v3978 = vunpack.c.h.b16 %v3698
    %v3979 = vunpack.c.l.b16 %v3699
    %v3980 = vunpack.c.h.b16 %v3699
    %v3981 = vunpack.c.l.b16 %v3700
    %v3982 = vunpack.c.h.b16 %v3700
    %v3983 = vunpack.c.l.b16 %v3701
    %v3984 = vunpack.c.h.b16 %v3701
    %v3985 = vunpack.c.l.b16 %v3702
    %v3986 = vunpack.c.h.b16 %v3702
    %v3987 = vunpack.c.l.b16 %v3703
    %v3988 = vunpack.c.h.b16 %v3703
    %v3989 = vunpack.c.l.b16 %v3704
    %v3990 = vunpack.c.h.b16 %v3704
    %v3991 = vunpack.c.l.b16 %v3705
    %v3992 = vunpack.c.h.b16 %v3705
    %v3993 = vunpack.c.l.b16 %v3706
    %v3994 = vunpack.c.h.b16 %v3706
    %v3995 = vunpack.c.l.b16 %v3707
    %v3996 = vunpack.c.h.b16 %v3707
    %v3997 = vunpack.c.l.b16 %v3708
    %v3998 = vunpack.c.h.b16 %v3708
    %v3999 = vunpack.c.l.b16 %v3709
    %v4000 = vunpack.c.h.b16 %v3709
    %v4001 = vunpack.c.l.b16 %v3710
    %v4002 = vunpack.c.h.b16 %v3710
    %v4003 = vunpack.c.l.b16 %v3711
    %v4004 = vunpack.c.h.b16 %v3711
    %v4005 = vunpack.c.l.b16 %v3712
    %v4006 = vunpack.c.h.b16 %v3712
    %v4007 = vunpack.c.l.b16 %v3713
    %v4008 = vunpack.c.h.b16 %v3713
    %v4009 = vunpack.c.l.b16 %v3714
    %v4010 = vunpack.c.h.b16 %v3714
    %v4011 = vunpack.c.l.b16 %v3715
    %v4012 = vunpack.c.h.b16 %v3715
    %v4013 = vunpack.c.l.b16 %v3716
    %v4014 = vunpack.c.h.b16 %v3716
    %v4015 = vunpack.c.l.b16 %v3717
    %v4016 = vunpack.c.h.b16 %v3717
    %v4017 = vunpack.c.l.b16 %v3718
    %v4018 = vunpack.c.h.b16 %v3718
    %v4019 = vunpack.c.l.b16 %v3719
    %v4020 = vunpack.c.h.b16 %v3719
    %v4021 = vunpack.c.l.b16 %v3720
    %v4022 = vunpack.c.h.b16 %v3720
    %v4023 = vunpack.c.l.b16 %v3721
    %v4024 = vunpack.c.h.b16 %v3721
    %v4025 = vunpack.c.l.b16 %v3722
    %v4026 = vunpack.c.h.b16 %v3722
    %v4027 = vunpack.c.l.b16 %v3723
    %v4028 = vunpack.c.h.b16 %v3723
    %v4029 = vunpack.c.l.b16 %v3724
    %v4030 = vunpack.c.h.b16 %v3724
    %v4031 = vunpack.c.l.b16 %v3725
    %v4032 = vunpack.c.h.b16 %v3725
    %v4033 = vunpack.c.l.b16 %v3726
    %v4034 = vunpack.c.h.b16 %v3726
    %v4035 = vunpack.c.l.b16 %v3727
    %v4036 = vunpack.c.h.b16 %v3727
    %v4037 = vunpack.c.l.b16 %v3728
    %v4038 = vunpack.c.h.b16 %v3728
    %v4039 = vunpack.c.l.b16 %v3729
    %v4040 = vunpack.c.h.b16 %v3729
    %v4041 = vunpack.c.l.b16 %v3730
    %v4042 = vunpack.c.h.b16 %v3730
    %v4043 = vunpack.c.l.b16 %v3731
    %v4044 = vunpack.c.h.b16 %v3731
    %v4045 = vunpack.c.l.b16 %v3732
    %v4046 = vunpack.c.h.b16 %v3732
    %v4047 = vunpack.c.l.b16 %v3733
    %v4048 = vunpack.c.h.b16 %v3733
    %v4049 = vunpack.c.l.b16 %v3734
    %v4050 = vunpack.c.h.b16 %v3734
    %v4051 = vunpack.c.l.b16 %v3735
    %v4052 = vunpack.c.h.b16 %v3735
    %v4053 = vunpack.c.l.b16 %v3736
    %v4054 = vunpack.c.h.b16 %v3736
    %v4055 = vunpack.c.l.b16 %v3737
    %v4056 = vunpack.c.h.b16 %v3737
    %v4057 = vunpack.c.l.b16 %v3738
    %v4058 = vunpack.c.h.b16 %v3738
    %v4059 = vunpack.c.l.b16 %v3739
    %v4060 = vunpack.c.h.b16 %v3739
    %v4061 = vunpack.c.l.b16 %v3740
    %v4062 = vunpack.c.h.b16 %v3740
    %v4063 = vunpack.c.l.b16 %v3741
    %v4064 = vunpack.c.h.b16 %v3741
    %v4065 = vunpack.c.l.b16 %v3742
    %v4066 = vunpack.c.h.b16 %v3742
    %v4067 = vunpack.c.l.b16 %v3743
    %v4068 = vunpack.c.h.b16 %v3743
    %v4069 = vunpack.c.l.b16 %v3744
    %v4070 = vunpack.c.h.b16 %v3744
    %v4071 = vunpack.c.l.b16 %v3745
    %v4072 = vunpack.c.h.b16 %v3745
    %v4073 = vunpack.c.l.b16 %v3746
    %v4074 = vunpack.c.h.b16 %v3746
    %v4075 = vunpack.c.l.b16 %v3747
    %v4076 = vunpack.c.h.b16 %v3747
    %v4077 = vunpack.c.l.b16 %v3748
    %v4078 = vunpack.c.h.b16 %v3748
    %v4079 = vunpack.c.l.b16 %v3749
    %v4080 = vunpack.c.h.b16 %v3749
    %v4081 = vunpack.c.l.b16 %v3750
    %v4082 = vunpack.c.h.b16 %v3750
    %v4083 = vunpack.c.l.b16 %v3751
    %v4084 = vunpack.c.h.b16 %v3751
    %v4085 = vunpack.c.l.b16 %v3752
    %v4086 = vunpack.c.h.b16 %v3752
    %v4087 = vunpack.c.l.b16 %v3753
    %v4088 = vunpack.c.h.b16 %v3753
    %v4089 = vunpack.c.l.b16 %v3754
    %v4090 = vunpack.c.h.b16 %v3754
    %v4091 = vunpack.c.l.b16 %v3755
    %v4092 = vunpack.c.h.b16 %v3755
    %v4093 = vunpack.c.l.b16 %v3756
    %v4094 = vunpack.c.h.b16 %v3756
    %v4095 = vunpack.c.l.b16 %v3757
    %v4096 = vunpack.c.h.b16 %v3757
    %v4097 = vunpack.c.l.b16 %v3758
    %v4098 = vunpack.c.h.b16 %v3758
    %v4099 = vunpack.c.l.b16 %v3759
    %v4100 = vunpack.c.h.b16 %v3759
    %v4101 = vunpack.c.l.b16 %v3760
    %v4102 = vunpack.c.h.b16 %v3760
    %v4103 = vunpack.c.l.b16 %v3761
    %v4104 = vunpack.c.h.b16 %v3761
    %v4105 = vunpack.c.l.b16 %v3762
    %v4106 = vunpack.c.h.b16 %v3762
    %v4107 = vunpack.c.l.b16 %v3763
    %v4108 = vunpack.c.h.b16 %v3763
    %v4109 = vunpack.c.l.b16 %v3764
    %v4110 = vunpack.c.h.b16 %v3764
    %v4111 = vunpack.c.l.b16 %v3765
    %v4112 = vunpack.c.h.b16 %v3765
    %v4113 = vunpack.c.l.b16 %v3766
    %v4114 = vunpack.c.h.b16 %v3766
    %v4115 = vunpack.c.l.b16 %v3767
    %v4116 = vunpack.c.h.b16 %v3767
    %v4117 = vunpack.c.l.b16 %v3768
    %v4118 = vunpack.c.h.b16 %v3768
    %v4119 = vunpack.c.l.b16 %v3769
    %v4120 = vunpack.c.h.b16 %v3769
    %v4121 = vunpack.c.l.b16 %v3770
    %v4122 = vunpack.c.h.b16 %v3770
    %v4123 = vunpack.c.l.b16 %v3771
    %v4124 = vunpack.c.h.b16 %v3771
    %v4125 = vunpack.c.l.b16 %v3772
    %v4126 = vunpack.c.h.b16 %v3772
    %v4127 = vunpack.c.l.b16 %v3773
    %v4128 = vunpack.c.h.b16 %v3773
    %v4129 = vunpack.c.l.b16 %v3774
    %v4130 = vunpack.c.h.b16 %v3774
    %v4131 = vunpack.c.l.b16 %v3775
    %v4132 = vunpack.c.h.b16 %v3775
    %v4133 = vunpack.c.l.b16 %v3776
    %v4134 = vunpack.c.h.b16 %v3776
    %v4135 = vunpack.c.l.b16 %v3777
    %v4136 = vunpack.c.h.b16 %v3777
    %v4137 = vunpack.c.l.b16 %v3778
    %v4138 = vunpack.c.h.b16 %v3778
    %v4139 = vunpack.c.l.b16 %v3779
    %v4140 = vunpack.c.h.b16 %v3779
    %v4141 = vunpack.c.l.b16 %v3780
    %v4142 = vunpack.c.h.b16 %v3780
    %v4143 = vunpack.c.l.b16 %v3781
    %v4144 = vunpack.c.h.b16 %v3781
    %v4145 = vunpack.c.l.b16 %v3782
    %v4146 = vunpack.c.h.b16 %v3782
    %v4147 = vunpack.c.l.b16 %v3783
    %v4148 = vunpack.c.h.b16 %v3783
    %v4149 = vunpack.c.l.b16 %v3784
    %v4150 = vunpack.c.h.b16 %v3784
    %v4151 = vunpack.c.l.b16 %v3785
    %v4152 = vunpack.c.h.b16 %v3785
    %v4153 = vunpack.c.l.b16 %v3786
    %v4154 = vunpack.c.h.b16 %v3786
    %v4155 = vunpack.c.l.b16 %v3787
    %v4156 = vunpack.c.h.b16 %v3787
    %v4157 = vunpack.c.l.b16 %v3788
    %v4158 = vunpack.c.h.b16 %v3788
    %v4159 = vunpack.c.l.b16 %v3789
    %v4160 = vunpack.c.h.b16 %v3789
    %v4161 = vunpack.c.l.b16 %v3790
    %v4162 = vunpack.c.h.b16 %v3790
    %v4163 = vunpack.c.l.b16 %v3791
    %v4164 = vunpack.c.h.b16 %v3791
    %v4165 = vunpack.c.l.b16 %v3792
    %v4166 = vunpack.c.h.b16 %v3792
    %v4167 = vunpack.c.l.b16 %v3793
    %v4168 = vunpack.c.h.b16 %v3793
    %v4169 = vunpack.c.l.b16 %v3794
    %v4170 = vunpack.c.h.b16 %v3794
    %v4171 = vunpack.c.l.b16 %v3795
    %v4172 = vunpack.c.h.b16 %v3795
    %v4173 = vunpack.c.l.b16 %v3796
    %v4174 = vunpack.c.h.b16 %v3796
    %v4175 = vunpack.c.l.b16 %v3797
    %v4176 = vunpack.c.h.b16 %v3797
    %v4177 = vunpack.c.l.b16 %v3798
    %v4178 = vunpack.c.h.b16 %v3798
    %v4179 = vunpack.c.l.b16 %v3799
    %v4180 = vunpack.c.h.b16 %v3799
    %v4181 = vunpack.c.l.b16 %v3800
    %v4182 = vunpack.c.h.b16 %v3800
    %v4183 = vunpack.c.l.b16 %v3801
    %v4184 = vunpack.c.h.b16 %v3801
    %v4185 = vunpack.c.l.b16 %v3802
    %v4186 = vunpack.c.h.b16 %v3802
    %v4187 = vpack.c.b16 %v3935, %v3931
    %v4188 = vpack.c.b16 %v3936, %v3932
    %v4189 = vpack.c.b16 %v3937, %v3933
    %v4190 = vpack.c.b16 %v3938, %v3934
    %v4191 = vpack.c.b16 %v3943, %v3939
    %v4192 = vpack.c.b16 %v3944, %v3940
    %v4193 = vpack.c.b16 %v3945, %v3941
    %v4194 = vpack.c.b16 %v3946, %v3942
    %v4195 = vpack.c.b16 %v3951, %v3947
    %v4196 = vpack.c.b16 %v3952, %v3948
    %v4197 = vpack.c.b16 %v3953, %v3949
    %v4198 = vpack.c.b16 %v3954, %v3950
    %v4199 = vpack.c.b16 %v3959, %v3955
    %v4200 = vpack.c.b16 %v3960, %v3956
    %v4201 = vpack.c.b16 %v3961, %v3957
    %v4202 = vpack.c.b16 %v3962, %v3958
    %v4203 = vpack.c.b16 %v3967, %v3963
    %v4204 = vpack.c.b16 %v3968, %v3964
    %v4205 = vpack.c.b16 %v3969, %v3965
    %v4206 = vpack.c.b16 %v3970, %v3966
    %v4207 = vpack.c.b16 %v3975, %v3971
    %v4208 = vpack.c.b16 %v3976, %v3972
    %v4209 = vpack.c.b16 %v3977, %v3973
    %v4210 = vpack.c.b16 %v3978, %v3974
    %v4211 = vpack.c.b16 %v3983, %v3979
    %v4212 = vpack.c.b16 %v3984, %v3980
    %v4213 = vpack.c.b16 %v3985, %v3981
    %v4214 = vpack.c.b16 %v3986, %v3982
    %v4215 = vpack.c.b16 %v3991, %v3987
    %v4216 = vpack.c.b16 %v3992, %v3988
    %v4217 = vpack.c.b16 %v3993, %v3989
    %v4218 = vpack.c.b16 %v3994, %v3990
    %v4219 = vpack.c.b16 %v3999, %v3995
    %v4220 = vpack.c.b16 %v4000, %v3996
    %v4221 = vpack.c.b16 %v4001, %v3997
    %v4222 = vpack.c.b16 %v4002, %v3998
    %v4223 = vpack.c.b16 %v4007, %v4003
    %v4224 = vpack.c.b16 %v4008, %v4004
    %v4225 = vpack.c.b16 %v4009, %v4005
    %v4226 = vpack.c.b16 %v4010, %v4006
    %v4227 = vpack.c.b16 %v4015, %v4011
    %v4228 = vpack.c.b16 %v4016, %v4012
    %v4229 = vpack.c.b16 %v4017, %v4013
    %v4230 = vpack.c.b16 %v4018, %v4014
    %v4231 = vpack.c.b16 %v4023, %v4019
    %v4232 = vpack.c.b16 %v4024, %v4020
    %v4233 = vpack.c.b16 %v4025, %v4021
    %v4234 = vpack.c.b16 %v4026, %v4022
    %v4235 = vpack.c.b16 %v4031, %v4027
    %v4236 = vpack.c.b16 %v4032, %v4028
    %v4237 = vpack.c.b16 %v4033, %v4029
    %v4238 = vpack.c.b16 %v4034, %v4030
    %v4239 = vpack.c.b16 %v4039, %v4035
    %v4240 = vpack.c.b16 %v4040, %v4036
    %v4241 = vpack.c.b16 %v4041, %v4037
    %v4242 = vpack.c.b16 %v4042, %v4038
    %v4243 = vpack.c.b16 %v4047, %v4043
    %v4244 = vpack.c.b16 %v4048, %v4044
    %v4245 = vpack.c.b16 %v4049, %v4045
    %v4246 = vpack.c.b16 %v4050, %v4046
    %v4247 = vpack.c.b16 %v4055, %v4051
    %v4248 = vpack.c.b16 %v4056, %v4052
    %v4249 = vpack.c.b16 %v4057, %v4053
    %v4250 = vpack.c.b16 %v4058, %v4054
    %v4251 = vpack.c.b16 %v4063, %v4059
    %v4252 = vpack.c.b16 %v4064, %v4060
    %v4253 = vpack.c.b16 %v4065, %v4061
    %v4254 = vpack.c.b16 %v4066, %v4062
    %v4255 = vpack.c.b16 %v4071, %v4067
    %v4256 = vpack.c.b16 %v4072, %v4068
    %v4257 = vpack.c.b16 %v4073, %v4069
    %v4258 = vpack.c.b16 %v4074, %v4070
    %v4259 = vpack.c.b16 %v4079, %v4075
    %v4260 = vpack.c.b16 %v4080, %v4076
    %v4261 = vpack.c.b16 %v4081, %v4077
    %v4262 = vpack.c.b16 %v4082, %v4078
    %v4263 = vpack.c.b16 %v4087, %v4083
    %v4264 = vpack.c.b16 %v4088, %v4084
    %v4265 = vpack.c.b16 %v4089, %v4085
    %v4266 = vpack.c.b16 %v4090, %v4086
    %v4267 = vpack.c.b16 %v4095, %v4091
    %v4268 = vpack.c.b16 %v4096, %v4092
    %v4269 = vpack.c.b16 %v4097, %v4093
    %v4270 = vpack.c.b16 %v4098, %v4094
    %v4271 = vpack.c.b16 %v4103, %v4099
    %v4272 = vpack.c.b16 %v4104, %v4100
    %v4273 = vpack.c.b16 %v4105, %v4101
    %v4274 = vpack.c.b16 %v4106, %v4102
    %v4275 = vpack.c.b16 %v4111, %v4107
    %v4276 = vpack.c.b16 %v4112, %v4108
    %v4277 = vpack.c.b16 %v4113, %v4109
    %v4278 = vpack.c.b16 %v4114, %v4110
    %v4279 = vpack.c.b16 %v4119, %v4115
    %v4280 = vpack.c.b16 %v4120, %v4116
    %v4281 = vpack.c.b16 %v4121, %v4117
    %v4282 = vpack.c.b16 %v4122, %v4118
    %v4283 = vpack.c.b16 %v4127, %v4123
    %v4284 = vpack.c.b16 %v4128, %v4124
    %v4285 = vpack.c.b16 %v4129, %v4125
    %v4286 = vpack.c.b16 %v4130, %v4126
    %v4287 = vpack.c.b16 %v4135, %v4131
    %v4288 = vpack.c.b16 %v4136, %v4132
    %v4289 = vpack.c.b16 %v4137, %v4133
    %v4290 = vpack.c.b16 %v4138, %v4134
    %v4291 = vpack.c.b16 %v4143, %v4139
    %v4292 = vpack.c.b16 %v4144, %v4140
    %v4293 = vpack.c.b16 %v4145, %v4141
    %v4294 = vpack.c.b16 %v4146, %v4142
    %v4295 = vpack.c.b16 %v4151, %v4147
    %v4296 = vpack.c.b16 %v4152, %v4148
    %v4297 = vpack.c.b16 %v4153, %v4149
    %v4298 = vpack.c.b16 %v4154, %v4150
    %v4299 = vpack.c.b16 %v4159, %v4155
    %v4300 = vpack.c.b16 %v4160, %v4156
    %v4301 = vpack.c.b16 %v4161, %v4157
    %v4302 = vpack.c.b16 %v4162, %v4158
    %v4303 = vpack.c.b16 %v4167, %v4163
    %v4304 = vpack.c.b16 %v4168, %v4164
    %v4305 = vpack.c.b16 %v4169, %v4165
    %v4306 = vpack.c.b16 %v4170, %v4166
    %v4307 = vpack.c.b16 %v4175, %v4171
    %v4308 = vpack.c.b16 %v4176, %v4172
    %v4309 = vpack.c.b16 %v4177, %v4173
    %v4310 = vpack.c.b16 %v4178, %v4174
    %v4311 = vpack.c.b16 %v4183, %v4179
    %v4312 = vpack.c.b16 %v4184, %v4180
    %v4313 = vpack.c.b16 %v4185, %v4181
    %v4314 = vpack.c.b16 %v4186, %v4182
    %4443 = vmatprep.subr.bf16.mxu0 %v4188
    %4444 = vmatpush1.bf16.msra.mxu0 %v4187
    %4445 = vmatprep.subr.bf16.mxu0 %v4192
    %4446 = vmatpush1.bf16.msra.mxu0 %v4191
    %4447 = vmatprep.subr.bf16.mxu0 %v4196
    %4448 = vmatpush1.bf16.msra.mxu0 %v4195
    %4449 = vmatprep.subr.bf16.mxu0 %v4200
    %4450 = vmatpush1.bf16.msra.mxu0 %v4199
    %4451 = vmatprep.subr.bf16.mxu0 %v4204
    %4452 = vmatpush1.bf16.msra.mxu0 %v4203
    %4453 = vmatprep.subr.bf16.mxu0 %v4208
    %4454 = vmatpush1.bf16.msra.mxu0 %v4207
    %4455 = vmatprep.subr.bf16.mxu0 %v4212
    %4456 = vmatpush1.bf16.msra.mxu0 %v4211
    %4457 = vmatprep.subr.bf16.mxu0 %v4216
    %4458 = vmatpush1.bf16.msra.mxu0 %v4215
    %4459 = vmatprep.subr.bf16.mxu0 %v4220
    %4460 = vmatpush1.bf16.msra.mxu0 %v4219
    %4461 = vmatprep.subr.bf16.mxu0 %v4224
    %4462 = vmatpush1.bf16.msra.mxu0 %v4223
    %4463 = vmatprep.subr.bf16.mxu0 %v4228
    %4464 = vmatpush1.bf16.msra.mxu0 %v4227
    %4465 = vmatprep.subr.bf16.mxu0 %v4232
    %4466 = vmatpush1.bf16.msra.mxu0 %v4231
    %4467 = vmatprep.subr.bf16.mxu0 %v4236
    %4468 = vmatpush1.bf16.msra.mxu0 %v4235
    %4469 = vmatprep.subr.bf16.mxu0 %v4240
    %4470 = vmatpush1.bf16.msra.mxu0 %v4239
    %4471 = vmatprep.subr.bf16.mxu0 %v4244
    %4472 = vmatpush1.bf16.msra.mxu0 %v4243
    %4473 = vmatprep.subr.bf16.mxu0 %v4248
    %4474 = vmatpush1.bf16.msra.mxu0 %v4247
    %4475 = vmatprep.mubr.bf16.mxu0 %v3672
    %4476 = vmatmul.mubr.bf16.gmra.mrb[0].mxu0 %v3671
    %v4477 = vpop.f32.mrb[0].mxu0
    %v4478 = vadd.f32 0.0, %v4477
    %v4479 = vpop.f32.mrb[0].mxu0
    %v4480 = vadd.f32 0.0, %v4479
    %v4481 = vpop.f32.mrb[0].mxu0
    %v4482 = vpop.f32.mrb[0].mxu0
    %4483 = vdwg.mxu0
    %4484 = vmatprep.subr.bf16.mxu0 %v4252
    %4485 = vmatpush1.bf16.msra.mxu0 %v4251
    %4486 = vmatprep.subr.bf16.mxu0 %v4256
    %4487 = vmatpush1.bf16.msra.mxu0 %v4255
    %4488 = vmatprep.subr.bf16.mxu0 %v4260
    %4489 = vmatpush1.bf16.msra.mxu0 %v4259
    %4490 = vmatprep.subr.bf16.mxu0 %v4264
    %4491 = vmatpush1.bf16.msra.mxu0 %v4263
    %4492 = vmatprep.subr.bf16.mxu0 %v4268
    %4493 = vmatpush1.bf16.msra.mxu0 %v4267
    %4494 = vmatprep.subr.bf16.mxu0 %v4272
    %4495 = vmatpush1.bf16.msra.mxu0 %v4271
    %4496 = vmatprep.subr.bf16.mxu0 %v4276
    %4497 = vmatpush1.bf16.msra.mxu0 %v4275
    %4498 = vmatprep.subr.bf16.mxu0 %v4280
    %4499 = vmatpush1.bf16.msra.mxu0 %v4279
    %4500 = vmatprep.subr.bf16.mxu0 %v4284
    %4501 = vmatpush1.bf16.msra.mxu0 %v4283
    %4502 = vmatprep.subr.bf16.mxu0 %v4288
    %4503 = vmatpush1.bf16.msra.mxu0 %v4287
    %4504 = vmatprep.subr.bf16.mxu0 %v4292
    %4505 = vmatpush1.bf16.msra.mxu0 %v4291
    %4506 = vmatprep.subr.bf16.mxu0 %v4296
    %4507 = vmatpush1.bf16.msra.mxu0 %v4295
    %4508 = vmatprep.subr.bf16.mxu0 %v4300
    %4509 = vmatpush1.bf16.msra.mxu0 %v4299
    %4510 = vmatprep.subr.bf16.mxu0 %v4304
    %4511 = vmatpush1.bf16.msra.mxu0 %v4303
    %4512 = vmatprep.subr.bf16.mxu0 %v4308
    %4513 = vmatpush1.bf16.msra.mxu0 %v4307
    %4514 = vmatprep.subr.bf16.mxu0 %v4312
    %4515 = vmatpush1.bf16.msra.mxu0 %v4311
    %4516 = vmatprep.mubr.bf16.mxu0 %v3674
    %4517 = vmatmul.mubr.bf16.gmra.mrb[0].mxu0 %v3673
    %v4518 = vpop.f32.mrb[0].mxu0
    %v4519 = vadd.f32 %v4478, %v4518
    %v4520 = vpop.f32.mrb[0].mxu0
    %v4521 = vadd.f32 %v4480, %v4520
    %v4522 = vpop.f32.mrb[0].mxu0
    %v4523 = vpop.f32.mrb[0].mxu0
    %4524 = vdwg.mxu0
    %4525 = vmatprep.subr.bf16.mxu0 %v4190
    %4526 = vmatpush1.bf16.msra.mxu0 %v4189
    %4527 = vmatprep.subr.bf16.mxu0 %v4194
    %4528 = vmatpush1.bf16.msra.mxu0 %v4193
    %4529 = vmatprep.subr.bf16.mxu0 %v4198
    %4530 = vmatpush1.bf16.msra.mxu0 %v4197
    %4531 = vmatprep.subr.bf16.mxu0 %v4202
    %4532 = vmatpush1.bf16.msra.mxu0 %v4201
    %4533 = vmatprep.subr.bf16.mxu0 %v4206
    %4534 = vmatpush1.bf16.msra.mxu0 %v4205
    %4535 = vmatprep.subr.bf16.mxu0 %v4210
    %4536 = vmatpush1.bf16.msra.mxu0 %v4209
    %4537 = vmatprep.subr.bf16.mxu0 %v4214
    %4538 = vmatpush1.bf16.msra.mxu0 %v4213
    %4539 = vmatprep.subr.bf16.mxu0 %v4218
    %4540 = vmatpush1.bf16.msra.mxu0 %v4217
    %4541 = vmatprep.subr.bf16.mxu0 %v4222
    %4542 = vmatpush1.bf16.msra.mxu0 %v4221
    %4543 = vmatprep.subr.bf16.mxu0 %v4226
    %4544 = vmatpush1.bf16.msra.mxu0 %v4225
    %4545 = vmatprep.subr.bf16.mxu0 %v4230
    %4546 = vmatpush1.bf16.msra.mxu0 %v4229
    %4547 = vmatprep.subr.bf16.mxu0 %v4234
    %4548 = vmatpush1.bf16.msra.mxu0 %v4233
    %4549 = vmatprep.subr.bf16.mxu0 %v4238
    %4550 = vmatpush1.bf16.msra.mxu0 %v4237
    %4551 = vmatprep.subr.bf16.mxu0 %v4242
    %4552 = vmatpush1.bf16.msra.mxu0 %v4241
    %4553 = vmatprep.subr.bf16.mxu0 %v4246
    %4554 = vmatpush1.bf16.msra.mxu0 %v4245
    %4555 = vmatprep.subr.bf16.mxu0 %v4250
    %4556 = vmatpush1.bf16.msra.mxu0 %v4249
    %4557 = vmatprep.mubr.bf16.mxu0 %v3672
    %4558 = vmatmul.mubr.bf16.gmra.mrb[0].mxu0 %v3671
    %v4559 = vpop.f32.mrb[0].mxu0
    %v4560 = vadd.f32 0.0, %v4559
    %v4561 = vpop.f32.mrb[0].mxu0
    %v4562 = vadd.f32 0.0, %v4561
    %v4563 = vpop.f32.mrb[0].mxu0
    %v4564 = vpop.f32.mrb[0].mxu0
    %4565 = vdwg.mxu0
    %4566 = vmatprep.subr.bf16.mxu0 %v4254
    %4567 = vmatpush1.bf16.msra.mxu0 %v4253
    %4568 = vmatprep.subr.bf16.mxu0 %v4258
    %4569 = vmatpush1.bf16.msra.mxu0 %v4257
    %4570 = vmatprep.subr.bf16.mxu0 %v4262
    %4571 = vmatpush1.bf16.msra.mxu0 %v4261
    %4572 = vmatprep.subr.bf16.mxu0 %v4266
    %4573 = vmatpush1.bf16.msra.mxu0 %v4265
    %4574 = vmatprep.subr.bf16.mxu0 %v4270
    %4575 = vmatpush1.bf16.msra.mxu0 %v4269
    %4576 = vmatprep.subr.bf16.mxu0 %v4274
    %4577 = vmatpush1.bf16.msra.mxu0 %v4273
    %4578 = vmatprep.subr.bf16.mxu0 %v4278
    %4579 = vmatpush1.bf16.msra.mxu0 %v4277
    %4580 = vmatprep.subr.bf16.mxu0 %v4282
    %4581 = vmatpush1.bf16.msra.mxu0 %v4281
    %4582 = vmatprep.subr.bf16.mxu0 %v4286
    %4583 = vmatpush1.bf16.msra.mxu0 %v4285
    %4584 = vmatprep.subr.bf16.mxu0 %v4290
    %4585 = vmatpush1.bf16.msra.mxu0 %v4289
    %4586 = vmatprep.subr.bf16.mxu0 %v4294
    %4587 = vmatpush1.bf16.msra.mxu0 %v4293
    %4588 = vmatprep.subr.bf16.mxu0 %v4298
    %4589 = vmatpush1.bf16.msra.mxu0 %v4297
    %4590 = vmatprep.subr.bf16.mxu0 %v4302
    %4591 = vmatpush1.bf16.msra.mxu0 %v4301
    %4592 = vmatprep.subr.bf16.mxu0 %v4306
    %4593 = vmatpush1.bf16.msra.mxu0 %v4305
    %4594 = vmatprep.subr.bf16.mxu0 %v4310
    %4595 = vmatpush1.bf16.msra.mxu0 %v4309
    %4596 = vmatprep.subr.bf16.mxu0 %v4314
    %4597 = vmatpush1.bf16.msra.mxu0 %v4313
    %4598 = vmatprep.mubr.bf16.mxu0 %v3674
    %4599 = vmatmul.mubr.bf16.gmra.mrb[0].mxu0 %v3673
    %v4600 = vpop.f32.mrb[0].mxu0
    %v4601 = vadd.f32 %v4560, %v4600
    %v4602 = vpop.f32.mrb[0].mxu0
    %v4603 = vadd.f32 %v4562, %v4602
    %v4604 = vpop.f32.mrb[0].mxu0
    %v4605 = vpop.f32.mrb[0].mxu0
    %4606 = vdwg.mxu0
    %v4607 = vld [vmem:[#allocation32] sm:$0xff]
    %v4608 = vld [vmem:[#allocation32 + $0x8] sm:$0xff]
    %v4609 = vld [vmem:[#allocation32 + $0x10] sm:$0xff]
    %v4610 = vld [vmem:[#allocation32 + $0x18] sm:$0xff]
    %v4611 = vld [vmem:[#allocation32 + $0x20] sm:$0xff]
    %v4612 = vld [vmem:[#allocation32 + $0x28] sm:$0xff]
    %v4613 = vld [vmem:[#allocation32 + $0x30] sm:$0xff]
    %v4614 = vld [vmem:[#allocation32 + $0x38] sm:$0xff]
    %v4615 = vld [vmem:[#allocation32 + $0x40] sm:$0xff]
    %v4616 = vld [vmem:[#allocation32 + $0x48] sm:$0xff]
    %v4617 = vld [vmem:[#allocation32 + $0x50] sm:$0xff]
    %v4618 = vld [vmem:[#allocation32 + $0x58] sm:$0xff]
    %v4619 = vld [vmem:[#allocation32 + $0x60] sm:$0xff]
    %v4620 = vld [vmem:[#allocation32 + $0x68] sm:$0xff]
    %v4621 = vld [vmem:[#allocation32 + $0x70] sm:$0xff]
    %v4622 = vld [vmem:[#allocation32 + $0x78] sm:$0xff]
    %v4623 = vld [vmem:[#allocation32 + $0x80] sm:$0xff]
    %v4624 = vld [vmem:[#allocation32 + $0x88] sm:$0xff]
    %v4625 = vld [vmem:[#allocation32 + $0x90] sm:$0xff]
    %v4626 = vld [vmem:[#allocation32 + $0x98] sm:$0xff]
    %v4627 = vld [vmem:[#allocation32 + $0xa0] sm:$0xff]
    %v4628 = vld [vmem:[#allocation32 + $0xa8] sm:$0xff]
    %v4629 = vld [vmem:[#allocation32 + $0xb0] sm:$0xff]
    %v4630 = vld [vmem:[#allocation32 + $0xb8] sm:$0xff]
    %v4631 = vld [vmem:[#allocation32 + $0xc0] sm:$0xff]
    %v4632 = vld [vmem:[#allocation32 + $0xc8] sm:$0xff]
    %v4633 = vld [vmem:[#allocation32 + $0xd0] sm:$0xff]
    %v4634 = vld [vmem:[#allocation32 + $0xd8] sm:$0xff]
    %v4635 = vld [vmem:[#allocation32 + $0xe0] sm:$0xff]
    %v4636 = vld [vmem:[#allocation32 + $0xe8] sm:$0xff]
    %v4637 = vld [vmem:[#allocation32 + $0xf0] sm:$0xff]
    %v4638 = vld [vmem:[#allocation32 + $0xf8] sm:$0xff]
    %v4639 = vld [vmem:[#allocation32 + $0x100] sm:$0xff]
    %v4640 = vld [vmem:[#allocation32 + $0x108] sm:$0xff]
    %v4641 = vld [vmem:[#allocation32 + $0x110] sm:$0xff]
    %v4642 = vld [vmem:[#allocation32 + $0x118] sm:$0xff]
    %v4643 = vld [vmem:[#allocation32 + $0x120] sm:$0xff]
    %v4644 = vld [vmem:[#allocation32 + $0x128] sm:$0xff]
    %v4645 = vld [vmem:[#allocation32 + $0x130] sm:$0xff]
    %v4646 = vld [vmem:[#allocation32 + $0x138] sm:$0xff]
    %v4647 = vld [vmem:[#allocation32 + $0x140] sm:$0xff]
    %v4648 = vld [vmem:[#allocation32 + $0x148] sm:$0xff]
    %v4649 = vld [vmem:[#allocation32 + $0x150] sm:$0xff]
    %v4650 = vld [vmem:[#allocation32 + $0x158] sm:$0xff]
    %v4651 = vld [vmem:[#allocation32 + $0x160] sm:$0xff]
    %v4652 = vld [vmem:[#allocation32 + $0x168] sm:$0xff]
    %v4653 = vld [vmem:[#allocation32 + $0x170] sm:$0xff]
    %v4654 = vld [vmem:[#allocation32 + $0x178] sm:$0xff]
    %v4655 = vld [vmem:[#allocation32 + $0x180] sm:$0xff]
    %v4656 = vld [vmem:[#allocation32 + $0x188] sm:$0xff]
    %v4657 = vld [vmem:[#allocation32 + $0x190] sm:$0xff]
    %v4658 = vld [vmem:[#allocation32 + $0x198] sm:$0xff]
    %v4659 = vld [vmem:[#allocation32 + $0x1a0] sm:$0xff]
    %v4660 = vld [vmem:[#allocation32 + $0x1a8] sm:$0xff]
    %v4661 = vld [vmem:[#allocation32 + $0x1b0] sm:$0xff]
    %v4662 = vld [vmem:[#allocation32 + $0x1b8] sm:$0xff]
    %v4663 = vld [vmem:[#allocation32 + $0x1c0] sm:$0xff]
    %v4664 = vld [vmem:[#allocation32 + $0x1c8] sm:$0xff]
    %v4665 = vld [vmem:[#allocation32 + $0x1d0] sm:$0xff]
    %v4666 = vld [vmem:[#allocation32 + $0x1d8] sm:$0xff]
    %v4667 = vld [vmem:[#allocation32 + $0x1e0] sm:$0xff]
    %v4668 = vld [vmem:[#allocation32 + $0x1e8] sm:$0xff]
    %v4669 = vld [vmem:[#allocation32 + $0x1f0] sm:$0xff]
    %v4670 = vld [vmem:[#allocation32 + $0x1f8] sm:$0xff]
    %v4735 = vunpack.c.l.b16 %v4607
    %v4736 = vunpack.c.h.b16 %v4607
    %v4737 = vunpack.c.l.b16 %v4608
    %v4738 = vunpack.c.h.b16 %v4608
    %v4739 = vunpack.c.l.b16 %v4609
    %v4740 = vunpack.c.h.b16 %v4609
    %v4741 = vunpack.c.l.b16 %v4610
    %v4742 = vunpack.c.h.b16 %v4610
    %v4743 = vunpack.c.l.b16 %v4611
    %v4744 = vunpack.c.h.b16 %v4611
    %v4745 = vunpack.c.l.b16 %v4612
    %v4746 = vunpack.c.h.b16 %v4612
    %v4747 = vunpack.c.l.b16 %v4613
    %v4748 = vunpack.c.h.b16 %v4613
    %v4749 = vunpack.c.l.b16 %v4614
    %v4750 = vunpack.c.h.b16 %v4614
    %v4751 = vunpack.c.l.b16 %v4615
    %v4752 = vunpack.c.h.b16 %v4615
    %v4753 = vunpack.c.l.b16 %v4616
    %v4754 = vunpack.c.h.b16 %v4616
    %v4755 = vunpack.c.l.b16 %v4617
    %v4756 = vunpack.c.h.b16 %v4617
    %v4757 = vunpack.c.l.b16 %v4618
    %v4758 = vunpack.c.h.b16 %v4618
    %v4759 = vunpack.c.l.b16 %v4619
    %v4760 = vunpack.c.h.b16 %v4619
    %v4761 = vunpack.c.l.b16 %v4620
    %v4762 = vunpack.c.h.b16 %v4620
    %v4763 = vunpack.c.l.b16 %v4621
    %v4764 = vunpack.c.h.b16 %v4621
    %v4765 = vunpack.c.l.b16 %v4622
    %v4766 = vunpack.c.h.b16 %v4622
    %v4767 = vunpack.c.l.b16 %v4623
    %v4768 = vunpack.c.h.b16 %v4623
    %v4769 = vunpack.c.l.b16 %v4624
    %v4770 = vunpack.c.h.b16 %v4624
    %v4771 = vunpack.c.l.b16 %v4625
    %v4772 = vunpack.c.h.b16 %v4625
    %v4773 = vunpack.c.l.b16 %v4626
    %v4774 = vunpack.c.h.b16 %v4626
    %v4775 = vunpack.c.l.b16 %v4627
    %v4776 = vunpack.c.h.b16 %v4627
    %v4777 = vunpack.c.l.b16 %v4628
    %v4778 = vunpack.c.h.b16 %v4628
    %v4779 = vunpack.c.l.b16 %v4629
    %v4780 = vunpack.c.h.b16 %v4629
    %v4781 = vunpack.c.l.b16 %v4630
    %v4782 = vunpack.c.h.b16 %v4630
    %v4783 = vunpack.c.l.b16 %v4631
    %v4784 = vunpack.c.h.b16 %v4631
    %v4785 = vunpack.c.l.b16 %v4632
    %v4786 = vunpack.c.h.b16 %v4632
    %v4787 = vunpack.c.l.b16 %v4633
    %v4788 = vunpack.c.h.b16 %v4633
    %v4789 = vunpack.c.l.b16 %v4634
    %v4790 = vunpack.c.h.b16 %v4634
    %v4791 = vunpack.c.l.b16 %v4635
    %v4792 = vunpack.c.h.b16 %v4635
    %v4793 = vunpack.c.l.b16 %v4636
    %v4794 = vunpack.c.h.b16 %v4636
    %v4795 = vunpack.c.l.b16 %v4637
    %v4796 = vunpack.c.h.b16 %v4637
    %v4797 = vunpack.c.l.b16 %v4638
    %v4798 = vunpack.c.h.b16 %v4638
    %v4799 = vunpack.c.l.b16 %v4639
    %v4800 = vunpack.c.h.b16 %v4639
    %v4801 = vunpack.c.l.b16 %v4640
    %v4802 = vunpack.c.h.b16 %v4640
    %v4803 = vunpack.c.l.b16 %v4641
    %v4804 = vunpack.c.h.b16 %v4641
    %v4805 = vunpack.c.l.b16 %v4642
    %v4806 = vunpack.c.h.b16 %v4642
    %v4807 = vunpack.c.l.b16 %v4643
    %v4808 = vunpack.c.h.b16 %v4643
    %v4809 = vunpack.c.l.b16 %v4644
    %v4810 = vunpack.c.h.b16 %v4644
    %v4811 = vunpack.c.l.b16 %v4645
    %v4812 = vunpack.c.h.b16 %v4645
    %v4813 = vunpack.c.l.b16 %v4646
    %v4814 = vunpack.c.h.b16 %v4646
    %v4815 = vunpack.c.l.b16 %v4647
    %v4816 = vunpack.c.h.b16 %v4647
    %v4817 = vunpack.c.l.b16 %v4648
    %v4818 = vunpack.c.h.b16 %v4648
    %v4819 = vunpack.c.l.b16 %v4649
    %v4820 = vunpack.c.h.b16 %v4649
    %v4821 = vunpack.c.l.b16 %v4650
    %v4822 = vunpack.c.h.b16 %v4650
    %v4823 = vunpack.c.l.b16 %v4651
    %v4824 = vunpack.c.h.b16 %v4651
    %v4825 = vunpack.c.l.b16 %v4652
    %v4826 = vunpack.c.h.b16 %v4652
    %v4827 = vunpack.c.l.b16 %v4653
    %v4828 = vunpack.c.h.b16 %v4653
    %v4829 = vunpack.c.l.b16 %v4654
    %v4830 = vunpack.c.h.b16 %v4654
    %v4831 = vunpack.c.l.b16 %v4655
    %v4832 = vunpack.c.h.b16 %v4655
    %v4833 = vunpack.c.l.b16 %v4656
    %v4834 = vunpack.c.h.b16 %v4656
    %v4835 = vunpack.c.l.b16 %v4657
    %v4836 = vunpack.c.h.b16 %v4657
    %v4837 = vunpack.c.l.b16 %v4658
    %v4838 = vunpack.c.h.b16 %v4658
    %v4839 = vunpack.c.l.b16 %v4659
    %v4840 = vunpack.c.h.b16 %v4659
    %v4841 = vunpack.c.l.b16 %v4660
    %v4842 = vunpack.c.h.b16 %v4660
    %v4843 = vunpack.c.l.b16 %v4661
    %v4844 = vunpack.c.h.b16 %v4661
    %v4845 = vunpack.c.l.b16 %v4662
    %v4846 = vunpack.c.h.b16 %v4662
    %v4847 = vunpack.c.l.b16 %v4663
    %v4848 = vunpack.c.h.b16 %v4663
    %v4849 = vunpack.c.l.b16 %v4664
    %v4850 = vunpack.c.h.b16 %v4664
    %v4851 = vunpack.c.l.b16 %v4665
    %v4852 = vunpack.c.h.b16 %v4665
    %v4853 = vunpack.c.l.b16 %v4666
    %v4854 = vunpack.c.h.b16 %v4666
    %v4855 = vunpack.c.l.b16 %v4667
    %v4856 = vunpack.c.h.b16 %v4667
    %v4857 = vunpack.c.l.b16 %v4668
    %v4858 = vunpack.c.h.b16 %v4668
    %v4859 = vunpack.c.l.b16 %v4669
    %v4860 = vunpack.c.h.b16 %v4669
    %v4861 = vunpack.c.l.b16 %v4670
    %v4862 = vunpack.c.h.b16 %v4670
    %v4863 = vpack.c.b16 %v4739, %v4735
    %v4864 = vpack.c.b16 %v4740, %v4736
    %v4865 = vpack.c.b16 %v4741, %v4737
    %v4866 = vpack.c.b16 %v4742, %v4738
    %v4867 = vpack.c.b16 %v4747, %v4743
    %v4868 = vpack.c.b16 %v4748, %v4744
    %v4869 = vpack.c.b16 %v4749, %v4745
    %v4870 = vpack.c.b16 %v4750, %v4746
    %v4871 = vpack.c.b16 %v4755, %v4751
    %v4872 = vpack.c.b16 %v4756, %v4752
    %v4873 = vpack.c.b16 %v4757, %v4753
    %v4874 = vpack.c.b16 %v4758, %v4754
    %v4875 = vpack.c.b16 %v4763, %v4759
    %v4876 = vpack.c.b16 %v4764, %v4760
    %v4877 = vpack.c.b16 %v4765, %v4761
    %v4878 = vpack.c.b16 %v4766, %v4762
    %v4879 = vpack.c.b16 %v4771, %v4767
    %v4880 = vpack.c.b16 %v4772, %v4768
    %v4881 = vpack.c.b16 %v4773, %v4769
    %v4882 = vpack.c.b16 %v4774, %v4770
    %v4883 = vpack.c.b16 %v4779, %v4775
    %v4884 = vpack.c.b16 %v4780, %v4776
    %v4885 = vpack.c.b16 %v4781, %v4777
    %v4886 = vpack.c.b16 %v4782, %v4778
    %v4887 = vpack.c.b16 %v4787, %v4783
    %v4888 = vpack.c.b16 %v4788, %v4784
    %v4889 = vpack.c.b16 %v4789, %v4785
    %v4890 = vpack.c.b16 %v4790, %v4786
    %v4891 = vpack.c.b16 %v4795, %v4791
    %v4892 = vpack.c.b16 %v4796, %v4792
    %v4893 = vpack.c.b16 %v4797, %v4793
    %v4894 = vpack.c.b16 %v4798, %v4794
    %v4895 = vpack.c.b16 %v4803, %v4799
    %v4896 = vpack.c.b16 %v4804, %v4800
    %v4897 = vpack.c.b16 %v4805, %v4801
    %v4898 = vpack.c.b16 %v4806, %v4802
    %v4899 = vpack.c.b16 %v4811, %v4807
    %v4900 = vpack.c.b16 %v4812, %v4808
    %v4901 = vpack.c.b16 %v4813, %v4809
    %v4902 = vpack.c.b16 %v4814, %v4810
    %v4903 = vpack.c.b16 %v4819, %v4815
    %v4904 = vpack.c.b16 %v4820, %v4816
    %v4905 = vpack.c.b16 %v4821, %v4817
    %v4906 = vpack.c.b16 %v4822, %v4818
    %v4907 = vpack.c.b16 %v4827, %v4823
    %v4908 = vpack.c.b16 %v4828, %v4824
    %v4909 = vpack.c.b16 %v4829, %v4825
    %v4910 = vpack.c.b16 %v4830, %v4826
    %v4911 = vpack.c.b16 %v4835, %v4831
    %v4912 = vpack.c.b16 %v4836, %v4832
    %v4913 = vpack.c.b16 %v4837, %v4833
    %v4914 = vpack.c.b16 %v4838, %v4834
    %v4915 = vpack.c.b16 %v4843, %v4839
    %v4916 = vpack.c.b16 %v4844, %v4840
    %v4917 = vpack.c.b16 %v4845, %v4841
    %v4918 = vpack.c.b16 %v4846, %v4842
    %v4919 = vpack.c.b16 %v4851, %v4847
    %v4920 = vpack.c.b16 %v4852, %v4848
    %v4921 = vpack.c.b16 %v4853, %v4849
    %v4922 = vpack.c.b16 %v4854, %v4850
    %v4923 = vpack.c.b16 %v4859, %v4855
    %v4924 = vpack.c.b16 %v4860, %v4856
    %v4925 = vpack.c.b16 %v4861, %v4857
    %v4926 = vpack.c.b16 %v4862, %v4858
    %4991 = vmatprep.subr.bf16.mxu0 %v4864
    %4992 = vmatpush1.bf16.msra.mxu0 %v4863
    %4993 = vmatprep.subr.bf16.mxu0 %v4868
    %4994 = vmatpush1.bf16.msra.mxu0 %v4867
    %4995 = vmatprep.subr.bf16.mxu0 %v4872
    %4996 = vmatpush1.bf16.msra.mxu0 %v4871
    %4997 = vmatprep.subr.bf16.mxu0 %v4876
    %4998 = vmatpush1.bf16.msra.mxu0 %v4875
    %4999 = vmatprep.subr.bf16.mxu0 %v4880
    %5000 = vmatpush1.bf16.msra.mxu0 %v4879
    %5001 = vmatprep.subr.bf16.mxu0 %v4884
    %5002 = vmatpush1.bf16.msra.mxu0 %v4883
    %5003 = vmatprep.subr.bf16.mxu0 %v4888
    %5004 = vmatpush1.bf16.msra.mxu0 %v4887
    %5005 = vmatprep.subr.bf16.mxu0 %v4892
    %5006 = vmatpush1.bf16.msra.mxu0 %v4891
    %5007 = vmatprep.subr.bf16.mxu0 %v4896
    %5008 = vmatpush1.bf16.msra.mxu0 %v4895
    %5009 = vmatprep.subr.bf16.mxu0 %v4900
    %5010 = vmatpush1.bf16.msra.mxu0 %v4899
    %5011 = vmatprep.subr.bf16.mxu0 %v4904
    %5012 = vmatpush1.bf16.msra.mxu0 %v4903
    %5013 = vmatprep.subr.bf16.mxu0 %v4908
    %5014 = vmatpush1.bf16.msra.mxu0 %v4907
    %5015 = vmatprep.subr.bf16.mxu0 %v4912
    %5016 = vmatpush1.bf16.msra.mxu0 %v4911
    %5017 = vmatprep.subr.bf16.mxu0 %v4916
    %5018 = vmatpush1.bf16.msra.mxu0 %v4915
    %5019 = vmatprep.subr.bf16.mxu0 %v4920
    %5020 = vmatpush1.bf16.msra.mxu0 %v4919
    %5021 = vmatprep.subr.bf16.mxu0 %v4924
    %5022 = vmatpush1.bf16.msra.mxu0 %v4923
    %5023 = vmatprep.mubr.bf16.mxu0 %v3674
    %5024 = vmatmul.mubr.bf16.gmra.mrb[0].mxu0 %v3673
    %v5025 = vpop.f32.mrb[0].mxu0
    %v5026 = vadd.f32 0.0, %v5025
    %v5027 = vpop.f32.mrb[0].mxu0
    %v5028 = vadd.f32 0.0, %v5027
    %v5029 = vpop.f32.mrb[0].mxu0
    %v5030 = vpop.f32.mrb[0].mxu0
    %5031 = vdwg.mxu0
    %5032 = vmatprep.subr.bf16.mxu0 %v4866
    %5033 = vmatpush1.bf16.msra.mxu0 %v4865
    %5034 = vmatprep.subr.bf16.mxu0 %v4870
    %5035 = vmatpush1.bf16.msra.mxu0 %v4869
    %5036 = vmatprep.subr.bf16.mxu0 %v4874
    %5037 = vmatpush1.bf16.msra.mxu0 %v4873
    %5038 = vmatprep.subr.bf16.mxu0 %v4878
    %5039 = vmatpush1.bf16.msra.mxu0 %v4877
    %5040 = vmatprep.subr.bf16.mxu0 %v4882
    %5041 = vmatpush1.bf16.msra.mxu0 %v4881
    %5042 = vmatprep.subr.bf16.mxu0 %v4886
    %5043 = vmatpush1.bf16.msra.mxu0 %v4885
    %5044 = vmatprep.subr.bf16.mxu0 %v4890
    %5045 = vmatpush1.bf16.msra.mxu0 %v4889
    %5046 = vmatprep.subr.bf16.mxu0 %v4894
    %5047 = vmatpush1.bf16.msra.mxu0 %v4893
    %5048 = vmatprep.subr.bf16.mxu0 %v4898
    %5049 = vmatpush1.bf16.msra.mxu0 %v4897
    %5050 = vmatprep.subr.bf16.mxu0 %v4902
    %5051 = vmatpush1.bf16.msra.mxu0 %v4901
    %5052 = vmatprep.subr.bf16.mxu0 %v4906
    %5053 = vmatpush1.bf16.msra.mxu0 %v4905
    %5054 = vmatprep.subr.bf16.mxu0 %v4910
    %5055 = vmatpush1.bf16.msra.mxu0 %v4909
    %5056 = vmatprep.subr.bf16.mxu0 %v4914
    %5057 = vmatpush1.bf16.msra.mxu0 %v4913
    %5058 = vmatprep.subr.bf16.mxu0 %v4918
    %5059 = vmatpush1.bf16.msra.mxu0 %v4917
    %5060 = vmatprep.subr.bf16.mxu0 %v4922
    %5061 = vmatpush1.bf16.msra.mxu0 %v4921
    %5062 = vmatprep.subr.bf16.mxu0 %v4926
    %5063 = vmatpush1.bf16.msra.mxu0 %v4925
    %5064 = vmatprep.mubr.bf16.mxu0 %v3674
    %5065 = vmatmul.mubr.bf16.gmra.mrb[0].mxu0 %v3673
    %v5066 = vpop.f32.mrb[0].mxu0
    %v5067 = vadd.f32 0.0, %v5066
    %v5068 = vpop.f32.mrb[0].mxu0
    %v5069 = vadd.f32 0.0, %v5068
    %v5070 = vpop.f32.mrb[0].mxu0
    %v5071 = vpop.f32.mrb[0].mxu0
    %5072 = vdwg.mxu0
    %v5073 = vld [vmem:[#allocation33] sm:$0xff]
    %v5074 = vld [vmem:[#allocation33 + $0x8] sm:$0xff]
    %v5075 = vld [vmem:[#allocation33 + $0x10] sm:$0xff]
    %v5076 = vld [vmem:[#allocation33 + $0x18] sm:$0xff]
    %v5077 = vld [vmem:[#allocation33 + $0x20] sm:$0xff]
    %v5078 = vld [vmem:[#allocation33 + $0x28] sm:$0xff]
    %v5079 = vld [vmem:[#allocation33 + $0x30] sm:$0xff]
    %v5080 = vld [vmem:[#allocation33 + $0x38] sm:$0xff]
    %v5081 = vld [vmem:[#allocation33 + $0x40] sm:$0xff]
    %v5082 = vld [vmem:[#allocation33 + $0x48] sm:$0xff]
    %v5083 = vld [vmem:[#allocation33 + $0x50] sm:$0xff]
    %v5084 = vld [vmem:[#allocation33 + $0x58] sm:$0xff]
    %v5085 = vld [vmem:[#allocation33 + $0x60] sm:$0xff]
    %v5086 = vld [vmem:[#allocation33 + $0x68] sm:$0xff]
    %v5087 = vld [vmem:[#allocation33 + $0x70] sm:$0xff]
    %v5088 = vld [vmem:[#allocation33 + $0x78] sm:$0xff]
    %v5089 = vld [vmem:[#allocation33 + $0x80] sm:$0xff]
    %v5090 = vld [vmem:[#allocation33 + $0x88] sm:$0xff]
    %v5091 = vld [vmem:[#allocation33 + $0x90] sm:$0xff]
    %v5092 = vld [vmem:[#allocation33 + $0x98] sm:$0xff]
    %v5093 = vld [vmem:[#allocation33 + $0xa0] sm:$0xff]
    %v5094 = vld [vmem:[#allocation33 + $0xa8] sm:$0xff]
    %v5095 = vld [vmem:[#allocation33 + $0xb0] sm:$0xff]
    %v5096 = vld [vmem:[#allocation33 + $0xb8] sm:$0xff]
    %v5097 = vld [vmem:[#allocation33 + $0xc0] sm:$0xff]
    %v5098 = vld [vmem:[#allocation33 + $0xc8] sm:$0xff]
    %v5099 = vld [vmem:[#allocation33 + $0xd0] sm:$0xff]
    %v5100 = vld [vmem:[#allocation33 + $0xd8] sm:$0xff]
    %v5101 = vld [vmem:[#allocation33 + $0xe0] sm:$0xff]
    %v5102 = vld [vmem:[#allocation33 + $0xe8] sm:$0xff]
    %v5103 = vld [vmem:[#allocation33 + $0xf0] sm:$0xff]
    %v5104 = vld [vmem:[#allocation33 + $0xf8] sm:$0xff]
    %v5105 = vld [vmem:[#allocation33 + $0x100] sm:$0xff]
    %v5106 = vld [vmem:[#allocation33 + $0x108] sm:$0xff]
    %v5107 = vld [vmem:[#allocation33 + $0x110] sm:$0xff]
    %v5108 = vld [vmem:[#allocation33 + $0x118] sm:$0xff]
    %v5109 = vld [vmem:[#allocation33 + $0x120] sm:$0xff]
    %v5110 = vld [vmem:[#allocation33 + $0x128] sm:$0xff]
    %v5111 = vld [vmem:[#allocation33 + $0x130] sm:$0xff]
    %v5112 = vld [vmem:[#allocation33 + $0x138] sm:$0xff]
    %v5113 = vld [vmem:[#allocation33 + $0x140] sm:$0xff]
    %v5114 = vld [vmem:[#allocation33 + $0x148] sm:$0xff]
    %v5115 = vld [vmem:[#allocation33 + $0x150] sm:$0xff]
    %v5116 = vld [vmem:[#allocation33 + $0x158] sm:$0xff]
    %v5117 = vld [vmem:[#allocation33 + $0x160] sm:$0xff]
    %v5118 = vld [vmem:[#allocation33 + $0x168] sm:$0xff]
    %v5119 = vld [vmem:[#allocation33 + $0x170] sm:$0xff]
    %v5120 = vld [vmem:[#allocation33 + $0x178] sm:$0xff]
    %v5121 = vld [vmem:[#allocation33 + $0x180] sm:$0xff]
    %v5122 = vld [vmem:[#allocation33 + $0x188] sm:$0xff]
    %v5123 = vld [vmem:[#allocation33 + $0x190] sm:$0xff]
    %v5124 = vld [vmem:[#allocation33 + $0x198] sm:$0xff]
    %v5125 = vld [vmem:[#allocation33 + $0x1a0] sm:$0xff]
    %v5126 = vld [vmem:[#allocation33 + $0x1a8] sm:$0xff]
    %v5127 = vld [vmem:[#allocation33 + $0x1b0] sm:$0xff]
    %v5128 = vld [vmem:[#allocation33 + $0x1b8] sm:$0xff]
    %v5129 = vld [vmem:[#allocation33 + $0x1c0] sm:$0xff]
    %v5130 = vld [vmem:[#allocation33 + $0x1c8] sm:$0xff]
    %v5131 = vld [vmem:[#allocation33 + $0x1d0] sm:$0xff]
    %v5132 = vld [vmem:[#allocation33 + $0x1d8] sm:$0xff]
    %v5133 = vld [vmem:[#allocation33 + $0x1e0] sm:$0xff]
    %v5134 = vld [vmem:[#allocation33 + $0x1e8] sm:$0xff]
    %v5135 = vld [vmem:[#allocation33 + $0x1f0] sm:$0xff]
    %v5136 = vld [vmem:[#allocation33 + $0x1f8] sm:$0xff]
    %v5201 = vunpack.c.l.b16 %v5073
    %v5202 = vunpack.c.h.b16 %v5073
    %v5203 = vunpack.c.l.b16 %v5074
    %v5204 = vunpack.c.h.b16 %v5074
    %v5205 = vunpack.c.l.b16 %v5075
    %v5206 = vunpack.c.h.b16 %v5075
    %v5207 = vunpack.c.l.b16 %v5076
    %v5208 = vunpack.c.h.b16 %v5076
    %v5209 = vunpack.c.l.b16 %v5077
    %v5210 = vunpack.c.h.b16 %v5077
    %v5211 = vunpack.c.l.b16 %v5078
    %v5212 = vunpack.c.h.b16 %v5078
    %v5213 = vunpack.c.l.b16 %v5079
    %v5214 = vunpack.c.h.b16 %v5079
    %v5215 = vunpack.c.l.b16 %v5080
    %v5216 = vunpack.c.h.b16 %v5080
    %v5217 = vunpack.c.l.b16 %v5081
    %v5218 = vunpack.c.h.b16 %v5081
    %v5219 = vunpack.c.l.b16 %v5082
    %v5220 = vunpack.c.h.b16 %v5082
    %v5221 = vunpack.c.l.b16 %v5083
    %v5222 = vunpack.c.h.b16 %v5083
    %v5223 = vunpack.c.l.b16 %v5084
    %v5224 = vunpack.c.h.b16 %v5084
    %v5225 = vunpack.c.l.b16 %v5085
    %v5226 = vunpack.c.h.b16 %v5085
    %v5227 = vunpack.c.l.b16 %v5086
    %v5228 = vunpack.c.h.b16 %v5086
    %v5229 = vunpack.c.l.b16 %v5087
    %v5230 = vunpack.c.h.b16 %v5087
    %v5231 = vunpack.c.l.b16 %v5088
    %v5232 = vunpack.c.h.b16 %v5088
    %v5233 = vunpack.c.l.b16 %v5089
    %v5234 = vunpack.c.h.b16 %v5089
    %v5235 = vunpack.c.l.b16 %v5090
    %v5236 = vunpack.c.h.b16 %v5090
    %v5237 = vunpack.c.l.b16 %v5091
    %v5238 = vunpack.c.h.b16 %v5091
    %v5239 = vunpack.c.l.b16 %v5092
    %v5240 = vunpack.c.h.b16 %v5092
    %v5241 = vunpack.c.l.b16 %v5093
    %v5242 = vunpack.c.h.b16 %v5093
    %v5243 = vunpack.c.l.b16 %v5094
    %v5244 = vunpack.c.h.b16 %v5094
    %v5245 = vunpack.c.l.b16 %v5095
    %v5246 = vunpack.c.h.b16 %v5095
    %v5247 = vunpack.c.l.b16 %v5096
    %v5248 = vunpack.c.h.b16 %v5096
    %v5249 = vunpack.c.l.b16 %v5097
    %v5250 = vunpack.c.h.b16 %v5097
    %v5251 = vunpack.c.l.b16 %v5098
    %v5252 = vunpack.c.h.b16 %v5098
    %v5253 = vunpack.c.l.b16 %v5099
    %v5254 = vunpack.c.h.b16 %v5099
    %v5255 = vunpack.c.l.b16 %v5100
    %v5256 = vunpack.c.h.b16 %v5100
    %v5257 = vunpack.c.l.b16 %v5101
    %v5258 = vunpack.c.h.b16 %v5101
    %v5259 = vunpack.c.l.b16 %v5102
    %v5260 = vunpack.c.h.b16 %v5102
    %v5261 = vunpack.c.l.b16 %v5103
    %v5262 = vunpack.c.h.b16 %v5103
    %v5263 = vunpack.c.l.b16 %v5104
    %v5264 = vunpack.c.h.b16 %v5104
    %v5265 = vunpack.c.l.b16 %v5105
    %v5266 = vunpack.c.h.b16 %v5105
    %v5267 = vunpack.c.l.b16 %v5106
    %v5268 = vunpack.c.h.b16 %v5106
    %v5269 = vunpack.c.l.b16 %v5107
    %v5270 = vunpack.c.h.b16 %v5107
    %v5271 = vunpack.c.l.b16 %v5108
    %v5272 = vunpack.c.h.b16 %v5108
    %v5273 = vunpack.c.l.b16 %v5109
    %v5274 = vunpack.c.h.b16 %v5109
    %v5275 = vunpack.c.l.b16 %v5110
    %v5276 = vunpack.c.h.b16 %v5110
    %v5277 = vunpack.c.l.b16 %v5111
    %v5278 = vunpack.c.h.b16 %v5111
    %v5279 = vunpack.c.l.b16 %v5112
    %v5280 = vunpack.c.h.b16 %v5112
    %v5281 = vunpack.c.l.b16 %v5113
    %v5282 = vunpack.c.h.b16 %v5113
    %v5283 = vunpack.c.l.b16 %v5114
    %v5284 = vunpack.c.h.b16 %v5114
    %v5285 = vunpack.c.l.b16 %v5115
    %v5286 = vunpack.c.h.b16 %v5115
    %v5287 = vunpack.c.l.b16 %v5116
    %v5288 = vunpack.c.h.b16 %v5116
    %v5289 = vunpack.c.l.b16 %v5117
    %v5290 = vunpack.c.h.b16 %v5117
    %v5291 = vunpack.c.l.b16 %v5118
    %v5292 = vunpack.c.h.b16 %v5118
    %v5293 = vunpack.c.l.b16 %v5119
    %v5294 = vunpack.c.h.b16 %v5119
    %v5295 = vunpack.c.l.b16 %v5120
    %v5296 = vunpack.c.h.b16 %v5120
    %v5297 = vunpack.c.l.b16 %v5121
    %v5298 = vunpack.c.h.b16 %v5121
    %v5299 = vunpack.c.l.b16 %v5122
    %v5300 = vunpack.c.h.b16 %v5122
    %v5301 = vunpack.c.l.b16 %v5123
    %v5302 = vunpack.c.h.b16 %v5123
    %v5303 = vunpack.c.l.b16 %v5124
    %v5304 = vunpack.c.h.b16 %v5124
    %v5305 = vunpack.c.l.b16 %v5125
    %v5306 = vunpack.c.h.b16 %v5125
    %v5307 = vunpack.c.l.b16 %v5126
    %v5308 = vunpack.c.h.b16 %v5126
    %v5309 = vunpack.c.l.b16 %v5127
    %v5310 = vunpack.c.h.b16 %v5127
    %v5311 = vunpack.c.l.b16 %v5128
    %v5312 = vunpack.c.h.b16 %v5128
    %v5313 = vunpack.c.l.b16 %v5129
    %v5314 = vunpack.c.h.b16 %v5129
    %v5315 = vunpack.c.l.b16 %v5130
    %v5316 = vunpack.c.h.b16 %v5130
    %v5317 = vunpack.c.l.b16 %v5131
    %v5318 = vunpack.c.h.b16 %v5131
    %v5319 = vunpack.c.l.b16 %v5132
    %v5320 = vunpack.c.h.b16 %v5132
    %v5321 = vunpack.c.l.b16 %v5133
    %v5322 = vunpack.c.h.b16 %v5133
    %v5323 = vunpack.c.l.b16 %v5134
    %v5324 = vunpack.c.h.b16 %v5134
    %v5325 = vunpack.c.l.b16 %v5135
    %v5326 = vunpack.c.h.b16 %v5135
    %v5327 = vunpack.c.l.b16 %v5136
    %v5328 = vunpack.c.h.b16 %v5136
    %v5329 = vpack.c.b16 %v5205, %v5201
    %v5330 = vpack.c.b16 %v5206, %v5202
    %v5331 = vpack.c.b16 %v5207, %v5203
    %v5332 = vpack.c.b16 %v5208, %v5204
    %v5333 = vpack.c.b16 %v5213, %v5209
    %v5334 = vpack.c.b16 %v5214, %v5210
    %v5335 = vpack.c.b16 %v5215, %v5211
    %v5336 = vpack.c.b16 %v5216, %v5212
    %v5337 = vpack.c.b16 %v5221, %v5217
    %v5338 = vpack.c.b16 %v5222, %v5218
    %v5339 = vpack.c.b16 %v5223, %v5219
    %v5340 = vpack.c.b16 %v5224, %v5220
    %v5341 = vpack.c.b16 %v5229, %v5225
    %v5342 = vpack.c.b16 %v5230, %v5226
    %v5343 = vpack.c.b16 %v5231, %v5227
    %v5344 = vpack.c.b16 %v5232, %v5228
    %v5345 = vpack.c.b16 %v5237, %v5233
    %v5346 = vpack.c.b16 %v5238, %v5234
    %v5347 = vpack.c.b16 %v5239, %v5235
    %v5348 = vpack.c.b16 %v5240, %v5236
    %v5349 = vpack.c.b16 %v5245, %v5241
    %v5350 = vpack.c.b16 %v5246, %v5242
    %v5351 = vpack.c.b16 %v5247, %v5243
    %v5352 = vpack.c.b16 %v5248, %v5244
    %v5353 = vpack.c.b16 %v5253, %v5249
    %v5354 = vpack.c.b16 %v5254, %v5250
    %v5355 = vpack.c.b16 %v5255, %v5251
    %v5356 = vpack.c.b16 %v5256, %v5252
    %v5357 = vpack.c.b16 %v5261, %v5257
    %v5358 = vpack.c.b16 %v5262, %v5258
    %v5359 = vpack.c.b16 %v5263, %v5259
    %v5360 = vpack.c.b16 %v5264, %v5260
    %v5361 = vpack.c.b16 %v5269, %v5265
    %v5362 = vpack.c.b16 %v5270, %v5266
    %v5363 = vpack.c.b16 %v5271, %v5267
    %v5364 = vpack.c.b16 %v5272, %v5268
    %v5365 = vpack.c.b16 %v5277, %v5273
    %v5366 = vpack.c.b16 %v5278, %v5274
    %v5367 = vpack.c.b16 %v5279, %v5275
    %v5368 = vpack.c.b16 %v5280, %v5276
    %v5369 = vpack.c.b16 %v5285, %v5281
    %v5370 = vpack.c.b16 %v5286, %v5282
    %v5371 = vpack.c.b16 %v5287, %v5283
    %v5372 = vpack.c.b16 %v5288, %v5284
    %v5373 = vpack.c.b16 %v5293, %v5289
    %v5374 = vpack.c.b16 %v5294, %v5290
    %v5375 = vpack.c.b16 %v5295, %v5291
    %v5376 = vpack.c.b16 %v5296, %v5292
    %v5377 = vpack.c.b16 %v5301, %v5297
    %v5378 = vpack.c.b16 %v5302, %v5298
    %v5379 = vpack.c.b16 %v5303, %v5299
    %v5380 = vpack.c.b16 %v5304, %v5300
    %v5381 = vpack.c.b16 %v5309, %v5305
    %v5382 = vpack.c.b16 %v5310, %v5306
    %v5383 = vpack.c.b16 %v5311, %v5307
    %v5384 = vpack.c.b16 %v5312, %v5308
    %v5385 = vpack.c.b16 %v5317, %v5313
    %v5386 = vpack.c.b16 %v5318, %v5314
    %v5387 = vpack.c.b16 %v5319, %v5315
    %v5388 = vpack.c.b16 %v5320, %v5316
    %v5389 = vpack.c.b16 %v5325, %v5321
    %v5390 = vpack.c.b16 %v5326, %v5322
    %v5391 = vpack.c.b16 %v5327, %v5323
    %v5392 = vpack.c.b16 %v5328, %v5324
    %5457 = vmatprep.subr.bf16.mxu0 %v5330
    %5458 = vmatpush1.bf16.msra.mxu0 %v5329
    %5459 = vmatprep.subr.bf16.mxu0 %v5334
    %5460 = vmatpush1.bf16.msra.mxu0 %v5333
    %5461 = vmatprep.subr.bf16.mxu0 %v5338
    %5462 = vmatpush1.bf16.msra.mxu0 %v5337
    %5463 = vmatprep.subr.bf16.mxu0 %v5342
    %5464 = vmatpush1.bf16.msra.mxu0 %v5341
    %5465 = vmatprep.subr.bf16.mxu0 %v5346
    %5466 = vmatpush1.bf16.msra.mxu0 %v5345
    %5467 = vmatprep.subr.bf16.mxu0 %v5350
    %5468 = vmatpush1.bf16.msra.mxu0 %v5349
    %5469 = vmatprep.subr.bf16.mxu0 %v5354
    %5470 = vmatpush1.bf16.msra.mxu0 %v5353
    %5471 = vmatprep.subr.bf16.mxu0 %v5358
    %5472 = vmatpush1.bf16.msra.mxu0 %v5357
    %5473 = vmatprep.subr.bf16.mxu0 %v5362
    %5474 = vmatpush1.bf16.msra.mxu0 %v5361
    %5475 = vmatprep.subr.bf16.mxu0 %v5366
    %5476 = vmatpush1.bf16.msra.mxu0 %v5365
    %5477 = vmatprep.subr.bf16.mxu0 %v5370
    %5478 = vmatpush1.bf16.msra.mxu0 %v5369
    %5479 = vmatprep.subr.bf16.mxu0 %v5374
    %5480 = vmatpush1.bf16.msra.mxu0 %v5373
    %5481 = vmatprep.subr.bf16.mxu0 %v5378
    %5482 = vmatpush1.bf16.msra.mxu0 %v5377
    %5483 = vmatprep.subr.bf16.mxu0 %v5382
    %5484 = vmatpush1.bf16.msra.mxu0 %v5381
    %5485 = vmatprep.subr.bf16.mxu0 %v5386
    %5486 = vmatpush1.bf16.msra.mxu0 %v5385
    %5487 = vmatprep.subr.bf16.mxu0 %v5390
    %5488 = vmatpush1.bf16.msra.mxu0 %v5389
    %5489 = vmatprep.mubr.bf16.mxu0 %v3672
    %5490 = vmatmul.mubr.bf16.gmra.mrb[0].mxu0 %v3671
    %v5491 = vpop.f32.mrb[0].mxu0
    %v5492 = vadd.f32 0.0, %v5491
    %v5493 = vpop.f32.mrb[0].mxu0
    %v5494 = vadd.f32 0.0, %v5493
    %v5495 = vpop.f32.mrb[0].mxu0
    %v5496 = vpop.f32.mrb[0].mxu0
    %5497 = vdwg.mxu0
    %5498 = vmatprep.subr.bf16.mxu0 %v5332
    %5499 = vmatpush1.bf16.msra.mxu0 %v5331
    %5500 = vmatprep.subr.bf16.mxu0 %v5336
    %5501 = vmatpush1.bf16.msra.mxu0 %v5335
    %5502 = vmatprep.subr.bf16.mxu0 %v5340
    %5503 = vmatpush1.bf16.msra.mxu0 %v5339
    %5504 = vmatprep.subr.bf16.mxu0 %v5344
    %5505 = vmatpush1.bf16.msra.mxu0 %v5343
    %5506 = vmatprep.subr.bf16.mxu0 %v5348
    %5507 = vmatpush1.bf16.msra.mxu0 %v5347
    %5508 = vmatprep.subr.bf16.mxu0 %v5352
    %5509 = vmatpush1.bf16.msra.mxu0 %v5351
    %5510 = vmatprep.subr.bf16.mxu0 %v5356
    %5511 = vmatpush1.bf16.msra.mxu0 %v5355
    %5512 = vmatprep.subr.bf16.mxu0 %v5360
    %5513 = vmatpush1.bf16.msra.mxu0 %v5359
    %5514 = vmatprep.subr.bf16.mxu0 %v5364
    %5515 = vmatpush1.bf16.msra.mxu0 %v5363
    %5516 = vmatprep.subr.bf16.mxu0 %v5368
    %5517 = vmatpush1.bf16.msra.mxu0 %v5367
    %5518 = vmatprep.subr.bf16.mxu0 %v5372
    %5519 = vmatpush1.bf16.msra.mxu0 %v5371
    %5520 = vmatprep.subr.bf16.mxu0 %v5376
    %5521 = vmatpush1.bf16.msra.mxu0 %v5375
    %5522 = vmatprep.subr.bf16.mxu0 %v5380
    %5523 = vmatpush1.bf16.msra.mxu0 %v5379
    %5524 = vmatprep.subr.bf16.mxu0 %v5384
    %5525 = vmatpush1.bf16.msra.mxu0 %v5383
    %5526 = vmatprep.subr.bf16.mxu0 %v5388
    %5527 = vmatpush1.bf16.msra.mxu0 %v5387
    %5528 = vmatprep.subr.bf16.mxu0 %v5392
    %5529 = vmatpush1.bf16.msra.mxu0 %v5391
    %5530 = vmatprep.mubr.bf16.mxu0 %v3672
    %5531 = vmatmul.mubr.bf16.gmra.mrb[0].mxu0 %v3671
    %v5532 = vpop.f32.mrb[0].mxu0
    %v5533 = vadd.f32 0.0, %v5532
    %v5534 = vpop.f32.mrb[0].mxu0
    %v5535 = vadd.f32 0.0, %v5534
    %v5536 = vpop.f32.mrb[0].mxu0
    %v5537 = vpop.f32.mrb[0].mxu0
    %5538 = vdwg.mxu0
    %v5543 = vrot.slane %v5026, 7
    %v5544 = vrot.slane %v5028, 7
    %v5545 = vrot.slane %v5067, 7
    %v5546 = vrot.slane %v5069, 7
    %v5551 = vadd.f32 %v4519, %v5543
    %v5552 = vadd.f32 %v4521, %v5544
    %v5553 = vadd.f32 %v4601, %v5545
    %v5554 = vadd.f32 %v4603, %v5546
    %v5555 = vadd.f32 %v5551, 0.0
    %v5556 = vadd.f32 %v5552, 0.0
    %v5557 = vadd.f32 %v5553, 0.0
    %v5558 = vadd.f32 %v5554, 0.0
    %v5559 = vmul.f32 %v5551, %v5551
    %v5560 = vmul.f32 %v5552, %v5552
    %v5561 = vmul.f32 %v5553, %v5553
    %v5562 = vmul.f32 %v5554, %v5554
    %v5563 = vadd.f32 %v5559, 0.0
    %v5564 = vadd.f32 %v5560, 0.0
    %v5565 = vadd.f32 %v5561, 0.0
    %v5566 = vadd.f32 %v5562, 0.0
    %v5571 = vrot.slane %v5555, 2
    %v5572 = vrot.slane %v5556, 2
    %v5573 = vrot.slane %v5557, 2
    %v5574 = vrot.slane %v5558, 2
    %v5579 = vadd.f32 %v5555, %v5571
    %v5580 = vadd.f32 %v5556, %v5572
    %v5581 = vadd.f32 %v5557, %v5573
    %v5582 = vadd.f32 %v5558, %v5574
    %v5587 = vrot.slane %v5563, 2
    %v5588 = vrot.slane %v5564, 2
    %v5589 = vrot.slane %v5565, 2
    %v5590 = vrot.slane %v5566, 2
    %v5595 = vadd.f32 %v5563, %v5587
    %v5596 = vadd.f32 %v5564, %v5588
    %v5597 = vadd.f32 %v5565, %v5589
    %v5598 = vadd.f32 %v5566, %v5590
    %v5599 = vrcp.pop 2.0
    %v5600 = vmul.f32 %v5579, %v5599
    %v5601 = vmul.f32 %v5580, %v5599
    %v5602 = vmul.f32 %v5581, %v5599
    %v5603 = vmul.f32 %v5582, %v5599
    %v5604 = vmul.f32 %v5595, %v5599
    %v5605 = vmul.f32 %v5596, %v5599
    %v5606 = vmul.f32 %v5597, %v5599
    %v5607 = vmul.f32 %v5598, %v5599
    %v5608 = vmul.f32 %v5600, %v5600
    %v5609 = vmul.f32 %v5601, %v5601
    %v5610 = vmul.f32 %v5602, %v5602
    %v5611 = vmul.f32 %v5603, %v5603
    %v5612 = vsub.f32 %v5604, %v5608
    %v5613 = vsub.f32 %v5605, %v5609
    %v5614 = vsub.f32 %v5606, %v5610
    %v5615 = vsub.f32 %v5607, %v5611
    %v5616 = vmax.f32 %v5612, 0.0
    %v5617 = vmax.f32 %v5613, 0.0
    %v5618 = vmax.f32 %v5614, 0.0
    %v5619 = vmax.f32 %v5615, 0.0
    %v5620 = vadd.f32 %v5616, 1e-05
    %v5621 = vadd.f32 %v5617, 1e-05
    %v5622 = vadd.f32 %v5618, 1e-05
    %v5623 = vadd.f32 %v5619, 1e-05
    %v5624 = vrsqrt.pop %v5620
    %v5625 = vrsqrt.pop %v5621
    %v5626 = vrsqrt.pop %v5622
    %v5627 = vrsqrt.pop %v5623
    %v5628 = vsub.f32 %v5551, %v5600
    %v5629 = vsub.f32 %v5552, %v5601
    %v5630 = vsub.f32 %v5553, %v5602
    %v5631 = vsub.f32 %v5554, %v5603
    %v5632 = vmul.f32 %v5628, %v5624
    %v5633 = vmul.f32 %v5629, %v5625
    %v5634 = vmul.f32 %v5630, %v5626
    %v5635 = vmul.f32 %v5631, %v5627
    %v5640 = vrot.slane %v5600, 6
    %v5641 = vrot.slane %v5601, 6
    %v5642 = vrot.slane %v5602, 6
    %v5643 = vrot.slane %v5603, 6
    %v5648 = vsub.f32 %v5551, %v5640
    %v5649 = vsub.f32 %v5552, %v5641
    %v5650 = vsub.f32 %v5553, %v5642
    %v5651 = vsub.f32 %v5554, %v5643
    %v5656 = vrot.slane %v5624, 6
    %v5657 = vrot.slane %v5625, 6
    %v5658 = vrot.slane %v5626, 6
    %v5659 = vrot.slane %v5627, 6
    %v5664 = vmul.f32 %v5648, %v5656
    %v5665 = vmul.f32 %v5649, %v5657
    %v5666 = vmul.f32 %v5650, %v5658
    %v5667 = vmul.f32 %v5651, %v5659
    %v5668 = vmax.f32 %v5632, 0.0
    %v5669 = vmax.f32 %v5633, 0.0
    %v5670 = vmax.f32 %v5634, 0.0
    %v5671 = vmax.f32 %v5635, 0.0
    %v5672 = vmax.f32 %v5664, 0.0
    %v5673 = vmax.f32 %v5665, 0.0
    %v5674 = vmax.f32 %v5666, 0.0
    %v5675 = vmax.f32 %v5667, 0.0
    %5676 = vst.msk [vmem:[#allocation10] ss:$8 sm:$0xf] %vm3597, 0.0
    %5677 = vst.msk [vmem:[#allocation10] ss:$8 sm:$0x0] %vm3597, 0.0
    %v5682 = vcombine.low %v5668, %v5669
    %v5683 = vcombine.low %v5670, %v5671
    %v5685 = vunpack.c.l.s4 1966171168
    %v5686 = vunpack.c.0.s8 %v5685
    %v5687 = vlaneseq
    %v5688 = vshrl.u32 %v5687, 7
    %v5689 = vsub.s32 %v5686, %v5688
    %v5690 = vrot.slane %v5682, %v5689
    %v5692 = vunpack.c.l.s4 1966171168
    %v5693 = vunpack.c.0.s8 %v5692
    %v5694 = vlaneseq
    %v5695 = vshrl.u32 %v5694, 7
    %v5696 = vsub.s32 %v5693, %v5695
    %v5697 = vrot.slane %v5683, %v5696
    %v5698 = vcombine.high %v5690, %v5697
    %v5700 = vunpack.c.l.s4 1966171168
    %v5701 = vunpack.c.0.s8 %v5700
    %v5702 = vlaneseq
    %v5703 = vshrl.u32 %v5702, 7
    %v5704 = vsub.s32 %v5701, %v5703
    %v5705 = vrot.slane %v5698, %v5704
    %s5707 = scalar_lea.vmem [#allocation10], 1
    %5708 = vst.msk [vmem:[%s5707] ss:$8 sm:$0xf] %vm3597, %v5705
    %5709 = vst.msk [vmem:[%s5707] ss:$8 sm:$0x0] %vm3597, %v5705
    %s5710 = scalar_lea.vmem [#allocation10], 2
    %5711 = vst.msk [vmem:[%s5710] ss:$8 sm:$0xf] %vm3597, 0.0
    %5712 = vst.msk [vmem:[%s5710] ss:$8 sm:$0x0] %vm3597, 0.0
    %s5713 = scalar_lea.vmem [#allocation10], 3
    %5714 = vst.msk [vmem:[%s5713] ss:$8 sm:$0xf] %vm3597, 0.0
    %5715 = vst.msk [vmem:[%s5713] ss:$8 sm:$0x0] %vm3597, 0.0
    %v5720 = vcombine.low %v5672, %v5673
    %v5721 = vcombine.low %v5674, %v5675
    %v5723 = vunpack.c.l.s4 1966171168
    %v5724 = vunpack.c.0.s8 %v5723
    %v5725 = vlaneseq
    %v5726 = vshrl.u32 %v5725, 7
    %v5727 = vsub.s32 %v5724, %v5726
    %v5728 = vrot.slane %v5720, %v5727
    %v5730 = vunpack.c.l.s4 1966171168
    %v5731 = vunpack.c.0.s8 %v5730
    %v5732 = vlaneseq
    %v5733 = vshrl.u32 %v5732, 7
    %v5734 = vsub.s32 %v5731, %v5733
    %v5735 = vrot.slane %v5721, %v5734
    %v5736 = vcombine.high %v5728, %v5735
    %v5738 = vunpack.c.l.s4 1966171168
    %v5739 = vunpack.c.0.s8 %v5738
    %v5740 = vlaneseq
    %v5741 = vshrl.u32 %v5740, 7
    %v5742 = vsub.s32 %v5739, %v5741
    %v5743 = vrot.slane %v5736, %v5742
    %v5744 = vcombine.high %v5743, %v5743
    %s5746 = scalar_lea.vmem [#allocation10], 4
    %5747 = vst.msk [vmem:[%s5746] ss:$8 sm:$0xf] %vm3597, %v5744
    %5748 = vst.msk [vmem:[%s5746] ss:$8 sm:$0x0] %vm3597, %v5744
    %s5749 = scalar_lea.vmem [#allocation10], 5
    %5750 = vst.msk [vmem:[%s5749] ss:$8 sm:$0xf] %vm3597, 0.0
    %5751 = vst.msk [vmem:[%s5749] ss:$8 sm:$0x0] %vm3597, 0.0
    %v5752 = vadd.f32 %v5492, 0.0
    %v5753 = vadd.f32 %v5494, 0.0
    %v5754 = vadd.f32 %v5533, 0.0
    %v5755 = vadd.f32 %v5535, 0.0
    %v5756 = vmul.f32 %v5492, %v5492
    %v5757 = vmul.f32 %v5494, %v5494
    %v5758 = vmul.f32 %v5533, %v5533
    %v5759 = vmul.f32 %v5535, %v5535
    %v5760 = vadd.f32 %v5756, 0.0
    %v5761 = vadd.f32 %v5757, 0.0
    %v5762 = vadd.f32 %v5758, 0.0
    %v5763 = vadd.f32 %v5759, 0.0
    %v5768 = vrot.slane %v5752, 2
    %v5769 = vrot.slane %v5753, 2
    %v5770 = vrot.slane %v5754, 2
    %v5771 = vrot.slane %v5755, 2
    %v5776 = vadd.f32 %v5752, %v5768
    %v5777 = vadd.f32 %v5753, %v5769
    %v5778 = vadd.f32 %v5754, %v5770
    %v5779 = vadd.f32 %v5755, %v5771
    %v5784 = vrot.slane %v5760, 2
    %v5785 = vrot.slane %v5761, 2
    %v5786 = vrot.slane %v5762, 2
    %v5787 = vrot.slane %v5763, 2
    %v5792 = vadd.f32 %v5760, %v5784
    %v5793 = vadd.f32 %v5761, %v5785
    %v5794 = vadd.f32 %v5762, %v5786
    %v5795 = vadd.f32 %v5763, %v5787
    %v5796 = vmul.f32 %v5776, %v5599
    %v5797 = vmul.f32 %v5777, %v5599
    %v5798 = vmul.f32 %v5778, %v5599
    %v5799 = vmul.f32 %v5779, %v5599
    %v5800 = vmul.f32 %v5792, %v5599
    %v5801 = vmul.f32 %v5793, %v5599
    %v5802 = vmul.f32 %v5794, %v5599
    %v5803 = vmul.f32 %v5795, %v5599
    %v5804 = vmul.f32 %v5796, %v5796
    %v5805 = vmul.f32 %v5797, %v5797
    %v5806 = vmul.f32 %v5798, %v5798
    %v5807 = vmul.f32 %v5799, %v5799
    %v5808 = vsub.f32 %v5800, %v5804
    %v5809 = vsub.f32 %v5801, %v5805
    %v5810 = vsub.f32 %v5802, %v5806
    %v5811 = vsub.f32 %v5803, %v5807
    %v5812 = vmax.f32 %v5808, 0.0
    %v5813 = vmax.f32 %v5809, 0.0
    %v5814 = vmax.f32 %v5810, 0.0
    %v5815 = vmax.f32 %v5811, 0.0
    %v5816 = vadd.f32 %v5812, 1e-05
    %v5817 = vadd.f32 %v5813, 1e-05
    %v5818 = vadd.f32 %v5814, 1e-05
    %v5819 = vadd.f32 %v5815, 1e-05
    %v5820 = vrsqrt.pop %v5816
    %v5821 = vrsqrt.pop %v5817
    %v5822 = vrsqrt.pop %v5818
    %v5823 = vrsqrt.pop %v5819
    %v5824 = vsub.f32 %v5492, %v5796
    %v5825 = vsub.f32 %v5494, %v5797
    %v5826 = vsub.f32 %v5533, %v5798
    %v5827 = vsub.f32 %v5535, %v5799
    %v5828 = vmul.f32 %v5824, %v5820
    %v5829 = vmul.f32 %v5825, %v5821
    %v5830 = vmul.f32 %v5826, %v5822
    %v5831 = vmul.f32 %v5827, %v5823
    %v5836 = vrot.slane %v5796, 6
    %v5837 = vrot.slane %v5797, 6
    %v5838 = vrot.slane %v5798, 6
    %v5839 = vrot.slane %v5799, 6
    %v5844 = vsub.f32 %v5492, %v5836
    %v5845 = vsub.f32 %v5494, %v5837
    %v5846 = vsub.f32 %v5533, %v5838
    %v5847 = vsub.f32 %v5535, %v5839
    %v5852 = vrot.slane %v5820, 6
    %v5853 = vrot.slane %v5821, 6
    %v5854 = vrot.slane %v5822, 6
    %v5855 = vrot.slane %v5823, 6
    %v5860 = vmul.f32 %v5844, %v5852
    %v5861 = vmul.f32 %v5845, %v5853
    %v5862 = vmul.f32 %v5846, %v5854
    %v5863 = vmul.f32 %v5847, %v5855
    %v5864 = vld [vmem:[#allocation10] sm:$0x3f]
    %v5865 = vld [vmem:[#allocation10 + $0x8] sm:$0x3f]
    %v5866 = vld [vmem:[#allocation10 + $0x10] sm:$0x3f]
    %v5867 = vld [vmem:[#allocation10 + $0x18] sm:$0x3f]
    %v5868 = vpack.c.bf16 %v5864, %v5864
    %v5869 = vpack.c.bf16 %v5865, %v5865
    %v5870 = vpack.c.bf16 %v5866, %v5866
    %v5871 = vpack.c.bf16 %v5867, %v5867
    %v5872 = vld [vmem:[#allocation35] sm:$0xff]
    %v5873 = vld [vmem:[#allocation35 + $0x8] sm:$0xff]
    %v5874 = vld [vmem:[#allocation35 + $0x10] sm:$0xff]
    %v5875 = vld [vmem:[#allocation35 + $0x18] sm:$0xff]
    %v5876 = vld [vmem:[#allocation35 + $0x20] sm:$0xff]
    %v5877 = vld [vmem:[#allocation35 + $0x28] sm:$0xff]
    %v5878 = vld [vmem:[#allocation35 + $0x30] sm:$0xff]
    %v5879 = vld [vmem:[#allocation35 + $0x38] sm:$0xff]
    %v5880 = vld [vmem:[#allocation35 + $0x40] sm:$0xff]
    %v5881 = vld [vmem:[#allocation35 + $0x48] sm:$0xff]
    %v5882 = vld [vmem:[#allocation35 + $0x50] sm:$0xff]
    %v5883 = vld [vmem:[#allocation35 + $0x58] sm:$0xff]
    %v5884 = vld [vmem:[#allocation35 + $0x60] sm:$0xff]
    %v5885 = vld [vmem:[#allocation35 + $0x68] sm:$0xff]
    %v5886 = vld [vmem:[#allocation35 + $0x70] sm:$0xff]
    %v5887 = vld [vmem:[#allocation35 + $0x78] sm:$0xff]
    %v5888 = vld [vmem:[#allocation35 + $0x80] sm:$0xff]
    %v5889 = vld [vmem:[#allocation35 + $0x88] sm:$0xff]
    %v5890 = vld [vmem:[#allocation35 + $0x90] sm:$0xff]
    %v5891 = vld [vmem:[#allocation35 + $0x98] sm:$0xff]
    %v5892 = vld [vmem:[#allocation35 + $0xa0] sm:$0xff]
    %v5893 = vld [vmem:[#allocation35 + $0xa8] sm:$0xff]
    %v5894 = vld [vmem:[#allocation35 + $0xb0] sm:$0xff]
    %v5895 = vld [vmem:[#allocation35 + $0xb8] sm:$0xff]
    %v5896 = vld [vmem:[#allocation35 + $0xc0] sm:$0xff]
    %v5897 = vld [vmem:[#allocation35 + $0xc8] sm:$0xff]
    %v5898 = vld [vmem:[#allocation35 + $0xd0] sm:$0xff]
    %v5899 = vld [vmem:[#allocation35 + $0xd8] sm:$0xff]
    %v5900 = vld [vmem:[#allocation35 + $0xe0] sm:$0xff]
    %v5901 = vld [vmem:[#allocation35 + $0xe8] sm:$0xff]
    %v5902 = vld [vmem:[#allocation35 + $0xf0] sm:$0xff]
    %v5903 = vld [vmem:[#allocation35 + $0xf8] sm:$0xff]
    %v5904 = vld [vmem:[#allocation35 + $0x100] sm:$0xff]
    %v5905 = vld [vmem:[#allocation35 + $0x108] sm:$0xff]
    %v5906 = vld [vmem:[#allocation35 + $0x110] sm:$0xff]
    %v5907 = vld [vmem:[#allocation35 + $0x118] sm:$0xff]
    %v5908 = vld [vmem:[#allocation35 + $0x120] sm:$0xff]
    %v5909 = vld [vmem:[#allocation35 + $0x128] sm:$0xff]
    %v5910 = vld [vmem:[#allocation35 + $0x130] sm:$0xff]
    %v5911 = vld [vmem:[#allocation35 + $0x138] sm:$0xff]
    %v5912 = vld [vmem:[#allocation35 + $0x140] sm:$0xff]
    %v5913 = vld [vmem:[#allocation35 + $0x148] sm:$0xff]
    %v5914 = vld [vmem:[#allocation35 + $0x150] sm:$0xff]
    %v5915 = vld [vmem:[#allocation35 + $0x158] sm:$0xff]
    %v5916 = vld [vmem:[#allocation35 + $0x160] sm:$0xff]
    %v5917 = vld [vmem:[#allocation35 + $0x168] sm:$0xff]
    %v5918 = vld [vmem:[#allocation35 + $0x170] sm:$0xff]
    %v5919 = vld [vmem:[#allocation35 + $0x178] sm:$0xff]
    %v5920 = vld [vmem:[#allocation35 + $0x180] sm:$0xff]
    %v5921 = vld [vmem:[#allocation35 + $0x188] sm:$0xff]
    %v5922 = vld [vmem:[#allocation35 + $0x190] sm:$0xff]
    %v5923 = vld [vmem:[#allocation35 + $0x198] sm:$0xff]
    %v5924 = vld [vmem:[#allocation35 + $0x1a0] sm:$0xff]
    %v5925 = vld [vmem:[#allocation35 + $0x1a8] sm:$0xff]
    %v5926 = vld [vmem:[#allocation35 + $0x1b0] sm:$0xff]
    %v5927 = vld [vmem:[#allocation35 + $0x1b8] sm:$0xff]
    %v5928 = vld [vmem:[#allocation35 + $0x1c0] sm:$0xff]
    %v5929 = vld [vmem:[#allocation35 + $0x1c8] sm:$0xff]
    %v5930 = vld [vmem:[#allocation35 + $0x1d0] sm:$0xff]
    %v5931 = vld [vmem:[#allocation35 + $0x1d8] sm:$0xff]
    %v5932 = vld [vmem:[#allocation35 + $0x1e0] sm:$0xff]
    %v5933 = vld [vmem:[#allocation35 + $0x1e8] sm:$0xff]
    %v5934 = vld [vmem:[#allocation35 + $0x1f0] sm:$0xff]
    %v5935 = vld [vmem:[#allocation35 + $0x1f8] sm:$0xff]
    %v5936 = vld [vmem:[#allocation35 + $0x200] sm:$0xff]
    %v5937 = vld [vmem:[#allocation35 + $0x208] sm:$0xff]
    %v5938 = vld [vmem:[#allocation35 + $0x210] sm:$0xff]
    %v5939 = vld [vmem:[#allocation35 + $0x218] sm:$0xff]
    %v5940 = vld [vmem:[#allocation35 + $0x220] sm:$0xff]
    %v5941 = vld [vmem:[#allocation35 + $0x228] sm:$0xff]
    %v5942 = vld [vmem:[#allocation35 + $0x230] sm:$0xff]
    %v5943 = vld [vmem:[#allocation35 + $0x238] sm:$0xff]
    %v5944 = vld [vmem:[#allocation35 + $0x240] sm:$0xff]
    %v5945 = vld [vmem:[#allocation35 + $0x248] sm:$0xff]
    %v5946 = vld [vmem:[#allocation35 + $0x250] sm:$0xff]
    %v5947 = vld [vmem:[#allocation35 + $0x258] sm:$0xff]
    %v5948 = vld [vmem:[#allocation35 + $0x260] sm:$0xff]
    %v5949 = vld [vmem:[#allocation35 + $0x268] sm:$0xff]
    %v5950 = vld [vmem:[#allocation35 + $0x270] sm:$0xff]
    %v5951 = vld [vmem:[#allocation35 + $0x278] sm:$0xff]
    %v5952 = vld [vmem:[#allocation35 + $0x280] sm:$0xff]
    %v5953 = vld [vmem:[#allocation35 + $0x288] sm:$0xff]
    %v5954 = vld [vmem:[#allocation35 + $0x290] sm:$0xff]
    %v5955 = vld [vmem:[#allocation35 + $0x298] sm:$0xff]
    %v5956 = vld [vmem:[#allocation35 + $0x2a0] sm:$0xff]
    %v5957 = vld [vmem:[#allocation35 + $0x2a8] sm:$0xff]
    %v5958 = vld [vmem:[#allocation35 + $0x2b0] sm:$0xff]
    %v5959 = vld [vmem:[#allocation35 + $0x2b8] sm:$0xff]
    %v5960 = vld [vmem:[#allocation35 + $0x2c0] sm:$0xff]
    %v5961 = vld [vmem:[#allocation35 + $0x2c8] sm:$0xff]
    %v5962 = vld [vmem:[#allocation35 + $0x2d0] sm:$0xff]
    %v5963 = vld [vmem:[#allocation35 + $0x2d8] sm:$0xff]
    %v5964 = vld [vmem:[#allocation35 + $0x2e0] sm:$0xff]
    %v5965 = vld [vmem:[#allocation35 + $0x2e8] sm:$0xff]
    %v5966 = vld [vmem:[#allocation35 + $0x2f0] sm:$0xff]
    %v5967 = vld [vmem:[#allocation35 + $0x2f8] sm:$0xff]
    %v5968 = vld [vmem:[#allocation35 + $0x300] sm:$0xff]
    %v5969 = vld [vmem:[#allocation35 + $0x308] sm:$0xff]
    %v5970 = vld [vmem:[#allocation35 + $0x310] sm:$0xff]
    %v5971 = vld [vmem:[#allocation35 + $0x318] sm:$0xff]
    %v5972 = vld [vmem:[#allocation35 + $0x320] sm:$0xff]
    %v5973 = vld [vmem:[#allocation35 + $0x328] sm:$0xff]
    %v5974 = vld [vmem:[#allocation35 + $0x330] sm:$0xff]
    %v5975 = vld [vmem:[#allocation35 + $0x338] sm:$0xff]
    %v5976 = vld [vmem:[#allocation35 + $0x340] sm:$0xff]
    %v5977 = vld [vmem:[#allocation35 + $0x348] sm:$0xff]
    %v5978 = vld [vmem:[#allocation35 + $0x350] sm:$0xff]
    %v5979 = vld [vmem:[#allocation35 + $0x358] sm:$0xff]
    %v5980 = vld [vmem:[#allocation35 + $0x360] sm:$0xff]
    %v5981 = vld [vmem:[#allocation35 + $0x368] sm:$0xff]
    %v5982 = vld [vmem:[#allocation35 + $0x370] sm:$0xff]
    %v5983 = vld [vmem:[#allocation35 + $0x378] sm:$0xff]
    %v5984 = vld [vmem:[#allocation35 + $0x380] sm:$0xff]
    %v5985 = vld [vmem:[#allocation35 + $0x388] sm:$0xff]
    %v5986 = vld [vmem:[#allocation35 + $0x390] sm:$0xff]
    %v5987 = vld [vmem:[#allocation35 + $0x398] sm:$0xff]
    %v5988 = vld [vmem:[#allocation35 + $0x3a0] sm:$0xff]
    %v5989 = vld [vmem:[#allocation35 + $0x3a8] sm:$0xff]
    %v5990 = vld [vmem:[#allocation35 + $0x3b0] sm:$0xff]
    %v5991 = vld [vmem:[#allocation35 + $0x3b8] sm:$0xff]
    %v5992 = vld [vmem:[#allocation35 + $0x3c0] sm:$0xff]
    %v5993 = vld [vmem:[#allocation35 + $0x3c8] sm:$0xff]
    %v5994 = vld [vmem:[#allocation35 + $0x3d0] sm:$0xff]
    %v5995 = vld [vmem:[#allocation35 + $0x3d8] sm:$0xff]
    %v5996 = vld [vmem:[#allocation35 + $0x3e0] sm:$0xff]
    %v5997 = vld [vmem:[#allocation35 + $0x3e8] sm:$0xff]
    %v5998 = vld [vmem:[#allocation35 + $0x3f0] sm:$0xff]
    %v5999 = vld [vmem:[#allocation35 + $0x3f8] sm:$0xff]
    %v6128 = vunpack.c.l.b16 %v5872
    %v6129 = vunpack.c.h.b16 %v5872
    %v6130 = vunpack.c.l.b16 %v5873
    %v6131 = vunpack.c.h.b16 %v5873
    %v6132 = vunpack.c.l.b16 %v5874
    %v6133 = vunpack.c.h.b16 %v5874
    %v6134 = vunpack.c.l.b16 %v5875
    %v6135 = vunpack.c.h.b16 %v5875
    %v6136 = vunpack.c.l.b16 %v5876
    %v6137 = vunpack.c.h.b16 %v5876
    %v6138 = vunpack.c.l.b16 %v5877
    %v6139 = vunpack.c.h.b16 %v5877
    %v6140 = vunpack.c.l.b16 %v5878
    %v6141 = vunpack.c.h.b16 %v5878
    %v6142 = vunpack.c.l.b16 %v5879
    %v6143 = vunpack.c.h.b16 %v5879
    %v6144 = vunpack.c.l.b16 %v5880
    %v6145 = vunpack.c.h.b16 %v5880
    %v6146 = vunpack.c.l.b16 %v5881
    %v6147 = vunpack.c.h.b16 %v5881
    %v6148 = vunpack.c.l.b16 %v5882
    %v6149 = vunpack.c.h.b16 %v5882
    %v6150 = vunpack.c.l.b16 %v5883
    %v6151 = vunpack.c.h.b16 %v5883
    %v6152 = vunpack.c.l.b16 %v5884
    %v6153 = vunpack.c.h.b16 %v5884
    %v6154 = vunpack.c.l.b16 %v5885
    %v6155 = vunpack.c.h.b16 %v5885
    %v6156 = vunpack.c.l.b16 %v5886
    %v6157 = vunpack.c.h.b16 %v5886
    %v6158 = vunpack.c.l.b16 %v5887
    %v6159 = vunpack.c.h.b16 %v5887
    %v6160 = vunpack.c.l.b16 %v5888
    %v6161 = vunpack.c.h.b16 %v5888
    %v6162 = vunpack.c.l.b16 %v5889
    %v6163 = vunpack.c.h.b16 %v5889
    %v6164 = vunpack.c.l.b16 %v5890
    %v6165 = vunpack.c.h.b16 %v5890
    %v6166 = vunpack.c.l.b16 %v5891
    %v6167 = vunpack.c.h.b16 %v5891
    %v6168 = vunpack.c.l.b16 %v5892
    %v6169 = vunpack.c.h.b16 %v5892
    %v6170 = vunpack.c.l.b16 %v5893
    %v6171 = vunpack.c.h.b16 %v5893
    %v6172 = vunpack.c.l.b16 %v5894
    %v6173 = vunpack.c.h.b16 %v5894
    %v6174 = vunpack.c.l.b16 %v5895
    %v6175 = vunpack.c.h.b16 %v5895
    %v6176 = vunpack.c.l.b16 %v5896
    %v6177 = vunpack.c.h.b16 %v5896
    %v6178 = vunpack.c.l.b16 %v5897
    %v6179 = vunpack.c.h.b16 %v5897
    %v6180 = vunpack.c.l.b16 %v5898
    %v6181 = vunpack.c.h.b16 %v5898
    %v6182 = vunpack.c.l.b16 %v5899
    %v6183 = vunpack.c.h.b16 %v5899
    %v6184 = vunpack.c.l.b16 %v5900
    %v6185 = vunpack.c.h.b16 %v5900
    %v6186 = vunpack.c.l.b16 %v5901
    %v6187 = vunpack.c.h.b16 %v5901
    %v6188 = vunpack.c.l.b16 %v5902
    %v6189 = vunpack.c.h.b16 %v5902
    %v6190 = vunpack.c.l.b16 %v5903
    %v6191 = vunpack.c.h.b16 %v5903
    %v6192 = vunpack.c.l.b16 %v5904
    %v6193 = vunpack.c.h.b16 %v5904
    %v6194 = vunpack.c.l.b16 %v5905
    %v6195 = vunpack.c.h.b16 %v5905
    %v6196 = vunpack.c.l.b16 %v5906
    %v6197 = vunpack.c.h.b16 %v5906
    %v6198 = vunpack.c.l.b16 %v5907
    %v6199 = vunpack.c.h.b16 %v5907
    %v6200 = vunpack.c.l.b16 %v5908
    %v6201 = vunpack.c.h.b16 %v5908
    %v6202 = vunpack.c.l.b16 %v5909
    %v6203 = vunpack.c.h.b16 %v5909
    %v6204 = vunpack.c.l.b16 %v5910
    %v6205 = vunpack.c.h.b16 %v5910
    %v6206 = vunpack.c.l.b16 %v5911
    %v6207 = vunpack.c.h.b16 %v5911
    %v6208 = vunpack.c.l.b16 %v5912
    %v6209 = vunpack.c.h.b16 %v5912
    %v6210 = vunpack.c.l.b16 %v5913
    %v6211 = vunpack.c.h.b16 %v5913
    %v6212 = vunpack.c.l.b16 %v5914
    %v6213 = vunpack.c.h.b16 %v5914
    %v6214 = vunpack.c.l.b16 %v5915
    %v6215 = vunpack.c.h.b16 %v5915
    %v6216 = vunpack.c.l.b16 %v5916
    %v6217 = vunpack.c.h.b16 %v5916
    %v6218 = vunpack.c.l.b16 %v5917
    %v6219 = vunpack.c.h.b16 %v5917
    %v6220 = vunpack.c.l.b16 %v5918
    %v6221 = vunpack.c.h.b16 %v5918
    %v6222 = vunpack.c.l.b16 %v5919
    %v6223 = vunpack.c.h.b16 %v5919
    %v6224 = vunpack.c.l.b16 %v5920
    %v6225 = vunpack.c.h.b16 %v5920
    %v6226 = vunpack.c.l.b16 %v5921
    %v6227 = vunpack.c.h.b16 %v5921
    %v6228 = vunpack.c.l.b16 %v5922
    %v6229 = vunpack.c.h.b16 %v5922
    %v6230 = vunpack.c.l.b16 %v5923
    %v6231 = vunpack.c.h.b16 %v5923
    %v6232 = vunpack.c.l.b16 %v5924
    %v6233 = vunpack.c.h.b16 %v5924
    %v6234 = vunpack.c.l.b16 %v5925
    %v6235 = vunpack.c.h.b16 %v5925
    %v6236 = vunpack.c.l.b16 %v5926
    %v6237 = vunpack.c.h.b16 %v5926
    %v6238 = vunpack.c.l.b16 %v5927
    %v6239 = vunpack.c.h.b16 %v5927
    %v6240 = vunpack.c.l.b16 %v5928
    %v6241 = vunpack.c.h.b16 %v5928
    %v6242 = vunpack.c.l.b16 %v5929
    %v6243 = vunpack.c.h.b16 %v5929
    %v6244 = vunpack.c.l.b16 %v5930
    %v6245 = vunpack.c.h.b16 %v5930
    %v6246 = vunpack.c.l.b16 %v5931
    %v6247 = vunpack.c.h.b16 %v5931
    %v6248 = vunpack.c.l.b16 %v5932
    %v6249 = vunpack.c.h.b16 %v5932
    %v6250 = vunpack.c.l.b16 %v5933
    %v6251 = vunpack.c.h.b16 %v5933
    %v6252 = vunpack.c.l.b16 %v5934
    %v6253 = vunpack.c.h.b16 %v5934
    %v6254 = vunpack.c.l.b16 %v5935
    %v6255 = vunpack.c.h.b16 %v5935
    %v6256 = vunpack.c.l.b16 %v5936
    %v6257 = vunpack.c.h.b16 %v5936
    %v6258 = vunpack.c.l.b16 %v5937
    %v6259 = vunpack.c.h.b16 %v5937
    %v6260 = vunpack.c.l.b16 %v5938
    %v6261 = vunpack.c.h.b16 %v5938
    %v6262 = vunpack.c.l.b16 %v5939
    %v6263 = vunpack.c.h.b16 %v5939
    %v6264 = vunpack.c.l.b16 %v5940
    %v6265 = vunpack.c.h.b16 %v5940
    %v6266 = vunpack.c.l.b16 %v5941
    %v6267 = vunpack.c.h.b16 %v5941
    %v6268 = vunpack.c.l.b16 %v5942
    %v6269 = vunpack.c.h.b16 %v5942
    %v6270 = vunpack.c.l.b16 %v5943
    %v6271 = vunpack.c.h.b16 %v5943
    %v6272 = vunpack.c.l.b16 %v5944
    %v6273 = vunpack.c.h.b16 %v5944
    %v6274 = vunpack.c.l.b16 %v5945
    %v6275 = vunpack.c.h.b16 %v5945
    %v6276 = vunpack.c.l.b16 %v5946
    %v6277 = vunpack.c.h.b16 %v5946
    %v6278 = vunpack.c.l.b16 %v5947
    %v6279 = vunpack.c.h.b16 %v5947
    %v6280 = vunpack.c.l.b16 %v5948
    %v6281 = vunpack.c.h.b16 %v5948
    %v6282 = vunpack.c.l.b16 %v5949
    %v6283 = vunpack.c.h.b16 %v5949
    %v6284 = vunpack.c.l.b16 %v5950
    %v6285 = vunpack.c.h.b16 %v5950
    %v6286 = vunpack.c.l.b16 %v5951
    %v6287 = vunpack.c.h.b16 %v5951
    %v6288 = vunpack.c.l.b16 %v5952
    %v6289 = vunpack.c.h.b16 %v5952
    %v6290 = vunpack.c.l.b16 %v5953
    %v6291 = vunpack.c.h.b16 %v5953
    %v6292 = vunpack.c.l.b16 %v5954
    %v6293 = vunpack.c.h.b16 %v5954
    %v6294 = vunpack.c.l.b16 %v5955
    %v6295 = vunpack.c.h.b16 %v5955
    %v6296 = vunpack.c.l.b16 %v5956
    %v6297 = vunpack.c.h.b16 %v5956
    %v6298 = vunpack.c.l.b16 %v5957
    %v6299 = vunpack.c.h.b16 %v5957
    %v6300 = vunpack.c.l.b16 %v5958
    %v6301 = vunpack.c.h.b16 %v5958
    %v6302 = vunpack.c.l.b16 %v5959
    %v6303 = vunpack.c.h.b16 %v5959
    %v6304 = vunpack.c.l.b16 %v5960
    %v6305 = vunpack.c.h.b16 %v5960
    %v6306 = vunpack.c.l.b16 %v5961
    %v6307 = vunpack.c.h.b16 %v5961
    %v6308 = vunpack.c.l.b16 %v5962
    %v6309 = vunpack.c.h.b16 %v5962
    %v6310 = vunpack.c.l.b16 %v5963
    %v6311 = vunpack.c.h.b16 %v5963
    %v6312 = vunpack.c.l.b16 %v5964
    %v6313 = vunpack.c.h.b16 %v5964
    %v6314 = vunpack.c.l.b16 %v5965
    %v6315 = vunpack.c.h.b16 %v5965
    %v6316 = vunpack.c.l.b16 %v5966
    %v6317 = vunpack.c.h.b16 %v5966
    %v6318 = vunpack.c.l.b16 %v5967
    %v6319 = vunpack.c.h.b16 %v5967
    %v6320 = vunpack.c.l.b16 %v5968
    %v6321 = vunpack.c.h.b16 %v5968
    %v6322 = vunpack.c.l.b16 %v5969
    %v6323 = vunpack.c.h.b16 %v5969
    %v6324 = vunpack.c.l.b16 %v5970
    %v6325 = vunpack.c.h.b16 %v5970
    %v6326 = vunpack.c.l.b16 %v5971
    %v6327 = vunpack.c.h.b16 %v5971
    %v6328 = vunpack.c.l.b16 %v5972
    %v6329 = vunpack.c.h.b16 %v5972
    %v6330 = vunpack.c.l.b16 %v5973
    %v6331 = vunpack.c.h.b16 %v5973
    %v6332 = vunpack.c.l.b16 %v5974
    %v6333 = vunpack.c.h.b16 %v5974
    %v6334 = vunpack.c.l.b16 %v5975
    %v6335 = vunpack.c.h.b16 %v5975
    %v6336 = vunpack.c.l.b16 %v5976
    %v6337 = vunpack.c.h.b16 %v5976
    %v6338 = vunpack.c.l.b16 %v5977
    %v6339 = vunpack.c.h.b16 %v5977
    %v6340 = vunpack.c.l.b16 %v5978
    %v6341 = vunpack.c.h.b16 %v5978
    %v6342 = vunpack.c.l.b16 %v5979
    %v6343 = vunpack.c.h.b16 %v5979
    %v6344 = vunpack.c.l.b16 %v5980
    %v6345 = vunpack.c.h.b16 %v5980
    %v6346 = vunpack.c.l.b16 %v5981
    %v6347 = vunpack.c.h.b16 %v5981
    %v6348 = vunpack.c.l.b16 %v5982
    %v6349 = vunpack.c.h.b16 %v5982
    %v6350 = vunpack.c.l.b16 %v5983
    %v6351 = vunpack.c.h.b16 %v5983
    %v6352 = vunpack.c.l.b16 %v5984
    %v6353 = vunpack.c.h.b16 %v5984
    %v6354 = vunpack.c.l.b16 %v5985
    %v6355 = vunpack.c.h.b16 %v5985
    %v6356 = vunpack.c.l.b16 %v5986
    %v6357 = vunpack.c.h.b16 %v5986
    %v6358 = vunpack.c.l.b16 %v5987
    %v6359 = vunpack.c.h.b16 %v5987
    %v6360 = vunpack.c.l.b16 %v5988
    %v6361 = vunpack.c.h.b16 %v5988
    %v6362 = vunpack.c.l.b16 %v5989
    %v6363 = vunpack.c.h.b16 %v5989
    %v6364 = vunpack.c.l.b16 %v5990
    %v6365 = vunpack.c.h.b16 %v5990
    %v6366 = vunpack.c.l.b16 %v5991
    %v6367 = vunpack.c.h.b16 %v5991
    %v6368 = vunpack.c.l.b16 %v5992
    %v6369 = vunpack.c.h.b16 %v5992
    %v6370 = vunpack.c.l.b16 %v5993
    %v6371 = vunpack.c.h.b16 %v5993
    %v6372 = vunpack.c.l.b16 %v5994
    %v6373 = vunpack.c.h.b16 %v5994
    %v6374 = vunpack.c.l.b16 %v5995
    %v6375 = vunpack.c.h.b16 %v5995
    %v6376 = vunpack.c.l.b16 %v5996
    %v6377 = vunpack.c.h.b16 %v5996
    %v6378 = vunpack.c.l.b16 %v5997
    %v6379 = vunpack.c.h.b16 %v5997
    %v6380 = vunpack.c.l.b16 %v5998
    %v6381 = vunpack.c.h.b16 %v5998
    %v6382 = vunpack.c.l.b16 %v5999
    %v6383 = vunpack.c.h.b16 %v5999
    %v6384 = vpack.c.b16 %v6132, %v6128
    %v6385 = vpack.c.b16 %v6133, %v6129
    %v6386 = vpack.c.b16 %v6134, %v6130
    %v6387 = vpack.c.b16 %v6135, %v6131
    %v6388 = vpack.c.b16 %v6140, %v6136
    %v6389 = vpack.c.b16 %v6141, %v6137
    %v6390 = vpack.c.b16 %v6142, %v6138
    %v6391 = vpack.c.b16 %v6143, %v6139
    %v6392 = vpack.c.b16 %v6148, %v6144
    %v6393 = vpack.c.b16 %v6149, %v6145
    %v6394 = vpack.c.b16 %v6150, %v6146
    %v6395 = vpack.c.b16 %v6151, %v6147
    %v6396 = vpack.c.b16 %v6156, %v6152
    %v6397 = vpack.c.b16 %v6157, %v6153
    %v6398 = vpack.c.b16 %v6158, %v6154
    %v6399 = vpack.c.b16 %v6159, %v6155
    %v6400 = vpack.c.b16 %v6164, %v6160
    %v6401 = vpack.c.b16 %v6165, %v6161
    %v6402 = vpack.c.b16 %v6166, %v6162
    %v6403 = vpack.c.b16 %v6167, %v6163
    %v6404 = vpack.c.b16 %v6172, %v6168
    %v6405 = vpack.c.b16 %v6173, %v6169
    %v6406 = vpack.c.b16 %v6174, %v6170
    %v6407 = vpack.c.b16 %v6175, %v6171
    %v6408 = vpack.c.b16 %v6180, %v6176
    %v6409 = vpack.c.b16 %v6181, %v6177
    %v6410 = vpack.c.b16 %v6182, %v6178
    %v6411 = vpack.c.b16 %v6183, %v6179
    %v6412 = vpack.c.b16 %v6188, %v6184
    %v6413 = vpack.c.b16 %v6189, %v6185
    %v6414 = vpack.c.b16 %v6190, %v6186
    %v6415 = vpack.c.b16 %v6191, %v6187
    %v6416 = vpack.c.b16 %v6196, %v6192
    %v6417 = vpack.c.b16 %v6197, %v6193
    %v6418 = vpack.c.b16 %v6198, %v6194
    %v6419 = vpack.c.b16 %v6199, %v6195
    %v6420 = vpack.c.b16 %v6204, %v6200
    %v6421 = vpack.c.b16 %v6205, %v6201
    %v6422 = vpack.c.b16 %v6206, %v6202
    %v6423 = vpack.c.b16 %v6207, %v6203
    %v6424 = vpack.c.b16 %v6212, %v6208
    %v6425 = vpack.c.b16 %v6213, %v6209
    %v6426 = vpack.c.b16 %v6214, %v6210
    %v6427 = vpack.c.b16 %v6215, %v6211
    %v6428 = vpack.c.b16 %v6220, %v6216
    %v6429 = vpack.c.b16 %v6221, %v6217
    %v6430 = vpack.c.b16 %v6222, %v6218
    %v6431 = vpack.c.b16 %v6223, %v6219
    %v6432 = vpack.c.b16 %v6228, %v6224
    %v6433 = vpack.c.b16 %v6229, %v6225
    %v6434 = vpack.c.b16 %v6230, %v6226
    %v6435 = vpack.c.b16 %v6231, %v6227
    %v6436 = vpack.c.b16 %v6236, %v6232
    %v6437 = vpack.c.b16 %v6237, %v6233
    %v6438 = vpack.c.b16 %v6238, %v6234
    %v6439 = vpack.c.b16 %v6239, %v6235
    %v6440 = vpack.c.b16 %v6244, %v6240
    %v6441 = vpack.c.b16 %v6245, %v6241
    %v6442 = vpack.c.b16 %v6246, %v6242
    %v6443 = vpack.c.b16 %v6247, %v6243
    %v6444 = vpack.c.b16 %v6252, %v6248
    %v6445 = vpack.c.b16 %v6253, %v6249
    %v6446 = vpack.c.b16 %v6254, %v6250
    %v6447 = vpack.c.b16 %v6255, %v6251
    %v6448 = vpack.c.b16 %v6260, %v6256
    %v6449 = vpack.c.b16 %v6261, %v6257
    %v6450 = vpack.c.b16 %v6262, %v6258
    %v6451 = vpack.c.b16 %v6263, %v6259
    %v6452 = vpack.c.b16 %v6268, %v6264
    %v6453 = vpack.c.b16 %v6269, %v6265
    %v6454 = vpack.c.b16 %v6270, %v6266
    %v6455 = vpack.c.b16 %v6271, %v6267
    %v6456 = vpack.c.b16 %v6276, %v6272
    %v6457 = vpack.c.b16 %v6277, %v6273
    %v6458 = vpack.c.b16 %v6278, %v6274
    %v6459 = vpack.c.b16 %v6279, %v6275
    %v6460 = vpack.c.b16 %v6284, %v6280
    %v6461 = vpack.c.b16 %v6285, %v6281
    %v6462 = vpack.c.b16 %v6286, %v6282
    %v6463 = vpack.c.b16 %v6287, %v6283
    %v6464 = vpack.c.b16 %v6292, %v6288
    %v6465 = vpack.c.b16 %v6293, %v6289
    %v6466 = vpack.c.b16 %v6294, %v6290
    %v6467 = vpack.c.b16 %v6295, %v6291
    %v6468 = vpack.c.b16 %v6300, %v6296
    %v6469 = vpack.c.b16 %v6301, %v6297
    %v6470 = vpack.c.b16 %v6302, %v6298
    %v6471 = vpack.c.b16 %v6303, %v6299
    %v6472 = vpack.c.b16 %v6308, %v6304
    %v6473 = vpack.c.b16 %v6309, %v6305
    %v6474 = vpack.c.b16 %v6310, %v6306
    %v6475 = vpack.c.b16 %v6311, %v6307
    %v6476 = vpack.c.b16 %v6316, %v6312
    %v6477 = vpack.c.b16 %v6317, %v6313
    %v6478 = vpack.c.b16 %v6318, %v6314
    %v6479 = vpack.c.b16 %v6319, %v6315
    %v6480 = vpack.c.b16 %v6324, %v6320
    %v6481 = vpack.c.b16 %v6325, %v6321
    %v6482 = vpack.c.b16 %v6326, %v6322
    %v6483 = vpack.c.b16 %v6327, %v6323
    %v6484 = vpack.c.b16 %v6332, %v6328
    %v6485 = vpack.c.b16 %v6333, %v6329
    %v6486 = vpack.c.b16 %v6334, %v6330
    %v6487 = vpack.c.b16 %v6335, %v6331
    %v6488 = vpack.c.b16 %v6340, %v6336
    %v6489 = vpack.c.b16 %v6341, %v6337
    %v6490 = vpack.c.b16 %v6342, %v6338
    %v6491 = vpack.c.b16 %v6343, %v6339
    %v6492 = vpack.c.b16 %v6348, %v6344
    %v6493 = vpack.c.b16 %v6349, %v6345
    %v6494 = vpack.c.b16 %v6350, %v6346
    %v6495 = vpack.c.b16 %v6351, %v6347
    %v6496 = vpack.c.b16 %v6356, %v6352
    %v6497 = vpack.c.b16 %v6357, %v6353
    %v6498 = vpack.c.b16 %v6358, %v6354
    %v6499 = vpack.c.b16 %v6359, %v6355
    %v6500 = vpack.c.b16 %v6364, %v6360
    %v6501 = vpack.c.b16 %v6365, %v6361
    %v6502 = vpack.c.b16 %v6366, %v6362
    %v6503 = vpack.c.b16 %v6367, %v6363
    %v6504 = vpack.c.b16 %v6372, %v6368
    %v6505 = vpack.c.b16 %v6373, %v6369
    %v6506 = vpack.c.b16 %v6374, %v6370
    %v6507 = vpack.c.b16 %v6375, %v6371
    %v6508 = vpack.c.b16 %v6380, %v6376
    %v6509 = vpack.c.b16 %v6381, %v6377
    %v6510 = vpack.c.b16 %v6382, %v6378
    %v6511 = vpack.c.b16 %v6383, %v6379
    %6640 = vmatprep.subr.bf16.mxu0 %v6385
    %6641 = vmatpush1.bf16.msra.mxu0 %v6384
    %6642 = vmatprep.subr.bf16.mxu0 %v6389
    %6643 = vmatpush1.bf16.msra.mxu0 %v6388
    %6644 = vmatprep.subr.bf16.mxu0 %v6393
    %6645 = vmatpush1.bf16.msra.mxu0 %v6392
    %6646 = vmatprep.subr.bf16.mxu0 %v6397
    %6647 = vmatpush1.bf16.msra.mxu0 %v6396
    %6648 = vmatprep.subr.bf16.mxu0 %v6401
    %6649 = vmatpush1.bf16.msra.mxu0 %v6400
    %6650 = vmatprep.subr.bf16.mxu0 %v6405
    %6651 = vmatpush1.bf16.msra.mxu0 %v6404
    %6652 = vmatprep.subr.bf16.mxu0 %v6409
    %6653 = vmatpush1.bf16.msra.mxu0 %v6408
    %6654 = vmatprep.subr.bf16.mxu0 %v6413
    %6655 = vmatpush1.bf16.msra.mxu0 %v6412
    %6656 = vmatprep.subr.bf16.mxu0 %v6417
    %6657 = vmatpush1.bf16.msra.mxu0 %v6416
    %6658 = vmatprep.subr.bf16.mxu0 %v6421
    %6659 = vmatpush1.bf16.msra.mxu0 %v6420
    %6660 = vmatprep.subr.bf16.mxu0 %v6425
    %6661 = vmatpush1.bf16.msra.mxu0 %v6424
    %6662 = vmatprep.subr.bf16.mxu0 %v6429
    %6663 = vmatpush1.bf16.msra.mxu0 %v6428
    %6664 = vmatprep.subr.bf16.mxu0 %v6433
    %6665 = vmatpush1.bf16.msra.mxu0 %v6432
    %6666 = vmatprep.subr.bf16.mxu0 %v6437
    %6667 = vmatpush1.bf16.msra.mxu0 %v6436
    %6668 = vmatprep.subr.bf16.mxu0 %v6441
    %6669 = vmatpush1.bf16.msra.mxu0 %v6440
    %6670 = vmatprep.subr.bf16.mxu0 %v6445
    %6671 = vmatpush1.bf16.msra.mxu0 %v6444
    %6672 = vmatprep.mubr.bf16.mxu0 %v5869
    %6673 = vmatmul.mubr.bf16.gmra.mrb[0].mxu0 %v5868
    %v6674 = vpop.f32.mrb[0].mxu0
    %v6675 = vadd.f32 0.0, %v6674
    %v6676 = vpop.f32.mrb[0].mxu0
    %v6677 = vadd.f32 0.0, %v6676
    %v6678 = vpop.f32.mrb[0].mxu0
    %v6679 = vpop.f32.mrb[0].mxu0
    %6680 = vdwg.mxu0
    %6681 = vmatprep.subr.bf16.mxu0 %v6449
    %6682 = vmatpush1.bf16.msra.mxu0 %v6448
    %6683 = vmatprep.subr.bf16.mxu0 %v6453
    %6684 = vmatpush1.bf16.msra.mxu0 %v6452
    %6685 = vmatprep.subr.bf16.mxu0 %v6457
    %6686 = vmatpush1.bf16.msra.mxu0 %v6456
    %6687 = vmatprep.subr.bf16.mxu0 %v6461
    %6688 = vmatpush1.bf16.msra.mxu0 %v6460
    %6689 = vmatprep.subr.bf16.mxu0 %v6465
    %6690 = vmatpush1.bf16.msra.mxu0 %v6464
    %6691 = vmatprep.subr.bf16.mxu0 %v6469
    %6692 = vmatpush1.bf16.msra.mxu0 %v6468
    %6693 = vmatprep.subr.bf16.mxu0 %v6473
    %6694 = vmatpush1.bf16.msra.mxu0 %v6472
    %6695 = vmatprep.subr.bf16.mxu0 %v6477
    %6696 = vmatpush1.bf16.msra.mxu0 %v6476
    %6697 = vmatprep.subr.bf16.mxu0 %v6481
    %6698 = vmatpush1.bf16.msra.mxu0 %v6480
    %6699 = vmatprep.subr.bf16.mxu0 %v6485
    %6700 = vmatpush1.bf16.msra.mxu0 %v6484
    %6701 = vmatprep.subr.bf16.mxu0 %v6489
    %6702 = vmatpush1.bf16.msra.mxu0 %v6488
    %6703 = vmatprep.subr.bf16.mxu0 %v6493
    %6704 = vmatpush1.bf16.msra.mxu0 %v6492
    %6705 = vmatprep.subr.bf16.mxu0 %v6497
    %6706 = vmatpush1.bf16.msra.mxu0 %v6496
    %6707 = vmatprep.subr.bf16.mxu0 %v6501
    %6708 = vmatpush1.bf16.msra.mxu0 %v6500
    %6709 = vmatprep.subr.bf16.mxu0 %v6505
    %6710 = vmatpush1.bf16.msra.mxu0 %v6504
    %6711 = vmatprep.subr.bf16.mxu0 %v6509
    %6712 = vmatpush1.bf16.msra.mxu0 %v6508
    %6713 = vmatprep.mubr.bf16.mxu0 %v5871
    %6714 = vmatmul.mubr.bf16.gmra.mrb[0].mxu0 %v5870
    %v6715 = vpop.f32.mrb[0].mxu0
    %v6716 = vadd.f32 %v6675, %v6715
    %v6717 = vpop.f32.mrb[0].mxu0
    %v6718 = vadd.f32 %v6677, %v6717
    %v6719 = vpop.f32.mrb[0].mxu0
    %v6720 = vpop.f32.mrb[0].mxu0
    %6721 = vdwg.mxu0
    %6722 = vmatprep.subr.bf16.mxu0 %v6387
    %6723 = vmatpush1.bf16.msra.mxu0 %v6386
    %6724 = vmatprep.subr.bf16.mxu0 %v6391
    %6725 = vmatpush1.bf16.msra.mxu0 %v6390
    %6726 = vmatprep.subr.bf16.mxu0 %v6395
    %6727 = vmatpush1.bf16.msra.mxu0 %v6394
    %6728 = vmatprep.subr.bf16.mxu0 %v6399
    %6729 = vmatpush1.bf16.msra.mxu0 %v6398
    %6730 = vmatprep.subr.bf16.mxu0 %v6403
    %6731 = vmatpush1.bf16.msra.mxu0 %v6402
    %6732 = vmatprep.subr.bf16.mxu0 %v6407
    %6733 = vmatpush1.bf16.msra.mxu0 %v6406
    %6734 = vmatprep.subr.bf16.mxu0 %v6411
    %6735 = vmatpush1.bf16.msra.mxu0 %v6410
    %6736 = vmatprep.subr.bf16.mxu0 %v6415
    %6737 = vmatpush1.bf16.msra.mxu0 %v6414
    %6738 = vmatprep.subr.bf16.mxu0 %v6419
    %6739 = vmatpush1.bf16.msra.mxu0 %v6418
    %6740 = vmatprep.subr.bf16.mxu0 %v6423
    %6741 = vmatpush1.bf16.msra.mxu0 %v6422
    %6742 = vmatprep.subr.bf16.mxu0 %v6427
    %6743 = vmatpush1.bf16.msra.mxu0 %v6426
    %6744 = vmatprep.subr.bf16.mxu0 %v6431
    %6745 = vmatpush1.bf16.msra.mxu0 %v6430
    %6746 = vmatprep.subr.bf16.mxu0 %v6435
    %6747 = vmatpush1.bf16.msra.mxu0 %v6434
    %6748 = vmatprep.subr.bf16.mxu0 %v6439
    %6749 = vmatpush1.bf16.msra.mxu0 %v6438
    %6750 = vmatprep.subr.bf16.mxu0 %v6443
    %6751 = vmatpush1.bf16.msra.mxu0 %v6442
    %6752 = vmatprep.subr.bf16.mxu0 %v6447
    %6753 = vmatpush1.bf16.msra.mxu0 %v6446
    %6754 = vmatprep.mubr.bf16.mxu0 %v5869
    %6755 = vmatmul.mubr.bf16.gmra.mrb[0].mxu0 %v5868
    %v6756 = vpop.f32.mrb[0].mxu0
    %v6757 = vadd.f32 0.0, %v6756
    %v6758 = vpop.f32.mrb[0].mxu0
    %v6759 = vadd.f32 0.0, %v6758
    %v6760 = vpop.f32.mrb[0].mxu0
    %v6761 = vpop.f32.mrb[0].mxu0
    %6762 = vdwg.mxu0
    %6763 = vmatprep.subr.bf16.mxu0 %v6451
    %6764 = vmatpush1.bf16.msra.mxu0 %v6450
    %6765 = vmatprep.subr.bf16.mxu0 %v6455
    %6766 = vmatpush1.bf16.msra.mxu0 %v6454
    %6767 = vmatprep.subr.bf16.mxu0 %v6459
    %6768 = vmatpush1.bf16.msra.mxu0 %v6458
    %6769 = vmatprep.subr.bf16.mxu0 %v6463
    %6770 = vmatpush1.bf16.msra.mxu0 %v6462
    %6771 = vmatprep.subr.bf16.mxu0 %v6467
    %6772 = vmatpush1.bf16.msra.mxu0 %v6466
    %6773 = vmatprep.subr.bf16.mxu0 %v6471
    %6774 = vmatpush1.bf16.msra.mxu0 %v6470
    %6775 = vmatprep.subr.bf16.mxu0 %v6475
    %6776 = vmatpush1.bf16.msra.mxu0 %v6474
    %6777 = vmatprep.subr.bf16.mxu0 %v6479
    %6778 = vmatpush1.bf16.msra.mxu0 %v6478
    %6779 = vmatprep.subr.bf16.mxu0 %v6483
    %6780 = vmatpush1.bf16.msra.mxu0 %v6482
    %6781 = vmatprep.subr.bf16.mxu0 %v6487
    %6782 = vmatpush1.bf16.msra.mxu0 %v6486
    %6783 = vmatprep.subr.bf16.mxu0 %v6491
    %6784 = vmatpush1.bf16.msra.mxu0 %v6490
    %6785 = vmatprep.subr.bf16.mxu0 %v6495
    %6786 = vmatpush1.bf16.msra.mxu0 %v6494
    %6787 = vmatprep.subr.bf16.mxu0 %v6499
    %6788 = vmatpush1.bf16.msra.mxu0 %v6498
    %6789 = vmatprep.subr.bf16.mxu0 %v6503
    %6790 = vmatpush1.bf16.msra.mxu0 %v6502
    %6791 = vmatprep.subr.bf16.mxu0 %v6507
    %6792 = vmatpush1.bf16.msra.mxu0 %v6506
    %6793 = vmatprep.subr.bf16.mxu0 %v6511
    %6794 = vmatpush1.bf16.msra.mxu0 %v6510
    %6795 = vmatprep.mubr.bf16.mxu0 %v5871
    %6796 = vmatmul.mubr.bf16.gmra.mrb[0].mxu0 %v5870
    %v6797 = vpop.f32.mrb[0].mxu0
    %v6798 = vadd.f32 %v6757, %v6797
    %v6799 = vpop.f32.mrb[0].mxu0
    %v6800 = vadd.f32 %v6759, %v6799
    %v6801 = vpop.f32.mrb[0].mxu0
    %v6802 = vpop.f32.mrb[0].mxu0
    %6803 = vdwg.mxu0
    %s6804 = scalar_lea.vmem [#allocation35], 1024
    %v6805 = vld [vmem:[%s6804] sm:$0xff]
    %v6806 = vld [vmem:[%s6804 + $0x8] sm:$0xff]
    %v6807 = vld [vmem:[%s6804 + $0x10] sm:$0xff]
    %v6808 = vld [vmem:[%s6804 + $0x18] sm:$0xff]
    %v6809 = vld [vmem:[%s6804 + $0x20] sm:$0xff]
    %v6810 = vld [vmem:[%s6804 + $0x28] sm:$0xff]
    %v6811 = vld [vmem:[%s6804 + $0x30] sm:$0xff]
    %v6812 = vld [vmem:[%s6804 + $0x38] sm:$0xff]
    %v6813 = vld [vmem:[%s6804 + $0x40] sm:$0xff]
    %v6814 = vld [vmem:[%s6804 + $0x48] sm:$0xff]
    %v6815 = vld [vmem:[%s6804 + $0x50] sm:$0xff]
    %v6816 = vld [vmem:[%s6804 + $0x58] sm:$0xff]
    %v6817 = vld [vmem:[%s6804 + $0x60] sm:$0xff]
    %v6818 = vld [vmem:[%s6804 + $0x68] sm:$0xff]
    %v6819 = vld [vmem:[%s6804 + $0x70] sm:$0xff]
    %v6820 = vld [vmem:[%s6804 + $0x78] sm:$0xff]
    %v6821 = vld [vmem:[%s6804 + $0x80] sm:$0xff]
    %v6822 = vld [vmem:[%s6804 + $0x88] sm:$0xff]
    %v6823 = vld [vmem:[%s6804 + $0x90] sm:$0xff]
    %v6824 = vld [vmem:[%s6804 + $0x98] sm:$0xff]
    %v6825 = vld [vmem:[%s6804 + $0xa0] sm:$0xff]
    %v6826 = vld [vmem:[%s6804 + $0xa8] sm:$0xff]
    %v6827 = vld [vmem:[%s6804 + $0xb0] sm:$0xff]
    %v6828 = vld [vmem:[%s6804 + $0xb8] sm:$0xff]
    %v6829 = vld [vmem:[%s6804 + $0xc0] sm:$0xff]
    %v6830 = vld [vmem:[%s6804 + $0xc8] sm:$0xff]
    %v6831 = vld [vmem:[%s6804 + $0xd0] sm:$0xff]
    %v6832 = vld [vmem:[%s6804 + $0xd8] sm:$0xff]
    %v6833 = vld [vmem:[%s6804 + $0xe0] sm:$0xff]
    %v6834 = vld [vmem:[%s6804 + $0xe8] sm:$0xff]
    %v6835 = vld [vmem:[%s6804 + $0xf0] sm:$0xff]
    %v6836 = vld [vmem:[%s6804 + $0xf8] sm:$0xff]
    %v6837 = vld [vmem:[%s6804 + $0x100] sm:$0xff]
    %v6838 = vld [vmem:[%s6804 + $0x108] sm:$0xff]
    %v6839 = vld [vmem:[%s6804 + $0x110] sm:$0xff]
    %v6840 = vld [vmem:[%s6804 + $0x118] sm:$0xff]
    %v6841 = vld [vmem:[%s6804 + $0x120] sm:$0xff]
    %v6842 = vld [vmem:[%s6804 + $0x128] sm:$0xff]
    %v6843 = vld [vmem:[%s6804 + $0x130] sm:$0xff]
    %v6844 = vld [vmem:[%s6804 + $0x138] sm:$0xff]
    %v6845 = vld [vmem:[%s6804 + $0x140] sm:$0xff]
    %v6846 = vld [vmem:[%s6804 + $0x148] sm:$0xff]
    %v6847 = vld [vmem:[%s6804 + $0x150] sm:$0xff]
    %v6848 = vld [vmem:[%s6804 + $0x158] sm:$0xff]
    %v6849 = vld [vmem:[%s6804 + $0x160] sm:$0xff]
    %v6850 = vld [vmem:[%s6804 + $0x168] sm:$0xff]
    %v6851 = vld [vmem:[%s6804 + $0x170] sm:$0xff]
    %v6852 = vld [vmem:[%s6804 + $0x178] sm:$0xff]
    %v6853 = vld [vmem:[%s6804 + $0x180] sm:$0xff]
    %v6854 = vld [vmem:[%s6804 + $0x188] sm:$0xff]
    %v6855 = vld [vmem:[%s6804 + $0x190] sm:$0xff]
    %v6856 = vld [vmem:[%s6804 + $0x198] sm:$0xff]
    %v6857 = vld [vmem:[%s6804 + $0x1a0] sm:$0xff]
    %v6858 = vld [vmem:[%s6804 + $0x1a8] sm:$0xff]
    %v6859 = vld [vmem:[%s6804 + $0x1b0] sm:$0xff]
    %v6860 = vld [vmem:[%s6804 + $0x1b8] sm:$0xff]
    %v6861 = vld [vmem:[%s6804 + $0x1c0] sm:$0xff]
    %v6862 = vld [vmem:[%s6804 + $0x1c8] sm:$0xff]
    %v6863 = vld [vmem:[%s6804 + $0x1d0] sm:$0xff]
    %v6864 = vld [vmem:[%s6804 + $0x1d8] sm:$0xff]
    %v6865 = vld [vmem:[%s6804 + $0x1e0] sm:$0xff]
    %v6866 = vld [vmem:[%s6804 + $0x1e8] sm:$0xff]
    %v6867 = vld [vmem:[%s6804 + $0x1f0] sm:$0xff]
    %v6868 = vld [vmem:[%s6804 + $0x1f8] sm:$0xff]
    %v6869 = vld [vmem:[%s6804 + $0x200] sm:$0xff]
    %v6870 = vld [vmem:[%s6804 + $0x208] sm:$0xff]
    %v6871 = vld [vmem:[%s6804 + $0x210] sm:$0xff]
    %v6872 = vld [vmem:[%s6804 + $0x218] sm:$0xff]
    %v6873 = vld [vmem:[%s6804 + $0x220] sm:$0xff]
    %v6874 = vld [vmem:[%s6804 + $0x228] sm:$0xff]
    %v6875 = vld [vmem:[%s6804 + $0x230] sm:$0xff]
    %v6876 = vld [vmem:[%s6804 + $0x238] sm:$0xff]
    %v6877 = vld [vmem:[%s6804 + $0x240] sm:$0xff]
    %v6878 = vld [vmem:[%s6804 + $0x248] sm:$0xff]
    %v6879 = vld [vmem:[%s6804 + $0x250] sm:$0xff]
    %v6880 = vld [vmem:[%s6804 + $0x258] sm:$0xff]
    %v6881 = vld [vmem:[%s6804 + $0x260] sm:$0xff]
    %v6882 = vld [vmem:[%s6804 + $0x268] sm:$0xff]
    %v6883 = vld [vmem:[%s6804 + $0x270] sm:$0xff]
    %v6884 = vld [vmem:[%s6804 + $0x278] sm:$0xff]
    %v6885 = vld [vmem:[%s6804 + $0x280] sm:$0xff]
    %v6886 = vld [vmem:[%s6804 + $0x288] sm:$0xff]
    %v6887 = vld [vmem:[%s6804 + $0x290] sm:$0xff]
    %v6888 = vld [vmem:[%s6804 + $0x298] sm:$0xff]
    %v6889 = vld [vmem:[%s6804 + $0x2a0] sm:$0xff]
    %v6890 = vld [vmem:[%s6804 + $0x2a8] sm:$0xff]
    %v6891 = vld [vmem:[%s6804 + $0x2b0] sm:$0xff]
    %v6892 = vld [vmem:[%s6804 + $0x2b8] sm:$0xff]
    %v6893 = vld [vmem:[%s6804 + $0x2c0] sm:$0xff]
    %v6894 = vld [vmem:[%s6804 + $0x2c8] sm:$0xff]
    %v6895 = vld [vmem:[%s6804 + $0x2d0] sm:$0xff]
    %v6896 = vld [vmem:[%s6804 + $0x2d8] sm:$0xff]
    %v6897 = vld [vmem:[%s6804 + $0x2e0] sm:$0xff]
    %v6898 = vld [vmem:[%s6804 + $0x2e8] sm:$0xff]
    %v6899 = vld [vmem:[%s6804 + $0x2f0] sm:$0xff]
    %v6900 = vld [vmem:[%s6804 + $0x2f8] sm:$0xff]
    %v6901 = vld [vmem:[%s6804 + $0x300] sm:$0xff]
    %v6902 = vld [vmem:[%s6804 + $0x308] sm:$0xff]
    %v6903 = vld [vmem:[%s6804 + $0x310] sm:$0xff]
    %v6904 = vld [vmem:[%s6804 + $0x318] sm:$0xff]
    %v6905 = vld [vmem:[%s6804 + $0x320] sm:$0xff]
    %v6906 = vld [vmem:[%s6804 + $0x328] sm:$0xff]
    %v6907 = vld [vmem:[%s6804 + $0x330] sm:$0xff]
    %v6908 = vld [vmem:[%s6804 + $0x338] sm:$0xff]
    %v6909 = vld [vmem:[%s6804 + $0x340] sm:$0xff]
    %v6910 = vld [vmem:[%s6804 + $0x348] sm:$0xff]
    %v6911 = vld [vmem:[%s6804 + $0x350] sm:$0xff]
    %v6912 = vld [vmem:[%s6804 + $0x358] sm:$0xff]
    %v6913 = vld [vmem:[%s6804 + $0x360] sm:$0xff]
    %v6914 = vld [vmem:[%s6804 + $0x368] sm:$0xff]
    %v6915 = vld [vmem:[%s6804 + $0x370] sm:$0xff]
    %v6916 = vld [vmem:[%s6804 + $0x378] sm:$0xff]
    %v6917 = vld [vmem:[%s6804 + $0x380] sm:$0xff]
    %v6918 = vld [vmem:[%s6804 + $0x388] sm:$0xff]
    %v6919 = vld [vmem:[%s6804 + $0x390] sm:$0xff]
    %v6920 = vld [vmem:[%s6804 + $0x398] sm:$0xff]
    %v6921 = vld [vmem:[%s6804 + $0x3a0] sm:$0xff]
    %v6922 = vld [vmem:[%s6804 + $0x3a8] sm:$0xff]
    %v6923 = vld [vmem:[%s6804 + $0x3b0] sm:$0xff]
    %v6924 = vld [vmem:[%s6804 + $0x3b8] sm:$0xff]
    %v6925 = vld [vmem:[%s6804 + $0x3c0] sm:$0xff]
    %v6926 = vld [vmem:[%s6804 + $0x3c8] sm:$0xff]
    %v6927 = vld [vmem:[%s6804 + $0x3d0] sm:$0xff]
    %v6928 = vld [vmem:[%s6804 + $0x3d8] sm:$0xff]
    %v6929 = vld [vmem:[%s6804 + $0x3e0] sm:$0xff]
    %v6930 = vld [vmem:[%s6804 + $0x3e8] sm:$0xff]
    %v6931 = vld [vmem:[%s6804 + $0x3f0] sm:$0xff]
    %v6932 = vld [vmem:[%s6804 + $0x3f8] sm:$0xff]
    %v7061 = vunpack.c.l.b16 %v6805
    %v7062 = vunpack.c.h.b16 %v6805
    %v7063 = vunpack.c.l.b16 %v6806
    %v7064 = vunpack.c.h.b16 %v6806
    %v7065 = vunpack.c.l.b16 %v6807
    %v7066 = vunpack.c.h.b16 %v6807
    %v7067 = vunpack.c.l.b16 %v6808
    %v7068 = vunpack.c.h.b16 %v6808
    %v7069 = vunpack.c.l.b16 %v6809
    %v7070 = vunpack.c.h.b16 %v6809
    %v7071 = vunpack.c.l.b16 %v6810
    %v7072 = vunpack.c.h.b16 %v6810
    %v7073 = vunpack.c.l.b16 %v6811
    %v7074 = vunpack.c.h.b16 %v6811
    %v7075 = vunpack.c.l.b16 %v6812
    %v7076 = vunpack.c.h.b16 %v6812
    %v7077 = vunpack.c.l.b16 %v6813
    %v7078 = vunpack.c.h.b16 %v6813
    %v7079 = vunpack.c.l.b16 %v6814
    %v7080 = vunpack.c.h.b16 %v6814
    %v7081 = vunpack.c.l.b16 %v6815
    %v7082 = vunpack.c.h.b16 %v6815
    %v7083 = vunpack.c.l.b16 %v6816
    %v7084 = vunpack.c.h.b16 %v6816
    %v7085 = vunpack.c.l.b16 %v6817
    %v7086 = vunpack.c.h.b16 %v6817
    %v7087 = vunpack.c.l.b16 %v6818
    %v7088 = vunpack.c.h.b16 %v6818
    %v7089 = vunpack.c.l.b16 %v6819
    %v7090 = vunpack.c.h.b16 %v6819
    %v7091 = vunpack.c.l.b16 %v6820
    %v7092 = vunpack.c.h.b16 %v6820
    %v7093 = vunpack.c.l.b16 %v6821
    %v7094 = vunpack.c.h.b16 %v6821
    %v7095 = vunpack.c.l.b16 %v6822
    %v7096 = vunpack.c.h.b16 %v6822
    %v7097 = vunpack.c.l.b16 %v6823
    %v7098 = vunpack.c.h.b16 %v6823
    %v7099 = vunpack.c.l.b16 %v6824
    %v7100 = vunpack.c.h.b16 %v6824
    %v7101 = vunpack.c.l.b16 %v6825
    %v7102 = vunpack.c.h.b16 %v6825
    %v7103 = vunpack.c.l.b16 %v6826
    %v7104 = vunpack.c.h.b16 %v6826
    %v7105 = vunpack.c.l.b16 %v6827
    %v7106 = vunpack.c.h.b16 %v6827
    %v7107 = vunpack.c.l.b16 %v6828
    %v7108 = vunpack.c.h.b16 %v6828
    %v7109 = vunpack.c.l.b16 %v6829
    %v7110 = vunpack.c.h.b16 %v6829
    %v7111 = vunpack.c.l.b16 %v6830
    %v7112 = vunpack.c.h.b16 %v6830
    %v7113 = vunpack.c.l.b16 %v6831
    %v7114 = vunpack.c.h.b16 %v6831
    %v7115 = vunpack.c.l.b16 %v6832
    %v7116 = vunpack.c.h.b16 %v6832
    %v7117 = vunpack.c.l.b16 %v6833
    %v7118 = vunpack.c.h.b16 %v6833
    %v7119 = vunpack.c.l.b16 %v6834
    %v7120 = vunpack.c.h.b16 %v6834
    %v7121 = vunpack.c.l.b16 %v6835
    %v7122 = vunpack.c.h.b16 %v6835
    %v7123 = vunpack.c.l.b16 %v6836
    %v7124 = vunpack.c.h.b16 %v6836
    %v7125 = vunpack.c.l.b16 %v6837
    %v7126 = vunpack.c.h.b16 %v6837
    %v7127 = vunpack.c.l.b16 %v6838
    %v7128 = vunpack.c.h.b16 %v6838
    %v7129 = vunpack.c.l.b16 %v6839
    %v7130 = vunpack.c.h.b16 %v6839
    %v7131 = vunpack.c.l.b16 %v6840
    %v7132 = vunpack.c.h.b16 %v6840
    %v7133 = vunpack.c.l.b16 %v6841
    %v7134 = vunpack.c.h.b16 %v6841
    %v7135 = vunpack.c.l.b16 %v6842
    %v7136 = vunpack.c.h.b16 %v6842
    %v7137 = vunpack.c.l.b16 %v6843
    %v7138 = vunpack.c.h.b16 %v6843
    %v7139 = vunpack.c.l.b16 %v6844
    %v7140 = vunpack.c.h.b16 %v6844
    %v7141 = vunpack.c.l.b16 %v6845
    %v7142 = vunpack.c.h.b16 %v6845
    %v7143 = vunpack.c.l.b16 %v6846
    %v7144 = vunpack.c.h.b16 %v6846
    %v7145 = vunpack.c.l.b16 %v6847
    %v7146 = vunpack.c.h.b16 %v6847
    %v7147 = vunpack.c.l.b16 %v6848
    %v7148 = vunpack.c.h.b16 %v6848
    %v7149 = vunpack.c.l.b16 %v6849
    %v7150 = vunpack.c.h.b16 %v6849
    %v7151 = vunpack.c.l.b16 %v6850
    %v7152 = vunpack.c.h.b16 %v6850
    %v7153 = vunpack.c.l.b16 %v6851
    %v7154 = vunpack.c.h.b16 %v6851
    %v7155 = vunpack.c.l.b16 %v6852
    %v7156 = vunpack.c.h.b16 %v6852
    %v7157 = vunpack.c.l.b16 %v6853
    %v7158 = vunpack.c.h.b16 %v6853
    %v7159 = vunpack.c.l.b16 %v6854
    %v7160 = vunpack.c.h.b16 %v6854
    %v7161 = vunpack.c.l.b16 %v6855
    %v7162 = vunpack.c.h.b16 %v6855
    %v7163 = vunpack.c.l.b16 %v6856
    %v7164 = vunpack.c.h.b16 %v6856
    %v7165 = vunpack.c.l.b16 %v6857
    %v7166 = vunpack.c.h.b16 %v6857
    %v7167 = vunpack.c.l.b16 %v6858
    %v7168 = vunpack.c.h.b16 %v6858
    %v7169 = vunpack.c.l.b16 %v6859
    %v7170 = vunpack.c.h.b16 %v6859
    %v7171 = vunpack.c.l.b16 %v6860
    %v7172 = vunpack.c.h.b16 %v6860
    %v7173 = vunpack.c.l.b16 %v6861
    %v7174 = vunpack.c.h.b16 %v6861
    %v7175 = vunpack.c.l.b16 %v6862
    %v7176 = vunpack.c.h.b16 %v6862
    %v7177 = vunpack.c.l.b16 %v6863
    %v7178 = vunpack.c.h.b16 %v6863
    %v7179 = vunpack.c.l.b16 %v6864
    %v7180 = vunpack.c.h.b16 %v6864
    %v7181 = vunpack.c.l.b16 %v6865
    %v7182 = vunpack.c.h.b16 %v6865
    %v7183 = vunpack.c.l.b16 %v6866
    %v7184 = vunpack.c.h.b16 %v6866
    %v7185 = vunpack.c.l.b16 %v6867
    %v7186 = vunpack.c.h.b16 %v6867
    %v7187 = vunpack.c.l.b16 %v6868
    %v7188 = vunpack.c.h.b16 %v6868
    %v7189 = vunpack.c.l.b16 %v6869
    %v7190 = vunpack.c.h.b16 %v6869
    %v7191 = vunpack.c.l.b16 %v6870
    %v7192 = vunpack.c.h.b16 %v6870
    %v7193 = vunpack.c.l.b16 %v6871
    %v7194 = vunpack.c.h.b16 %v6871
    %v7195 = vunpack.c.l.b16 %v6872
    %v7196 = vunpack.c.h.b16 %v6872
    %v7197 = vunpack.c.l.b16 %v6873
    %v7198 = vunpack.c.h.b16 %v6873
    %v7199 = vunpack.c.l.b16 %v6874
    %v7200 = vunpack.c.h.b16 %v6874
    %v7201 = vunpack.c.l.b16 %v6875
    %v7202 = vunpack.c.h.b16 %v6875
    %v7203 = vunpack.c.l.b16 %v6876
    %v7204 = vunpack.c.h.b16 %v6876
    %v7205 = vunpack.c.l.b16 %v6877
    %v7206 = vunpack.c.h.b16 %v6877
    %v7207 = vunpack.c.l.b16 %v6878
    %v7208 = vunpack.c.h.b16 %v6878
    %v7209 = vunpack.c.l.b16 %v6879
    %v7210 = vunpack.c.h.b16 %v6879
    %v7211 = vunpack.c.l.b16 %v6880
    %v7212 = vunpack.c.h.b16 %v6880
    %v7213 = vunpack.c.l.b16 %v6881
    %v7214 = vunpack.c.h.b16 %v6881
    %v7215 = vunpack.c.l.b16 %v6882
    %v7216 = vunpack.c.h.b16 %v6882
    %v7217 = vunpack.c.l.b16 %v6883
    %v7218 = vunpack.c.h.b16 %v6883
    %v7219 = vunpack.c.l.b16 %v6884
    %v7220 = vunpack.c.h.b16 %v6884
    %v7221 = vunpack.c.l.b16 %v6885
    %v7222 = vunpack.c.h.b16 %v6885
    %v7223 = vunpack.c.l.b16 %v6886
    %v7224 = vunpack.c.h.b16 %v6886
    %v7225 = vunpack.c.l.b16 %v6887
    %v7226 = vunpack.c.h.b16 %v6887
    %v7227 = vunpack.c.l.b16 %v6888
    %v7228 = vunpack.c.h.b16 %v6888
    %v7229 = vunpack.c.l.b16 %v6889
    %v7230 = vunpack.c.h.b16 %v6889
    %v7231 = vunpack.c.l.b16 %v6890
    %v7232 = vunpack.c.h.b16 %v6890
    %v7233 = vunpack.c.l.b16 %v6891
    %v7234 = vunpack.c.h.b16 %v6891
    %v7235 = vunpack.c.l.b16 %v6892
    %v7236 = vunpack.c.h.b16 %v6892
    %v7237 = vunpack.c.l.b16 %v6893
    %v7238 = vunpack.c.h.b16 %v6893
    %v7239 = vunpack.c.l.b16 %v6894
    %v7240 = vunpack.c.h.b16 %v6894
    %v7241 = vunpack.c.l.b16 %v6895
    %v7242 = vunpack.c.h.b16 %v6895
    %v7243 = vunpack.c.l.b16 %v6896
    %v7244 = vunpack.c.h.b16 %v6896
    %v7245 = vunpack.c.l.b16 %v6897
    %v7246 = vunpack.c.h.b16 %v6897
    %v7247 = vunpack.c.l.b16 %v6898
    %v7248 = vunpack.c.h.b16 %v6898
    %v7249 = vunpack.c.l.b16 %v6899
    %v7250 = vunpack.c.h.b16 %v6899
    %v7251 = vunpack.c.l.b16 %v6900
    %v7252 = vunpack.c.h.b16 %v6900
    %v7253 = vunpack.c.l.b16 %v6901
    %v7254 = vunpack.c.h.b16 %v6901
    %v7255 = vunpack.c.l.b16 %v6902
    %v7256 = vunpack.c.h.b16 %v6902
    %v7257 = vunpack.c.l.b16 %v6903
    %v7258 = vunpack.c.h.b16 %v6903
    %v7259 = vunpack.c.l.b16 %v6904
    %v7260 = vunpack.c.h.b16 %v6904
    %v7261 = vunpack.c.l.b16 %v6905
    %v7262 = vunpack.c.h.b16 %v6905
    %v7263 = vunpack.c.l.b16 %v6906
    %v7264 = vunpack.c.h.b16 %v6906
    %v7265 = vunpack.c.l.b16 %v6907
    %v7266 = vunpack.c.h.b16 %v6907
    %v7267 = vunpack.c.l.b16 %v6908
    %v7268 = vunpack.c.h.b16 %v6908
    %v7269 = vunpack.c.l.b16 %v6909
    %v7270 = vunpack.c.h.b16 %v6909
    %v7271 = vunpack.c.l.b16 %v6910
    %v7272 = vunpack.c.h.b16 %v6910
    %v7273 = vunpack.c.l.b16 %v6911
    %v7274 = vunpack.c.h.b16 %v6911
    %v7275 = vunpack.c.l.b16 %v6912
    %v7276 = vunpack.c.h.b16 %v6912
    %v7277 = vunpack.c.l.b16 %v6913
    %v7278 = vunpack.c.h.b16 %v6913
    %v7279 = vunpack.c.l.b16 %v6914
    %v7280 = vunpack.c.h.b16 %v6914
    %v7281 = vunpack.c.l.b16 %v6915
    %v7282 = vunpack.c.h.b16 %v6915
    %v7283 = vunpack.c.l.b16 %v6916
    %v7284 = vunpack.c.h.b16 %v6916
    %v7285 = vunpack.c.l.b16 %v6917
    %v7286 = vunpack.c.h.b16 %v6917
    %v7287 = vunpack.c.l.b16 %v6918
    %v7288 = vunpack.c.h.b16 %v6918
    %v7289 = vunpack.c.l.b16 %v6919
    %v7290 = vunpack.c.h.b16 %v6919
    %v7291 = vunpack.c.l.b16 %v6920
    %v7292 = vunpack.c.h.b16 %v6920
    %v7293 = vunpack.c.l.b16 %v6921
    %v7294 = vunpack.c.h.b16 %v6921
    %v7295 = vunpack.c.l.b16 %v6922
    %v7296 = vunpack.c.h.b16 %v6922
    %v7297 = vunpack.c.l.b16 %v6923
    %v7298 = vunpack.c.h.b16 %v6923
    %v7299 = vunpack.c.l.b16 %v6924
    %v7300 = vunpack.c.h.b16 %v6924
    %v7301 = vunpack.c.l.b16 %v6925
    %v7302 = vunpack.c.h.b16 %v6925
    %v7303 = vunpack.c.l.b16 %v6926
    %v7304 = vunpack.c.h.b16 %v6926
    %v7305 = vunpack.c.l.b16 %v6927
    %v7306 = vunpack.c.h.b16 %v6927
    %v7307 = vunpack.c.l.b16 %v6928
    %v7308 = vunpack.c.h.b16 %v6928
    %v7309 = vunpack.c.l.b16 %v6929
    %v7310 = vunpack.c.h.b16 %v6929
    %v7311 = vunpack.c.l.b16 %v6930
    %v7312 = vunpack.c.h.b16 %v6930
    %v7313 = vunpack.c.l.b16 %v6931
    %v7314 = vunpack.c.h.b16 %v6931
    %v7315 = vunpack.c.l.b16 %v6932
    %v7316 = vunpack.c.h.b16 %v6932
    %v7317 = vpack.c.b16 %v7065, %v7061
    %v7318 = vpack.c.b16 %v7066, %v7062
    %v7319 = vpack.c.b16 %v7067, %v7063
    %v7320 = vpack.c.b16 %v7068, %v7064
    %v7321 = vpack.c.b16 %v7073, %v7069
    %v7322 = vpack.c.b16 %v7074, %v7070
    %v7323 = vpack.c.b16 %v7075, %v7071
    %v7324 = vpack.c.b16 %v7076, %v7072
    %v7325 = vpack.c.b16 %v7081, %v7077
    %v7326 = vpack.c.b16 %v7082, %v7078
    %v7327 = vpack.c.b16 %v7083, %v7079
    %v7328 = vpack.c.b16 %v7084, %v7080
    %v7329 = vpack.c.b16 %v7089, %v7085
    %v7330 = vpack.c.b16 %v7090, %v7086
    %v7331 = vpack.c.b16 %v7091, %v7087
    %v7332 = vpack.c.b16 %v7092, %v7088
    %v7333 = vpack.c.b16 %v7097, %v7093
    %v7334 = vpack.c.b16 %v7098, %v7094
    %v7335 = vpack.c.b16 %v7099, %v7095
    %v7336 = vpack.c.b16 %v7100, %v7096
    %v7337 = vpack.c.b16 %v7105, %v7101
    %v7338 = vpack.c.b16 %v7106, %v7102
    %v7339 = vpack.c.b16 %v7107, %v7103
    %v7340 = vpack.c.b16 %v7108, %v7104
    %v7341 = vpack.c.b16 %v7113, %v7109
    %v7342 = vpack.c.b16 %v7114, %v7110
    %v7343 = vpack.c.b16 %v7115, %v7111
    %v7344 = vpack.c.b16 %v7116, %v7112
    %v7345 = vpack.c.b16 %v7121, %v7117
    %v7346 = vpack.c.b16 %v7122, %v7118
    %v7347 = vpack.c.b16 %v7123, %v7119
    %v7348 = vpack.c.b16 %v7124, %v7120
    %v7349 = vpack.c.b16 %v7129, %v7125
    %v7350 = vpack.c.b16 %v7130, %v7126
    %v7351 = vpack.c.b16 %v7131, %v7127
    %v7352 = vpack.c.b16 %v7132, %v7128
    %v7353 = vpack.c.b16 %v7137, %v7133
    %v7354 = vpack.c.b16 %v7138, %v7134
    %v7355 = vpack.c.b16 %v7139, %v7135
    %v7356 = vpack.c.b16 %v7140, %v7136
    %v7357 = vpack.c.b16 %v7145, %v7141
    %v7358 = vpack.c.b16 %v7146, %v7142
    %v7359 = vpack.c.b16 %v7147, %v7143
    %v7360 = vpack.c.b16 %v7148, %v7144
    %v7361 = vpack.c.b16 %v7153, %v7149
    %v7362 = vpack.c.b16 %v7154, %v7150
    %v7363 = vpack.c.b16 %v7155, %v7151
    %v7364 = vpack.c.b16 %v7156, %v7152
    %v7365 = vpack.c.b16 %v7161, %v7157
    %v7366 = vpack.c.b16 %v7162, %v7158
    %v7367 = vpack.c.b16 %v7163, %v7159
    %v7368 = vpack.c.b16 %v7164, %v7160
    %v7369 = vpack.c.b16 %v7169, %v7165
    %v7370 = vpack.c.b16 %v7170, %v7166
    %v7371 = vpack.c.b16 %v7171, %v7167
    %v7372 = vpack.c.b16 %v7172, %v7168
    %v7373 = vpack.c.b16 %v7177, %v7173
    %v7374 = vpack.c.b16 %v7178, %v7174
    %v7375 = vpack.c.b16 %v7179, %v7175
    %v7376 = vpack.c.b16 %v7180, %v7176
    %v7377 = vpack.c.b16 %v7185, %v7181
    %v7378 = vpack.c.b16 %v7186, %v7182
    %v7379 = vpack.c.b16 %v7187, %v7183
    %v7380 = vpack.c.b16 %v7188, %v7184
    %v7381 = vpack.c.b16 %v7193, %v7189
    %v7382 = vpack.c.b16 %v7194, %v7190
    %v7383 = vpack.c.b16 %v7195, %v7191
    %v7384 = vpack.c.b16 %v7196, %v7192
    %v7385 = vpack.c.b16 %v7201, %v7197
    %v7386 = vpack.c.b16 %v7202, %v7198
    %v7387 = vpack.c.b16 %v7203, %v7199
    %v7388 = vpack.c.b16 %v7204, %v7200
    %v7389 = vpack.c.b16 %v7209, %v7205
    %v7390 = vpack.c.b16 %v7210, %v7206
    %v7391 = vpack.c.b16 %v7211, %v7207
    %v7392 = vpack.c.b16 %v7212, %v7208
    %v7393 = vpack.c.b16 %v7217, %v7213
    %v7394 = vpack.c.b16 %v7218, %v7214
    %v7395 = vpack.c.b16 %v7219, %v7215
    %v7396 = vpack.c.b16 %v7220, %v7216
    %v7397 = vpack.c.b16 %v7225, %v7221
    %v7398 = vpack.c.b16 %v7226, %v7222
    %v7399 = vpack.c.b16 %v7227, %v7223
    %v7400 = vpack.c.b16 %v7228, %v7224
    %v7401 = vpack.c.b16 %v7233, %v7229
    %v7402 = vpack.c.b16 %v7234, %v7230
    %v7403 = vpack.c.b16 %v7235, %v7231
    %v7404 = vpack.c.b16 %v7236, %v7232
    %v7405 = vpack.c.b16 %v7241, %v7237
    %v7406 = vpack.c.b16 %v7242, %v7238
    %v7407 = vpack.c.b16 %v7243, %v7239
    %v7408 = vpack.c.b16 %v7244, %v7240
    %v7409 = vpack.c.b16 %v7249, %v7245
    %v7410 = vpack.c.b16 %v7250, %v7246
    %v7411 = vpack.c.b16 %v7251, %v7247
    %v7412 = vpack.c.b16 %v7252, %v7248
    %v7413 = vpack.c.b16 %v7257, %v7253
    %v7414 = vpack.c.b16 %v7258, %v7254
    %v7415 = vpack.c.b16 %v7259, %v7255
    %v7416 = vpack.c.b16 %v7260, %v7256
    %v7417 = vpack.c.b16 %v7265, %v7261
    %v7418 = vpack.c.b16 %v7266, %v7262
    %v7419 = vpack.c.b16 %v7267, %v7263
    %v7420 = vpack.c.b16 %v7268, %v7264
    %v7421 = vpack.c.b16 %v7273, %v7269
    %v7422 = vpack.c.b16 %v7274, %v7270
    %v7423 = vpack.c.b16 %v7275, %v7271
    %v7424 = vpack.c.b16 %v7276, %v7272
    %v7425 = vpack.c.b16 %v7281, %v7277
    %v7426 = vpack.c.b16 %v7282, %v7278
    %v7427 = vpack.c.b16 %v7283, %v7279
    %v7428 = vpack.c.b16 %v7284, %v7280
    %v7429 = vpack.c.b16 %v7289, %v7285
    %v7430 = vpack.c.b16 %v7290, %v7286
    %v7431 = vpack.c.b16 %v7291, %v7287
    %v7432 = vpack.c.b16 %v7292, %v7288
    %v7433 = vpack.c.b16 %v7297, %v7293
    %v7434 = vpack.c.b16 %v7298, %v7294
    %v7435 = vpack.c.b16 %v7299, %v7295
    %v7436 = vpack.c.b16 %v7300, %v7296
    %v7437 = vpack.c.b16 %v7305, %v7301
    %v7438 = vpack.c.b16 %v7306, %v7302
    %v7439 = vpack.c.b16 %v7307, %v7303
    %v7440 = vpack.c.b16 %v7308, %v7304
    %v7441 = vpack.c.b16 %v7313, %v7309
    %v7442 = vpack.c.b16 %v7314, %v7310
    %v7443 = vpack.c.b16 %v7315, %v7311
    %v7444 = vpack.c.b16 %v7316, %v7312
    %7573 = vmatprep.subr.bf16.mxu0 %v7318
    %7574 = vmatpush1.bf16.msra.mxu0 %v7317
    %7575 = vmatprep.subr.bf16.mxu0 %v7322
    %7576 = vmatpush1.bf16.msra.mxu0 %v7321
    %7577 = vmatprep.subr.bf16.mxu0 %v7326
    %7578 = vmatpush1.bf16.msra.mxu0 %v7325
    %7579 = vmatprep.subr.bf16.mxu0 %v7330
    %7580 = vmatpush1.bf16.msra.mxu0 %v7329
    %7581 = vmatprep.subr.bf16.mxu0 %v7334
    %7582 = vmatpush1.bf16.msra.mxu0 %v7333
    %7583 = vmatprep.subr.bf16.mxu0 %v7338
    %7584 = vmatpush1.bf16.msra.mxu0 %v7337
    %7585 = vmatprep.subr.bf16.mxu0 %v7342
    %7586 = vmatpush1.bf16.msra.mxu0 %v7341
    %7587 = vmatprep.subr.bf16.mxu0 %v7346
    %7588 = vmatpush1.bf16.msra.mxu0 %v7345
    %7589 = vmatprep.subr.bf16.mxu0 %v7350
    %7590 = vmatpush1.bf16.msra.mxu0 %v7349
    %7591 = vmatprep.subr.bf16.mxu0 %v7354
    %7592 = vmatpush1.bf16.msra.mxu0 %v7353
    %7593 = vmatprep.subr.bf16.mxu0 %v7358
    %7594 = vmatpush1.bf16.msra.mxu0 %v7357
    %7595 = vmatprep.subr.bf16.mxu0 %v7362
    %7596 = vmatpush1.bf16.msra.mxu0 %v7361
    %7597 = vmatprep.subr.bf16.mxu0 %v7366
    %7598 = vmatpush1.bf16.msra.mxu0 %v7365
    %7599 = vmatprep.subr.bf16.mxu0 %v7370
    %7600 = vmatpush1.bf16.msra.mxu0 %v7369
    %7601 = vmatprep.subr.bf16.mxu0 %v7374
    %7602 = vmatpush1.bf16.msra.mxu0 %v7373
    %7603 = vmatprep.subr.bf16.mxu0 %v7378
    %7604 = vmatpush1.bf16.msra.mxu0 %v7377
    %7605 = vmatprep.mubr.bf16.mxu0 %v5869
    %7606 = vmatmul.mubr.bf16.gmra.mrb[0].mxu0 %v5868
    %v7607 = vpop.f32.mrb[0].mxu0
    %v7608 = vadd.f32 0.0, %v7607
    %v7609 = vpop.f32.mrb[0].mxu0
    %v7610 = vadd.f32 0.0, %v7609
    %v7611 = vpop.f32.mrb[0].mxu0
    %v7612 = vpop.f32.mrb[0].mxu0
    %7613 = vdwg.mxu0
    %7614 = vmatprep.subr.bf16.mxu0 %v7382
    %7615 = vmatpush1.bf16.msra.mxu0 %v7381
    %7616 = vmatprep.subr.bf16.mxu0 %v7386
    %7617 = vmatpush1.bf16.msra.mxu0 %v7385
    %7618 = vmatprep.subr.bf16.mxu0 %v7390
    %7619 = vmatpush1.bf16.msra.mxu0 %v7389
    %7620 = vmatprep.subr.bf16.mxu0 %v7394
    %7621 = vmatpush1.bf16.msra.mxu0 %v7393
    %7622 = vmatprep.subr.bf16.mxu0 %v7398
    %7623 = vmatpush1.bf16.msra.mxu0 %v7397
    %7624 = vmatprep.subr.bf16.mxu0 %v7402
    %7625 = vmatpush1.bf16.msra.mxu0 %v7401
    %7626 = vmatprep.subr.bf16.mxu0 %v7406
    %7627 = vmatpush1.bf16.msra.mxu0 %v7405
    %7628 = vmatprep.subr.bf16.mxu0 %v7410
    %7629 = vmatpush1.bf16.msra.mxu0 %v7409
    %7630 = vmatprep.subr.bf16.mxu0 %v7414
    %7631 = vmatpush1.bf16.msra.mxu0 %v7413
    %7632 = vmatprep.subr.bf16.mxu0 %v7418
    %7633 = vmatpush1.bf16.msra.mxu0 %v7417
    %7634 = vmatprep.subr.bf16.mxu0 %v7422
    %7635 = vmatpush1.bf16.msra.mxu0 %v7421
    %7636 = vmatprep.subr.bf16.mxu0 %v7426
    %7637 = vmatpush1.bf16.msra.mxu0 %v7425
    %7638 = vmatprep.subr.bf16.mxu0 %v7430
    %7639 = vmatpush1.bf16.msra.mxu0 %v7429
    %7640 = vmatprep.subr.bf16.mxu0 %v7434
    %7641 = vmatpush1.bf16.msra.mxu0 %v7433
    %7642 = vmatprep.subr.bf16.mxu0 %v7438
    %7643 = vmatpush1.bf16.msra.mxu0 %v7437
    %7644 = vmatprep.subr.bf16.mxu0 %v7442
    %7645 = vmatpush1.bf16.msra.mxu0 %v7441
    %7646 = vmatprep.mubr.bf16.mxu0 %v5871
    %7647 = vmatmul.mubr.bf16.gmra.mrb[0].mxu0 %v5870
    %v7648 = vpop.f32.mrb[0].mxu0
    %v7649 = vadd.f32 %v7608, %v7648
    %v7650 = vpop.f32.mrb[0].mxu0
    %v7651 = vadd.f32 %v7610, %v7650
    %v7652 = vpop.f32.mrb[0].mxu0
    %v7653 = vpop.f32.mrb[0].mxu0
    %7654 = vdwg.mxu0
    %7655 = vmatprep.subr.bf16.mxu0 %v7320
    %7656 = vmatpush1.bf16.msra.mxu0 %v7319
    %7657 = vmatprep.subr.bf16.mxu0 %v7324
    %7658 = vmatpush1.bf16.msra.mxu0 %v7323
    %7659 = vmatprep.subr.bf16.mxu0 %v7328
    %7660 = vmatpush1.bf16.msra.mxu0 %v7327
    %7661 = vmatprep.subr.bf16.mxu0 %v7332
    %7662 = vmatpush1.bf16.msra.mxu0 %v7331
    %7663 = vmatprep.subr.bf16.mxu0 %v7336
    %7664 = vmatpush1.bf16.msra.mxu0 %v7335
    %7665 = vmatprep.subr.bf16.mxu0 %v7340
    %7666 = vmatpush1.bf16.msra.mxu0 %v7339
    %7667 = vmatprep.subr.bf16.mxu0 %v7344
    %7668 = vmatpush1.bf16.msra.mxu0 %v7343
    %7669 = vmatprep.subr.bf16.mxu0 %v7348
    %7670 = vmatpush1.bf16.msra.mxu0 %v7347
    %7671 = vmatprep.subr.bf16.mxu0 %v7352
    %7672 = vmatpush1.bf16.msra.mxu0 %v7351
    %7673 = vmatprep.subr.bf16.mxu0 %v7356
    %7674 = vmatpush1.bf16.msra.mxu0 %v7355
    %7675 = vmatprep.subr.bf16.mxu0 %v7360
    %7676 = vmatpush1.bf16.msra.mxu0 %v7359
    %7677 = vmatprep.subr.bf16.mxu0 %v7364
    %7678 = vmatpush1.bf16.msra.mxu0 %v7363
    %7679 = vmatprep.subr.bf16.mxu0 %v7368
    %7680 = vmatpush1.bf16.msra.mxu0 %v7367
    %7681 = vmatprep.subr.bf16.mxu0 %v7372
    %7682 = vmatpush1.bf16.msra.mxu0 %v7371
    %7683 = vmatprep.subr.bf16.mxu0 %v7376
    %7684 = vmatpush1.bf16.msra.mxu0 %v7375
    %7685 = vmatprep.subr.bf16.mxu0 %v7380
    %7686 = vmatpush1.bf16.msra.mxu0 %v7379
    %7687 = vmatprep.mubr.bf16.mxu0 %v5869
    %7688 = vmatmul.mubr.bf16.gmra.mrb[0].mxu0 %v5868
    %v7689 = vpop.f32.mrb[0].mxu0
    %v7690 = vadd.f32 0.0, %v7689
    %v7691 = vpop.f32.mrb[0].mxu0
    %v7692 = vadd.f32 0.0, %v7691
    %v7693 = vpop.f32.mrb[0].mxu0
    %v7694 = vpop.f32.mrb[0].mxu0
    %7695 = vdwg.mxu0
    %7696 = vmatprep.subr.bf16.mxu0 %v7384
    %7697 = vmatpush1.bf16.msra.mxu0 %v7383
    %7698 = vmatprep.subr.bf16.mxu0 %v7388
    %7699 = vmatpush1.bf16.msra.mxu0 %v7387
    %7700 = vmatprep.subr.bf16.mxu0 %v7392
    %7701 = vmatpush1.bf16.msra.mxu0 %v7391
    %7702 = vmatprep.subr.bf16.mxu0 %v7396
    %7703 = vmatpush1.bf16.msra.mxu0 %v7395
    %7704 = vmatprep.subr.bf16.mxu0 %v7400
    %7705 = vmatpush1.bf16.msra.mxu0 %v7399
    %7706 = vmatprep.subr.bf16.mxu0 %v7404
    %7707 = vmatpush1.bf16.msra.mxu0 %v7403
    %7708 = vmatprep.subr.bf16.mxu0 %v7408
    %7709 = vmatpush1.bf16.msra.mxu0 %v7407
    %7710 = vmatprep.subr.bf16.mxu0 %v7412
    %7711 = vmatpush1.bf16.msra.mxu0 %v7411
    %7712 = vmatprep.subr.bf16.mxu0 %v7416
    %7713 = vmatpush1.bf16.msra.mxu0 %v7415
    %7714 = vmatprep.subr.bf16.mxu0 %v7420
    %7715 = vmatpush1.bf16.msra.mxu0 %v7419
    %7716 = vmatprep.subr.bf16.mxu0 %v7424
    %7717 = vmatpush1.bf16.msra.mxu0 %v7423
    %7718 = vmatprep.subr.bf16.mxu0 %v7428
    %7719 = vmatpush1.bf16.msra.mxu0 %v7427
    %7720 = vmatprep.subr.bf16.mxu0 %v7432
    %7721 = vmatpush1.bf16.msra.mxu0 %v7431
    %7722 = vmatprep.subr.bf16.mxu0 %v7436
    %7723 = vmatpush1.bf16.msra.mxu0 %v7435
    %7724 = vmatprep.subr.bf16.mxu0 %v7440
    %7725 = vmatpush1.bf16.msra.mxu0 %v7439
    %7726 = vmatprep.subr.bf16.mxu0 %v7444
    %7727 = vmatpush1.bf16.msra.mxu0 %v7443
    %7728 = vmatprep.mubr.bf16.mxu0 %v5871
    %7729 = vmatmul.mubr.bf16.gmra.mrb[0].mxu0 %v5870
    %v7730 = vpop.f32.mrb[0].mxu0
    %v7731 = vadd.f32 %v7690, %v7730
    %v7732 = vpop.f32.mrb[0].mxu0
    %v7733 = vadd.f32 %v7692, %v7732
    %v7734 = vpop.f32.mrb[0].mxu0
    %v7735 = vpop.f32.mrb[0].mxu0
    %7736 = vdwg.mxu0
    %s7737 = scalar_lea.vmem [#allocation35], 2048
    %v7738 = vld [vmem:[%s7737] sm:$0xff]
    %v7739 = vld [vmem:[%s7737 + $0x8] sm:$0xff]
    %v7740 = vld [vmem:[%s7737 + $0x10] sm:$0xff]
    %v7741 = vld [vmem:[%s7737 + $0x18] sm:$0xff]
    %v7742 = vld [vmem:[%s7737 + $0x20] sm:$0xff]
    %v7743 = vld [vmem:[%s7737 + $0x28] sm:$0xff]
    %v7744 = vld [vmem:[%s7737 + $0x30] sm:$0xff]
    %v7745 = vld [vmem:[%s7737 + $0x38] sm:$0xff]
    %v7746 = vld [vmem:[%s7737 + $0x40] sm:$0xff]
    %v7747 = vld [vmem:[%s7737 + $0x48] sm:$0xff]
    %v7748 = vld [vmem:[%s7737 + $0x50] sm:$0xff]
    %v7749 = vld [vmem:[%s7737 + $0x58] sm:$0xff]
    %v7750 = vld [vmem:[%s7737 + $0x60] sm:$0xff]
    %v7751 = vld [vmem:[%s7737 + $0x68] sm:$0xff]
    %v7752 = vld [vmem:[%s7737 + $0x70] sm:$0xff]
    %v7753 = vld [vmem:[%s7737 + $0x78] sm:$0xff]
    %v7754 = vld [vmem:[%s7737 + $0x80] sm:$0xff]
    %v7755 = vld [vmem:[%s7737 + $0x88] sm:$0xff]
    %v7756 = vld [vmem:[%s7737 + $0x90] sm:$0xff]
    %v7757 = vld [vmem:[%s7737 + $0x98] sm:$0xff]
    %v7758 = vld [vmem:[%s7737 + $0xa0] sm:$0xff]
    %v7759 = vld [vmem:[%s7737 + $0xa8] sm:$0xff]
    %v7760 = vld [vmem:[%s7737 + $0xb0] sm:$0xff]
    %v7761 = vld [vmem:[%s7737 + $0xb8] sm:$0xff]
    %v7762 = vld [vmem:[%s7737 + $0xc0] sm:$0xff]
    %v7763 = vld [vmem:[%s7737 + $0xc8] sm:$0xff]
    %v7764 = vld [vmem:[%s7737 + $0xd0] sm:$0xff]
    %v7765 = vld [vmem:[%s7737 + $0xd8] sm:$0xff]
    %v7766 = vld [vmem:[%s7737 + $0xe0] sm:$0xff]
    %v7767 = vld [vmem:[%s7737 + $0xe8] sm:$0xff]
    %v7768 = vld [vmem:[%s7737 + $0xf0] sm:$0xff]
    %v7769 = vld [vmem:[%s7737 + $0xf8] sm:$0xff]
    %v7770 = vld [vmem:[%s7737 + $0x100] sm:$0xff]
    %v7771 = vld [vmem:[%s7737 + $0x108] sm:$0xff]
    %v7772 = vld [vmem:[%s7737 + $0x110] sm:$0xff]
    %v7773 = vld [vmem:[%s7737 + $0x118] sm:$0xff]
    %v7774 = vld [vmem:[%s7737 + $0x120] sm:$0xff]
    %v7775 = vld [vmem:[%s7737 + $0x128] sm:$0xff]
    %v7776 = vld [vmem:[%s7737 + $0x130] sm:$0xff]
    %v7777 = vld [vmem:[%s7737 + $0x138] sm:$0xff]
    %v7778 = vld [vmem:[%s7737 + $0x140] sm:$0xff]
    %v7779 = vld [vmem:[%s7737 + $0x148] sm:$0xff]
    %v7780 = vld [vmem:[%s7737 + $0x150] sm:$0xff]
    %v7781 = vld [vmem:[%s7737 + $0x158] sm:$0xff]
    %v7782 = vld [vmem:[%s7737 + $0x160] sm:$0xff]
    %v7783 = vld [vmem:[%s7737 + $0x168] sm:$0xff]
    %v7784 = vld [vmem:[%s7737 + $0x170] sm:$0xff]
    %v7785 = vld [vmem:[%s7737 + $0x178] sm:$0xff]
    %v7786 = vld [vmem:[%s7737 + $0x180] sm:$0xff]
    %v7787 = vld [vmem:[%s7737 + $0x188] sm:$0xff]
    %v7788 = vld [vmem:[%s7737 + $0x190] sm:$0xff]
    %v7789 = vld [vmem:[%s7737 + $0x198] sm:$0xff]
    %v7790 = vld [vmem:[%s7737 + $0x1a0] sm:$0xff]
    %v7791 = vld [vmem:[%s7737 + $0x1a8] sm:$0xff]
    %v7792 = vld [vmem:[%s7737 + $0x1b0] sm:$0xff]
    %v7793 = vld [vmem:[%s7737 + $0x1b8] sm:$0xff]
    %v7794 = vld [vmem:[%s7737 + $0x1c0] sm:$0xff]
    %v7795 = vld [vmem:[%s7737 + $0x1c8] sm:$0xff]
    %v7796 = vld [vmem:[%s7737 + $0x1d0] sm:$0xff]
    %v7797 = vld [vmem:[%s7737 + $0x1d8] sm:$0xff]
    %v7798 = vld [vmem:[%s7737 + $0x1e0] sm:$0xff]
    %v7799 = vld [vmem:[%s7737 + $0x1e8] sm:$0xff]
    %v7800 = vld [vmem:[%s7737 + $0x1f0] sm:$0xff]
    %v7801 = vld [vmem:[%s7737 + $0x1f8] sm:$0xff]
    %v7802 = vld [vmem:[%s7737 + $0x200] sm:$0xff]
    %v7803 = vld [vmem:[%s7737 + $0x208] sm:$0xff]
    %v7804 = vld [vmem:[%s7737 + $0x210] sm:$0xff]
    %v7805 = vld [vmem:[%s7737 + $0x218] sm:$0xff]
    %v7806 = vld [vmem:[%s7737 + $0x220] sm:$0xff]
    %v7807 = vld [vmem:[%s7737 + $0x228] sm:$0xff]
    %v7808 = vld [vmem:[%s7737 + $0x230] sm:$0xff]
    %v7809 = vld [vmem:[%s7737 + $0x238] sm:$0xff]
    %v7810 = vld [vmem:[%s7737 + $0x240] sm:$0xff]
    %v7811 = vld [vmem:[%s7737 + $0x248] sm:$0xff]
    %v7812 = vld [vmem:[%s7737 + $0x250] sm:$0xff]
    %v7813 = vld [vmem:[%s7737 + $0x258] sm:$0xff]
    %v7814 = vld [vmem:[%s7737 + $0x260] sm:$0xff]
    %v7815 = vld [vmem:[%s7737 + $0x268] sm:$0xff]
    %v7816 = vld [vmem:[%s7737 + $0x270] sm:$0xff]
    %v7817 = vld [vmem:[%s7737 + $0x278] sm:$0xff]
    %v7818 = vld [vmem:[%s7737 + $0x280] sm:$0xff]
    %v7819 = vld [vmem:[%s7737 + $0x288] sm:$0xff]
    %v7820 = vld [vmem:[%s7737 + $0x290] sm:$0xff]
    %v7821 = vld [vmem:[%s7737 + $0x298] sm:$0xff]
    %v7822 = vld [vmem:[%s7737 + $0x2a0] sm:$0xff]
    %v7823 = vld [vmem:[%s7737 + $0x2a8] sm:$0xff]
    %v7824 = vld [vmem:[%s7737 + $0x2b0] sm:$0xff]
    %v7825 = vld [vmem:[%s7737 + $0x2b8] sm:$0xff]
    %v7826 = vld [vmem:[%s7737 + $0x2c0] sm:$0xff]
    %v7827 = vld [vmem:[%s7737 + $0x2c8] sm:$0xff]
    %v7828 = vld [vmem:[%s7737 + $0x2d0] sm:$0xff]
    %v7829 = vld [vmem:[%s7737 + $0x2d8] sm:$0xff]
    %v7830 = vld [vmem:[%s7737 + $0x2e0] sm:$0xff]
    %v7831 = vld [vmem:[%s7737 + $0x2e8] sm:$0xff]
    %v7832 = vld [vmem:[%s7737 + $0x2f0] sm:$0xff]
    %v7833 = vld [vmem:[%s7737 + $0x2f8] sm:$0xff]
    %v7834 = vld [vmem:[%s7737 + $0x300] sm:$0xff]
    %v7835 = vld [vmem:[%s7737 + $0x308] sm:$0xff]
    %v7836 = vld [vmem:[%s7737 + $0x310] sm:$0xff]
    %v7837 = vld [vmem:[%s7737 + $0x318] sm:$0xff]
    %v7838 = vld [vmem:[%s7737 + $0x320] sm:$0xff]
    %v7839 = vld [vmem:[%s7737 + $0x328] sm:$0xff]
    %v7840 = vld [vmem:[%s7737 + $0x330] sm:$0xff]
    %v7841 = vld [vmem:[%s7737 + $0x338] sm:$0xff]
    %v7842 = vld [vmem:[%s7737 + $0x340] sm:$0xff]
    %v7843 = vld [vmem:[%s7737 + $0x348] sm:$0xff]
    %v7844 = vld [vmem:[%s7737 + $0x350] sm:$0xff]
    %v7845 = vld [vmem:[%s7737 + $0x358] sm:$0xff]
    %v7846 = vld [vmem:[%s7737 + $0x360] sm:$0xff]
    %v7847 = vld [vmem:[%s7737 + $0x368] sm:$0xff]
    %v7848 = vld [vmem:[%s7737 + $0x370] sm:$0xff]
    %v7849 = vld [vmem:[%s7737 + $0x378] sm:$0xff]
    %v7850 = vld [vmem:[%s7737 + $0x380] sm:$0xff]
    %v7851 = vld [vmem:[%s7737 + $0x388] sm:$0xff]
    %v7852 = vld [vmem:[%s7737 + $0x390] sm:$0xff]
    %v7853 = vld [vmem:[%s7737 + $0x398] sm:$0xff]
    %v7854 = vld [vmem:[%s7737 + $0x3a0] sm:$0xff]
    %v7855 = vld [vmem:[%s7737 + $0x3a8] sm:$0xff]
    %v7856 = vld [vmem:[%s7737 + $0x3b0] sm:$0xff]
    %v7857 = vld [vmem:[%s7737 + $0x3b8] sm:$0xff]
    %v7858 = vld [vmem:[%s7737 + $0x3c0] sm:$0xff]
    %v7859 = vld [vmem:[%s7737 + $0x3c8] sm:$0xff]
    %v7860 = vld [vmem:[%s7737 + $0x3d0] sm:$0xff]
    %v7861 = vld [vmem:[%s7737 + $0x3d8] sm:$0xff]
    %v7862 = vld [vmem:[%s7737 + $0x3e0] sm:$0xff]
    %v7863 = vld [vmem:[%s7737 + $0x3e8] sm:$0xff]
    %v7864 = vld [vmem:[%s7737 + $0x3f0] sm:$0xff]
    %v7865 = vld [vmem:[%s7737 + $0x3f8] sm:$0xff]
    %v7994 = vunpack.c.l.b16 %v7738
    %v7995 = vunpack.c.h.b16 %v7738
    %v7996 = vunpack.c.l.b16 %v7739
    %v7997 = vunpack.c.h.b16 %v7739
    %v7998 = vunpack.c.l.b16 %v7740
    %v7999 = vunpack.c.h.b16 %v7740
    %v8000 = vunpack.c.l.b16 %v7741
    %v8001 = vunpack.c.h.b16 %v7741
    %v8002 = vunpack.c.l.b16 %v7742
    %v8003 = vunpack.c.h.b16 %v7742
    %v8004 = vunpack.c.l.b16 %v7743
    %v8005 = vunpack.c.h.b16 %v7743
    %v8006 = vunpack.c.l.b16 %v7744
    %v8007 = vunpack.c.h.b16 %v7744
    %v8008 = vunpack.c.l.b16 %v7745
    %v8009 = vunpack.c.h.b16 %v7745
    %v8010 = vunpack.c.l.b16 %v7746
    %v8011 = vunpack.c.h.b16 %v7746
    %v8012 = vunpack.c.l.b16 %v7747
    %v8013 = vunpack.c.h.b16 %v7747
    %v8014 = vunpack.c.l.b16 %v7748
    %v8015 = vunpack.c.h.b16 %v7748
    %v8016 = vunpack.c.l.b16 %v7749
    %v8017 = vunpack.c.h.b16 %v7749
    %v8018 = vunpack.c.l.b16 %v7750
    %v8019 = vunpack.c.h.b16 %v7750
    %v8020 = vunpack.c.l.b16 %v7751
    %v8021 = vunpack.c.h.b16 %v7751
    %v8022 = vunpack.c.l.b16 %v7752
    %v8023 = vunpack.c.h.b16 %v7752
    %v8024 = vunpack.c.l.b16 %v7753
    %v8025 = vunpack.c.h.b16 %v7753
    %v8026 = vunpack.c.l.b16 %v7754
    %v8027 = vunpack.c.h.b16 %v7754
    %v8028 = vunpack.c.l.b16 %v7755
    %v8029 = vunpack.c.h.b16 %v7755
    %v8030 = vunpack.c.l.b16 %v7756
    %v8031 = vunpack.c.h.b16 %v7756
    %v8032 = vunpack.c.l.b16 %v7757
    %v8033 = vunpack.c.h.b16 %v7757
    %v8034 = vunpack.c.l.b16 %v7758
    %v8035 = vunpack.c.h.b16 %v7758
    %v8036 = vunpack.c.l.b16 %v7759
    %v8037 = vunpack.c.h.b16 %v7759
    %v8038 = vunpack.c.l.b16 %v7760
    %v8039 = vunpack.c.h.b16 %v7760
    %v8040 = vunpack.c.l.b16 %v7761
    %v8041 = vunpack.c.h.b16 %v7761
    %v8042 = vunpack.c.l.b16 %v7762
    %v8043 = vunpack.c.h.b16 %v7762
    %v8044 = vunpack.c.l.b16 %v7763
    %v8045 = vunpack.c.h.b16 %v7763
    %v8046 = vunpack.c.l.b16 %v7764
    %v8047 = vunpack.c.h.b16 %v7764
    %v8048 = vunpack.c.l.b16 %v7765
    %v8049 = vunpack.c.h.b16 %v7765
    %v8050 = vunpack.c.l.b16 %v7766
    %v8051 = vunpack.c.h.b16 %v7766
    %v8052 = vunpack.c.l.b16 %v7767
    %v8053 = vunpack.c.h.b16 %v7767
    %v8054 = vunpack.c.l.b16 %v7768
    %v8055 = vunpack.c.h.b16 %v7768
    %v8056 = vunpack.c.l.b16 %v7769
    %v8057 = vunpack.c.h.b16 %v7769
    %v8058 = vunpack.c.l.b16 %v7770
    %v8059 = vunpack.c.h.b16 %v7770
    %v8060 = vunpack.c.l.b16 %v7771
    %v8061 = vunpack.c.h.b16 %v7771
    %v8062 = vunpack.c.l.b16 %v7772
    %v8063 = vunpack.c.h.b16 %v7772
    %v8064 = vunpack.c.l.b16 %v7773
    %v8065 = vunpack.c.h.b16 %v7773
    %v8066 = vunpack.c.l.b16 %v7774
    %v8067 = vunpack.c.h.b16 %v7774
    %v8068 = vunpack.c.l.b16 %v7775
    %v8069 = vunpack.c.h.b16 %v7775
    %v8070 = vunpack.c.l.b16 %v7776
    %v8071 = vunpack.c.h.b16 %v7776
    %v8072 = vunpack.c.l.b16 %v7777
    %v8073 = vunpack.c.h.b16 %v7777
    %v8074 = vunpack.c.l.b16 %v7778
    %v8075 = vunpack.c.h.b16 %v7778
    %v8076 = vunpack.c.l.b16 %v7779
    %v8077 = vunpack.c.h.b16 %v7779
    %v8078 = vunpack.c.l.b16 %v7780
    %v8079 = vunpack.c.h.b16 %v7780
    %v8080 = vunpack.c.l.b16 %v7781
    %v8081 = vunpack.c.h.b16 %v7781
    %v8082 = vunpack.c.l.b16 %v7782
    %v8083 = vunpack.c.h.b16 %v7782
    %v8084 = vunpack.c.l.b16 %v7783
    %v8085 = vunpack.c.h.b16 %v7783
    %v8086 = vunpack.c.l.b16 %v7784
    %v8087 = vunpack.c.h.b16 %v7784
    %v8088 = vunpack.c.l.b16 %v7785
    %v8089 = vunpack.c.h.b16 %v7785
    %v8090 = vunpack.c.l.b16 %v7786
    %v8091 = vunpack.c.h.b16 %v7786
    %v8092 = vunpack.c.l.b16 %v7787
    %v8093 = vunpack.c.h.b16 %v7787
    %v8094 = vunpack.c.l.b16 %v7788
    %v8095 = vunpack.c.h.b16 %v7788
    %v8096 = vunpack.c.l.b16 %v7789
    %v8097 = vunpack.c.h.b16 %v7789
    %v8098 = vunpack.c.l.b16 %v7790
    %v8099 = vunpack.c.h.b16 %v7790
    %v8100 = vunpack.c.l.b16 %v7791
    %v8101 = vunpack.c.h.b16 %v7791
    %v8102 = vunpack.c.l.b16 %v7792
    %v8103 = vunpack.c.h.b16 %v7792
    %v8104 = vunpack.c.l.b16 %v7793
    %v8105 = vunpack.c.h.b16 %v7793
    %v8106 = vunpack.c.l.b16 %v7794
    %v8107 = vunpack.c.h.b16 %v7794
    %v8108 = vunpack.c.l.b16 %v7795
    %v8109 = vunpack.c.h.b16 %v7795
    %v8110 = vunpack.c.l.b16 %v7796
    %v8111 = vunpack.c.h.b16 %v7796
    %v8112 = vunpack.c.l.b16 %v7797
    %v8113 = vunpack.c.h.b16 %v7797
    %v8114 = vunpack.c.l.b16 %v7798
    %v8115 = vunpack.c.h.b16 %v7798
    %v8116 = vunpack.c.l.b16 %v7799
    %v8117 = vunpack.c.h.b16 %v7799
    %v8118 = vunpack.c.l.b16 %v7800
    %v8119 = vunpack.c.h.b16 %v7800
    %v8120 = vunpack.c.l.b16 %v7801
    %v8121 = vunpack.c.h.b16 %v7801
    %v8122 = vunpack.c.l.b16 %v7802
    %v8123 = vunpack.c.h.b16 %v7802
    %v8124 = vunpack.c.l.b16 %v7803
    %v8125 = vunpack.c.h.b16 %v7803
    %v8126 = vunpack.c.l.b16 %v7804
    %v8127 = vunpack.c.h.b16 %v7804
    %v8128 = vunpack.c.l.b16 %v7805
    %v8129 = vunpack.c.h.b16 %v7805
    %v8130 = vunpack.c.l.b16 %v7806
    %v8131 = vunpack.c.h.b16 %v7806
    %v8132 = vunpack.c.l.b16 %v7807
    %v8133 = vunpack.c.h.b16 %v7807
    %v8134 = vunpack.c.l.b16 %v7808
    %v8135 = vunpack.c.h.b16 %v7808
    %v8136 = vunpack.c.l.b16 %v7809
    %v8137 = vunpack.c.h.b16 %v7809
    %v8138 = vunpack.c.l.b16 %v7810
    %v8139 = vunpack.c.h.b16 %v7810
    %v8140 = vunpack.c.l.b16 %v7811
    %v8141 = vunpack.c.h.b16 %v7811
    %v8142 = vunpack.c.l.b16 %v7812
    %v8143 = vunpack.c.h.b16 %v7812
    %v8144 = vunpack.c.l.b16 %v7813
    %v8145 = vunpack.c.h.b16 %v7813
    %v8146 = vunpack.c.l.b16 %v7814
    %v8147 = vunpack.c.h.b16 %v7814
    %v8148 = vunpack.c.l.b16 %v7815
    %v8149 = vunpack.c.h.b16 %v7815
    %v8150 = vunpack.c.l.b16 %v7816
    %v8151 = vunpack.c.h.b16 %v7816
    %v8152 = vunpack.c.l.b16 %v7817
    %v8153 = vunpack.c.h.b16 %v7817
    %v8154 = vunpack.c.l.b16 %v7818
    %v8155 = vunpack.c.h.b16 %v7818
    %v8156 = vunpack.c.l.b16 %v7819
    %v8157 = vunpack.c.h.b16 %v7819
    %v8158 = vunpack.c.l.b16 %v7820
    %v8159 = vunpack.c.h.b16 %v7820
    %v8160 = vunpack.c.l.b16 %v7821
    %v8161 = vunpack.c.h.b16 %v7821
    %v8162 = vunpack.c.l.b16 %v7822
    %v8163 = vunpack.c.h.b16 %v7822
    %v8164 = vunpack.c.l.b16 %v7823
    %v8165 = vunpack.c.h.b16 %v7823
    %v8166 = vunpack.c.l.b16 %v7824
    %v8167 = vunpack.c.h.b16 %v7824
    %v8168 = vunpack.c.l.b16 %v7825
    %v8169 = vunpack.c.h.b16 %v7825
    %v8170 = vunpack.c.l.b16 %v7826
    %v8171 = vunpack.c.h.b16 %v7826
    %v8172 = vunpack.c.l.b16 %v7827
    %v8173 = vunpack.c.h.b16 %v7827
    %v8174 = vunpack.c.l.b16 %v7828
    %v8175 = vunpack.c.h.b16 %v7828
    %v8176 = vunpack.c.l.b16 %v7829
    %v8177 = vunpack.c.h.b16 %v7829
    %v8178 = vunpack.c.l.b16 %v7830
    %v8179 = vunpack.c.h.b16 %v7830
    %v8180 = vunpack.c.l.b16 %v7831
    %v8181 = vunpack.c.h.b16 %v7831
    %v8182 = vunpack.c.l.b16 %v7832
    %v8183 = vunpack.c.h.b16 %v7832
    %v8184 = vunpack.c.l.b16 %v7833
    %v8185 = vunpack.c.h.b16 %v7833
    %v8186 = vunpack.c.l.b16 %v7834
    %v8187 = vunpack.c.h.b16 %v7834
    %v8188 = vunpack.c.l.b16 %v7835
    %v8189 = vunpack.c.h.b16 %v7835
    %v8190 = vunpack.c.l.b16 %v7836
    %v8191 = vunpack.c.h.b16 %v7836
    %v8192 = vunpack.c.l.b16 %v7837
    %v8193 = vunpack.c.h.b16 %v7837
    %v8194 = vunpack.c.l.b16 %v7838
    %v8195 = vunpack.c.h.b16 %v7838
    %v8196 = vunpack.c.l.b16 %v7839
    %v8197 = vunpack.c.h.b16 %v7839
    %v8198 = vunpack.c.l.b16 %v7840
    %v8199 = vunpack.c.h.b16 %v7840
    %v8200 = vunpack.c.l.b16 %v7841
    %v8201 = vunpack.c.h.b16 %v7841
    %v8202 = vunpack.c.l.b16 %v7842
    %v8203 = vunpack.c.h.b16 %v7842
    %v8204 = vunpack.c.l.b16 %v7843
    %v8205 = vunpack.c.h.b16 %v7843
    %v8206 = vunpack.c.l.b16 %v7844
    %v8207 = vunpack.c.h.b16 %v7844
    %v8208 = vunpack.c.l.b16 %v7845
    %v8209 = vunpack.c.h.b16 %v7845
    %v8210 = vunpack.c.l.b16 %v7846
    %v8211 = vunpack.c.h.b16 %v7846
    %v8212 = vunpack.c.l.b16 %v7847
    %v8213 = vunpack.c.h.b16 %v7847
    %v8214 = vunpack.c.l.b16 %v7848
    %v8215 = vunpack.c.h.b16 %v7848
    %v8216 = vunpack.c.l.b16 %v7849
    %v8217 = vunpack.c.h.b16 %v7849
    %v8218 = vunpack.c.l.b16 %v7850
    %v8219 = vunpack.c.h.b16 %v7850
    %v8220 = vunpack.c.l.b16 %v7851
    %v8221 = vunpack.c.h.b16 %v7851
    %v8222 = vunpack.c.l.b16 %v7852
    %v8223 = vunpack.c.h.b16 %v7852
    %v8224 = vunpack.c.l.b16 %v7853
    %v8225 = vunpack.c.h.b16 %v7853
    %v8226 = vunpack.c.l.b16 %v7854
    %v8227 = vunpack.c.h.b16 %v7854
    %v8228 = vunpack.c.l.b16 %v7855
    %v8229 = vunpack.c.h.b16 %v7855
    %v8230 = vunpack.c.l.b16 %v7856
    %v8231 = vunpack.c.h.b16 %v7856
    %v8232 = vunpack.c.l.b16 %v7857
    %v8233 = vunpack.c.h.b16 %v7857
    %v8234 = vunpack.c.l.b16 %v7858
    %v8235 = vunpack.c.h.b16 %v7858
    %v8236 = vunpack.c.l.b16 %v7859
    %v8237 = vunpack.c.h.b16 %v7859
    %v8238 = vunpack.c.l.b16 %v7860
    %v8239 = vunpack.c.h.b16 %v7860
    %v8240 = vunpack.c.l.b16 %v7861
    %v8241 = vunpack.c.h.b16 %v7861
    %v8242 = vunpack.c.l.b16 %v7862
    %v8243 = vunpack.c.h.b16 %v7862
    %v8244 = vunpack.c.l.b16 %v7863
    %v8245 = vunpack.c.h.b16 %v7863
    %v8246 = vunpack.c.l.b16 %v7864
    %v8247 = vunpack.c.h.b16 %v7864
    %v8248 = vunpack.c.l.b16 %v7865
    %v8249 = vunpack.c.h.b16 %v7865
    %v8250 = vpack.c.b16 %v7998, %v7994
    %v8251 = vpack.c.b16 %v7999, %v7995
    %v8252 = vpack.c.b16 %v8000, %v7996
    %v8253 = vpack.c.b16 %v8001, %v7997
    %v8254 = vpack.c.b16 %v8006, %v8002
    %v8255 = vpack.c.b16 %v8007, %v8003
    %v8256 = vpack.c.b16 %v8008, %v8004
    %v8257 = vpack.c.b16 %v8009, %v8005
    %v8258 = vpack.c.b16 %v8014, %v8010
    %v8259 = vpack.c.b16 %v8015, %v8011
    %v8260 = vpack.c.b16 %v8016, %v8012
    %v8261 = vpack.c.b16 %v8017, %v8013
    %v8262 = vpack.c.b16 %v8022, %v8018
    %v8263 = vpack.c.b16 %v8023, %v8019
    %v8264 = vpack.c.b16 %v8024, %v8020
    %v8265 = vpack.c.b16 %v8025, %v8021
    %v8266 = vpack.c.b16 %v8030, %v8026
    %v8267 = vpack.c.b16 %v8031, %v8027
    %v8268 = vpack.c.b16 %v8032, %v8028
    %v8269 = vpack.c.b16 %v8033, %v8029
    %v8270 = vpack.c.b16 %v8038, %v8034
    %v8271 = vpack.c.b16 %v8039, %v8035
    %v8272 = vpack.c.b16 %v8040, %v8036
    %v8273 = vpack.c.b16 %v8041, %v8037
    %v8274 = vpack.c.b16 %v8046, %v8042
    %v8275 = vpack.c.b16 %v8047, %v8043
    %v8276 = vpack.c.b16 %v8048, %v8044
    %v8277 = vpack.c.b16 %v8049, %v8045
    %v8278 = vpack.c.b16 %v8054, %v8050
    %v8279 = vpack.c.b16 %v8055, %v8051
    %v8280 = vpack.c.b16 %v8056, %v8052
    %v8281 = vpack.c.b16 %v8057, %v8053
    %v8282 = vpack.c.b16 %v8062, %v8058
    %v8283 = vpack.c.b16 %v8063, %v8059
    %v8284 = vpack.c.b16 %v8064, %v8060
    %v8285 = vpack.c.b16 %v8065, %v8061
    %v8286 = vpack.c.b16 %v8070, %v8066
    %v8287 = vpack.c.b16 %v8071, %v8067
    %v8288 = vpack.c.b16 %v8072, %v8068
    %v8289 = vpack.c.b16 %v8073, %v8069
    %v8290 = vpack.c.b16 %v8078, %v8074
    %v8291 = vpack.c.b16 %v8079, %v8075
    %v8292 = vpack.c.b16 %v8080, %v8076
    %v8293 = vpack.c.b16 %v8081, %v8077
    %v8294 = vpack.c.b16 %v8086, %v8082
    %v8295 = vpack.c.b16 %v8087, %v8083
    %v8296 = vpack.c.b16 %v8088, %v8084
    %v8297 = vpack.c.b16 %v8089, %v8085
    %v8298 = vpack.c.b16 %v8094, %v8090
    %v8299 = vpack.c.b16 %v8095, %v8091
    %v8300 = vpack.c.b16 %v8096, %v8092
    %v8301 = vpack.c.b16 %v8097, %v8093
    %v8302 = vpack.c.b16 %v8102, %v8098
    %v8303 = vpack.c.b16 %v8103, %v8099
    %v8304 = vpack.c.b16 %v8104, %v8100
    %v8305 = vpack.c.b16 %v8105, %v8101
    %v8306 = vpack.c.b16 %v8110, %v8106
    %v8307 = vpack.c.b16 %v8111, %v8107
    %v8308 = vpack.c.b16 %v8112, %v8108
    %v8309 = vpack.c.b16 %v8113, %v8109
    %v8310 = vpack.c.b16 %v8118, %v8114
    %v8311 = vpack.c.b16 %v8119, %v8115
    %v8312 = vpack.c.b16 %v8120, %v8116
    %v8313 = vpack.c.b16 %v8121, %v8117
    %v8314 = vpack.c.b16 %v8126, %v8122
    %v8315 = vpack.c.b16 %v8127, %v8123
    %v8316 = vpack.c.b16 %v8128, %v8124
    %v8317 = vpack.c.b16 %v8129, %v8125
    %v8318 = vpack.c.b16 %v8134, %v8130
    %v8319 = vpack.c.b16 %v8135, %v8131
    %v8320 = vpack.c.b16 %v8136, %v8132
    %v8321 = vpack.c.b16 %v8137, %v8133
    %v8322 = vpack.c.b16 %v8142, %v8138
    %v8323 = vpack.c.b16 %v8143, %v8139
    %v8324 = vpack.c.b16 %v8144, %v8140
    %v8325 = vpack.c.b16 %v8145, %v8141
    %v8326 = vpack.c.b16 %v8150, %v8146
    %v8327 = vpack.c.b16 %v8151, %v8147
    %v8328 = vpack.c.b16 %v8152, %v8148
    %v8329 = vpack.c.b16 %v8153, %v8149
    %v8330 = vpack.c.b16 %v8158, %v8154
    %v8331 = vpack.c.b16 %v8159, %v8155
    %v8332 = vpack.c.b16 %v8160, %v8156
    %v8333 = vpack.c.b16 %v8161, %v8157
    %v8334 = vpack.c.b16 %v8166, %v8162
    %v8335 = vpack.c.b16 %v8167, %v8163
    %v8336 = vpack.c.b16 %v8168, %v8164
    %v8337 = vpack.c.b16 %v8169, %v8165
    %v8338 = vpack.c.b16 %v8174, %v8170
    %v8339 = vpack.c.b16 %v8175, %v8171
    %v8340 = vpack.c.b16 %v8176, %v8172
    %v8341 = vpack.c.b16 %v8177, %v8173
    %v8342 = vpack.c.b16 %v8182, %v8178
    %v8343 = vpack.c.b16 %v8183, %v8179
    %v8344 = vpack.c.b16 %v8184, %v8180
    %v8345 = vpack.c.b16 %v8185, %v8181
    %v8346 = vpack.c.b16 %v8190, %v8186
    %v8347 = vpack.c.b16 %v8191, %v8187
    %v8348 = vpack.c.b16 %v8192, %v8188
    %v8349 = vpack.c.b16 %v8193, %v8189
    %v8350 = vpack.c.b16 %v8198, %v8194
    %v8351 = vpack.c.b16 %v8199, %v8195
    %v8352 = vpack.c.b16 %v8200, %v8196
    %v8353 = vpack.c.b16 %v8201, %v8197
    %v8354 = vpack.c.b16 %v8206, %v8202
    %v8355 = vpack.c.b16 %v8207, %v8203
    %v8356 = vpack.c.b16 %v8208, %v8204
    %v8357 = vpack.c.b16 %v8209, %v8205
    %v8358 = vpack.c.b16 %v8214, %v8210
    %v8359 = vpack.c.b16 %v8215, %v8211
    %v8360 = vpack.c.b16 %v8216, %v8212
    %v8361 = vpack.c.b16 %v8217, %v8213
    %v8362 = vpack.c.b16 %v8222, %v8218
    %v8363 = vpack.c.b16 %v8223, %v8219
    %v8364 = vpack.c.b16 %v8224, %v8220
    %v8365 = vpack.c.b16 %v8225, %v8221
    %v8366 = vpack.c.b16 %v8230, %v8226
    %v8367 = vpack.c.b16 %v8231, %v8227
    %v8368 = vpack.c.b16 %v8232, %v8228
    %v8369 = vpack.c.b16 %v8233, %v8229
    %v8370 = vpack.c.b16 %v8238, %v8234
    %v8371 = vpack.c.b16 %v8239, %v8235
    %v8372 = vpack.c.b16 %v8240, %v8236
    %v8373 = vpack.c.b16 %v8241, %v8237
    %v8374 = vpack.c.b16 %v8246, %v8242
    %v8375 = vpack.c.b16 %v8247, %v8243
    %v8376 = vpack.c.b16 %v8248, %v8244
    %v8377 = vpack.c.b16 %v8249, %v8245
    %8506 = vmatprep.subr.bf16.mxu0 %v8251
    %8507 = vmatpush1.bf16.msra.mxu0 %v8250
    %8508 = vmatprep.subr.bf16.mxu0 %v8255
    %8509 = vmatpush1.bf16.msra.mxu0 %v8254
    %8510 = vmatprep.subr.bf16.mxu0 %v8259
    %8511 = vmatpush1.bf16.msra.mxu0 %v8258
    %8512 = vmatprep.subr.bf16.mxu0 %v8263
    %8513 = vmatpush1.bf16.msra.mxu0 %v8262
    %8514 = vmatprep.subr.bf16.mxu0 %v8267
    %8515 = vmatpush1.bf16.msra.mxu0 %v8266
    %8516 = vmatprep.subr.bf16.mxu0 %v8271
    %8517 = vmatpush1.bf16.msra.mxu0 %v8270
    %8518 = vmatprep.subr.bf16.mxu0 %v8275
    %8519 = vmatpush1.bf16.msra.mxu0 %v8274
    %8520 = vmatprep.subr.bf16.mxu0 %v8279
    %8521 = vmatpush1.bf16.msra.mxu0 %v8278
    %8522 = vmatprep.subr.bf16.mxu0 %v8283
    %8523 = vmatpush1.bf16.msra.mxu0 %v8282
    %8524 = vmatprep.subr.bf16.mxu0 %v8287
    %8525 = vmatpush1.bf16.msra.mxu0 %v8286
    %8526 = vmatprep.subr.bf16.mxu0 %v8291
    %8527 = vmatpush1.bf16.msra.mxu0 %v8290
    %8528 = vmatprep.subr.bf16.mxu0 %v8295
    %8529 = vmatpush1.bf16.msra.mxu0 %v8294
    %8530 = vmatprep.subr.bf16.mxu0 %v8299
    %8531 = vmatpush1.bf16.msra.mxu0 %v8298
    %8532 = vmatprep.subr.bf16.mxu0 %v8303
    %8533 = vmatpush1.bf16.msra.mxu0 %v8302
    %8534 = vmatprep.subr.bf16.mxu0 %v8307
    %8535 = vmatpush1.bf16.msra.mxu0 %v8306
    %8536 = vmatprep.subr.bf16.mxu0 %v8311
    %8537 = vmatpush1.bf16.msra.mxu0 %v8310
    %8538 = vmatprep.mubr.bf16.mxu0 %v5869
    %8539 = vmatmul.mubr.bf16.gmra.mrb[0].mxu0 %v5868
    %v8540 = vpop.f32.mrb[0].mxu0
    %v8541 = vadd.f32 0.0, %v8540
    %v8542 = vpop.f32.mrb[0].mxu0
    %v8543 = vadd.f32 0.0, %v8542
    %v8544 = vpop.f32.mrb[0].mxu0
    %v8545 = vpop.f32.mrb[0].mxu0
    %8546 = vdwg.mxu0
    %8547 = vmatprep.subr.bf16.mxu0 %v8315
    %8548 = vmatpush1.bf16.msra.mxu0 %v8314
    %8549 = vmatprep.subr.bf16.mxu0 %v8319
    %8550 = vmatpush1.bf16.msra.mxu0 %v8318
    %8551 = vmatprep.subr.bf16.mxu0 %v8323
    %8552 = vmatpush1.bf16.msra.mxu0 %v8322
    %8553 = vmatprep.subr.bf16.mxu0 %v8327
    %8554 = vmatpush1.bf16.msra.mxu0 %v8326
    %8555 = vmatprep.subr.bf16.mxu0 %v8331
    %8556 = vmatpush1.bf16.msra.mxu0 %v8330
    %8557 = vmatprep.subr.bf16.mxu0 %v8335
    %8558 = vmatpush1.bf16.msra.mxu0 %v8334
    %8559 = vmatprep.subr.bf16.mxu0 %v8339
    %8560 = vmatpush1.bf16.msra.mxu0 %v8338
    %8561 = vmatprep.subr.bf16.mxu0 %v8343
    %8562 = vmatpush1.bf16.msra.mxu0 %v8342
    %8563 = vmatprep.subr.bf16.mxu0 %v8347
    %8564 = vmatpush1.bf16.msra.mxu0 %v8346
    %8565 = vmatprep.subr.bf16.mxu0 %v8351
    %8566 = vmatpush1.bf16.msra.mxu0 %v8350
    %8567 = vmatprep.subr.bf16.mxu0 %v8355
    %8568 = vmatpush1.bf16.msra.mxu0 %v8354
    %8569 = vmatprep.subr.bf16.mxu0 %v8359
    %8570 = vmatpush1.bf16.msra.mxu0 %v8358
    %8571 = vmatprep.subr.bf16.mxu0 %v8363
    %8572 = vmatpush1.bf16.msra.mxu0 %v8362
    %8573 = vmatprep.subr.bf16.mxu0 %v8367
    %8574 = vmatpush1.bf16.msra.mxu0 %v8366
    %8575 = vmatprep.subr.bf16.mxu0 %v8371
    %8576 = vmatpush1.bf16.msra.mxu0 %v8370
    %8577 = vmatprep.subr.bf16.mxu0 %v8375
    %8578 = vmatpush1.bf16.msra.mxu0 %v8374
    %8579 = vmatprep.mubr.bf16.mxu0 %v5871
    %8580 = vmatmul.mubr.bf16.gmra.mrb[0].mxu0 %v5870
    %v8581 = vpop.f32.mrb[0].mxu0
    %v8582 = vadd.f32 %v8541, %v8581
    %v8583 = vpop.f32.mrb[0].mxu0
    %v8584 = vadd.f32 %v8543, %v8583
    %v8585 = vpop.f32.mrb[0].mxu0
    %v8586 = vpop.f32.mrb[0].mxu0
    %8587 = vdwg.mxu0
    %8588 = vmatprep.subr.bf16.mxu0 %v8253
    %8589 = vmatpush1.bf16.msra.mxu0 %v8252
    %8590 = vmatprep.subr.bf16.mxu0 %v8257
    %8591 = vmatpush1.bf16.msra.mxu0 %v8256
    %8592 = vmatprep.subr.bf16.mxu0 %v8261
    %8593 = vmatpush1.bf16.msra.mxu0 %v8260
    %8594 = vmatprep.subr.bf16.mxu0 %v8265
    %8595 = vmatpush1.bf16.msra.mxu0 %v8264
    %8596 = vmatprep.subr.bf16.mxu0 %v8269
    %8597 = vmatpush1.bf16.msra.mxu0 %v8268
    %8598 = vmatprep.subr.bf16.mxu0 %v8273
    %8599 = vmatpush1.bf16.msra.mxu0 %v8272
    %8600 = vmatprep.subr.bf16.mxu0 %v8277
    %8601 = vmatpush1.bf16.msra.mxu0 %v8276
    %8602 = vmatprep.subr.bf16.mxu0 %v8281
    %8603 = vmatpush1.bf16.msra.mxu0 %v8280
    %8604 = vmatprep.subr.bf16.mxu0 %v8285
    %8605 = vmatpush1.bf16.msra.mxu0 %v8284
    %8606 = vmatprep.subr.bf16.mxu0 %v8289
    %8607 = vmatpush1.bf16.msra.mxu0 %v8288
    %8608 = vmatprep.subr.bf16.mxu0 %v8293
    %8609 = vmatpush1.bf16.msra.mxu0 %v8292
    %8610 = vmatprep.subr.bf16.mxu0 %v8297
    %8611 = vmatpush1.bf16.msra.mxu0 %v8296
    %8612 = vmatprep.subr.bf16.mxu0 %v8301
    %8613 = vmatpush1.bf16.msra.mxu0 %v8300
    %8614 = vmatprep.subr.bf16.mxu0 %v8305
    %8615 = vmatpush1.bf16.msra.mxu0 %v8304
    %8616 = vmatprep.subr.bf16.mxu0 %v8309
    %8617 = vmatpush1.bf16.msra.mxu0 %v8308
    %8618 = vmatprep.subr.bf16.mxu0 %v8313
    %8619 = vmatpush1.bf16.msra.mxu0 %v8312
    %8620 = vmatprep.mubr.bf16.mxu0 %v5869
    %8621 = vmatmul.mubr.bf16.gmra.mrb[0].mxu0 %v5868
    %v8622 = vpop.f32.mrb[0].mxu0
    %v8623 = vadd.f32 0.0, %v8622
    %v8624 = vpop.f32.mrb[0].mxu0
    %v8625 = vadd.f32 0.0, %v8624
    %v8626 = vpop.f32.mrb[0].mxu0
    %v8627 = vpop.f32.mrb[0].mxu0
    %8628 = vdwg.mxu0
    %8629 = vmatprep.subr.bf16.mxu0 %v8317
    %8630 = vmatpush1.bf16.msra.mxu0 %v8316
    %8631 = vmatprep.subr.bf16.mxu0 %v8321
    %8632 = vmatpush1.bf16.msra.mxu0 %v8320
    %8633 = vmatprep.subr.bf16.mxu0 %v8325
    %8634 = vmatpush1.bf16.msra.mxu0 %v8324
    %8635 = vmatprep.subr.bf16.mxu0 %v8329
    %8636 = vmatpush1.bf16.msra.mxu0 %v8328
    %8637 = vmatprep.subr.bf16.mxu0 %v8333
    %8638 = vmatpush1.bf16.msra.mxu0 %v8332
    %8639 = vmatprep.subr.bf16.mxu0 %v8337
    %8640 = vmatpush1.bf16.msra.mxu0 %v8336
    %8641 = vmatprep.subr.bf16.mxu0 %v8341
    %8642 = vmatpush1.bf16.msra.mxu0 %v8340
    %8643 = vmatprep.subr.bf16.mxu0 %v8345
    %8644 = vmatpush1.bf16.msra.mxu0 %v8344
    %8645 = vmatprep.subr.bf16.mxu0 %v8349
    %8646 = vmatpush1.bf16.msra.mxu0 %v8348
    %8647 = vmatprep.subr.bf16.mxu0 %v8353
    %8648 = vmatpush1.bf16.msra.mxu0 %v8352
    %8649 = vmatprep.subr.bf16.mxu0 %v8357
    %8650 = vmatpush1.bf16.msra.mxu0 %v8356
    %8651 = vmatprep.subr.bf16.mxu0 %v8361
    %8652 = vmatpush1.bf16.msra.mxu0 %v8360
    %8653 = vmatprep.subr.bf16.mxu0 %v8365
    %8654 = vmatpush1.bf16.msra.mxu0 %v8364
    %8655 = vmatprep.subr.bf16.mxu0 %v8369
    %8656 = vmatpush1.bf16.msra.mxu0 %v8368
    %8657 = vmatprep.subr.bf16.mxu0 %v8373
    %8658 = vmatpush1.bf16.msra.mxu0 %v8372
    %8659 = vmatprep.subr.bf16.mxu0 %v8377
    %8660 = vmatpush1.bf16.msra.mxu0 %v8376
    %8661 = vmatprep.mubr.bf16.mxu0 %v5871
    %8662 = vmatmul.mubr.bf16.gmra.mrb[0].mxu0 %v5870
    %v8663 = vpop.f32.mrb[0].mxu0
    %v8664 = vadd.f32 %v8623, %v8663
    %v8665 = vpop.f32.mrb[0].mxu0
    %v8666 = vadd.f32 %v8625, %v8665
    %v8667 = vpop.f32.mrb[0].mxu0
    %v8668 = vpop.f32.mrb[0].mxu0
    %8669 = vdwg.mxu0
    %v8674 = vrot.slane %v7649, 1
    %v8675 = vrot.slane %v7651, 1
    %v8676 = vrot.slane %v7731, 1
    %v8677 = vrot.slane %v7733, 1
    %v8682 = vadd.f32 %v6716, %v8674
    %v8683 = vadd.f32 %v6718, %v8675
    %v8684 = vadd.f32 %v6798, %v8676
    %v8685 = vadd.f32 %v6800, %v8677
    %v8690 = vrot.slane %v8582, 2
    %v8691 = vrot.slane %v8584, 2
    %v8692 = vrot.slane %v8664, 2
    %v8693 = vrot.slane %v8666, 2
    %v8698 = vadd.f32 %v8682, %v8690
    %v8699 = vadd.f32 %v8683, %v8691
    %v8700 = vadd.f32 %v8684, %v8692
    %v8701 = vadd.f32 %v8685, %v8693
    %v8702 = vadd.f32 %v8698, 0.0
    %v8703 = vadd.f32 %v8699, 0.0
    %v8704 = vadd.f32 %v8700, 0.0
    %v8705 = vadd.f32 %v8701, 0.0
    %v8706 = vmul.f32 %v8698, %v8698
    %v8707 = vmul.f32 %v8699, %v8699
    %v8708 = vmul.f32 %v8700, %v8700
    %v8709 = vmul.f32 %v8701, %v8701
    %v8710 = vadd.f32 %v8706, 0.0
    %v8711 = vadd.f32 %v8707, 0.0
    %v8712 = vadd.f32 %v8708, 0.0
    %v8713 = vadd.f32 %v8709, 0.0
    %v8718 = vrot.slane %v8702, 3
    %v8719 = vrot.slane %v8703, 3
    %v8720 = vrot.slane %v8704, 3
    %v8721 = vrot.slane %v8705, 3
    %v8726 = vadd.f32 %v8702, %v8718
    %v8727 = vadd.f32 %v8703, %v8719
    %v8728 = vadd.f32 %v8704, %v8720
    %v8729 = vadd.f32 %v8705, %v8721
    %v8734 = vrot.slane %v8710, 3
    %v8735 = vrot.slane %v8711, 3
    %v8736 = vrot.slane %v8712, 3
    %v8737 = vrot.slane %v8713, 3
    %v8742 = vadd.f32 %v8710, %v8734
    %v8743 = vadd.f32 %v8711, %v8735
    %v8744 = vadd.f32 %v8712, %v8736
    %v8745 = vadd.f32 %v8713, %v8737
    %v8746 = vmul.f32 %v8726, %v5599
    %v8747 = vmul.f32 %v8727, %v5599
    %v8748 = vmul.f32 %v8728, %v5599
    %v8749 = vmul.f32 %v8729, %v5599
    %v8750 = vmul.f32 %v8742, %v5599
    %v8751 = vmul.f32 %v8743, %v5599
    %v8752 = vmul.f32 %v8744, %v5599
    %v8753 = vmul.f32 %v8745, %v5599
    %v8754 = vmul.f32 %v8746, %v8746
    %v8755 = vmul.f32 %v8747, %v8747
    %v8756 = vmul.f32 %v8748, %v8748
    %v8757 = vmul.f32 %v8749, %v8749
    %v8758 = vsub.f32 %v8750, %v8754
    %v8759 = vsub.f32 %v8751, %v8755
    %v8760 = vsub.f32 %v8752, %v8756
    %v8761 = vsub.f32 %v8753, %v8757
    %v8762 = vmax.f32 %v8758, 0.0
    %v8763 = vmax.f32 %v8759, 0.0
    %v8764 = vmax.f32 %v8760, 0.0
    %v8765 = vmax.f32 %v8761, 0.0
    %v8766 = vadd.f32 %v8762, 1e-05
    %v8767 = vadd.f32 %v8763, 1e-05
    %v8768 = vadd.f32 %v8764, 1e-05
    %v8769 = vadd.f32 %v8765, 1e-05
    %v8770 = vrsqrt.pop %v8766
    %v8771 = vrsqrt.pop %v8767
    %v8772 = vrsqrt.pop %v8768
    %v8773 = vrsqrt.pop %v8769
    %v8774 = vsub.f32 %v8698, %v8746
    %v8775 = vsub.f32 %v8699, %v8747
    %v8776 = vsub.f32 %v8700, %v8748
    %v8777 = vsub.f32 %v8701, %v8749
    %v8778 = vmul.f32 %v8774, %v8770
    %v8779 = vmul.f32 %v8775, %v8771
    %v8780 = vmul.f32 %v8776, %v8772
    %v8781 = vmul.f32 %v8777, %v8773
    %v8786 = vrot.slane %v8746, 5
    %v8787 = vrot.slane %v8747, 5
    %v8788 = vrot.slane %v8748, 5
    %v8789 = vrot.slane %v8749, 5
    %v8794 = vsub.f32 %v8698, %v8786
    %v8795 = vsub.f32 %v8699, %v8787
    %v8796 = vsub.f32 %v8700, %v8788
    %v8797 = vsub.f32 %v8701, %v8789
    %v8802 = vrot.slane %v8770, 5
    %v8803 = vrot.slane %v8771, 5
    %v8804 = vrot.slane %v8772, 5
    %v8805 = vrot.slane %v8773, 5
    %v8810 = vmul.f32 %v8794, %v8802
    %v8811 = vmul.f32 %v8795, %v8803
    %v8812 = vmul.f32 %v8796, %v8804
    %v8813 = vmul.f32 %v8797, %v8805
    %v8818 = vrot.slane %v5828, 1
    %v8819 = vrot.slane %v5829, 1
    %v8820 = vrot.slane %v5830, 1
    %v8821 = vrot.slane %v5831, 1
    %v8826 = vadd.f32 %v8778, %v8818
    %v8827 = vadd.f32 %v8779, %v8819
    %v8828 = vadd.f32 %v8780, %v8820
    %v8829 = vadd.f32 %v8781, %v8821
    %v8830 = vmax.f32 %v8826, 0.0
    %v8831 = vmax.f32 %v8827, 0.0
    %v8832 = vmax.f32 %v8828, 0.0
    %v8833 = vmax.f32 %v8829, 0.0
    %v8834 = vadd.f32 %v8810, %v5860
    %v8835 = vadd.f32 %v8811, %v5861
    %v8836 = vadd.f32 %v8812, %v5862
    %v8837 = vadd.f32 %v8813, %v5863
    %v8838 = vmax.f32 %v8834, 0.0
    %v8839 = vmax.f32 %v8835, 0.0
    %v8840 = vmax.f32 %v8836, 0.0
    %v8841 = vmax.f32 %v8837, 0.0
    %v8842 = vadd.f32 %v8830, 0.0
    %v8843 = vadd.f32 %v8831, 0.0
    %v8844 = vadd.f32 %v8832, 0.0
    %v8845 = vadd.f32 %v8833, 0.0
    %v8850 = vcombine.low %v8842, %v8843
    %v8851 = vcombine.low %v8844, %v8845
    %v8853 = vunpack.c.l.s4 1966171168
    %v8854 = vunpack.c.0.s8 %v8853
    %v8855 = vlaneseq
    %v8856 = vshrl.u32 %v8855, 7
    %v8857 = vsub.s32 %v8854, %v8856
    %v8858 = vrot.slane %v8850, %v8857
    %v8860 = vunpack.c.l.s4 1966171168
    %v8861 = vunpack.c.0.s8 %v8860
    %v8862 = vlaneseq
    %v8863 = vshrl.u32 %v8862, 7
    %v8864 = vsub.s32 %v8861, %v8863
    %v8865 = vrot.slane %v8851, %v8864
    %v8866 = vcombine.low %v8858, %v8865
    %v8868 = vunpack.c.l.s4 1966171168
    %v8869 = vunpack.c.0.s8 %v8868
    %v8870 = vlaneseq
    %v8871 = vshrl.u32 %v8870, 7
    %v8872 = vsub.s32 %v8869, %v8871
    %v8873 = vrot.slane %v8866, %v8872
    %8875 = vst.msk [vmem:[#allocation11] ss:$2 sm:$0xf] %vm3597, %v8873
    %v8876 = vadd.f32 %v8838, 0.0
    %v8877 = vadd.f32 %v8839, 0.0
    %v8878 = vadd.f32 %v8840, 0.0
    %v8879 = vadd.f32 %v8841, 0.0
    %v8884 = vcombine.low %v8876, %v8877
    %v8885 = vcombine.low %v8878, %v8879
    %v8887 = vunpack.c.l.s4 1966171168
    %v8888 = vunpack.c.0.s8 %v8887
    %v8889 = vlaneseq
    %v8890 = vshrl.u32 %v8889, 7
    %v8891 = vsub.s32 %v8888, %v8890
    %v8892 = vrot.slane %v8884, %v8891
    %v8894 = vunpack.c.l.s4 1966171168
    %v8895 = vunpack.c.0.s8 %v8894
    %v8896 = vlaneseq
    %v8897 = vshrl.u32 %v8896, 7
    %v8898 = vsub.s32 %v8895, %v8897
    %v8899 = vrot.slane %v8885, %v8898
    %v8900 = vcombine.high %v8892, %v8899
    %v8902 = vunpack.c.l.s4 1966171168
    %v8903 = vunpack.c.0.s8 %v8902
    %v8904 = vlaneseq
    %v8905 = vshrl.u32 %v8904, 7
    %v8906 = vsub.s32 %v8903, %v8905
    %v8907 = vrot.slane %v8900, %v8906
    %v8908 = vcombine.high %v8907, %v8907
    %s8910 = scalar_lea.vmem [#allocation11], 1
    %8911 = vst.msk [vmem:[%s8910] ss:$2 sm:$0xf] %vm3597, %v8908
    %v8912 = vld [vmem:[#allocation11] sm:$0xff]
    %v8913 = vld [vmem:[%s16] sm:$0xff]
    %v8914 = vld [vmem:[%s16 + $0x8] sm:$0xff]
    %v8915 = vld [vmem:[%s16 + $0x10] sm:$0xff]
    %v8916 = vld [vmem:[%s16 + $0x18] sm:$0xff]
    %v8917 = vld [vmem:[%s16 + $0x20] sm:$0xff]
    %v8918 = vld [vmem:[%s16 + $0x28] sm:$0xff]
    %v8919 = vld [vmem:[%s16 + $0x30] sm:$0xff]
    %v8920 = vld [vmem:[%s16 + $0x38] sm:$0xff]
    %v8921 = vld [vmem:[%s16 + $0x40] sm:$0xff]
    %v8922 = vld [vmem:[%s16 + $0x48] sm:$0xff]
    %v8923 = vld [vmem:[%s16 + $0x50] sm:$0xff]
    %v8924 = vld [vmem:[%s16 + $0x58] sm:$0xff]
    %v8925 = vld [vmem:[%s16 + $0x60] sm:$0xff]
    %v8926 = vld [vmem:[%s16 + $0x68] sm:$0xff]
    %v8927 = vld [vmem:[%s16 + $0x70] sm:$0xff]
    %v8928 = vld [vmem:[%s16 + $0x78] sm:$0xff]
    %v8929 = vld [vmem:[%s16 + $0x80] sm:$0xff]
    %v8930 = vld [vmem:[%s16 + $0x88] sm:$0xff]
    %v8931 = vld [vmem:[%s16 + $0x90] sm:$0xff]
    %v8932 = vld [vmem:[%s16 + $0x98] sm:$0xff]
    %v8933 = vld [vmem:[%s16 + $0xa0] sm:$0xff]
    %v8934 = vld [vmem:[%s16 + $0xa8] sm:$0xff]
    %v8935 = vld [vmem:[%s16 + $0xb0] sm:$0xff]
    %v8936 = vld [vmem:[%s16 + $0xb8] sm:$0xff]
    %v8937 = vld [vmem:[%s16 + $0xc0] sm:$0xff]
    %v8938 = vld [vmem:[%s16 + $0xc8] sm:$0xff]
    %v8939 = vld [vmem:[%s16 + $0xd0] sm:$0xff]
    %v8940 = vld [vmem:[%s16 + $0xd8] sm:$0xff]
    %v8941 = vld [vmem:[%s16 + $0xe0] sm:$0xff]
    %v8942 = vld [vmem:[%s16 + $0xe8] sm:$0xff]
    %v8943 = vld [vmem:[%s16 + $0xf0] sm:$0xff]
    %v8944 = vld [vmem:[%s16 + $0xf8] sm:$0xff]
    %v8945 = vld [vmem:[%s16 + $0x100] sm:$0xff]
    %v8946 = vld [vmem:[%s16 + $0x108] sm:$0xff]
    %v8947 = vld [vmem:[%s16 + $0x110] sm:$0xff]
    %v8948 = vld [vmem:[%s16 + $0x118] sm:$0xff]
    %v8949 = vld [vmem:[%s16 + $0x120] sm:$0xff]
    %v8950 = vld [vmem:[%s16 + $0x128] sm:$0xff]
    %v8951 = vld [vmem:[%s16 + $0x130] sm:$0xff]
    %v8952 = vld [vmem:[%s16 + $0x138] sm:$0xff]
    %v8953 = vld [vmem:[%s16 + $0x140] sm:$0xff]
    %v8954 = vld [vmem:[%s16 + $0x148] sm:$0xff]
    %v8955 = vld [vmem:[%s16 + $0x150] sm:$0xff]
    %v8956 = vld [vmem:[%s16 + $0x158] sm:$0xff]
    %v8957 = vld [vmem:[%s16 + $0x160] sm:$0xff]
    %v8958 = vld [vmem:[%s16 + $0x168] sm:$0xff]
    %v8959 = vld [vmem:[%s16 + $0x170] sm:$0xff]
    %v8960 = vld [vmem:[%s16 + $0x178] sm:$0xff]
    %v8961 = vld [vmem:[%s16 + $0x180] sm:$0xff]
    %v8962 = vld [vmem:[%s16 + $0x188] sm:$0xff]
    %v8963 = vld [vmem:[%s16 + $0x190] sm:$0xff]
    %v8964 = vld [vmem:[%s16 + $0x198] sm:$0xff]
    %v8965 = vld [vmem:[%s16 + $0x1a0] sm:$0xff]
    %v8966 = vld [vmem:[%s16 + $0x1a8] sm:$0xff]
    %v8967 = vld [vmem:[%s16 + $0x1b0] sm:$0xff]
    %v8968 = vld [vmem:[%s16 + $0x1b8] sm:$0xff]
    %v8969 = vld [vmem:[%s16 + $0x1c0] sm:$0xff]
    %v8970 = vld [vmem:[%s16 + $0x1c8] sm:$0xff]
    %v8971 = vld [vmem:[%s16 + $0x1d0] sm:$0xff]
    %v8972 = vld [vmem:[%s16 + $0x1d8] sm:$0xff]
    %v8973 = vld [vmem:[%s16 + $0x1e0] sm:$0xff]
    %v8974 = vld [vmem:[%s16 + $0x1e8] sm:$0xff]
    %v8975 = vld [vmem:[%s16 + $0x1f0] sm:$0xff]
    %v8976 = vld [vmem:[%s16 + $0x1f8] sm:$0xff]
    %v8977 = vld [vmem:[#allocation36] sm:$0x1]
    %v8979 = vlaneseq
    %v8980 = vshrl.u32 %v8979, 7
    %v8981 = vsub.s32 0, %v8980
    %v8982 = vrot.slane %v8977, %v8981
    %v8985 = vcombine.high %v8912, %v8912
    %v8987 = vunpack.c.l.s4 1983009808
    %v8988 = vunpack.c.0.s8 %v8987
    %v8989 = vlaneseq
    %v8990 = vshrl.u32 %v8989, 7
    %v8991 = vsub.s32 %v8988, %v8990
    %v8992 = vrot.slane %v8912, %v8991
    %v8994 = vunpack.c.l.s4 1983009808
    %v8995 = vunpack.c.0.s8 %v8994
    %v8996 = vlaneseq
    %v8997 = vshrl.u32 %v8996, 7
    %v8998 = vsub.s32 %v8995, %v8997
    %v8999 = vrot.slane %v8985, %v8998
    %v9000 = vcombine.high %v8992, %v8992
    %v9001 = vcombine.high %v8999, %v8999
    %9006 = vmatprep.subr.mxu0 0.0
    %9007 = vmatpush1.msra.mxu0 %v8913
    %9008 = vmatprep.subr.mxu0 0.0
    %9009 = vmatpush1.msra.mxu0 %v8914
    %9010 = vmatprep.subr.mxu0 0.0
    %9011 = vmatpush1.msra.mxu0 %v8915
    %9012 = vmatprep.subr.mxu0 0.0
    %9013 = vmatpush1.msra.mxu0 %v8916
    %9014 = vmatprep.subr.mxu0 0.0
    %9015 = vmatpush1.msra.mxu0 %v8917
    %9016 = vmatprep.subr.mxu0 0.0
    %9017 = vmatpush1.msra.mxu0 %v8918
    %9018 = vmatprep.subr.mxu0 0.0
    %9019 = vmatpush1.msra.mxu0 %v8919
    %9020 = vmatprep.subr.mxu0 0.0
    %9021 = vmatpush1.msra.mxu0 %v8920
    %9022 = vmatprep.subr.mxu0 0.0
    %9023 = vmatpush1.msra.mxu0 %v8921
    %9024 = vmatprep.subr.mxu0 0.0
    %9025 = vmatpush1.msra.mxu0 %v8922
    %9026 = vmatprep.subr.mxu0 0.0
    %9027 = vmatpush1.msra.mxu0 %v8923
    %9028 = vmatprep.subr.mxu0 0.0
    %9029 = vmatpush1.msra.mxu0 %v8924
    %9030 = vmatprep.subr.mxu0 0.0
    %9031 = vmatpush1.msra.mxu0 %v8925
    %9032 = vmatprep.subr.mxu0 0.0
    %9033 = vmatpush1.msra.mxu0 %v8926
    %9034 = vmatprep.subr.mxu0 0.0
    %9035 = vmatpush1.msra.mxu0 %v8927
    %9036 = vmatprep.subr.mxu0 0.0
    %9037 = vmatpush1.msra.mxu0 %v8928
    %9038 = vmatprep.subr.mxu0 0.0
    %9039 = vmatpush1.msra.mxu0 %v8929
    %9040 = vmatprep.subr.mxu0 0.0
    %9041 = vmatpush1.msra.mxu0 %v8930
    %9042 = vmatprep.subr.mxu0 0.0
    %9043 = vmatpush1.msra.mxu0 %v8931
    %9044 = vmatprep.subr.mxu0 0.0
    %9045 = vmatpush1.msra.mxu0 %v8932
    %9046 = vmatprep.subr.mxu0 0.0
    %9047 = vmatpush1.msra.mxu0 %v8933
    %9048 = vmatprep.subr.mxu0 0.0
    %9049 = vmatpush1.msra.mxu0 %v8934
    %9050 = vmatprep.subr.mxu0 0.0
    %9051 = vmatpush1.msra.mxu0 %v8935
    %9052 = vmatprep.subr.mxu0 0.0
    %9053 = vmatpush1.msra.mxu0 %v8936
    %9054 = vmatprep.subr.mxu0 0.0
    %9055 = vmatpush1.msra.mxu0 %v8937
    %9056 = vmatprep.subr.mxu0 0.0
    %9057 = vmatpush1.msra.mxu0 %v8938
    %9058 = vmatprep.subr.mxu0 0.0
    %9059 = vmatpush1.msra.mxu0 %v8939
    %9060 = vmatprep.subr.mxu0 0.0
    %9061 = vmatpush1.msra.mxu0 %v8940
    %9062 = vmatprep.subr.mxu0 0.0
    %9063 = vmatpush1.msra.mxu0 %v8941
    %9064 = vmatprep.subr.mxu0 0.0
    %9065 = vmatpush1.msra.mxu0 %v8942
    %9066 = vmatprep.subr.mxu0 0.0
    %9067 = vmatpush1.msra.mxu0 %v8943
    %9068 = vmatprep.subr.mxu0 0.0
    %9069 = vmatpush1.msra.mxu0 %v8944
    %9070 = vmatprep.mubr.f32.mxu0 %v9000
    %9071 = vmatmul.mubr.f32.gmra.mrb[0].mxu0 %v8992
    %v9072 = vpop.f32.mrb[0].mxu0
    %v9073 = vadd.f32 %v8982, %v9072
    %v9074 = vpop.f32.mrb[0].mxu0
    %9075 = vdwg.mxu0
    %9076 = vmatprep.subr.mxu0 0.0
    %9077 = vmatpush1.msra.mxu0 %v8945
    %9078 = vmatprep.subr.mxu0 0.0
    %9079 = vmatpush1.msra.mxu0 %v8946
    %9080 = vmatprep.subr.mxu0 0.0
    %9081 = vmatpush1.msra.mxu0 %v8947
    %9082 = vmatprep.subr.mxu0 0.0
    %9083 = vmatpush1.msra.mxu0 %v8948
    %9084 = vmatprep.subr.mxu0 0.0
    %9085 = vmatpush1.msra.mxu0 %v8949
    %9086 = vmatprep.subr.mxu0 0.0
    %9087 = vmatpush1.msra.mxu0 %v8950
    %9088 = vmatprep.subr.mxu0 0.0
    %9089 = vmatpush1.msra.mxu0 %v8951
    %9090 = vmatprep.subr.mxu0 0.0
    %9091 = vmatpush1.msra.mxu0 %v8952
    %9092 = vmatprep.subr.mxu0 0.0
    %9093 = vmatpush1.msra.mxu0 %v8953
    %9094 = vmatprep.subr.mxu0 0.0
    %9095 = vmatpush1.msra.mxu0 %v8954
    %9096 = vmatprep.subr.mxu0 0.0
    %9097 = vmatpush1.msra.mxu0 %v8955
    %9098 = vmatprep.subr.mxu0 0.0
    %9099 = vmatpush1.msra.mxu0 %v8956
    %9100 = vmatprep.subr.mxu0 0.0
    %9101 = vmatpush1.msra.mxu0 %v8957
    %9102 = vmatprep.subr.mxu0 0.0
    %9103 = vmatpush1.msra.mxu0 %v8958
    %9104 = vmatprep.subr.mxu0 0.0
    %9105 = vmatpush1.msra.mxu0 %v8959
    %9106 = vmatprep.subr.mxu0 0.0
    %9107 = vmatpush1.msra.mxu0 %v8960
    %9108 = vmatprep.subr.mxu0 0.0
    %9109 = vmatpush1.msra.mxu0 %v8961
    %9110 = vmatprep.subr.mxu0 0.0
    %9111 = vmatpush1.msra.mxu0 %v8962
    %9112 = vmatprep.subr.mxu0 0.0
    %9113 = vmatpush1.msra.mxu0 %v8963
    %9114 = vmatprep.subr.mxu0 0.0
    %9115 = vmatpush1.msra.mxu0 %v8964
    %9116 = vmatprep.subr.mxu0 0.0
    %9117 = vmatpush1.msra.mxu0 %v8965
    %9118 = vmatprep.subr.mxu0 0.0
    %9119 = vmatpush1.msra.mxu0 %v8966
    %9120 = vmatprep.subr.mxu0 0.0
    %9121 = vmatpush1.msra.mxu0 %v8967
    %9122 = vmatprep.subr.mxu0 0.0
    %9123 = vmatpush1.msra.mxu0 %v8968
    %9124 = vmatprep.subr.mxu0 0.0
    %9125 = vmatpush1.msra.mxu0 %v8969
    %9126 = vmatprep.subr.mxu0 0.0
    %9127 = vmatpush1.msra.mxu0 %v8970
    %9128 = vmatprep.subr.mxu0 0.0
    %9129 = vmatpush1.msra.mxu0 %v8971
    %9130 = vmatprep.subr.mxu0 0.0
    %9131 = vmatpush1.msra.mxu0 %v8972
    %9132 = vmatprep.subr.mxu0 0.0
    %9133 = vmatpush1.msra.mxu0 %v8973
    %9134 = vmatprep.subr.mxu0 0.0
    %9135 = vmatpush1.msra.mxu0 %v8974
    %9136 = vmatprep.subr.mxu0 0.0
    %9137 = vmatpush1.msra.mxu0 %v8975
    %9138 = vmatprep.subr.mxu0 0.0
    %9139 = vmatpush1.msra.mxu0 %v8976
    %9140 = vmatprep.mubr.f32.mxu0 %v9001
    %9141 = vmatmul.mubr.f32.gmra.mrb[0].mxu0 %v8999
    %v9142 = vpop.f32.mrb[0].mxu0
    %v9143 = vadd.f32 %v9073, %v9142
    %v9144 = vpop.f32.mrb[0].mxu0
    %9145 = vdwg.mxu0
    %v9146 = vmul.f32 %v9143, %v9143
    %vm9147 = vcmask 9216
    %v9148 = vsel %vm9147, %v9146, 0.0
    %9149 = vadd.xlane.f32.xlu0 %v9148
    %v9150 = vpop.xlane.xlu0 %9149
    %v9151 = vadd.f32 %v9150, 1e-12
    %v9152 = vrsqrt.pop %v9151
    %v9153 = vmul.f32 %v9143, %v9152
    %9154 = vst.msk [vmem:[#allocation38] sm:$0x3] %vm9147, %v9153
    // Predicated region
    $region138: #{resnet_forward.1} parent=1 // pred_check
      _
    $region139: #{resnet_forward.1} parent=1 // pred_check_branch
      %9156 = sbr.rel (0) target = $region141
    $region140: #{resnet_forward.1} parent=1 // pred_region
      %s9158 = ssub.s32 32, 32
      %9159 = vsyncadd [#allocation14], %s9158
      %s9161 = sshll.u32 [#allocation38], 4
      %s9162 = int_to_ptr.vmem [resolvable:$true] %s9161
      %9164 = dma.vmem_to_hbm [thread:$0]  %s9162, 32, %s18, [#allocation14]
    $region141: #{resnet_forward.1} parent=1 // pred_fallthru
      _
    // Predicated region
    $region142: #{resnet_forward.1} parent=1 // pred_check
      _
    $region143: #{resnet_forward.1} parent=1 // pred_check_branch
      %9166 = sbr.rel (0) target = $region145
    $region144: #{resnet_forward.1} parent=1 // pred_region
      %9167 = dma.done [#allocation14], 32
    $region145: #{resnet_forward.1} parent=1 // pred_fallthru
      _
    %9168 = vsyncpa [#allocation13], 1
    %9169 = vsyncpa [#allocation16], 1
    %9170 = vsyncpa [#allocation19], 1
    %9171 = vsyncpa [#allocation22], 1
    %9172 = vsyncpa [#allocation25], 1
    %9173 = vsyncpa [#allocation28], 1
    %9174 = vsyncpa [#allocation31], 1
    %9175 = vsyncpa [#allocation34], 1
    %9176 = vsyncpa [#allocation37], 1
    %9177 = vsyncpa [#allocation14], 1

</llo_original>
